<compile_context>
chip_gen: v5e
topology: v5e:2x2
jax: 0.10.0
libtpu: 0.0.40
codegen_flags: <defaults>
</compile_context>

<pallas_src>
import functools

import jax
import jax.numpy as jnp
import numpy as np
from jax.experimental import pallas as pl
from jax.experimental.pallas import tpu as pltpu

_TM_GRAN = 512    # dst-row padding granularity (= pack-kernel row tile)
_TK_GRAN = 1024   # src-col padding granularity (= pack-kernel col tile)


def _round_up(x, m):
    return ((x + m - 1) // m) * m


def _cdiv(a, b):
    return -(-a // b)


def _vmem_capacity_bytes():
    try:
        return int(pltpu.get_tpu_info().vmem_capacity_bytes)
    except Exception:
        return 64 * 1024 * 1024   # conservative default (v7x per-core VMEM)


def _deg_norm(deg, norm_2):
    """clamp(deg, 1) ** norm_2 with cheap special cases (rsqrt rides the EUP)."""
    deg = jnp.maximum(deg, 1.0)
    if norm_2 == -1:
        return 1.0 / deg
    if norm_2 == -0.5:
        return jax.lax.rsqrt(deg)
    if norm_2 == 0.5:
        return jnp.sqrt(deg)
    if norm_2 == 1:
        return deg
    return jnp.power(deg, jnp.float32(norm_2))


def _largest_divisor(total, gran, cap, ok):
    """Largest multiple of `gran` dividing `total`, <= cap, satisfying ok()."""
    best = gran
    t = gran
    cap = min(cap, total)
    while t <= cap:
        if total % t == 0 and ok(t):
            best = t
        t += gran
    return best


def _select_tiles(n_dst, n_src, d_p, terms, budget, tm_req, tk_req):
    if tm_req is not None or tk_req is not None:
        tm = _round_up(tm_req if tm_req else _TM_GRAN, _TM_GRAN)
        tk = _round_up(tk_req if tk_req else _TK_GRAN, _TK_GRAN)
        return tm, tk, _round_up(n_dst, tm), _round_up(n_src, tk)

    nd_p = _round_up(n_dst, _TM_GRAN)
    ns_p = _round_up(n_src, _TK_GRAN)
    fbytes = terms * d_p * 2              # packed bf16 feature row
    obytes = d_p * 4                      # f32 output row

    def ws(tm, tk):                       # VMEM working set estimate:
        # int8 A double-buffer + in-kernel bf16 copy + feat + out double-buffers
        return 4 * tm * tk + 2 * tk * fbytes + 2 * tm * obytes

    tm_cap = 2048
    if nd_p >= 2 * _TM_GRAN:              # keep >= 2 dst tiles for megacore
        tm_cap = min(tm_cap, nd_p // 2)

    if ws(256, ns_p) <= budget:
        # Whole src dim in one reduction step: features are DMA'd exactly once.
        tk = ns_p
        tm = _largest_divisor(nd_p, 256, tm_cap, lambda t: ws(t, tk) <= budget)
    else:
        tm = _largest_divisor(nd_p, 256, tm_cap,
                              lambda t: ws(t, min(ns_p, 2048)) <= budget)
        tk = _largest_divisor(ns_p, _TK_GRAN, 8192,
                              lambda t: ws(tm, t) <= budget)
    # TODO(synk): tile the feature (lane) dimension for very large D; the
    # current kernel assumes terms*d_p fits one block.
    return tm, tk, nd_p, ns_p


def _make_pack_kernel(n_dst, n_src, tmp, tkp, ragged):
    """Fused f32 -> zero-padded int8 cast + column-sum (out-degree) pass."""

    def kernel(adj_ref, a8_ref, colsum_ref):
        s = pl.program_id(0)
        r = pl.program_id(1)

        @pl.when(r == 0)
        def _init():
            colsum_ref[...] = jnp.zeros_like(colsum_ref)

        a = adj_ref[...]
        if ragged:
            rows = jax.lax.broadcasted_iota(jnp.int32, a.shape, 0) + r * tmp
            cols = jax.lax.broadcasted_iota(jnp.int32, a.shape, 1) + s * tkp
            a = jnp.where((rows < n_dst) & (cols < n_src), a, 0.0)
        a8_ref[...] = a.astype(jnp.int8)
        colsum_ref[...] += jnp.sum(a, axis=0, keepdims=True)

    return kernel


def _pack_adjacency(adj, nd_p, ns_p, vmem_limit):
    """One fused pass over A: zero-padded int8 adjacency + column sums."""
    n_dst, n_src = adj.shape
    tmp, tkp = _TM_GRAN, _TK_GRAN
    if n_dst < tmp or n_src < tkp:
        # Tiny graph: the fused pre-pass would need blocks larger than the
        # array itself; plain XLA glue is negligible at this size.
        adj_i8 = jnp.pad(adj.astype(jnp.int8),
                         ((0, nd_p - n_dst), (0, ns_p - n_src)))
        return adj_i8, jnp.sum(adj, axis=0)

    ragged = (nd_p != n_dst) or (ns_p != n_src)
    # Input windows that would start past the source array are clamped back to
    # the last in-bounds block; the in-kernel mask then zeroes them, so every
    # padded region of the int8 output is written with exact zeros.
    last_r = _cdiv(n_dst, tmp) - 1
    last_s = _cdiv(n_src, tkp) - 1
    grid = (ns_p // tkp, nd_p // tmp)     # (src tiles, dst tiles): dst = reduce

    adj_i8, col_sum = pl.pallas_call(
        _make_pack_kernel(n_dst, n_src, tmp, tkp, ragged),
        out_shape=(jax.ShapeDtypeStruct((nd_p, ns_p), jnp.int8),
                   jax.ShapeDtypeStruct((1, ns_p), jnp.float32)),
        grid_spec=pltpu.PrefetchScalarGridSpec(
            num_scalar_prefetch=0,
            grid=grid,
            in_specs=[pl.BlockSpec(
                (tmp, tkp),
                lambda s, r: (jnp.minimum(r, last_r), jnp.minimum(s, last_s)))],
            out_specs=(pl.BlockSpec((tmp, tkp), lambda s, r: (r, s)),
                       pl.BlockSpec((1, tkp), lambda s, r: (0, s))),
        ),
        compiler_params=pltpu.CompilerParams(
            dimension_semantics=("parallel", "arbitrary"),
            vmem_limit_bytes=vmem_limit,
        ),
    )(adj)
    return adj_i8, col_sum[0]


def _pack_features(feat_scaled, ns_p, d, d_p, terms):
    """bf16 multi-term split of the out-degree-scaled f32 features, padded to
    (ns_p, terms*d_p).  A 'ones' column at lane `d` of term 0 makes the main
    matmul also emit the destination in-degree (row sums of A)."""
    n_src = feat_scaled.shape[0]
    packed = jnp.zeros((ns_p, terms * d_p), jnp.bfloat16)
    resid = feat_scaled
    for t in range(terms):
        part = resid.astype(jnp.bfloat16)
        packed = packed.at[:n_src, t * d_p:t * d_p + d].set(part)
        if t + 1 < terms:
            resid = resid - part.astype(jnp.float32)
    packed = packed.at[:n_src, d].set(1.0)
    return packed


def _make_lightgcn_kernel(terms, d_p, deg_col, norm_2):
    def kernel(a_ref, feat_ref, out_ref):
        k = pl.program_id(1)

        @pl.when(k == 0)
        def _init():
            out_ref[...] = jnp.zeros_like(out_ref)

        a = a_ref[...].astype(jnp.bfloat16)          # int8 {0,1} -> bf16, exact
        acc = out_ref[...]
        for t in range(terms):                        # bf16 MXU passes, f32 acc
            acc = acc + jnp.dot(a, feat_ref[:, t * d_p:(t + 1) * d_p],
                                preferred_element_type=jnp.float32)
        out_ref[...] = acc

        @pl.when(k == pl.num_programs(1) - 1)
        def _finalize():
            res = out_ref[...]
            # Lane `deg_col` carries sum_k A[i, k] thanks to the ones column.
            scale = _deg_norm(res[:, deg_col:deg_col + 1], norm_2)
            out_ref[...] = res * scale

    return kernel


@functools.partial(jax.jit,
                   static_argnames=("etype", "norm_2", "tm", "tk", "split_terms"))
def lightgcn_layer(adj, h, etype, norm_2=-1, *, tm=None, tk=None, split_terms=3):
    """Pallas LightGCN layer.

    adj   : [N_dst, N_src] dense 0/1 adjacency, adj[d, s] = 1 iff edge s -> d.
    h     : dict node-type -> [N, D] features.
    etype : (src_type, relation, dst_type).
    """
    src, _, _dst = etype
    feat_src = h[src]
    n_dst, n_src = adj.shape
    d = feat_src.shape[-1]
    out_dtype = feat_src.dtype

    if adj.dtype != jnp.float32:
        adj = adj.astype(jnp.float32)

    terms = 1 if feat_src.dtype == jnp.bfloat16 else int(split_terms)
    d_p = _round_up(d + 1, 128)          # >= 1 spare lane for the in-degree

    cap = _vmem_capacity_bytes()
    budget = int(cap * 0.55)             # working-set target (leaves headroom)
    vmem_limit = int(cap * 0.75)

    tm, tk, nd_p, ns_p = _select_tiles(n_dst, n_src, d_p, terms, budget, tm, tk)

    # Pass 1: fused cast + zero-pad + column-sum (source out-degrees) over A.
    adj_i8, col_sum = _pack_adjacency(adj, nd_p, ns_p, vmem_limit)

    # Source-side normalisation + bf16 split of the features (small matrices).
    norm_src = _deg_norm(col_sum[:n_src], norm_2)
    feat_scaled = feat_src.astype(jnp.float32) * norm_src[:, None]
    feat_packed = _pack_features(feat_scaled, ns_p, d, d_p, terms)

    # Pass 2: tiled A @ feat with fused in-degree + destination normalisation.
    grid = (nd_p // tm, ns_p // tk)
    out = pl.pallas_call(
        _make_lightgcn_kernel(terms, d_p, d, norm_2),
        out_shape=jax.ShapeDtypeStruct((nd_p, d_p), jnp.float32),
        grid_spec=pltpu.PrefetchScalarGridSpec(
            num_scalar_prefetch=0,
            grid=grid,
            in_specs=[
                pl.BlockSpec((tm, tk), lambda i, k: (i, k)),           # A, int8
                pl.BlockSpec((tk, terms * d_p), lambda i, k: (k, 0)),  # features
            ],
            out_specs=pl.BlockSpec((tm, d_p), lambda i, k: (i, 0)),
        ),
        compiler_params=pltpu.CompilerParams(
            dimension_semantics=("parallel", "arbitrary"),
            vmem_limit_bytes=vmem_limit,
        ),
    )(adj_i8, feat_packed)

    rst = out[:n_dst, :d]
    if out_dtype != jnp.float32:
        rst = rst.astype(out_dtype)
    return rst


def _reference(adj, feat_src, norm_2):
    """float64 NumPy reference of the PyTorch/DGL forward pass."""
    a = np.asarray(adj, dtype=np.float64)
    f = np.asarray(feat_src, dtype=np.float64)
    out_deg = np.maximum(a.sum(axis=0), 1.0)
    in_deg = np.maximum(a.sum(axis=1), 1.0)
    rst = a @ (f * np.power(out_deg, float(norm_2))[:, None])
    return rst * np.power(in_deg, float(norm_2))[:, None]


def _run_case(key, n_src, n_dst, d, norm_2, **tile_kwargs):
    k_adj, k_feat = jax.random.split(key)
    etype = ("user", "rates", "item")
    adj = (jax.random.uniform(k_adj, (n_dst, n_src)) < 0.05).astype(jnp.float32)
    h = {
        "user": jax.random.normal(k_feat, (n_src, d), dtype=jnp.float32),
        "item": jnp.zeros((n_dst, d), dtype=jnp.float32),
    }
    rst = jax.block_until_ready(
        lightgcn_layer(adj, h, etype=etype, norm_2=norm_2, **tile_kwargs))
    ref = _reference(adj, h["user"], norm_2)
    np.testing.assert_allclose(np.asarray(rst, dtype=np.float64), ref,
                               rtol=2e-5, atol=2e-5)


if __name__ == "__main__":
    keys = jax.random.split(jax.random.PRNGKey(0), 3)
    # Tiny ragged graph: XLA-glue pre-pass, single (tm, tk) tile.
    _run_case(keys[0], n_src=300, n_dst=200, d=40, norm_2=-1)
    # Moderate ragged graph: fused int8 pack pre-kernel with boundary masking,
    # two dst tiles (megacore-friendly), rsqrt destination norm.
    _run_case(keys[1], n_src=2500, n_dst=1100, d=64, norm_2=-0.5)
    # Forced multi-step reduction over the src axis, d a multiple of 128 (the
    # in-degree column lives in an extra lane group), clamp path in the packer.
    _run_case(keys[2], n_src=2500, n_dst=1100, d=128, norm_2=-1, tm=1024, tk=1024)
    print("KERNEL_OK")
</pallas_src>

<mosaic_0001>
module attributes {stable_mosaic.version = 11 : i64} {
  func.func @kernel(%arg0: i32, %arg1: i32, %arg2: memref<512x1024xi8, #tpu.memory_space<vmem>>, %arg3: memref<1024x384xbf16, #tpu.memory_space<vmem>>, %arg4: memref<512x128xf32, #tpu.memory_space<vmem>>) attributes {dimension_semantics = [#tpu.dimension_semantics<parallel>, #tpu.dimension_semantics<arbitrary>], iteration_bounds = array<i64: 1, 1>, scalar_prefetch = 0 : i64, scratch_operands = 0 : i64, tpu.core_type = #tpu.core_type<tc>, window_params = [{transform_indices = @transform_0, window_bounds = array<i64: 512, 1024>}, {transform_indices = @transform_1, window_bounds = array<i64: 1024, 384>}, {transform_indices = @transform_2, window_bounds = array<i64: 512, 128>}]} {
    %c0_i32 = arith.constant 0 : i32
    %0 = arith.cmpi eq, %arg1, %c0_i32 : i32
    %1 = arith.extui %0 : i1 to i32
    %c0_i32_0 = arith.constant 0 : i32
    %2 = arith.cmpi ne, %1, %c0_i32_0 : i32
    scf.if %2 {
      %cst_14 = arith.constant 0.000000e+00 : f32
      %19 = vector.broadcast %cst_14 : f32 to vector<512x128xf32>
      %c0_15 = arith.constant 0 : index
      %c0_16 = arith.constant 0 : index
      %20 = vector.load %arg4[%c0_15, %c0_16] : memref<512x128xf32, #tpu.memory_space<vmem>>, vector<512x128xf32>
      tpu.vector_store %arg4[%c0_15, %c0_16], %19 {strides = array<i32>} : memref<512x128xf32, #tpu.memory_space<vmem>>, vector<512x128xf32>,
    } else {
    }
    %c0 = arith.constant 0 : index
    %c0_1 = arith.constant 0 : index
    %3 = vector.load %arg2[%c0, %c0_1] : memref<512x1024xi8, #tpu.memory_space<vmem>>, vector<512x1024xi8>
    %4 = arith.sitofp %3 : vector<512x1024xi8> to vector<512x1024xbf16>
    %c0_2 = arith.constant 0 : index
    %c0_3 = arith.constant 0 : index
    %5 = vector.load %arg4[%c0_2, %c0_3] : memref<512x128xf32, #tpu.memory_space<vmem>>, vector<512x128xf32>
    %c0_4 = arith.constant 0 : index
    %c0_5 = arith.constant 0 : index
    %6 = vector.load %arg3[%c0_4, %c0_5] : memref<1024x384xbf16, #tpu.memory_space<vmem>>, vector<1024x128xbf16>
    %cst = arith.constant dense<0.000000e+00> : vector<512x128xf32>
    %7 = tpu.matmul %4, %6, %cst {dimension_numbers = #tpu.dot_dimension_numbers<[1], [0], [0], [1], [0, 0, 1, 1], [], []>} : vector<512x1024xbf16>, vector<1024x128xbf16>, vector<512x128xf32> -> vector<512x128xf32>
    %8 = arith.addf %5, %7 : vector<512x128xf32>
    %c0_6 = arith.constant 0 : index
    %c128 = arith.constant 128 : index
    %9 = vector.load %arg3[%c0_6, %c128] : memref<1024x384xbf16, #tpu.memory_space<vmem>>, vector<1024x128xbf16>
    %cst_7 = arith.constant dense<0.000000e+00> : vector<512x128xf32>
    %10 = tpu.matmul %4, %9, %cst_7 {dimension_numbers = #tpu.dot_dimension_numbers<[1], [0], [0], [1], [0, 0, 1, 1], [], []>} : vector<512x1024xbf16>, vector<1024x128xbf16>, vector<512x128xf32> -> vector<512x128xf32>
    %11 = arith.addf %8, %10 : vector<512x128xf32>
    %c0_8 = arith.constant 0 : index
    %c256 = arith.constant 256 : index
    %12 = vector.load %arg3[%c0_8, %c256] : memref<1024x384xbf16, #tpu.memory_space<vmem>>, vector<1024x128xbf16>
    %cst_9 = arith.constant dense<0.000000e+00> : vector<512x128xf32>
    %13 = tpu.matmul %4, %12, %cst_9 {dimension_numbers = #tpu.dot_dimension_numbers<[1], [0], [0], [1], [0, 0, 1, 1], [], []>} : vector<512x1024xbf16>, vector<1024x128xbf16>, vector<512x128xf32> -> vector<512x128xf32>
    %14 = arith.addf %11, %13 : vector<512x128xf32>
    %c0_10 = arith.constant 0 : index
    %c0_11 = arith.constant 0 : index
    %15 = vector.load %arg4[%c0_10, %c0_11] : memref<512x128xf32, #tpu.memory_space<vmem>>, vector<512x128xf32>
    tpu.vector_store %arg4[%c0_10, %c0_11], %14 {strides = array<i32>} : memref<512x128xf32, #tpu.memory_space<vmem>>, vector<512x128xf32>,
    %c0_i32_12 = arith.constant 0 : i32
    %16 = arith.cmpi eq, %arg1, %c0_i32_12 : i32
    %17 = arith.extui %16 : i1 to i32
    %c0_i32_13 = arith.constant 0 : i32
    %18 = arith.cmpi ne, %17, %c0_i32_13 : i32
    scf.if %18 {
      %c0_14 = arith.constant 0 : index
      %c0_15 = arith.constant 0 : index
      %19 = vector.load %arg4[%c0_14, %c0_15] : memref<512x128xf32, #tpu.memory_space<vmem>>, vector<512x128xf32>
      %20 = vector.extract_strided_slice %19 {offsets = [0, 40], sizes = [512, 1], strides = [1, 1]} : vector<512x128xf32> to vector<512x1xf32>
      %cst_16 = arith.constant 1.000000e+00 : f32
      %21 = vector.broadcast %cst_16 : f32 to vector<512x1xf32>
      %22 = arith.maximumf %20, %21 : vector<512x1xf32>
      %cst_17 = arith.constant 1.000000e+00 : f32
      %23 = vector.broadcast %cst_17 : f32 to vector<512x1xf32>
      %24 = arith.divf %23, %22 : vector<512x1xf32>
      %25 = vector.broadcast %24 : vector<512x1xf32> to vector<512x128xf32>
      %26 = arith.mulf %19, %25 : vector<512x128xf32>
      %c0_18 = arith.constant 0 : index
      %c0_19 = arith.constant 0 : index
      %27 = vector.load %arg4[%c0_18, %c0_19] : memref<512x128xf32, #tpu.memory_space<vmem>>, vector<512x128xf32>
      tpu.vector_store %arg4[%c0_18, %c0_19], %26 {strides = array<i32>} : memref<512x128xf32, #tpu.memory_space<vmem>>, vector<512x128xf32>,
    } else {
    }
    return
  }
  func.func @transform_0(%arg0: i32, %arg1: i32) -> (i32, i32) {
    %c0_i32 = arith.constant 0 : i32
    return %arg0, %arg1 : i32, i32
  }
  func.func @transform_1(%arg0: i32, %arg1: i32) -> (i32, i32) {
    %c0_i32 = arith.constant 0 : i32
    %c0_i32_0 = arith.constant 0 : i32
    return %arg1, %c0_i32 : i32, i32
  }
  func.func @transform_2(%arg0: i32, %arg1: i32) -> (i32, i32) {
    %c0_i32 = arith.constant 0 : i32
    %c0_i32_0 = arith.constant 0 : i32
    return %arg0, %c0_i32 : i32, i32
  }
}

</mosaic_0001>

<llo_original>
// kernel: lightgcn_layer.1
$region0: #{lightgcn_layer.1}
  #allocation0 [shape = 'u32[]', space=smem, size = 0x4, offset = 0x4, fixed_abs, tag = 'smem constant byte address 0x4 - core index']
  #allocation1 [shape = 'u32[72,128]{1,0:T(1,128)}', space=vmem, size = 0x9000, scoped, tag = 'internal scratch']
  %s0 = inlined_call_operand.vmem [shape: s8[512,1024], index: 0, kind: input, shape index: {}]
  %s1 = inlined_call_operand.vmem [shape: bf16[1024,384], index: 1, kind: input, shape index: {}]
  %s2 = inlined_call_operand.vmem [shape: f32[512,128], index: 2, kind: output, shape index: {}]
  %s3 = sld [smem:[#allocation0]]
  $region26: #{lightgcn_layer.1} parent=0
    _
  %s5 = ssub.s32 1, %s3
  %s6 = scalar_select 0, %s5, %s3
  // Predicated region
  $region2: #{lightgcn_layer.1} parent=0 // pred_check
    _
  $region3: #{lightgcn_layer.1} parent=0 // pred_check_branch
    %8 = sbr.rel (0) target = $region5
  $region4: #{lightgcn_layer.1} parent=0 // pred_region
    _
  $region5: #{lightgcn_layer.1} parent=0 // pred_fallthru
    _
  // Predicated region
  $region6: #{lightgcn_layer.1} parent=0 // pred_check
    _
  $region7: #{lightgcn_layer.1} parent=0 // pred_check_branch
    %10 = sbr.rel (0) target = $region9
  $region8: #{lightgcn_layer.1} parent=0 // pred_region
    _
  $region9: #{lightgcn_layer.1} parent=0 // pred_fallthru
    _
  %p11 = scmp.eq.s32.totalorder 0, 0
  // Predicated region
  $region10: #{lightgcn_layer.1} parent=0 // pred_check
    %p12 = pneg %p11
  $region11: #{lightgcn_layer.1} parent=0 // pred_check_branch
    %14 = sbr.rel (%p12) target = $region13
  $region12: #{lightgcn_layer.1} parent=0 // pred_region
    %15 = vst [vmem:[%s2] sm:$0xff] 0.0
    %16 = vst [vmem:[%s2 + $0x8] sm:$0xff] 0.0
    %17 = vst [vmem:[%s2 + $0x10] sm:$0xff] 0.0
    %18 = vst [vmem:[%s2 + $0x18] sm:$0xff] 0.0
    %19 = vst [vmem:[%s2 + $0x20] sm:$0xff] 0.0
    %20 = vst [vmem:[%s2 + $0x28] sm:$0xff] 0.0
    %21 = vst [vmem:[%s2 + $0x30] sm:$0xff] 0.0
    %22 = vst [vmem:[%s2 + $0x38] sm:$0xff] 0.0
    %23 = vst [vmem:[%s2 + $0x40] sm:$0xff] 0.0
    %24 = vst [vmem:[%s2 + $0x48] sm:$0xff] 0.0
    %25 = vst [vmem:[%s2 + $0x50] sm:$0xff] 0.0
    %26 = vst [vmem:[%s2 + $0x58] sm:$0xff] 0.0
    %27 = vst [vmem:[%s2 + $0x60] sm:$0xff] 0.0
    %28 = vst [vmem:[%s2 + $0x68] sm:$0xff] 0.0
    %29 = vst [vmem:[%s2 + $0x70] sm:$0xff] 0.0
    %30 = vst [vmem:[%s2 + $0x78] sm:$0xff] 0.0
    %31 = vst [vmem:[%s2 + $0x80] sm:$0xff] 0.0
    %32 = vst [vmem:[%s2 + $0x88] sm:$0xff] 0.0
    %33 = vst [vmem:[%s2 + $0x90] sm:$0xff] 0.0
    %34 = vst [vmem:[%s2 + $0x98] sm:$0xff] 0.0
    %35 = vst [vmem:[%s2 + $0xa0] sm:$0xff] 0.0
    %36 = vst [vmem:[%s2 + $0xa8] sm:$0xff] 0.0
    %37 = vst [vmem:[%s2 + $0xb0] sm:$0xff] 0.0
    %38 = vst [vmem:[%s2 + $0xb8] sm:$0xff] 0.0
    %39 = vst [vmem:[%s2 + $0xc0] sm:$0xff] 0.0
    %40 = vst [vmem:[%s2 + $0xc8] sm:$0xff] 0.0
    %41 = vst [vmem:[%s2 + $0xd0] sm:$0xff] 0.0
    %42 = vst [vmem:[%s2 + $0xd8] sm:$0xff] 0.0
    %43 = vst [vmem:[%s2 + $0xe0] sm:$0xff] 0.0
    %44 = vst [vmem:[%s2 + $0xe8] sm:$0xff] 0.0
    %45 = vst [vmem:[%s2 + $0xf0] sm:$0xff] 0.0
    %46 = vst [vmem:[%s2 + $0xf8] sm:$0xff] 0.0
    %47 = vst [vmem:[%s2 + $0x100] sm:$0xff] 0.0
    %48 = vst [vmem:[%s2 + $0x108] sm:$0xff] 0.0
    %49 = vst [vmem:[%s2 + $0x110] sm:$0xff] 0.0
    %50 = vst [vmem:[%s2 + $0x118] sm:$0xff] 0.0
    %51 = vst [vmem:[%s2 + $0x120] sm:$0xff] 0.0
    %52 = vst [vmem:[%s2 + $0x128] sm:$0xff] 0.0
    %53 = vst [vmem:[%s2 + $0x130] sm:$0xff] 0.0
    %54 = vst [vmem:[%s2 + $0x138] sm:$0xff] 0.0
    %55 = vst [vmem:[%s2 + $0x140] sm:$0xff] 0.0
    %56 = vst [vmem:[%s2 + $0x148] sm:$0xff] 0.0
    %57 = vst [vmem:[%s2 + $0x150] sm:$0xff] 0.0
    %58 = vst [vmem:[%s2 + $0x158] sm:$0xff] 0.0
    %59 = vst [vmem:[%s2 + $0x160] sm:$0xff] 0.0
    %60 = vst [vmem:[%s2 + $0x168] sm:$0xff] 0.0
    %61 = vst [vmem:[%s2 + $0x170] sm:$0xff] 0.0
    %62 = vst [vmem:[%s2 + $0x178] sm:$0xff] 0.0
    %63 = vst [vmem:[%s2 + $0x180] sm:$0xff] 0.0
    %64 = vst [vmem:[%s2 + $0x188] sm:$0xff] 0.0
    %65 = vst [vmem:[%s2 + $0x190] sm:$0xff] 0.0
    %66 = vst [vmem:[%s2 + $0x198] sm:$0xff] 0.0
    %67 = vst [vmem:[%s2 + $0x1a0] sm:$0xff] 0.0
    %68 = vst [vmem:[%s2 + $0x1a8] sm:$0xff] 0.0
    %69 = vst [vmem:[%s2 + $0x1b0] sm:$0xff] 0.0
    %70 = vst [vmem:[%s2 + $0x1b8] sm:$0xff] 0.0
    %71 = vst [vmem:[%s2 + $0x1c0] sm:$0xff] 0.0
    %72 = vst [vmem:[%s2 + $0x1c8] sm:$0xff] 0.0
    %73 = vst [vmem:[%s2 + $0x1d0] sm:$0xff] 0.0
    %74 = vst [vmem:[%s2 + $0x1d8] sm:$0xff] 0.0
    %75 = vst [vmem:[%s2 + $0x1e0] sm:$0xff] 0.0
    %76 = vst [vmem:[%s2 + $0x1e8] sm:$0xff] 0.0
    %77 = vst [vmem:[%s2 + $0x1f0] sm:$0xff] 0.0
    %78 = vst [vmem:[%s2 + $0x1f8] sm:$0xff] 0.0
  $region13: #{lightgcn_layer.1} parent=0 // pred_fallthru
    _
  %v79 = vld [vmem:[%s0] sm:$0xff]
  %v80 = vld [vmem:[%s0 + $0x8] sm:$0xff]
  %v81 = vld [vmem:[%s0 + $0x10] sm:$0xff]
  %v82 = vld [vmem:[%s0 + $0x18] sm:$0xff]
  %v83 = vld [vmem:[%s0 + $0x20] sm:$0xff]
  %v84 = vld [vmem:[%s0 + $0x28] sm:$0xff]
  %v85 = vld [vmem:[%s0 + $0x30] sm:$0xff]
  %v86 = vld [vmem:[%s0 + $0x38] sm:$0xff]
  %v87 = vld [vmem:[%s0 + $0x40] sm:$0xff]
  %v88 = vld [vmem:[%s0 + $0x48] sm:$0xff]
  %v89 = vld [vmem:[%s0 + $0x50] sm:$0xff]
  %v90 = vld [vmem:[%s0 + $0x58] sm:$0xff]
  %v91 = vld [vmem:[%s0 + $0x60] sm:$0xff]
  %v92 = vld [vmem:[%s0 + $0x68] sm:$0xff]
  %v93 = vld [vmem:[%s0 + $0x70] sm:$0xff]
  %v94 = vld [vmem:[%s0 + $0x78] sm:$0xff]
  %v95 = vld [vmem:[%s0 + $0x80] sm:$0xff]
  %v96 = vld [vmem:[%s0 + $0x88] sm:$0xff]
  %v97 = vld [vmem:[%s0 + $0x90] sm:$0xff]
  %v98 = vld [vmem:[%s0 + $0x98] sm:$0xff]
  %v99 = vld [vmem:[%s0 + $0xa0] sm:$0xff]
  %v100 = vld [vmem:[%s0 + $0xa8] sm:$0xff]
  %v101 = vld [vmem:[%s0 + $0xb0] sm:$0xff]
  %v102 = vld [vmem:[%s0 + $0xb8] sm:$0xff]
  %v103 = vld [vmem:[%s0 + $0xc0] sm:$0xff]
  %v104 = vld [vmem:[%s0 + $0xc8] sm:$0xff]
  %v105 = vld [vmem:[%s0 + $0xd0] sm:$0xff]
  %v106 = vld [vmem:[%s0 + $0xd8] sm:$0xff]
  %v107 = vld [vmem:[%s0 + $0xe0] sm:$0xff]
  %v108 = vld [vmem:[%s0 + $0xe8] sm:$0xff]
  %v109 = vld [vmem:[%s0 + $0xf0] sm:$0xff]
  %v110 = vld [vmem:[%s0 + $0xf8] sm:$0xff]
  %v111 = vld [vmem:[%s0 + $0x100] sm:$0xff]
  %v112 = vld [vmem:[%s0 + $0x108] sm:$0xff]
  %v113 = vld [vmem:[%s0 + $0x110] sm:$0xff]
  %v114 = vld [vmem:[%s0 + $0x118] sm:$0xff]
  %v115 = vld [vmem:[%s0 + $0x120] sm:$0xff]
  %v116 = vld [vmem:[%s0 + $0x128] sm:$0xff]
  %v117 = vld [vmem:[%s0 + $0x130] sm:$0xff]
  %v118 = vld [vmem:[%s0 + $0x138] sm:$0xff]
  %v119 = vld [vmem:[%s0 + $0x140] sm:$0xff]
  %v120 = vld [vmem:[%s0 + $0x148] sm:$0xff]
  %v121 = vld [vmem:[%s0 + $0x150] sm:$0xff]
  %v122 = vld [vmem:[%s0 + $0x158] sm:$0xff]
  %v123 = vld [vmem:[%s0 + $0x160] sm:$0xff]
  %v124 = vld [vmem:[%s0 + $0x168] sm:$0xff]
  %v125 = vld [vmem:[%s0 + $0x170] sm:$0xff]
  %v126 = vld [vmem:[%s0 + $0x178] sm:$0xff]
  %v127 = vld [vmem:[%s0 + $0x180] sm:$0xff]
  %v128 = vld [vmem:[%s0 + $0x188] sm:$0xff]
  %v129 = vld [vmem:[%s0 + $0x190] sm:$0xff]
  %v130 = vld [vmem:[%s0 + $0x198] sm:$0xff]
  %v131 = vld [vmem:[%s0 + $0x1a0] sm:$0xff]
  %v132 = vld [vmem:[%s0 + $0x1a8] sm:$0xff]
  %v133 = vld [vmem:[%s0 + $0x1b0] sm:$0xff]
  %v134 = vld [vmem:[%s0 + $0x1b8] sm:$0xff]
  %v135 = vld [vmem:[%s0 + $0x1c0] sm:$0xff]
  %v136 = vld [vmem:[%s0 + $0x1c8] sm:$0xff]
  %v137 = vld [vmem:[%s0 + $0x1d0] sm:$0xff]
  %v138 = vld [vmem:[%s0 + $0x1d8] sm:$0xff]
  %v139 = vld [vmem:[%s0 + $0x1e0] sm:$0xff]
  %v140 = vld [vmem:[%s0 + $0x1e8] sm:$0xff]
  %v141 = vld [vmem:[%s0 + $0x1f0] sm:$0xff]
  %v142 = vld [vmem:[%s0 + $0x1f8] sm:$0xff]
  %v143 = vld [vmem:[%s0 + $0x200] sm:$0xff]
  %v144 = vld [vmem:[%s0 + $0x208] sm:$0xff]
  %v145 = vld [vmem:[%s0 + $0x210] sm:$0xff]
  %v146 = vld [vmem:[%s0 + $0x218] sm:$0xff]
  %v147 = vld [vmem:[%s0 + $0x220] sm:$0xff]
  %v148 = vld [vmem:[%s0 + $0x228] sm:$0xff]
  %v149 = vld [vmem:[%s0 + $0x230] sm:$0xff]
  %v150 = vld [vmem:[%s0 + $0x238] sm:$0xff]
  %v151 = vld [vmem:[%s0 + $0x240] sm:$0xff]
  %v152 = vld [vmem:[%s0 + $0x248] sm:$0xff]
  %v153 = vld [vmem:[%s0 + $0x250] sm:$0xff]
  %v154 = vld [vmem:[%s0 + $0x258] sm:$0xff]
  %v155 = vld [vmem:[%s0 + $0x260] sm:$0xff]
  %v156 = vld [vmem:[%s0 + $0x268] sm:$0xff]
  %v157 = vld [vmem:[%s0 + $0x270] sm:$0xff]
  %v158 = vld [vmem:[%s0 + $0x278] sm:$0xff]
  %v159 = vld [vmem:[%s0 + $0x280] sm:$0xff]
  %v160 = vld [vmem:[%s0 + $0x288] sm:$0xff]
  %v161 = vld [vmem:[%s0 + $0x290] sm:$0xff]
  %v162 = vld [vmem:[%s0 + $0x298] sm:$0xff]
  %v163 = vld [vmem:[%s0 + $0x2a0] sm:$0xff]
  %v164 = vld [vmem:[%s0 + $0x2a8] sm:$0xff]
  %v165 = vld [vmem:[%s0 + $0x2b0] sm:$0xff]
  %v166 = vld [vmem:[%s0 + $0x2b8] sm:$0xff]
  %v167 = vld [vmem:[%s0 + $0x2c0] sm:$0xff]
  %v168 = vld [vmem:[%s0 + $0x2c8] sm:$0xff]
  %v169 = vld [vmem:[%s0 + $0x2d0] sm:$0xff]
  %v170 = vld [vmem:[%s0 + $0x2d8] sm:$0xff]
  %v171 = vld [vmem:[%s0 + $0x2e0] sm:$0xff]
  %v172 = vld [vmem:[%s0 + $0x2e8] sm:$0xff]
  %v173 = vld [vmem:[%s0 + $0x2f0] sm:$0xff]
  %v174 = vld [vmem:[%s0 + $0x2f8] sm:$0xff]
  %v175 = vld [vmem:[%s0 + $0x300] sm:$0xff]
  %v176 = vld [vmem:[%s0 + $0x308] sm:$0xff]
  %v177 = vld [vmem:[%s0 + $0x310] sm:$0xff]
  %v178 = vld [vmem:[%s0 + $0x318] sm:$0xff]
  %v179 = vld [vmem:[%s0 + $0x320] sm:$0xff]
  %v180 = vld [vmem:[%s0 + $0x328] sm:$0xff]
  %v181 = vld [vmem:[%s0 + $0x330] sm:$0xff]
  %v182 = vld [vmem:[%s0 + $0x338] sm:$0xff]
  %v183 = vld [vmem:[%s0 + $0x340] sm:$0xff]
  %v184 = vld [vmem:[%s0 + $0x348] sm:$0xff]
  %v185 = vld [vmem:[%s0 + $0x350] sm:$0xff]
  %v186 = vld [vmem:[%s0 + $0x358] sm:$0xff]
  %v187 = vld [vmem:[%s0 + $0x360] sm:$0xff]
  %v188 = vld [vmem:[%s0 + $0x368] sm:$0xff]
  %v189 = vld [vmem:[%s0 + $0x370] sm:$0xff]
  %v190 = vld [vmem:[%s0 + $0x378] sm:$0xff]
  %v191 = vld [vmem:[%s0 + $0x380] sm:$0xff]
  %v192 = vld [vmem:[%s0 + $0x388] sm:$0xff]
  %v193 = vld [vmem:[%s0 + $0x390] sm:$0xff]
  %v194 = vld [vmem:[%s0 + $0x398] sm:$0xff]
  %v195 = vld [vmem:[%s0 + $0x3a0] sm:$0xff]
  %v196 = vld [vmem:[%s0 + $0x3a8] sm:$0xff]
  %v197 = vld [vmem:[%s0 + $0x3b0] sm:$0xff]
  %v198 = vld [vmem:[%s0 + $0x3b8] sm:$0xff]
  %v199 = vld [vmem:[%s0 + $0x3c0] sm:$0xff]
  %v200 = vld [vmem:[%s0 + $0x3c8] sm:$0xff]
  %v201 = vld [vmem:[%s0 + $0x3d0] sm:$0xff]
  %v202 = vld [vmem:[%s0 + $0x3d8] sm:$0xff]
  %v203 = vld [vmem:[%s0 + $0x3e0] sm:$0xff]
  %v204 = vld [vmem:[%s0 + $0x3e8] sm:$0xff]
  %v205 = vld [vmem:[%s0 + $0x3f0] sm:$0xff]
  %v206 = vld [vmem:[%s0 + $0x3f8] sm:$0xff]
  %v207 = vunpack.c.0.s8 %v79
  %v208 = vunpack.c.0.s8 %v80
  %v209 = vunpack.c.0.s8 %v81
  %v210 = vunpack.c.0.s8 %v82
  %v211 = vunpack.c.0.s8 %v83
  %v212 = vunpack.c.0.s8 %v84
  %v213 = vunpack.c.0.s8 %v85
  %v214 = vunpack.c.0.s8 %v86
  %v215 = vunpack.c.1.s8 %v79
  %v216 = vunpack.c.1.s8 %v80
  %v217 = vunpack.c.1.s8 %v81
  %v218 = vunpack.c.1.s8 %v82
  %v219 = vunpack.c.1.s8 %v83
  %v220 = vunpack.c.1.s8 %v84
  %v221 = vunpack.c.1.s8 %v85
  %v222 = vunpack.c.1.s8 %v86
  %v223 = vunpack.c.2.s8 %v79
  %v224 = vunpack.c.2.s8 %v80
  %v225 = vunpack.c.2.s8 %v81
  %v226 = vunpack.c.2.s8 %v82
  %v227 = vunpack.c.2.s8 %v83
  %v228 = vunpack.c.2.s8 %v84
  %v229 = vunpack.c.2.s8 %v85
  %v230 = vunpack.c.2.s8 %v86
  %v231 = vunpack.c.3.s8 %v79
  %v232 = vunpack.c.3.s8 %v80
  %v233 = vunpack.c.3.s8 %v81
  %v234 = vunpack.c.3.s8 %v82
  %v235 = vunpack.c.3.s8 %v83
  %v236 = vunpack.c.3.s8 %v84
  %v237 = vunpack.c.3.s8 %v85
  %v238 = vunpack.c.3.s8 %v86
  %v239 = vunpack.c.0.s8 %v87
  %v240 = vunpack.c.0.s8 %v88
  %v241 = vunpack.c.0.s8 %v89
  %v242 = vunpack.c.0.s8 %v90
  %v243 = vunpack.c.0.s8 %v91
  %v244 = vunpack.c.0.s8 %v92
  %v245 = vunpack.c.0.s8 %v93
  %v246 = vunpack.c.0.s8 %v94
  %v247 = vunpack.c.1.s8 %v87
  %v248 = vunpack.c.1.s8 %v88
  %v249 = vunpack.c.1.s8 %v89
  %v250 = vunpack.c.1.s8 %v90
  %v251 = vunpack.c.1.s8 %v91
  %v252 = vunpack.c.1.s8 %v92
  %v253 = vunpack.c.1.s8 %v93
  %v254 = vunpack.c.1.s8 %v94
  %v255 = vunpack.c.2.s8 %v87
  %v256 = vunpack.c.2.s8 %v88
  %v257 = vunpack.c.2.s8 %v89
  %v258 = vunpack.c.2.s8 %v90
  %v259 = vunpack.c.2.s8 %v91
  %v260 = vunpack.c.2.s8 %v92
  %v261 = vunpack.c.2.s8 %v93
  %v262 = vunpack.c.2.s8 %v94
  %v263 = vunpack.c.3.s8 %v87
  %v264 = vunpack.c.3.s8 %v88
  %v265 = vunpack.c.3.s8 %v89
  %v266 = vunpack.c.3.s8 %v90
  %v267 = vunpack.c.3.s8 %v91
  %v268 = vunpack.c.3.s8 %v92
  %v269 = vunpack.c.3.s8 %v93
  %v270 = vunpack.c.3.s8 %v94
  %v271 = vunpack.c.0.s8 %v95
  %v272 = vunpack.c.0.s8 %v96
  %v273 = vunpack.c.0.s8 %v97
  %v274 = vunpack.c.0.s8 %v98
  %v275 = vunpack.c.0.s8 %v99
  %v276 = vunpack.c.0.s8 %v100
  %v277 = vunpack.c.0.s8 %v101
  %v278 = vunpack.c.0.s8 %v102
  %v279 = vunpack.c.1.s8 %v95
  %v280 = vunpack.c.1.s8 %v96
  %v281 = vunpack.c.1.s8 %v97
  %v282 = vunpack.c.1.s8 %v98
  %v283 = vunpack.c.1.s8 %v99
  %v284 = vunpack.c.1.s8 %v100
  %v285 = vunpack.c.1.s8 %v101
  %v286 = vunpack.c.1.s8 %v102
  %v287 = vunpack.c.2.s8 %v95
  %v288 = vunpack.c.2.s8 %v96
  %v289 = vunpack.c.2.s8 %v97
  %v290 = vunpack.c.2.s8 %v98
  %v291 = vunpack.c.2.s8 %v99
  %v292 = vunpack.c.2.s8 %v100
  %v293 = vunpack.c.2.s8 %v101
  %v294 = vunpack.c.2.s8 %v102
  %v295 = vunpack.c.3.s8 %v95
  %v296 = vunpack.c.3.s8 %v96
  %v297 = vunpack.c.3.s8 %v97
  %v298 = vunpack.c.3.s8 %v98
  %v299 = vunpack.c.3.s8 %v99
  %v300 = vunpack.c.3.s8 %v100
  %v301 = vunpack.c.3.s8 %v101
  %v302 = vunpack.c.3.s8 %v102
  %v303 = vunpack.c.0.s8 %v103
  %v304 = vunpack.c.0.s8 %v104
  %v305 = vunpack.c.0.s8 %v105
  %v306 = vunpack.c.0.s8 %v106
  %v307 = vunpack.c.0.s8 %v107
  %v308 = vunpack.c.0.s8 %v108
  %v309 = vunpack.c.0.s8 %v109
  %v310 = vunpack.c.0.s8 %v110
  %v311 = vunpack.c.1.s8 %v103
  %v312 = vunpack.c.1.s8 %v104
  %v313 = vunpack.c.1.s8 %v105
  %v314 = vunpack.c.1.s8 %v106
  %v315 = vunpack.c.1.s8 %v107
  %v316 = vunpack.c.1.s8 %v108
  %v317 = vunpack.c.1.s8 %v109
  %v318 = vunpack.c.1.s8 %v110
  %v319 = vunpack.c.2.s8 %v103
  %v320 = vunpack.c.2.s8 %v104
  %v321 = vunpack.c.2.s8 %v105
  %v322 = vunpack.c.2.s8 %v106
  %v323 = vunpack.c.2.s8 %v107
  %v324 = vunpack.c.2.s8 %v108
  %v325 = vunpack.c.2.s8 %v109
  %v326 = vunpack.c.2.s8 %v110
  %v327 = vunpack.c.3.s8 %v103
  %v328 = vunpack.c.3.s8 %v104
  %v329 = vunpack.c.3.s8 %v105
  %v330 = vunpack.c.3.s8 %v106
  %v331 = vunpack.c.3.s8 %v107
  %v332 = vunpack.c.3.s8 %v108
  %v333 = vunpack.c.3.s8 %v109
  %v334 = vunpack.c.3.s8 %v110
  %v335 = vunpack.c.0.s8 %v111
  %v336 = vunpack.c.0.s8 %v112
  %v337 = vunpack.c.0.s8 %v113
  %v338 = vunpack.c.0.s8 %v114
  %v339 = vunpack.c.0.s8 %v115
  %v340 = vunpack.c.0.s8 %v116
  %v341 = vunpack.c.0.s8 %v117
  %v342 = vunpack.c.0.s8 %v118
  %v343 = vunpack.c.1.s8 %v111
  %v344 = vunpack.c.1.s8 %v112
  %v345 = vunpack.c.1.s8 %v113
  %v346 = vunpack.c.1.s8 %v114
  %v347 = vunpack.c.1.s8 %v115
  %v348 = vunpack.c.1.s8 %v116
  %v349 = vunpack.c.1.s8 %v117
  %v350 = vunpack.c.1.s8 %v118
  %v351 = vunpack.c.2.s8 %v111
  %v352 = vunpack.c.2.s8 %v112
  %v353 = vunpack.c.2.s8 %v113
  %v354 = vunpack.c.2.s8 %v114
  %v355 = vunpack.c.2.s8 %v115
  %v356 = vunpack.c.2.s8 %v116
  %v357 = vunpack.c.2.s8 %v117
  %v358 = vunpack.c.2.s8 %v118
  %v359 = vunpack.c.3.s8 %v111
  %v360 = vunpack.c.3.s8 %v112
  %v361 = vunpack.c.3.s8 %v113
  %v362 = vunpack.c.3.s8 %v114
  %v363 = vunpack.c.3.s8 %v115
  %v364 = vunpack.c.3.s8 %v116
  %v365 = vunpack.c.3.s8 %v117
  %v366 = vunpack.c.3.s8 %v118
  %v367 = vunpack.c.0.s8 %v119
  %v368 = vunpack.c.0.s8 %v120
  %v369 = vunpack.c.0.s8 %v121
  %v370 = vunpack.c.0.s8 %v122
  %v371 = vunpack.c.0.s8 %v123
  %v372 = vunpack.c.0.s8 %v124
  %v373 = vunpack.c.0.s8 %v125
  %v374 = vunpack.c.0.s8 %v126
  %v375 = vunpack.c.1.s8 %v119
  %v376 = vunpack.c.1.s8 %v120
  %v377 = vunpack.c.1.s8 %v121
  %v378 = vunpack.c.1.s8 %v122
  %v379 = vunpack.c.1.s8 %v123
  %v380 = vunpack.c.1.s8 %v124
  %v381 = vunpack.c.1.s8 %v125
  %v382 = vunpack.c.1.s8 %v126
  %v383 = vunpack.c.2.s8 %v119
  %v384 = vunpack.c.2.s8 %v120
  %v385 = vunpack.c.2.s8 %v121
  %v386 = vunpack.c.2.s8 %v122
  %v387 = vunpack.c.2.s8 %v123
  %v388 = vunpack.c.2.s8 %v124
  %v389 = vunpack.c.2.s8 %v125
  %v390 = vunpack.c.2.s8 %v126
  %v391 = vunpack.c.3.s8 %v119
  %v392 = vunpack.c.3.s8 %v120
  %v393 = vunpack.c.3.s8 %v121
  %v394 = vunpack.c.3.s8 %v122
  %v395 = vunpack.c.3.s8 %v123
  %v396 = vunpack.c.3.s8 %v124
  %v397 = vunpack.c.3.s8 %v125
  %v398 = vunpack.c.3.s8 %v126
  %v399 = vunpack.c.0.s8 %v127
  %v400 = vunpack.c.0.s8 %v128
  %v401 = vunpack.c.0.s8 %v129
  %v402 = vunpack.c.0.s8 %v130
  %v403 = vunpack.c.0.s8 %v131
  %v404 = vunpack.c.0.s8 %v132
  %v405 = vunpack.c.0.s8 %v133
  %v406 = vunpack.c.0.s8 %v134
  %v407 = vunpack.c.1.s8 %v127
  %v408 = vunpack.c.1.s8 %v128
  %v409 = vunpack.c.1.s8 %v129
  %v410 = vunpack.c.1.s8 %v130
  %v411 = vunpack.c.1.s8 %v131
  %v412 = vunpack.c.1.s8 %v132
  %v413 = vunpack.c.1.s8 %v133
  %v414 = vunpack.c.1.s8 %v134
  %v415 = vunpack.c.2.s8 %v127
  %v416 = vunpack.c.2.s8 %v128
  %v417 = vunpack.c.2.s8 %v129
  %v418 = vunpack.c.2.s8 %v130
  %v419 = vunpack.c.2.s8 %v131
  %v420 = vunpack.c.2.s8 %v132
  %v421 = vunpack.c.2.s8 %v133
  %v422 = vunpack.c.2.s8 %v134
  %v423 = vunpack.c.3.s8 %v127
  %v424 = vunpack.c.3.s8 %v128
  %v425 = vunpack.c.3.s8 %v129
  %v426 = vunpack.c.3.s8 %v130
  %v427 = vunpack.c.3.s8 %v131
  %v428 = vunpack.c.3.s8 %v132
  %v429 = vunpack.c.3.s8 %v133
  %v430 = vunpack.c.3.s8 %v134
  %v431 = vunpack.c.0.s8 %v135
  %v432 = vunpack.c.0.s8 %v136
  %v433 = vunpack.c.0.s8 %v137
  %v434 = vunpack.c.0.s8 %v138
  %v435 = vunpack.c.0.s8 %v139
  %v436 = vunpack.c.0.s8 %v140
  %v437 = vunpack.c.0.s8 %v141
  %v438 = vunpack.c.0.s8 %v142
  %v439 = vunpack.c.1.s8 %v135
  %v440 = vunpack.c.1.s8 %v136
  %v441 = vunpack.c.1.s8 %v137
  %v442 = vunpack.c.1.s8 %v138
  %v443 = vunpack.c.1.s8 %v139
  %v444 = vunpack.c.1.s8 %v140
  %v445 = vunpack.c.1.s8 %v141
  %v446 = vunpack.c.1.s8 %v142
  %v447 = vunpack.c.2.s8 %v135
  %v448 = vunpack.c.2.s8 %v136
  %v449 = vunpack.c.2.s8 %v137
  %v450 = vunpack.c.2.s8 %v138
  %v451 = vunpack.c.2.s8 %v139
  %v452 = vunpack.c.2.s8 %v140
  %v453 = vunpack.c.2.s8 %v141
  %v454 = vunpack.c.2.s8 %v142
  %v455 = vunpack.c.3.s8 %v135
  %v456 = vunpack.c.3.s8 %v136
  %v457 = vunpack.c.3.s8 %v137
  %v458 = vunpack.c.3.s8 %v138
  %v459 = vunpack.c.3.s8 %v139
  %v460 = vunpack.c.3.s8 %v140
  %v461 = vunpack.c.3.s8 %v141
  %v462 = vunpack.c.3.s8 %v142
  %v463 = vunpack.c.0.s8 %v143
  %v464 = vunpack.c.0.s8 %v144
  %v465 = vunpack.c.0.s8 %v145
  %v466 = vunpack.c.0.s8 %v146
  %v467 = vunpack.c.0.s8 %v147
  %v468 = vunpack.c.0.s8 %v148
  %v469 = vunpack.c.0.s8 %v149
  %v470 = vunpack.c.0.s8 %v150
  %v471 = vunpack.c.1.s8 %v143
  %v472 = vunpack.c.1.s8 %v144
  %v473 = vunpack.c.1.s8 %v145
  %v474 = vunpack.c.1.s8 %v146
  %v475 = vunpack.c.1.s8 %v147
  %v476 = vunpack.c.1.s8 %v148
  %v477 = vunpack.c.1.s8 %v149
  %v478 = vunpack.c.1.s8 %v150
  %v479 = vunpack.c.2.s8 %v143
  %v480 = vunpack.c.2.s8 %v144
  %v481 = vunpack.c.2.s8 %v145
  %v482 = vunpack.c.2.s8 %v146
  %v483 = vunpack.c.2.s8 %v147
  %v484 = vunpack.c.2.s8 %v148
  %v485 = vunpack.c.2.s8 %v149
  %v486 = vunpack.c.2.s8 %v150
  %v487 = vunpack.c.3.s8 %v143
  %v488 = vunpack.c.3.s8 %v144
  %v489 = vunpack.c.3.s8 %v145
  %v490 = vunpack.c.3.s8 %v146
  %v491 = vunpack.c.3.s8 %v147
  %v492 = vunpack.c.3.s8 %v148
  %v493 = vunpack.c.3.s8 %v149
  %v494 = vunpack.c.3.s8 %v150
  %v495 = vunpack.c.0.s8 %v151
  %v496 = vunpack.c.0.s8 %v152
  %v497 = vunpack.c.0.s8 %v153
  %v498 = vunpack.c.0.s8 %v154
  %v499 = vunpack.c.0.s8 %v155
  %v500 = vunpack.c.0.s8 %v156
  %v501 = vunpack.c.0.s8 %v157
  %v502 = vunpack.c.0.s8 %v158
  %v503 = vunpack.c.1.s8 %v151
  %v504 = vunpack.c.1.s8 %v152
  %v505 = vunpack.c.1.s8 %v153
  %v506 = vunpack.c.1.s8 %v154
  %v507 = vunpack.c.1.s8 %v155
  %v508 = vunpack.c.1.s8 %v156
  %v509 = vunpack.c.1.s8 %v157
  %v510 = vunpack.c.1.s8 %v158
  %v511 = vunpack.c.2.s8 %v151
  %v512 = vunpack.c.2.s8 %v152
  %v513 = vunpack.c.2.s8 %v153
  %v514 = vunpack.c.2.s8 %v154
  %v515 = vunpack.c.2.s8 %v155
  %v516 = vunpack.c.2.s8 %v156
  %v517 = vunpack.c.2.s8 %v157
  %v518 = vunpack.c.2.s8 %v158
  %v519 = vunpack.c.3.s8 %v151
  %v520 = vunpack.c.3.s8 %v152
  %v521 = vunpack.c.3.s8 %v153
  %v522 = vunpack.c.3.s8 %v154
  %v523 = vunpack.c.3.s8 %v155
  %v524 = vunpack.c.3.s8 %v156
  %v525 = vunpack.c.3.s8 %v157
  %v526 = vunpack.c.3.s8 %v158
  %v527 = vunpack.c.0.s8 %v159
  %v528 = vunpack.c.0.s8 %v160
  %v529 = vunpack.c.0.s8 %v161
  %v530 = vunpack.c.0.s8 %v162
  %v531 = vunpack.c.0.s8 %v163
  %v532 = vunpack.c.0.s8 %v164
  %v533 = vunpack.c.0.s8 %v165
  %v534 = vunpack.c.0.s8 %v166
  %v535 = vunpack.c.1.s8 %v159
  %v536 = vunpack.c.1.s8 %v160
  %v537 = vunpack.c.1.s8 %v161
  %v538 = vunpack.c.1.s8 %v162
  %v539 = vunpack.c.1.s8 %v163
  %v540 = vunpack.c.1.s8 %v164
  %v541 = vunpack.c.1.s8 %v165
  %v542 = vunpack.c.1.s8 %v166
  %v543 = vunpack.c.2.s8 %v159
  %v544 = vunpack.c.2.s8 %v160
  %v545 = vunpack.c.2.s8 %v161
  %v546 = vunpack.c.2.s8 %v162
  %v547 = vunpack.c.2.s8 %v163
  %v548 = vunpack.c.2.s8 %v164
  %v549 = vunpack.c.2.s8 %v165
  %v550 = vunpack.c.2.s8 %v166
  %v551 = vunpack.c.3.s8 %v159
  %v552 = vunpack.c.3.s8 %v160
  %v553 = vunpack.c.3.s8 %v161
  %v554 = vunpack.c.3.s8 %v162
  %v555 = vunpack.c.3.s8 %v163
  %v556 = vunpack.c.3.s8 %v164
  %v557 = vunpack.c.3.s8 %v165
  %v558 = vunpack.c.3.s8 %v166
  %v559 = vunpack.c.0.s8 %v167
  %v560 = vunpack.c.0.s8 %v168
  %v561 = vunpack.c.0.s8 %v169
  %v562 = vunpack.c.0.s8 %v170
  %v563 = vunpack.c.0.s8 %v171
  %v564 = vunpack.c.0.s8 %v172
  %v565 = vunpack.c.0.s8 %v173
  %v566 = vunpack.c.0.s8 %v174
  %v567 = vunpack.c.1.s8 %v167
  %v568 = vunpack.c.1.s8 %v168
  %v569 = vunpack.c.1.s8 %v169
  %v570 = vunpack.c.1.s8 %v170
  %v571 = vunpack.c.1.s8 %v171
  %v572 = vunpack.c.1.s8 %v172
  %v573 = vunpack.c.1.s8 %v173
  %v574 = vunpack.c.1.s8 %v174
  %v575 = vunpack.c.2.s8 %v167
  %v576 = vunpack.c.2.s8 %v168
  %v577 = vunpack.c.2.s8 %v169
  %v578 = vunpack.c.2.s8 %v170
  %v579 = vunpack.c.2.s8 %v171
  %v580 = vunpack.c.2.s8 %v172
  %v581 = vunpack.c.2.s8 %v173
  %v582 = vunpack.c.2.s8 %v174
  %v583 = vunpack.c.3.s8 %v167
  %v584 = vunpack.c.3.s8 %v168
  %v585 = vunpack.c.3.s8 %v169
  %v586 = vunpack.c.3.s8 %v170
  %v587 = vunpack.c.3.s8 %v171
  %v588 = vunpack.c.3.s8 %v172
  %v589 = vunpack.c.3.s8 %v173
  %v590 = vunpack.c.3.s8 %v174
  %v591 = vunpack.c.0.s8 %v175
  %v592 = vunpack.c.0.s8 %v176
  %v593 = vunpack.c.0.s8 %v177
  %v594 = vunpack.c.0.s8 %v178
  %v595 = vunpack.c.0.s8 %v179
  %v596 = vunpack.c.0.s8 %v180
  %v597 = vunpack.c.0.s8 %v181
  %v598 = vunpack.c.0.s8 %v182
  %v599 = vunpack.c.1.s8 %v175
  %v600 = vunpack.c.1.s8 %v176
  %v601 = vunpack.c.1.s8 %v177
  %v602 = vunpack.c.1.s8 %v178
  %v603 = vunpack.c.1.s8 %v179
  %v604 = vunpack.c.1.s8 %v180
  %v605 = vunpack.c.1.s8 %v181
  %v606 = vunpack.c.1.s8 %v182
  %v607 = vunpack.c.2.s8 %v175
  %v608 = vunpack.c.2.s8 %v176
  %v609 = vunpack.c.2.s8 %v177
  %v610 = vunpack.c.2.s8 %v178
  %v611 = vunpack.c.2.s8 %v179
  %v612 = vunpack.c.2.s8 %v180
  %v613 = vunpack.c.2.s8 %v181
  %v614 = vunpack.c.2.s8 %v182
  %v615 = vunpack.c.3.s8 %v175
  %v616 = vunpack.c.3.s8 %v176
  %v617 = vunpack.c.3.s8 %v177
  %v618 = vunpack.c.3.s8 %v178
  %v619 = vunpack.c.3.s8 %v179
  %v620 = vunpack.c.3.s8 %v180
  %v621 = vunpack.c.3.s8 %v181
  %v622 = vunpack.c.3.s8 %v182
  %v623 = vunpack.c.0.s8 %v183
  %v624 = vunpack.c.0.s8 %v184
  %v625 = vunpack.c.0.s8 %v185
  %v626 = vunpack.c.0.s8 %v186
  %v627 = vunpack.c.0.s8 %v187
  %v628 = vunpack.c.0.s8 %v188
  %v629 = vunpack.c.0.s8 %v189
  %v630 = vunpack.c.0.s8 %v190
  %v631 = vunpack.c.1.s8 %v183
  %v632 = vunpack.c.1.s8 %v184
  %v633 = vunpack.c.1.s8 %v185
  %v634 = vunpack.c.1.s8 %v186
  %v635 = vunpack.c.1.s8 %v187
  %v636 = vunpack.c.1.s8 %v188
  %v637 = vunpack.c.1.s8 %v189
  %v638 = vunpack.c.1.s8 %v190
  %v639 = vunpack.c.2.s8 %v183
  %v640 = vunpack.c.2.s8 %v184
  %v641 = vunpack.c.2.s8 %v185
  %v642 = vunpack.c.2.s8 %v186
  %v643 = vunpack.c.2.s8 %v187
  %v644 = vunpack.c.2.s8 %v188
  %v645 = vunpack.c.2.s8 %v189
  %v646 = vunpack.c.2.s8 %v190
  %v647 = vunpack.c.3.s8 %v183
  %v648 = vunpack.c.3.s8 %v184
  %v649 = vunpack.c.3.s8 %v185
  %v650 = vunpack.c.3.s8 %v186
  %v651 = vunpack.c.3.s8 %v187
  %v652 = vunpack.c.3.s8 %v188
  %v653 = vunpack.c.3.s8 %v189
  %v654 = vunpack.c.3.s8 %v190
  %v655 = vunpack.c.0.s8 %v191
  %v656 = vunpack.c.0.s8 %v192
  %v657 = vunpack.c.0.s8 %v193
  %v658 = vunpack.c.0.s8 %v194
  %v659 = vunpack.c.0.s8 %v195
  %v660 = vunpack.c.0.s8 %v196
  %v661 = vunpack.c.0.s8 %v197
  %v662 = vunpack.c.0.s8 %v198
  %v663 = vunpack.c.1.s8 %v191
  %v664 = vunpack.c.1.s8 %v192
  %v665 = vunpack.c.1.s8 %v193
  %v666 = vunpack.c.1.s8 %v194
  %v667 = vunpack.c.1.s8 %v195
  %v668 = vunpack.c.1.s8 %v196
  %v669 = vunpack.c.1.s8 %v197
  %v670 = vunpack.c.1.s8 %v198
  %v671 = vunpack.c.2.s8 %v191
  %v672 = vunpack.c.2.s8 %v192
  %v673 = vunpack.c.2.s8 %v193
  %v674 = vunpack.c.2.s8 %v194
  %v675 = vunpack.c.2.s8 %v195
  %v676 = vunpack.c.2.s8 %v196
  %v677 = vunpack.c.2.s8 %v197
  %v678 = vunpack.c.2.s8 %v198
  %v679 = vunpack.c.3.s8 %v191
  %v680 = vunpack.c.3.s8 %v192
  %v681 = vunpack.c.3.s8 %v193
  %v682 = vunpack.c.3.s8 %v194
  %v683 = vunpack.c.3.s8 %v195
  %v684 = vunpack.c.3.s8 %v196
  %v685 = vunpack.c.3.s8 %v197
  %v686 = vunpack.c.3.s8 %v198
  %v687 = vunpack.c.0.s8 %v199
  %v688 = vunpack.c.0.s8 %v200
  %v689 = vunpack.c.0.s8 %v201
  %v690 = vunpack.c.0.s8 %v202
  %v691 = vunpack.c.0.s8 %v203
  %v692 = vunpack.c.0.s8 %v204
  %v693 = vunpack.c.0.s8 %v205
  %v694 = vunpack.c.0.s8 %v206
  %v695 = vunpack.c.1.s8 %v199
  %v696 = vunpack.c.1.s8 %v200
  %v697 = vunpack.c.1.s8 %v201
  %v698 = vunpack.c.1.s8 %v202
  %v699 = vunpack.c.1.s8 %v203
  %v700 = vunpack.c.1.s8 %v204
  %v701 = vunpack.c.1.s8 %v205
  %v702 = vunpack.c.1.s8 %v206
  %v703 = vunpack.c.2.s8 %v199
  %v704 = vunpack.c.2.s8 %v200
  %v705 = vunpack.c.2.s8 %v201
  %v706 = vunpack.c.2.s8 %v202
  %v707 = vunpack.c.2.s8 %v203
  %v708 = vunpack.c.2.s8 %v204
  %v709 = vunpack.c.2.s8 %v205
  %v710 = vunpack.c.2.s8 %v206
  %v711 = vunpack.c.3.s8 %v199
  %v712 = vunpack.c.3.s8 %v200
  %v713 = vunpack.c.3.s8 %v201
  %v714 = vunpack.c.3.s8 %v202
  %v715 = vunpack.c.3.s8 %v203
  %v716 = vunpack.c.3.s8 %v204
  %v717 = vunpack.c.3.s8 %v205
  %v718 = vunpack.c.3.s8 %v206
  %v719 = vcvt.s32.f32 %v207
  %v720 = vcvt.s32.f32 %v208
  %v721 = vcvt.s32.f32 %v209
  %v722 = vcvt.s32.f32 %v210
  %v723 = vcvt.s32.f32 %v211
  %v724 = vcvt.s32.f32 %v212
  %v725 = vcvt.s32.f32 %v213
  %v726 = vcvt.s32.f32 %v214
  %v727 = vcvt.s32.f32 %v215
  %v728 = vcvt.s32.f32 %v216
  %v729 = vcvt.s32.f32 %v217
  %v730 = vcvt.s32.f32 %v218
  %v731 = vcvt.s32.f32 %v219
  %v732 = vcvt.s32.f32 %v220
  %v733 = vcvt.s32.f32 %v221
  %v734 = vcvt.s32.f32 %v222
  %v735 = vcvt.s32.f32 %v223
  %v736 = vcvt.s32.f32 %v224
  %v737 = vcvt.s32.f32 %v225
  %v738 = vcvt.s32.f32 %v226
  %v739 = vcvt.s32.f32 %v227
  %v740 = vcvt.s32.f32 %v228
  %v741 = vcvt.s32.f32 %v229
  %v742 = vcvt.s32.f32 %v230
  %v743 = vcvt.s32.f32 %v231
  %v744 = vcvt.s32.f32 %v232
  %v745 = vcvt.s32.f32 %v233
  %v746 = vcvt.s32.f32 %v234
  %v747 = vcvt.s32.f32 %v235
  %v748 = vcvt.s32.f32 %v236
  %v749 = vcvt.s32.f32 %v237
  %v750 = vcvt.s32.f32 %v238
  %v751 = vcvt.s32.f32 %v239
  %v752 = vcvt.s32.f32 %v240
  %v753 = vcvt.s32.f32 %v241
  %v754 = vcvt.s32.f32 %v242
  %v755 = vcvt.s32.f32 %v243
  %v756 = vcvt.s32.f32 %v244
  %v757 = vcvt.s32.f32 %v245
  %v758 = vcvt.s32.f32 %v246
  %v759 = vcvt.s32.f32 %v247
  %v760 = vcvt.s32.f32 %v248
  %v761 = vcvt.s32.f32 %v249
  %v762 = vcvt.s32.f32 %v250
  %v763 = vcvt.s32.f32 %v251
  %v764 = vcvt.s32.f32 %v252
  %v765 = vcvt.s32.f32 %v253
  %v766 = vcvt.s32.f32 %v254
  %v767 = vcvt.s32.f32 %v255
  %v768 = vcvt.s32.f32 %v256
  %v769 = vcvt.s32.f32 %v257
  %v770 = vcvt.s32.f32 %v258
  %v771 = vcvt.s32.f32 %v259
  %v772 = vcvt.s32.f32 %v260
  %v773 = vcvt.s32.f32 %v261
  %v774 = vcvt.s32.f32 %v262
  %v775 = vcvt.s32.f32 %v263
  %v776 = vcvt.s32.f32 %v264
  %v777 = vcvt.s32.f32 %v265
  %v778 = vcvt.s32.f32 %v266
  %v779 = vcvt.s32.f32 %v267
  %v780 = vcvt.s32.f32 %v268
  %v781 = vcvt.s32.f32 %v269
  %v782 = vcvt.s32.f32 %v270
  %v783 = vcvt.s32.f32 %v271
  %v784 = vcvt.s32.f32 %v272
  %v785 = vcvt.s32.f32 %v273
  %v786 = vcvt.s32.f32 %v274
  %v787 = vcvt.s32.f32 %v275
  %v788 = vcvt.s32.f32 %v276
  %v789 = vcvt.s32.f32 %v277
  %v790 = vcvt.s32.f32 %v278
  %v791 = vcvt.s32.f32 %v279
  %v792 = vcvt.s32.f32 %v280
  %v793 = vcvt.s32.f32 %v281
  %v794 = vcvt.s32.f32 %v282
  %v795 = vcvt.s32.f32 %v283
  %v796 = vcvt.s32.f32 %v284
  %v797 = vcvt.s32.f32 %v285
  %v798 = vcvt.s32.f32 %v286
  %v799 = vcvt.s32.f32 %v287
  %v800 = vcvt.s32.f32 %v288
  %v801 = vcvt.s32.f32 %v289
  %v802 = vcvt.s32.f32 %v290
  %v803 = vcvt.s32.f32 %v291
  %v804 = vcvt.s32.f32 %v292
  %v805 = vcvt.s32.f32 %v293
  %v806 = vcvt.s32.f32 %v294
  %v807 = vcvt.s32.f32 %v295
  %v808 = vcvt.s32.f32 %v296
  %v809 = vcvt.s32.f32 %v297
  %v810 = vcvt.s32.f32 %v298
  %v811 = vcvt.s32.f32 %v299
  %v812 = vcvt.s32.f32 %v300
  %v813 = vcvt.s32.f32 %v301
  %v814 = vcvt.s32.f32 %v302
  %v815 = vcvt.s32.f32 %v303
  %v816 = vcvt.s32.f32 %v304
  %v817 = vcvt.s32.f32 %v305
  %v818 = vcvt.s32.f32 %v306
  %v819 = vcvt.s32.f32 %v307
  %v820 = vcvt.s32.f32 %v308
  %v821 = vcvt.s32.f32 %v309
  %v822 = vcvt.s32.f32 %v310
  %v823 = vcvt.s32.f32 %v311
  %v824 = vcvt.s32.f32 %v312
  %v825 = vcvt.s32.f32 %v313
  %v826 = vcvt.s32.f32 %v314
  %v827 = vcvt.s32.f32 %v315
  %v828 = vcvt.s32.f32 %v316
  %v829 = vcvt.s32.f32 %v317
  %v830 = vcvt.s32.f32 %v318
  %v831 = vcvt.s32.f32 %v319
  %v832 = vcvt.s32.f32 %v320
  %v833 = vcvt.s32.f32 %v321
  %v834 = vcvt.s32.f32 %v322
  %v835 = vcvt.s32.f32 %v323
  %v836 = vcvt.s32.f32 %v324
  %v837 = vcvt.s32.f32 %v325
  %v838 = vcvt.s32.f32 %v326
  %v839 = vcvt.s32.f32 %v327
  %v840 = vcvt.s32.f32 %v328
  %v841 = vcvt.s32.f32 %v329
  %v842 = vcvt.s32.f32 %v330
  %v843 = vcvt.s32.f32 %v331
  %v844 = vcvt.s32.f32 %v332
  %v845 = vcvt.s32.f32 %v333
  %v846 = vcvt.s32.f32 %v334
  %v847 = vcvt.s32.f32 %v335
  %v848 = vcvt.s32.f32 %v336
  %v849 = vcvt.s32.f32 %v337
  %v850 = vcvt.s32.f32 %v338
  %v851 = vcvt.s32.f32 %v339
  %v852 = vcvt.s32.f32 %v340
  %v853 = vcvt.s32.f32 %v341
  %v854 = vcvt.s32.f32 %v342
  %v855 = vcvt.s32.f32 %v343
  %v856 = vcvt.s32.f32 %v344
  %v857 = vcvt.s32.f32 %v345
  %v858 = vcvt.s32.f32 %v346
  %v859 = vcvt.s32.f32 %v347
  %v860 = vcvt.s32.f32 %v348
  %v861 = vcvt.s32.f32 %v349
  %v862 = vcvt.s32.f32 %v350
  %v863 = vcvt.s32.f32 %v351
  %v864 = vcvt.s32.f32 %v352
  %v865 = vcvt.s32.f32 %v353
  %v866 = vcvt.s32.f32 %v354
  %v867 = vcvt.s32.f32 %v355
  %v868 = vcvt.s32.f32 %v356
  %v869 = vcvt.s32.f32 %v357
  %v870 = vcvt.s32.f32 %v358
  %v871 = vcvt.s32.f32 %v359
  %v872 = vcvt.s32.f32 %v360
  %v873 = vcvt.s32.f32 %v361
  %v874 = vcvt.s32.f32 %v362
  %v875 = vcvt.s32.f32 %v363
  %v876 = vcvt.s32.f32 %v364
  %v877 = vcvt.s32.f32 %v365
  %v878 = vcvt.s32.f32 %v366
  %v879 = vcvt.s32.f32 %v367
  %v880 = vcvt.s32.f32 %v368
  %v881 = vcvt.s32.f32 %v369
  %v882 = vcvt.s32.f32 %v370
  %v883 = vcvt.s32.f32 %v371
  %v884 = vcvt.s32.f32 %v372
  %v885 = vcvt.s32.f32 %v373
  %v886 = vcvt.s32.f32 %v374
  %v887 = vcvt.s32.f32 %v375
  %v888 = vcvt.s32.f32 %v376
  %v889 = vcvt.s32.f32 %v377
  %v890 = vcvt.s32.f32 %v378
  %v891 = vcvt.s32.f32 %v379
  %v892 = vcvt.s32.f32 %v380
  %v893 = vcvt.s32.f32 %v381
  %v894 = vcvt.s32.f32 %v382
  %v895 = vcvt.s32.f32 %v383
  %v896 = vcvt.s32.f32 %v384
  %v897 = vcvt.s32.f32 %v385
  %v898 = vcvt.s32.f32 %v386
  %v899 = vcvt.s32.f32 %v387
  %v900 = vcvt.s32.f32 %v388
  %v901 = vcvt.s32.f32 %v389
  %v902 = vcvt.s32.f32 %v390
  %v903 = vcvt.s32.f32 %v391
  %v904 = vcvt.s32.f32 %v392
  %v905 = vcvt.s32.f32 %v393
  %v906 = vcvt.s32.f32 %v394
  %v907 = vcvt.s32.f32 %v395
  %v908 = vcvt.s32.f32 %v396
  %v909 = vcvt.s32.f32 %v397
  %v910 = vcvt.s32.f32 %v398
  %v911 = vcvt.s32.f32 %v399
  %v912 = vcvt.s32.f32 %v400
  %v913 = vcvt.s32.f32 %v401
  %v914 = vcvt.s32.f32 %v402
  %v915 = vcvt.s32.f32 %v403
  %v916 = vcvt.s32.f32 %v404
  %v917 = vcvt.s32.f32 %v405
  %v918 = vcvt.s32.f32 %v406
  %v919 = vcvt.s32.f32 %v407
  %v920 = vcvt.s32.f32 %v408
  %v921 = vcvt.s32.f32 %v409
  %v922 = vcvt.s32.f32 %v410
  %v923 = vcvt.s32.f32 %v411
  %v924 = vcvt.s32.f32 %v412
  %v925 = vcvt.s32.f32 %v413
  %v926 = vcvt.s32.f32 %v414
  %v927 = vcvt.s32.f32 %v415
  %v928 = vcvt.s32.f32 %v416
  %v929 = vcvt.s32.f32 %v417
  %v930 = vcvt.s32.f32 %v418
  %v931 = vcvt.s32.f32 %v419
  %v932 = vcvt.s32.f32 %v420
  %v933 = vcvt.s32.f32 %v421
  %v934 = vcvt.s32.f32 %v422
  %v935 = vcvt.s32.f32 %v423
  %v936 = vcvt.s32.f32 %v424
  %v937 = vcvt.s32.f32 %v425
  %v938 = vcvt.s32.f32 %v426
  %v939 = vcvt.s32.f32 %v427
  %v940 = vcvt.s32.f32 %v428
  %v941 = vcvt.s32.f32 %v429
  %v942 = vcvt.s32.f32 %v430
  %v943 = vcvt.s32.f32 %v431
  %v944 = vcvt.s32.f32 %v432
  %v945 = vcvt.s32.f32 %v433
  %v946 = vcvt.s32.f32 %v434
  %v947 = vcvt.s32.f32 %v435
  %v948 = vcvt.s32.f32 %v436
  %v949 = vcvt.s32.f32 %v437
  %v950 = vcvt.s32.f32 %v438
  %v951 = vcvt.s32.f32 %v439
  %v952 = vcvt.s32.f32 %v440
  %v953 = vcvt.s32.f32 %v441
  %v954 = vcvt.s32.f32 %v442
  %v955 = vcvt.s32.f32 %v443
  %v956 = vcvt.s32.f32 %v444
  %v957 = vcvt.s32.f32 %v445
  %v958 = vcvt.s32.f32 %v446
  %v959 = vcvt.s32.f32 %v447
  %v960 = vcvt.s32.f32 %v448
  %v961 = vcvt.s32.f32 %v449
  %v962 = vcvt.s32.f32 %v450
  %v963 = vcvt.s32.f32 %v451
  %v964 = vcvt.s32.f32 %v452
  %v965 = vcvt.s32.f32 %v453
  %v966 = vcvt.s32.f32 %v454
  %v967 = vcvt.s32.f32 %v455
  %v968 = vcvt.s32.f32 %v456
  %v969 = vcvt.s32.f32 %v457
  %v970 = vcvt.s32.f32 %v458
  %v971 = vcvt.s32.f32 %v459
  %v972 = vcvt.s32.f32 %v460
  %v973 = vcvt.s32.f32 %v461
  %v974 = vcvt.s32.f32 %v462
  %v975 = vcvt.s32.f32 %v463
  %v976 = vcvt.s32.f32 %v464
  %v977 = vcvt.s32.f32 %v465
  %v978 = vcvt.s32.f32 %v466
  %v979 = vcvt.s32.f32 %v467
  %v980 = vcvt.s32.f32 %v468
  %v981 = vcvt.s32.f32 %v469
  %v982 = vcvt.s32.f32 %v470
  %v983 = vcvt.s32.f32 %v471
  %v984 = vcvt.s32.f32 %v472
  %v985 = vcvt.s32.f32 %v473
  %v986 = vcvt.s32.f32 %v474
  %v987 = vcvt.s32.f32 %v475
  %v988 = vcvt.s32.f32 %v476
  %v989 = vcvt.s32.f32 %v477
  %v990 = vcvt.s32.f32 %v478
  %v991 = vcvt.s32.f32 %v479
  %v992 = vcvt.s32.f32 %v480
  %v993 = vcvt.s32.f32 %v481
  %v994 = vcvt.s32.f32 %v482
  %v995 = vcvt.s32.f32 %v483
  %v996 = vcvt.s32.f32 %v484
  %v997 = vcvt.s32.f32 %v485
  %v998 = vcvt.s32.f32 %v486
  %v999 = vcvt.s32.f32 %v487
  %v1000 = vcvt.s32.f32 %v488
  %v1001 = vcvt.s32.f32 %v489
  %v1002 = vcvt.s32.f32 %v490
  %v1003 = vcvt.s32.f32 %v491
  %v1004 = vcvt.s32.f32 %v492
  %v1005 = vcvt.s32.f32 %v493
  %v1006 = vcvt.s32.f32 %v494
  %v1007 = vcvt.s32.f32 %v495
  %v1008 = vcvt.s32.f32 %v496
  %v1009 = vcvt.s32.f32 %v497
  %v1010 = vcvt.s32.f32 %v498
  %v1011 = vcvt.s32.f32 %v499
  %v1012 = vcvt.s32.f32 %v500
  %v1013 = vcvt.s32.f32 %v501
  %v1014 = vcvt.s32.f32 %v502
  %v1015 = vcvt.s32.f32 %v503
  %v1016 = vcvt.s32.f32 %v504
  %v1017 = vcvt.s32.f32 %v505
  %v1018 = vcvt.s32.f32 %v506
  %v1019 = vcvt.s32.f32 %v507
  %v1020 = vcvt.s32.f32 %v508
  %v1021 = vcvt.s32.f32 %v509
  %v1022 = vcvt.s32.f32 %v510
  %v1023 = vcvt.s32.f32 %v511
  %v1024 = vcvt.s32.f32 %v512
  %v1025 = vcvt.s32.f32 %v513
  %v1026 = vcvt.s32.f32 %v514
  %v1027 = vcvt.s32.f32 %v515
  %v1028 = vcvt.s32.f32 %v516
  %v1029 = vcvt.s32.f32 %v517
  %v1030 = vcvt.s32.f32 %v518
  %v1031 = vcvt.s32.f32 %v519
  %v1032 = vcvt.s32.f32 %v520
  %v1033 = vcvt.s32.f32 %v521
  %v1034 = vcvt.s32.f32 %v522
  %v1035 = vcvt.s32.f32 %v523
  %v1036 = vcvt.s32.f32 %v524
  %v1037 = vcvt.s32.f32 %v525
  %v1038 = vcvt.s32.f32 %v526
  %v1039 = vcvt.s32.f32 %v527
  %v1040 = vcvt.s32.f32 %v528
  %v1041 = vcvt.s32.f32 %v529
  %v1042 = vcvt.s32.f32 %v530
  %v1043 = vcvt.s32.f32 %v531
  %v1044 = vcvt.s32.f32 %v532
  %v1045 = vcvt.s32.f32 %v533
  %v1046 = vcvt.s32.f32 %v534
  %v1047 = vcvt.s32.f32 %v535
  %v1048 = vcvt.s32.f32 %v536
  %v1049 = vcvt.s32.f32 %v537
  %v1050 = vcvt.s32.f32 %v538
  %v1051 = vcvt.s32.f32 %v539
  %v1052 = vcvt.s32.f32 %v540
  %v1053 = vcvt.s32.f32 %v541
  %v1054 = vcvt.s32.f32 %v542
  %v1055 = vcvt.s32.f32 %v543
  %v1056 = vcvt.s32.f32 %v544
  %v1057 = vcvt.s32.f32 %v545
  %v1058 = vcvt.s32.f32 %v546
  %v1059 = vcvt.s32.f32 %v547
  %v1060 = vcvt.s32.f32 %v548
  %v1061 = vcvt.s32.f32 %v549
  %v1062 = vcvt.s32.f32 %v550
  %v1063 = vcvt.s32.f32 %v551
  %v1064 = vcvt.s32.f32 %v552
  %v1065 = vcvt.s32.f32 %v553
  %v1066 = vcvt.s32.f32 %v554
  %v1067 = vcvt.s32.f32 %v555
  %v1068 = vcvt.s32.f32 %v556
  %v1069 = vcvt.s32.f32 %v557
  %v1070 = vcvt.s32.f32 %v558
  %v1071 = vcvt.s32.f32 %v559
  %v1072 = vcvt.s32.f32 %v560
  %v1073 = vcvt.s32.f32 %v561
  %v1074 = vcvt.s32.f32 %v562
  %v1075 = vcvt.s32.f32 %v563
  %v1076 = vcvt.s32.f32 %v564
  %v1077 = vcvt.s32.f32 %v565
  %v1078 = vcvt.s32.f32 %v566
  %v1079 = vcvt.s32.f32 %v567
  %v1080 = vcvt.s32.f32 %v568
  %v1081 = vcvt.s32.f32 %v569
  %v1082 = vcvt.s32.f32 %v570
  %v1083 = vcvt.s32.f32 %v571
  %v1084 = vcvt.s32.f32 %v572
  %v1085 = vcvt.s32.f32 %v573
  %v1086 = vcvt.s32.f32 %v574
  %v1087 = vcvt.s32.f32 %v575
  %v1088 = vcvt.s32.f32 %v576
  %v1089 = vcvt.s32.f32 %v577
  %v1090 = vcvt.s32.f32 %v578
  %v1091 = vcvt.s32.f32 %v579
  %v1092 = vcvt.s32.f32 %v580
  %v1093 = vcvt.s32.f32 %v581
  %v1094 = vcvt.s32.f32 %v582
  %v1095 = vcvt.s32.f32 %v583
  %v1096 = vcvt.s32.f32 %v584
  %v1097 = vcvt.s32.f32 %v585
  %v1098 = vcvt.s32.f32 %v586
  %v1099 = vcvt.s32.f32 %v587
  %v1100 = vcvt.s32.f32 %v588
  %v1101 = vcvt.s32.f32 %v589
  %v1102 = vcvt.s32.f32 %v590
  %v1103 = vcvt.s32.f32 %v591
  %v1104 = vcvt.s32.f32 %v592
  %v1105 = vcvt.s32.f32 %v593
  %v1106 = vcvt.s32.f32 %v594
  %v1107 = vcvt.s32.f32 %v595
  %v1108 = vcvt.s32.f32 %v596
  %v1109 = vcvt.s32.f32 %v597
  %v1110 = vcvt.s32.f32 %v598
  %v1111 = vcvt.s32.f32 %v599
  %v1112 = vcvt.s32.f32 %v600
  %v1113 = vcvt.s32.f32 %v601
  %v1114 = vcvt.s32.f32 %v602
  %v1115 = vcvt.s32.f32 %v603
  %v1116 = vcvt.s32.f32 %v604
  %v1117 = vcvt.s32.f32 %v605
  %v1118 = vcvt.s32.f32 %v606
  %v1119 = vcvt.s32.f32 %v607
  %v1120 = vcvt.s32.f32 %v608
  %v1121 = vcvt.s32.f32 %v609
  %v1122 = vcvt.s32.f32 %v610
  %v1123 = vcvt.s32.f32 %v611
  %v1124 = vcvt.s32.f32 %v612
  %v1125 = vcvt.s32.f32 %v613
  %v1126 = vcvt.s32.f32 %v614
  %v1127 = vcvt.s32.f32 %v615
  %v1128 = vcvt.s32.f32 %v616
  %v1129 = vcvt.s32.f32 %v617
  %v1130 = vcvt.s32.f32 %v618
  %v1131 = vcvt.s32.f32 %v619
  %v1132 = vcvt.s32.f32 %v620
  %v1133 = vcvt.s32.f32 %v621
  %v1134 = vcvt.s32.f32 %v622
  %v1135 = vcvt.s32.f32 %v623
  %v1136 = vcvt.s32.f32 %v624
  %v1137 = vcvt.s32.f32 %v625
  %v1138 = vcvt.s32.f32 %v626
  %v1139 = vcvt.s32.f32 %v627
  %v1140 = vcvt.s32.f32 %v628
  %v1141 = vcvt.s32.f32 %v629
  %v1142 = vcvt.s32.f32 %v630
  %v1143 = vcvt.s32.f32 %v631
  %v1144 = vcvt.s32.f32 %v632
  %v1145 = vcvt.s32.f32 %v633
  %v1146 = vcvt.s32.f32 %v634
  %v1147 = vcvt.s32.f32 %v635
  %v1148 = vcvt.s32.f32 %v636
  %v1149 = vcvt.s32.f32 %v637
  %v1150 = vcvt.s32.f32 %v638
  %v1151 = vcvt.s32.f32 %v639
  %v1152 = vcvt.s32.f32 %v640
  %v1153 = vcvt.s32.f32 %v641
  %v1154 = vcvt.s32.f32 %v642
  %v1155 = vcvt.s32.f32 %v643
  %v1156 = vcvt.s32.f32 %v644
  %v1157 = vcvt.s32.f32 %v645
  %v1158 = vcvt.s32.f32 %v646
  %v1159 = vcvt.s32.f32 %v647
  %v1160 = vcvt.s32.f32 %v648
  %v1161 = vcvt.s32.f32 %v649
  %v1162 = vcvt.s32.f32 %v650
  %v1163 = vcvt.s32.f32 %v651
  %v1164 = vcvt.s32.f32 %v652
  %v1165 = vcvt.s32.f32 %v653
  %v1166 = vcvt.s32.f32 %v654
  %v1167 = vcvt.s32.f32 %v655
  %v1168 = vcvt.s32.f32 %v656
  %v1169 = vcvt.s32.f32 %v657
  %v1170 = vcvt.s32.f32 %v658
  %v1171 = vcvt.s32.f32 %v659
  %v1172 = vcvt.s32.f32 %v660
  %v1173 = vcvt.s32.f32 %v661
  %v1174 = vcvt.s32.f32 %v662
  %v1175 = vcvt.s32.f32 %v663
  %v1176 = vcvt.s32.f32 %v664
  %v1177 = vcvt.s32.f32 %v665
  %v1178 = vcvt.s32.f32 %v666
  %v1179 = vcvt.s32.f32 %v667
  %v1180 = vcvt.s32.f32 %v668
  %v1181 = vcvt.s32.f32 %v669
  %v1182 = vcvt.s32.f32 %v670
  %v1183 = vcvt.s32.f32 %v671
  %v1184 = vcvt.s32.f32 %v672
  %v1185 = vcvt.s32.f32 %v673
  %v1186 = vcvt.s32.f32 %v674
  %v1187 = vcvt.s32.f32 %v675
  %v1188 = vcvt.s32.f32 %v676
  %v1189 = vcvt.s32.f32 %v677
  %v1190 = vcvt.s32.f32 %v678
  %v1191 = vcvt.s32.f32 %v679
  %v1192 = vcvt.s32.f32 %v680
  %v1193 = vcvt.s32.f32 %v681
  %v1194 = vcvt.s32.f32 %v682
  %v1195 = vcvt.s32.f32 %v683
  %v1196 = vcvt.s32.f32 %v684
  %v1197 = vcvt.s32.f32 %v685
  %v1198 = vcvt.s32.f32 %v686
  %v1199 = vcvt.s32.f32 %v687
  %v1200 = vcvt.s32.f32 %v688
  %v1201 = vcvt.s32.f32 %v689
  %v1202 = vcvt.s32.f32 %v690
  %v1203 = vcvt.s32.f32 %v691
  %v1204 = vcvt.s32.f32 %v692
  %v1205 = vcvt.s32.f32 %v693
  %v1206 = vcvt.s32.f32 %v694
  %v1207 = vcvt.s32.f32 %v695
  %v1208 = vcvt.s32.f32 %v696
  %v1209 = vcvt.s32.f32 %v697
  %v1210 = vcvt.s32.f32 %v698
  %v1211 = vcvt.s32.f32 %v699
  %v1212 = vcvt.s32.f32 %v700
  %v1213 = vcvt.s32.f32 %v701
  %v1214 = vcvt.s32.f32 %v702
  %v1215 = vcvt.s32.f32 %v703
  %v1216 = vcvt.s32.f32 %v704
  %v1217 = vcvt.s32.f32 %v705
  %v1218 = vcvt.s32.f32 %v706
  %v1219 = vcvt.s32.f32 %v707
  %v1220 = vcvt.s32.f32 %v708
  %v1221 = vcvt.s32.f32 %v709
  %v1222 = vcvt.s32.f32 %v710
  %v1223 = vcvt.s32.f32 %v711
  %v1224 = vcvt.s32.f32 %v712
  %v1225 = vcvt.s32.f32 %v713
  %v1226 = vcvt.s32.f32 %v714
  %v1227 = vcvt.s32.f32 %v715
  %v1228 = vcvt.s32.f32 %v716
  %v1229 = vcvt.s32.f32 %v717
  %v1230 = vcvt.s32.f32 %v718
  %v1231 = vpack.c.bf16 %v727, %v719
  %v1232 = vpack.c.bf16 %v728, %v720
  %v1233 = vpack.c.bf16 %v729, %v721
  %v1234 = vpack.c.bf16 %v730, %v722
  %v1235 = vpack.c.bf16 %v731, %v723
  %v1236 = vpack.c.bf16 %v732, %v724
  %v1237 = vpack.c.bf16 %v733, %v725
  %v1238 = vpack.c.bf16 %v734, %v726
  %v1239 = vpack.c.bf16 %v743, %v735
  %v1240 = vpack.c.bf16 %v744, %v736
  %v1241 = vpack.c.bf16 %v745, %v737
  %v1242 = vpack.c.bf16 %v746, %v738
  %v1243 = vpack.c.bf16 %v747, %v739
  %v1244 = vpack.c.bf16 %v748, %v740
  %v1245 = vpack.c.bf16 %v749, %v741
  %v1246 = vpack.c.bf16 %v750, %v742
  %v1247 = vpack.c.bf16 %v759, %v751
  %v1248 = vpack.c.bf16 %v760, %v752
  %v1249 = vpack.c.bf16 %v761, %v753
  %v1250 = vpack.c.bf16 %v762, %v754
  %v1251 = vpack.c.bf16 %v763, %v755
  %v1252 = vpack.c.bf16 %v764, %v756
  %v1253 = vpack.c.bf16 %v765, %v757
  %v1254 = vpack.c.bf16 %v766, %v758
  %v1255 = vpack.c.bf16 %v775, %v767
  %v1256 = vpack.c.bf16 %v776, %v768
  %v1257 = vpack.c.bf16 %v777, %v769
  %v1258 = vpack.c.bf16 %v778, %v770
  %v1259 = vpack.c.bf16 %v779, %v771
  %v1260 = vpack.c.bf16 %v780, %v772
  %v1261 = vpack.c.bf16 %v781, %v773
  %v1262 = vpack.c.bf16 %v782, %v774
  %v1263 = vpack.c.bf16 %v791, %v783
  %v1264 = vpack.c.bf16 %v792, %v784
  %v1265 = vpack.c.bf16 %v793, %v785
  %v1266 = vpack.c.bf16 %v794, %v786
  %v1267 = vpack.c.bf16 %v795, %v787
  %v1268 = vpack.c.bf16 %v796, %v788
  %v1269 = vpack.c.bf16 %v797, %v789
  %v1270 = vpack.c.bf16 %v798, %v790
  %v1271 = vpack.c.bf16 %v807, %v799
  %v1272 = vpack.c.bf16 %v808, %v800
  %v1273 = vpack.c.bf16 %v809, %v801
  %v1274 = vpack.c.bf16 %v810, %v802
  %v1275 = vpack.c.bf16 %v811, %v803
  %v1276 = vpack.c.bf16 %v812, %v804
  %v1277 = vpack.c.bf16 %v813, %v805
  %v1278 = vpack.c.bf16 %v814, %v806
  %v1279 = vpack.c.bf16 %v823, %v815
  %v1280 = vpack.c.bf16 %v824, %v816
  %v1281 = vpack.c.bf16 %v825, %v817
  %v1282 = vpack.c.bf16 %v826, %v818
  %v1283 = vpack.c.bf16 %v827, %v819
  %v1284 = vpack.c.bf16 %v828, %v820
  %v1285 = vpack.c.bf16 %v829, %v821
  %v1286 = vpack.c.bf16 %v830, %v822
  %v1287 = vpack.c.bf16 %v839, %v831
  %v1288 = vpack.c.bf16 %v840, %v832
  %v1289 = vpack.c.bf16 %v841, %v833
  %v1290 = vpack.c.bf16 %v842, %v834
  %v1291 = vpack.c.bf16 %v843, %v835
  %v1292 = vpack.c.bf16 %v844, %v836
  %v1293 = vpack.c.bf16 %v845, %v837
  %v1294 = vpack.c.bf16 %v846, %v838
  %v1295 = vpack.c.bf16 %v855, %v847
  %v1296 = vpack.c.bf16 %v856, %v848
  %v1297 = vpack.c.bf16 %v857, %v849
  %v1298 = vpack.c.bf16 %v858, %v850
  %v1299 = vpack.c.bf16 %v859, %v851
  %v1300 = vpack.c.bf16 %v860, %v852
  %v1301 = vpack.c.bf16 %v861, %v853
  %v1302 = vpack.c.bf16 %v862, %v854
  %v1303 = vpack.c.bf16 %v871, %v863
  %v1304 = vpack.c.bf16 %v872, %v864
  %v1305 = vpack.c.bf16 %v873, %v865
  %v1306 = vpack.c.bf16 %v874, %v866
  %v1307 = vpack.c.bf16 %v875, %v867
  %v1308 = vpack.c.bf16 %v876, %v868
  %v1309 = vpack.c.bf16 %v877, %v869
  %v1310 = vpack.c.bf16 %v878, %v870
  %v1311 = vpack.c.bf16 %v887, %v879
  %v1312 = vpack.c.bf16 %v888, %v880
  %v1313 = vpack.c.bf16 %v889, %v881
  %v1314 = vpack.c.bf16 %v890, %v882
  %v1315 = vpack.c.bf16 %v891, %v883
  %v1316 = vpack.c.bf16 %v892, %v884
  %v1317 = vpack.c.bf16 %v893, %v885
  %v1318 = vpack.c.bf16 %v894, %v886
  %v1319 = vpack.c.bf16 %v903, %v895
  %v1320 = vpack.c.bf16 %v904, %v896
  %v1321 = vpack.c.bf16 %v905, %v897
  %v1322 = vpack.c.bf16 %v906, %v898
  %v1323 = vpack.c.bf16 %v907, %v899
  %v1324 = vpack.c.bf16 %v908, %v900
  %v1325 = vpack.c.bf16 %v909, %v901
  %v1326 = vpack.c.bf16 %v910, %v902
  %v1327 = vpack.c.bf16 %v919, %v911
  %v1328 = vpack.c.bf16 %v920, %v912
  %v1329 = vpack.c.bf16 %v921, %v913
  %v1330 = vpack.c.bf16 %v922, %v914
  %v1331 = vpack.c.bf16 %v923, %v915
  %v1332 = vpack.c.bf16 %v924, %v916
  %v1333 = vpack.c.bf16 %v925, %v917
  %v1334 = vpack.c.bf16 %v926, %v918
  %v1335 = vpack.c.bf16 %v935, %v927
  %v1336 = vpack.c.bf16 %v936, %v928
  %v1337 = vpack.c.bf16 %v937, %v929
  %v1338 = vpack.c.bf16 %v938, %v930
  %v1339 = vpack.c.bf16 %v939, %v931
  %v1340 = vpack.c.bf16 %v940, %v932
  %v1341 = vpack.c.bf16 %v941, %v933
  %v1342 = vpack.c.bf16 %v942, %v934
  %v1343 = vpack.c.bf16 %v951, %v943
  %v1344 = vpack.c.bf16 %v952, %v944
  %v1345 = vpack.c.bf16 %v953, %v945
  %v1346 = vpack.c.bf16 %v954, %v946
  %v1347 = vpack.c.bf16 %v955, %v947
  %v1348 = vpack.c.bf16 %v956, %v948
  %v1349 = vpack.c.bf16 %v957, %v949
  %v1350 = vpack.c.bf16 %v958, %v950
  %v1351 = vpack.c.bf16 %v967, %v959
  %v1352 = vpack.c.bf16 %v968, %v960
  %v1353 = vpack.c.bf16 %v969, %v961
  %v1354 = vpack.c.bf16 %v970, %v962
  %v1355 = vpack.c.bf16 %v971, %v963
  %v1356 = vpack.c.bf16 %v972, %v964
  %v1357 = vpack.c.bf16 %v973, %v965
  %v1358 = vpack.c.bf16 %v974, %v966
  %v1359 = vpack.c.bf16 %v983, %v975
  %v1360 = vpack.c.bf16 %v984, %v976
  %v1361 = vpack.c.bf16 %v985, %v977
  %v1362 = vpack.c.bf16 %v986, %v978
  %v1363 = vpack.c.bf16 %v987, %v979
  %v1364 = vpack.c.bf16 %v988, %v980
  %v1365 = vpack.c.bf16 %v989, %v981
  %v1366 = vpack.c.bf16 %v990, %v982
  %v1367 = vpack.c.bf16 %v999, %v991
  %v1368 = vpack.c.bf16 %v1000, %v992
  %v1369 = vpack.c.bf16 %v1001, %v993
  %v1370 = vpack.c.bf16 %v1002, %v994
  %v1371 = vpack.c.bf16 %v1003, %v995
  %v1372 = vpack.c.bf16 %v1004, %v996
  %v1373 = vpack.c.bf16 %v1005, %v997
  %v1374 = vpack.c.bf16 %v1006, %v998
  %v1375 = vpack.c.bf16 %v1015, %v1007
  %v1376 = vpack.c.bf16 %v1016, %v1008
  %v1377 = vpack.c.bf16 %v1017, %v1009
  %v1378 = vpack.c.bf16 %v1018, %v1010
  %v1379 = vpack.c.bf16 %v1019, %v1011
  %v1380 = vpack.c.bf16 %v1020, %v1012
  %v1381 = vpack.c.bf16 %v1021, %v1013
  %v1382 = vpack.c.bf16 %v1022, %v1014
  %v1383 = vpack.c.bf16 %v1031, %v1023
  %v1384 = vpack.c.bf16 %v1032, %v1024
  %v1385 = vpack.c.bf16 %v1033, %v1025
  %v1386 = vpack.c.bf16 %v1034, %v1026
  %v1387 = vpack.c.bf16 %v1035, %v1027
  %v1388 = vpack.c.bf16 %v1036, %v1028
  %v1389 = vpack.c.bf16 %v1037, %v1029
  %v1390 = vpack.c.bf16 %v1038, %v1030
  %v1391 = vpack.c.bf16 %v1047, %v1039
  %v1392 = vpack.c.bf16 %v1048, %v1040
  %v1393 = vpack.c.bf16 %v1049, %v1041
  %v1394 = vpack.c.bf16 %v1050, %v1042
  %v1395 = vpack.c.bf16 %v1051, %v1043
  %v1396 = vpack.c.bf16 %v1052, %v1044
  %v1397 = vpack.c.bf16 %v1053, %v1045
  %v1398 = vpack.c.bf16 %v1054, %v1046
  %v1399 = vpack.c.bf16 %v1063, %v1055
  %v1400 = vpack.c.bf16 %v1064, %v1056
  %v1401 = vpack.c.bf16 %v1065, %v1057
  %v1402 = vpack.c.bf16 %v1066, %v1058
  %v1403 = vpack.c.bf16 %v1067, %v1059
  %v1404 = vpack.c.bf16 %v1068, %v1060
  %v1405 = vpack.c.bf16 %v1069, %v1061
  %v1406 = vpack.c.bf16 %v1070, %v1062
  %v1407 = vpack.c.bf16 %v1079, %v1071
  %v1408 = vpack.c.bf16 %v1080, %v1072
  %v1409 = vpack.c.bf16 %v1081, %v1073
  %v1410 = vpack.c.bf16 %v1082, %v1074
  %v1411 = vpack.c.bf16 %v1083, %v1075
  %v1412 = vpack.c.bf16 %v1084, %v1076
  %v1413 = vpack.c.bf16 %v1085, %v1077
  %v1414 = vpack.c.bf16 %v1086, %v1078
  %v1415 = vpack.c.bf16 %v1095, %v1087
  %v1416 = vpack.c.bf16 %v1096, %v1088
  %v1417 = vpack.c.bf16 %v1097, %v1089
  %v1418 = vpack.c.bf16 %v1098, %v1090
  %v1419 = vpack.c.bf16 %v1099, %v1091
  %v1420 = vpack.c.bf16 %v1100, %v1092
  %v1421 = vpack.c.bf16 %v1101, %v1093
  %v1422 = vpack.c.bf16 %v1102, %v1094
  %v1423 = vpack.c.bf16 %v1111, %v1103
  %v1424 = vpack.c.bf16 %v1112, %v1104
  %v1425 = vpack.c.bf16 %v1113, %v1105
  %v1426 = vpack.c.bf16 %v1114, %v1106
  %v1427 = vpack.c.bf16 %v1115, %v1107
  %v1428 = vpack.c.bf16 %v1116, %v1108
  %v1429 = vpack.c.bf16 %v1117, %v1109
  %v1430 = vpack.c.bf16 %v1118, %v1110
  %v1431 = vpack.c.bf16 %v1127, %v1119
  %v1432 = vpack.c.bf16 %v1128, %v1120
  %v1433 = vpack.c.bf16 %v1129, %v1121
  %v1434 = vpack.c.bf16 %v1130, %v1122
  %v1435 = vpack.c.bf16 %v1131, %v1123
  %v1436 = vpack.c.bf16 %v1132, %v1124
  %v1437 = vpack.c.bf16 %v1133, %v1125
  %v1438 = vpack.c.bf16 %v1134, %v1126
  %v1439 = vpack.c.bf16 %v1143, %v1135
  %v1440 = vpack.c.bf16 %v1144, %v1136
  %v1441 = vpack.c.bf16 %v1145, %v1137
  %v1442 = vpack.c.bf16 %v1146, %v1138
  %v1443 = vpack.c.bf16 %v1147, %v1139
  %v1444 = vpack.c.bf16 %v1148, %v1140
  %v1445 = vpack.c.bf16 %v1149, %v1141
  %v1446 = vpack.c.bf16 %v1150, %v1142
  %v1447 = vpack.c.bf16 %v1159, %v1151
  %v1448 = vpack.c.bf16 %v1160, %v1152
  %v1449 = vpack.c.bf16 %v1161, %v1153
  %v1450 = vpack.c.bf16 %v1162, %v1154
  %v1451 = vpack.c.bf16 %v1163, %v1155
  %v1452 = vpack.c.bf16 %v1164, %v1156
  %v1453 = vpack.c.bf16 %v1165, %v1157
  %v1454 = vpack.c.bf16 %v1166, %v1158
  %v1455 = vpack.c.bf16 %v1175, %v1167
  %v1456 = vpack.c.bf16 %v1176, %v1168
  %v1457 = vpack.c.bf16 %v1177, %v1169
  %v1458 = vpack.c.bf16 %v1178, %v1170
  %v1459 = vpack.c.bf16 %v1179, %v1171
  %v1460 = vpack.c.bf16 %v1180, %v1172
  %v1461 = vpack.c.bf16 %v1181, %v1173
  %v1462 = vpack.c.bf16 %v1182, %v1174
  %v1463 = vpack.c.bf16 %v1191, %v1183
  %v1464 = vpack.c.bf16 %v1192, %v1184
  %v1465 = vpack.c.bf16 %v1193, %v1185
  %v1466 = vpack.c.bf16 %v1194, %v1186
  %v1467 = vpack.c.bf16 %v1195, %v1187
  %v1468 = vpack.c.bf16 %v1196, %v1188
  %v1469 = vpack.c.bf16 %v1197, %v1189
  %v1470 = vpack.c.bf16 %v1198, %v1190
  %v1471 = vpack.c.bf16 %v1207, %v1199
  %v1472 = vpack.c.bf16 %v1208, %v1200
  %v1473 = vpack.c.bf16 %v1209, %v1201
  %v1474 = vpack.c.bf16 %v1210, %v1202
  %v1475 = vpack.c.bf16 %v1211, %v1203
  %v1476 = vpack.c.bf16 %v1212, %v1204
  %v1477 = vpack.c.bf16 %v1213, %v1205
  %v1478 = vpack.c.bf16 %v1214, %v1206
  %v1479 = vpack.c.bf16 %v1223, %v1215
  %v1480 = vpack.c.bf16 %v1224, %v1216
  %v1481 = vpack.c.bf16 %v1225, %v1217
  %v1482 = vpack.c.bf16 %v1226, %v1218
  %v1483 = vpack.c.bf16 %v1227, %v1219
  %v1484 = vpack.c.bf16 %v1228, %v1220
  %v1485 = vpack.c.bf16 %v1229, %v1221
  %v1486 = vpack.c.bf16 %v1230, %v1222
  %v1487 = vld [vmem:[%s2] sm:$0xff]
  %v1488 = vld [vmem:[%s2 + $0x8] sm:$0xff]
  %v1489 = vld [vmem:[%s2 + $0x10] sm:$0xff]
  %v1490 = vld [vmem:[%s2 + $0x18] sm:$0xff]
  %v1491 = vld [vmem:[%s2 + $0x20] sm:$0xff]
  %v1492 = vld [vmem:[%s2 + $0x28] sm:$0xff]
  %v1493 = vld [vmem:[%s2 + $0x30] sm:$0xff]
  %v1494 = vld [vmem:[%s2 + $0x38] sm:$0xff]
  %v1495 = vld [vmem:[%s2 + $0x40] sm:$0xff]
  %v1496 = vld [vmem:[%s2 + $0x48] sm:$0xff]
  %v1497 = vld [vmem:[%s2 + $0x50] sm:$0xff]
  %v1498 = vld [vmem:[%s2 + $0x58] sm:$0xff]
  %v1499 = vld [vmem:[%s2 + $0x60] sm:$0xff]
  %v1500 = vld [vmem:[%s2 + $0x68] sm:$0xff]
  %v1501 = vld [vmem:[%s2 + $0x70] sm:$0xff]
  %v1502 = vld [vmem:[%s2 + $0x78] sm:$0xff]
  %v1503 = vld [vmem:[%s2 + $0x80] sm:$0xff]
  %v1504 = vld [vmem:[%s2 + $0x88] sm:$0xff]
  %v1505 = vld [vmem:[%s2 + $0x90] sm:$0xff]
  %v1506 = vld [vmem:[%s2 + $0x98] sm:$0xff]
  %v1507 = vld [vmem:[%s2 + $0xa0] sm:$0xff]
  %v1508 = vld [vmem:[%s2 + $0xa8] sm:$0xff]
  %v1509 = vld [vmem:[%s2 + $0xb0] sm:$0xff]
  %v1510 = vld [vmem:[%s2 + $0xb8] sm:$0xff]
  %v1511 = vld [vmem:[%s2 + $0xc0] sm:$0xff]
  %v1512 = vld [vmem:[%s2 + $0xc8] sm:$0xff]
  %v1513 = vld [vmem:[%s2 + $0xd0] sm:$0xff]
  %v1514 = vld [vmem:[%s2 + $0xd8] sm:$0xff]
  %v1515 = vld [vmem:[%s2 + $0xe0] sm:$0xff]
  %v1516 = vld [vmem:[%s2 + $0xe8] sm:$0xff]
  %v1517 = vld [vmem:[%s2 + $0xf0] sm:$0xff]
  %v1518 = vld [vmem:[%s2 + $0xf8] sm:$0xff]
  %v1519 = vld [vmem:[%s2 + $0x100] sm:$0xff]
  %v1520 = vld [vmem:[%s2 + $0x108] sm:$0xff]
  %v1521 = vld [vmem:[%s2 + $0x110] sm:$0xff]
  %v1522 = vld [vmem:[%s2 + $0x118] sm:$0xff]
  %v1523 = vld [vmem:[%s2 + $0x120] sm:$0xff]
  %v1524 = vld [vmem:[%s2 + $0x128] sm:$0xff]
  %v1525 = vld [vmem:[%s2 + $0x130] sm:$0xff]
  %v1526 = vld [vmem:[%s2 + $0x138] sm:$0xff]
  %v1527 = vld [vmem:[%s2 + $0x140] sm:$0xff]
  %v1528 = vld [vmem:[%s2 + $0x148] sm:$0xff]
  %v1529 = vld [vmem:[%s2 + $0x150] sm:$0xff]
  %v1530 = vld [vmem:[%s2 + $0x158] sm:$0xff]
  %v1531 = vld [vmem:[%s2 + $0x160] sm:$0xff]
  %v1532 = vld [vmem:[%s2 + $0x168] sm:$0xff]
  %v1533 = vld [vmem:[%s2 + $0x170] sm:$0xff]
  %v1534 = vld [vmem:[%s2 + $0x178] sm:$0xff]
  %v1535 = vld [vmem:[%s2 + $0x180] sm:$0xff]
  %v1536 = vld [vmem:[%s2 + $0x188] sm:$0xff]
  %v1537 = vld [vmem:[%s2 + $0x190] sm:$0xff]
  %v1538 = vld [vmem:[%s2 + $0x198] sm:$0xff]
  %v1539 = vld [vmem:[%s2 + $0x1a0] sm:$0xff]
  %v1540 = vld [vmem:[%s2 + $0x1a8] sm:$0xff]
  %v1541 = vld [vmem:[%s2 + $0x1b0] sm:$0xff]
  %v1542 = vld [vmem:[%s2 + $0x1b8] sm:$0xff]
  %v1543 = vld [vmem:[%s2 + $0x1c0] sm:$0xff]
  %v1544 = vld [vmem:[%s2 + $0x1c8] sm:$0xff]
  %v1545 = vld [vmem:[%s2 + $0x1d0] sm:$0xff]
  %v1546 = vld [vmem:[%s2 + $0x1d8] sm:$0xff]
  %v1547 = vld [vmem:[%s2 + $0x1e0] sm:$0xff]
  %v1548 = vld [vmem:[%s2 + $0x1e8] sm:$0xff]
  %v1549 = vld [vmem:[%s2 + $0x1f0] sm:$0xff]
  %v1550 = vld [vmem:[%s2 + $0x1f8] sm:$0xff]
  %v1551 = vld [vmem:[%s1] sm:$0xf]
  %v1552 = vld [vmem:[%s1 + $0xc] sm:$0xf]
  %v1553 = vld [vmem:[%s1 + $0x18] sm:$0xf]
  %v1554 = vld [vmem:[%s1 + $0x24] sm:$0xf]
  %v1555 = vld [vmem:[%s1 + $0x30] sm:$0xf]
  %v1556 = vld [vmem:[%s1 + $0x3c] sm:$0xf]
  %v1557 = vld [vmem:[%s1 + $0x48] sm:$0xf]
  %v1558 = vld [vmem:[%s1 + $0x54] sm:$0xf]
  %v1559 = vld [vmem:[%s1 + $0x60] sm:$0xf]
  %v1560 = vld [vmem:[%s1 + $0x6c] sm:$0xf]
  %v1561 = vld [vmem:[%s1 + $0x78] sm:$0xf]
  %v1562 = vld [vmem:[%s1 + $0x84] sm:$0xf]
  %v1563 = vld [vmem:[%s1 + $0x90] sm:$0xf]
  %v1564 = vld [vmem:[%s1 + $0x9c] sm:$0xf]
  %v1565 = vld [vmem:[%s1 + $0xa8] sm:$0xf]
  %v1566 = vld [vmem:[%s1 + $0xb4] sm:$0xf]
  %v1567 = vld [vmem:[%s1 + $0xc0] sm:$0xf]
  %v1568 = vld [vmem:[%s1 + $0xcc] sm:$0xf]
  %v1569 = vld [vmem:[%s1 + $0xd8] sm:$0xf]
  %v1570 = vld [vmem:[%s1 + $0xe4] sm:$0xf]
  %v1571 = vld [vmem:[%s1 + $0xf0] sm:$0xf]
  %v1572 = vld [vmem:[%s1 + $0xfc] sm:$0xf]
  %v1573 = vld [vmem:[%s1 + $0x108] sm:$0xf]
  %v1574 = vld [vmem:[%s1 + $0x114] sm:$0xf]
  %v1575 = vld [vmem:[%s1 + $0x120] sm:$0xf]
  %v1576 = vld [vmem:[%s1 + $0x12c] sm:$0xf]
  %v1577 = vld [vmem:[%s1 + $0x138] sm:$0xf]
  %v1578 = vld [vmem:[%s1 + $0x144] sm:$0xf]
  %v1579 = vld [vmem:[%s1 + $0x150] sm:$0xf]
  %v1580 = vld [vmem:[%s1 + $0x15c] sm:$0xf]
  %v1581 = vld [vmem:[%s1 + $0x168] sm:$0xf]
  %v1582 = vld [vmem:[%s1 + $0x174] sm:$0xf]
  %v1583 = vld [vmem:[%s1 + $0x180] sm:$0xf]
  %v1584 = vld [vmem:[%s1 + $0x18c] sm:$0xf]
  %v1585 = vld [vmem:[%s1 + $0x198] sm:$0xf]
  %v1586 = vld [vmem:[%s1 + $0x1a4] sm:$0xf]
  %v1587 = vld [vmem:[%s1 + $0x1b0] sm:$0xf]
  %v1588 = vld [vmem:[%s1 + $0x1bc] sm:$0xf]
  %v1589 = vld [vmem:[%s1 + $0x1c8] sm:$0xf]
  %v1590 = vld [vmem:[%s1 + $0x1d4] sm:$0xf]
  %v1591 = vld [vmem:[%s1 + $0x1e0] sm:$0xf]
  %v1592 = vld [vmem:[%s1 + $0x1ec] sm:$0xf]
  %v1593 = vld [vmem:[%s1 + $0x1f8] sm:$0xf]
  %v1594 = vld [vmem:[%s1 + $0x204] sm:$0xf]
  %v1595 = vld [vmem:[%s1 + $0x210] sm:$0xf]
  %v1596 = vld [vmem:[%s1 + $0x21c] sm:$0xf]
  %v1597 = vld [vmem:[%s1 + $0x228] sm:$0xf]
  %v1598 = vld [vmem:[%s1 + $0x234] sm:$0xf]
  %v1599 = vld [vmem:[%s1 + $0x240] sm:$0xf]
  %v1600 = vld [vmem:[%s1 + $0x24c] sm:$0xf]
  %v1601 = vld [vmem:[%s1 + $0x258] sm:$0xf]
  %v1602 = vld [vmem:[%s1 + $0x264] sm:$0xf]
  %v1603 = vld [vmem:[%s1 + $0x270] sm:$0xf]
  %v1604 = vld [vmem:[%s1 + $0x27c] sm:$0xf]
  %v1605 = vld [vmem:[%s1 + $0x288] sm:$0xf]
  %v1606 = vld [vmem:[%s1 + $0x294] sm:$0xf]
  %v1607 = vld [vmem:[%s1 + $0x2a0] sm:$0xf]
  %v1608 = vld [vmem:[%s1 + $0x2ac] sm:$0xf]
  %v1609 = vld [vmem:[%s1 + $0x2b8] sm:$0xf]
  %v1610 = vld [vmem:[%s1 + $0x2c4] sm:$0xf]
  %v1611 = vld [vmem:[%s1 + $0x2d0] sm:$0xf]
  %v1612 = vld [vmem:[%s1 + $0x2dc] sm:$0xf]
  %v1613 = vld [vmem:[%s1 + $0x2e8] sm:$0xf]
  %v1614 = vld [vmem:[%s1 + $0x2f4] sm:$0xf]
  %v1615 = vld [vmem:[%s1 + $0x300] sm:$0xf]
  %v1616 = vld [vmem:[%s1 + $0x30c] sm:$0xf]
  %v1617 = vld [vmem:[%s1 + $0x318] sm:$0xf]
  %v1618 = vld [vmem:[%s1 + $0x324] sm:$0xf]
  %v1619 = vld [vmem:[%s1 + $0x330] sm:$0xf]
  %v1620 = vld [vmem:[%s1 + $0x33c] sm:$0xf]
  %v1621 = vld [vmem:[%s1 + $0x348] sm:$0xf]
  %v1622 = vld [vmem:[%s1 + $0x354] sm:$0xf]
  %v1623 = vld [vmem:[%s1 + $0x360] sm:$0xf]
  %v1624 = vld [vmem:[%s1 + $0x36c] sm:$0xf]
  %v1625 = vld [vmem:[%s1 + $0x378] sm:$0xf]
  %v1626 = vld [vmem:[%s1 + $0x384] sm:$0xf]
  %v1627 = vld [vmem:[%s1 + $0x390] sm:$0xf]
  %v1628 = vld [vmem:[%s1 + $0x39c] sm:$0xf]
  %v1629 = vld [vmem:[%s1 + $0x3a8] sm:$0xf]
  %v1630 = vld [vmem:[%s1 + $0x3b4] sm:$0xf]
  %v1631 = vld [vmem:[%s1 + $0x3c0] sm:$0xf]
  %v1632 = vld [vmem:[%s1 + $0x3cc] sm:$0xf]
  %v1633 = vld [vmem:[%s1 + $0x3d8] sm:$0xf]
  %v1634 = vld [vmem:[%s1 + $0x3e4] sm:$0xf]
  %v1635 = vld [vmem:[%s1 + $0x3f0] sm:$0xf]
  %v1636 = vld [vmem:[%s1 + $0x3fc] sm:$0xf]
  %v1637 = vld [vmem:[%s1 + $0x408] sm:$0xf]
  %v1638 = vld [vmem:[%s1 + $0x414] sm:$0xf]
  %v1639 = vld [vmem:[%s1 + $0x420] sm:$0xf]
  %v1640 = vld [vmem:[%s1 + $0x42c] sm:$0xf]
  %v1641 = vld [vmem:[%s1 + $0x438] sm:$0xf]
  %v1642 = vld [vmem:[%s1 + $0x444] sm:$0xf]
  %v1643 = vld [vmem:[%s1 + $0x450] sm:$0xf]
  %v1644 = vld [vmem:[%s1 + $0x45c] sm:$0xf]
  %v1645 = vld [vmem:[%s1 + $0x468] sm:$0xf]
  %v1646 = vld [vmem:[%s1 + $0x474] sm:$0xf]
  %v1647 = vld [vmem:[%s1 + $0x480] sm:$0xf]
  %v1648 = vld [vmem:[%s1 + $0x48c] sm:$0xf]
  %v1649 = vld [vmem:[%s1 + $0x498] sm:$0xf]
  %v1650 = vld [vmem:[%s1 + $0x4a4] sm:$0xf]
  %v1651 = vld [vmem:[%s1 + $0x4b0] sm:$0xf]
  %v1652 = vld [vmem:[%s1 + $0x4bc] sm:$0xf]
  %v1653 = vld [vmem:[%s1 + $0x4c8] sm:$0xf]
  %v1654 = vld [vmem:[%s1 + $0x4d4] sm:$0xf]
  %v1655 = vld [vmem:[%s1 + $0x4e0] sm:$0xf]
  %v1656 = vld [vmem:[%s1 + $0x4ec] sm:$0xf]
  %v1657 = vld [vmem:[%s1 + $0x4f8] sm:$0xf]
  %v1658 = vld [vmem:[%s1 + $0x504] sm:$0xf]
  %v1659 = vld [vmem:[%s1 + $0x510] sm:$0xf]
  %v1660 = vld [vmem:[%s1 + $0x51c] sm:$0xf]
  %v1661 = vld [vmem:[%s1 + $0x528] sm:$0xf]
  %v1662 = vld [vmem:[%s1 + $0x534] sm:$0xf]
  %v1663 = vld [vmem:[%s1 + $0x540] sm:$0xf]
  %v1664 = vld [vmem:[%s1 + $0x54c] sm:$0xf]
  %v1665 = vld [vmem:[%s1 + $0x558] sm:$0xf]
  %v1666 = vld [vmem:[%s1 + $0x564] sm:$0xf]
  %v1667 = vld [vmem:[%s1 + $0x570] sm:$0xf]
  %v1668 = vld [vmem:[%s1 + $0x57c] sm:$0xf]
  %v1669 = vld [vmem:[%s1 + $0x588] sm:$0xf]
  %v1670 = vld [vmem:[%s1 + $0x594] sm:$0xf]
  %v1671 = vld [vmem:[%s1 + $0x5a0] sm:$0xf]
  %v1672 = vld [vmem:[%s1 + $0x5ac] sm:$0xf]
  %v1673 = vld [vmem:[%s1 + $0x5b8] sm:$0xf]
  %v1674 = vld [vmem:[%s1 + $0x5c4] sm:$0xf]
  %v1675 = vld [vmem:[%s1 + $0x5d0] sm:$0xf]
  %v1676 = vld [vmem:[%s1 + $0x5dc] sm:$0xf]
  %v1677 = vld [vmem:[%s1 + $0x5e8] sm:$0xf]
  %v1678 = vld [vmem:[%s1 + $0x5f4] sm:$0xf]
  %v1807 = vunpack.c.l.b16 %v1551
  %v1808 = vunpack.c.l.b16 %v1552
  %v1809 = vunpack.c.l.b16 %v1553
  %v1810 = vunpack.c.l.b16 %v1554
  %v1811 = vunpack.c.l.b16 %v1555
  %v1812 = vunpack.c.l.b16 %v1556
  %v1813 = vunpack.c.l.b16 %v1557
  %v1814 = vunpack.c.l.b16 %v1558
  %v1815 = vunpack.c.l.b16 %v1559
  %v1816 = vunpack.c.l.b16 %v1560
  %v1817 = vunpack.c.l.b16 %v1561
  %v1818 = vunpack.c.l.b16 %v1562
  %v1819 = vunpack.c.l.b16 %v1563
  %v1820 = vunpack.c.l.b16 %v1564
  %v1821 = vunpack.c.l.b16 %v1565
  %v1822 = vunpack.c.l.b16 %v1566
  %v1823 = vunpack.c.l.b16 %v1567
  %v1824 = vunpack.c.l.b16 %v1568
  %v1825 = vunpack.c.l.b16 %v1569
  %v1826 = vunpack.c.l.b16 %v1570
  %v1827 = vunpack.c.l.b16 %v1571
  %v1828 = vunpack.c.l.b16 %v1572
  %v1829 = vunpack.c.l.b16 %v1573
  %v1830 = vunpack.c.l.b16 %v1574
  %v1831 = vunpack.c.l.b16 %v1575
  %v1832 = vunpack.c.l.b16 %v1576
  %v1833 = vunpack.c.l.b16 %v1577
  %v1834 = vunpack.c.l.b16 %v1578
  %v1835 = vunpack.c.l.b16 %v1579
  %v1836 = vunpack.c.l.b16 %v1580
  %v1837 = vunpack.c.l.b16 %v1581
  %v1838 = vunpack.c.l.b16 %v1582
  %v1839 = vunpack.c.l.b16 %v1583
  %v1840 = vunpack.c.l.b16 %v1584
  %v1841 = vunpack.c.l.b16 %v1585
  %v1842 = vunpack.c.l.b16 %v1586
  %v1843 = vunpack.c.l.b16 %v1587
  %v1844 = vunpack.c.l.b16 %v1588
  %v1845 = vunpack.c.l.b16 %v1589
  %v1846 = vunpack.c.l.b16 %v1590
  %v1847 = vunpack.c.l.b16 %v1591
  %v1848 = vunpack.c.l.b16 %v1592
  %v1849 = vunpack.c.l.b16 %v1593
  %v1850 = vunpack.c.l.b16 %v1594
  %v1851 = vunpack.c.l.b16 %v1595
  %v1852 = vunpack.c.l.b16 %v1596
  %v1853 = vunpack.c.l.b16 %v1597
  %v1854 = vunpack.c.l.b16 %v1598
  %v1855 = vunpack.c.l.b16 %v1599
  %v1856 = vunpack.c.l.b16 %v1600
  %v1857 = vunpack.c.l.b16 %v1601
  %v1858 = vunpack.c.l.b16 %v1602
  %v1859 = vunpack.c.l.b16 %v1603
  %v1860 = vunpack.c.l.b16 %v1604
  %v1861 = vunpack.c.l.b16 %v1605
  %v1862 = vunpack.c.l.b16 %v1606
  %v1863 = vunpack.c.l.b16 %v1607
  %v1864 = vunpack.c.l.b16 %v1608
  %v1865 = vunpack.c.l.b16 %v1609
  %v1866 = vunpack.c.l.b16 %v1610
  %v1867 = vunpack.c.l.b16 %v1611
  %v1868 = vunpack.c.l.b16 %v1612
  %v1869 = vunpack.c.l.b16 %v1613
  %v1870 = vunpack.c.l.b16 %v1614
  %v1871 = vunpack.c.l.b16 %v1615
  %v1872 = vunpack.c.l.b16 %v1616
  %v1873 = vunpack.c.l.b16 %v1617
  %v1874 = vunpack.c.l.b16 %v1618
  %v1875 = vunpack.c.l.b16 %v1619
  %v1876 = vunpack.c.l.b16 %v1620
  %v1877 = vunpack.c.l.b16 %v1621
  %v1878 = vunpack.c.l.b16 %v1622
  %v1879 = vunpack.c.l.b16 %v1623
  %v1880 = vunpack.c.l.b16 %v1624
  %v1881 = vunpack.c.l.b16 %v1625
  %v1882 = vunpack.c.l.b16 %v1626
  %v1883 = vunpack.c.l.b16 %v1627
  %v1884 = vunpack.c.l.b16 %v1628
  %v1885 = vunpack.c.l.b16 %v1629
  %v1886 = vunpack.c.l.b16 %v1630
  %v1887 = vunpack.c.l.b16 %v1631
  %v1888 = vunpack.c.l.b16 %v1632
  %v1889 = vunpack.c.l.b16 %v1633
  %v1890 = vunpack.c.l.b16 %v1634
  %v1891 = vunpack.c.l.b16 %v1635
  %v1892 = vunpack.c.l.b16 %v1636
  %v1893 = vunpack.c.l.b16 %v1637
  %v1894 = vunpack.c.l.b16 %v1638
  %v1895 = vunpack.c.l.b16 %v1639
  %v1896 = vunpack.c.l.b16 %v1640
  %v1897 = vunpack.c.l.b16 %v1641
  %v1898 = vunpack.c.l.b16 %v1642
  %v1899 = vunpack.c.l.b16 %v1643
  %v1900 = vunpack.c.l.b16 %v1644
  %v1901 = vunpack.c.l.b16 %v1645
  %v1902 = vunpack.c.l.b16 %v1646
  %v1903 = vunpack.c.l.b16 %v1647
  %v1904 = vunpack.c.l.b16 %v1648
  %v1905 = vunpack.c.l.b16 %v1649
  %v1906 = vunpack.c.l.b16 %v1650
  %v1907 = vunpack.c.l.b16 %v1651
  %v1908 = vunpack.c.l.b16 %v1652
  %v1909 = vunpack.c.l.b16 %v1653
  %v1910 = vunpack.c.l.b16 %v1654
  %v1911 = vunpack.c.l.b16 %v1655
  %v1912 = vunpack.c.l.b16 %v1656
  %v1913 = vunpack.c.l.b16 %v1657
  %v1914 = vunpack.c.l.b16 %v1658
  %v1915 = vunpack.c.l.b16 %v1659
  %v1916 = vunpack.c.l.b16 %v1660
  %v1917 = vunpack.c.l.b16 %v1661
  %v1918 = vunpack.c.l.b16 %v1662
  %v1919 = vunpack.c.l.b16 %v1663
  %v1920 = vunpack.c.l.b16 %v1664
  %v1921 = vunpack.c.l.b16 %v1665
  %v1922 = vunpack.c.l.b16 %v1666
  %v1923 = vunpack.c.l.b16 %v1667
  %v1924 = vunpack.c.l.b16 %v1668
  %v1925 = vunpack.c.l.b16 %v1669
  %v1926 = vunpack.c.l.b16 %v1670
  %v1927 = vunpack.c.l.b16 %v1671
  %v1928 = vunpack.c.l.b16 %v1672
  %v1929 = vunpack.c.l.b16 %v1673
  %v1930 = vunpack.c.l.b16 %v1674
  %v1931 = vunpack.c.l.b16 %v1675
  %v1932 = vunpack.c.l.b16 %v1676
  %v1933 = vunpack.c.l.b16 %v1677
  %v1934 = vunpack.c.l.b16 %v1678
  %v1935 = vpack.c.b16 %v1808, %v1807
  %v1936 = vpack.c.b16 %v1810, %v1809
  %v1937 = vpack.c.b16 %v1812, %v1811
  %v1938 = vpack.c.b16 %v1814, %v1813
  %v1939 = vpack.c.b16 %v1816, %v1815
  %v1940 = vpack.c.b16 %v1818, %v1817
  %v1941 = vpack.c.b16 %v1820, %v1819
  %v1942 = vpack.c.b16 %v1822, %v1821
  %v1943 = vpack.c.b16 %v1824, %v1823
  %v1944 = vpack.c.b16 %v1826, %v1825
  %v1945 = vpack.c.b16 %v1828, %v1827
  %v1946 = vpack.c.b16 %v1830, %v1829
  %v1947 = vpack.c.b16 %v1832, %v1831
  %v1948 = vpack.c.b16 %v1834, %v1833
  %v1949 = vpack.c.b16 %v1836, %v1835
  %v1950 = vpack.c.b16 %v1838, %v1837
  %v1951 = vpack.c.b16 %v1840, %v1839
  %v1952 = vpack.c.b16 %v1842, %v1841
  %v1953 = vpack.c.b16 %v1844, %v1843
  %v1954 = vpack.c.b16 %v1846, %v1845
  %v1955 = vpack.c.b16 %v1848, %v1847
  %v1956 = vpack.c.b16 %v1850, %v1849
  %v1957 = vpack.c.b16 %v1852, %v1851
  %v1958 = vpack.c.b16 %v1854, %v1853
  %v1959 = vpack.c.b16 %v1856, %v1855
  %v1960 = vpack.c.b16 %v1858, %v1857
  %v1961 = vpack.c.b16 %v1860, %v1859
  %v1962 = vpack.c.b16 %v1862, %v1861
  %v1963 = vpack.c.b16 %v1864, %v1863
  %v1964 = vpack.c.b16 %v1866, %v1865
  %v1965 = vpack.c.b16 %v1868, %v1867
  %v1966 = vpack.c.b16 %v1870, %v1869
  %v1967 = vpack.c.b16 %v1872, %v1871
  %v1968 = vpack.c.b16 %v1874, %v1873
  %v1969 = vpack.c.b16 %v1876, %v1875
  %v1970 = vpack.c.b16 %v1878, %v1877
  %v1971 = vpack.c.b16 %v1880, %v1879
  %v1972 = vpack.c.b16 %v1882, %v1881
  %v1973 = vpack.c.b16 %v1884, %v1883
  %v1974 = vpack.c.b16 %v1886, %v1885
  %v1975 = vpack.c.b16 %v1888, %v1887
  %v1976 = vpack.c.b16 %v1890, %v1889
  %v1977 = vpack.c.b16 %v1892, %v1891
  %v1978 = vpack.c.b16 %v1894, %v1893
  %v1979 = vpack.c.b16 %v1896, %v1895
  %v1980 = vpack.c.b16 %v1898, %v1897
  %v1981 = vpack.c.b16 %v1900, %v1899
  %v1982 = vpack.c.b16 %v1902, %v1901
  %v1983 = vpack.c.b16 %v1904, %v1903
  %v1984 = vpack.c.b16 %v1906, %v1905
  %v1985 = vpack.c.b16 %v1908, %v1907
  %v1986 = vpack.c.b16 %v1910, %v1909
  %v1987 = vpack.c.b16 %v1912, %v1911
  %v1988 = vpack.c.b16 %v1914, %v1913
  %v1989 = vpack.c.b16 %v1916, %v1915
  %v1990 = vpack.c.b16 %v1918, %v1917
  %v1991 = vpack.c.b16 %v1920, %v1919
  %v1992 = vpack.c.b16 %v1922, %v1921
  %v1993 = vpack.c.b16 %v1924, %v1923
  %v1994 = vpack.c.b16 %v1926, %v1925
  %v1995 = vpack.c.b16 %v1928, %v1927
  %v1996 = vpack.c.b16 %v1930, %v1929
  %v1997 = vpack.c.b16 %v1932, %v1931
  %v1998 = vpack.c.b16 %v1934, %v1933
  %2063 = vmatpush.bf16.msra.mxu0 %v1942
  %2064 = vmatpush.bf16.msra.mxu0 %v1941
  %2065 = vmatpush.bf16.msra.mxu0 %v1940
  %2066 = vmatpush.bf16.msra.mxu0 %v1939
  %2067 = vmatpush.bf16.msra.mxu0 %v1938
  %2068 = vmatpush.bf16.msra.mxu0 %v1937
  %2069 = vmatpush.bf16.msra.mxu0 %v1936
  %2070 = vmatpush.bf16.msra.mxu0 %v1935
  %2071 = vmatmul.bf16.gmra.mxu0 %v1231
  %v2072 = vpop.f32.mrf.mxu0
  %v2073 = vadd.f32 0.0, %v2072
  %v2074 = vpop.f32.mrf.mxu0
  %v2075 = vadd.f32 0.0, %v2074
  %2076 = vmatmul.bf16.gmra.mxu0 %v1239
  %v2077 = vpop.f32.mrf.mxu0
  %v2078 = vadd.f32 0.0, %v2077
  %v2079 = vpop.f32.mrf.mxu0
  %v2080 = vadd.f32 0.0, %v2079
  %2081 = vmatmul.bf16.gmra.mxu0 %v1247
  %v2082 = vpop.f32.mrf.mxu0
  %v2083 = vadd.f32 0.0, %v2082
  %v2084 = vpop.f32.mrf.mxu0
  %v2085 = vadd.f32 0.0, %v2084
  %2086 = vmatmul.bf16.gmra.mxu0 %v1255
  %v2087 = vpop.f32.mrf.mxu0
  %v2088 = vadd.f32 0.0, %v2087
  %v2089 = vpop.f32.mrf.mxu0
  %v2090 = vadd.f32 0.0, %v2089
  %2091 = vmatmul.bf16.gmra.mxu0 %v1263
  %v2092 = vpop.f32.mrf.mxu0
  %v2093 = vadd.f32 0.0, %v2092
  %v2094 = vpop.f32.mrf.mxu0
  %v2095 = vadd.f32 0.0, %v2094
  %2096 = vmatmul.bf16.gmra.mxu0 %v1271
  %v2097 = vpop.f32.mrf.mxu0
  %v2098 = vadd.f32 0.0, %v2097
  %v2099 = vpop.f32.mrf.mxu0
  %v2100 = vadd.f32 0.0, %v2099
  %2101 = vmatmul.bf16.gmra.mxu0 %v1279
  %v2102 = vpop.f32.mrf.mxu0
  %v2103 = vadd.f32 0.0, %v2102
  %v2104 = vpop.f32.mrf.mxu0
  %v2105 = vadd.f32 0.0, %v2104
  %2106 = vmatmul.bf16.gmra.mxu0 %v1287
  %v2107 = vpop.f32.mrf.mxu0
  %v2108 = vadd.f32 0.0, %v2107
  %v2109 = vpop.f32.mrf.mxu0
  %v2110 = vadd.f32 0.0, %v2109
  %2111 = vmatmul.bf16.gmra.mxu0 %v1295
  %v2112 = vpop.f32.mrf.mxu0
  %v2113 = vadd.f32 0.0, %v2112
  %v2114 = vpop.f32.mrf.mxu0
  %v2115 = vadd.f32 0.0, %v2114
  %2116 = vmatmul.bf16.gmra.mxu0 %v1303
  %v2117 = vpop.f32.mrf.mxu0
  %v2118 = vadd.f32 0.0, %v2117
  %v2119 = vpop.f32.mrf.mxu0
  %v2120 = vadd.f32 0.0, %v2119
  %2121 = vmatmul.bf16.gmra.mxu0 %v1311
  %v2122 = vpop.f32.mrf.mxu0
  %v2123 = vadd.f32 0.0, %v2122
  %v2124 = vpop.f32.mrf.mxu0
  %v2125 = vadd.f32 0.0, %v2124
  %2126 = vmatmul.bf16.gmra.mxu0 %v1319
  %v2127 = vpop.f32.mrf.mxu0
  %v2128 = vadd.f32 0.0, %v2127
  %v2129 = vpop.f32.mrf.mxu0
  %v2130 = vadd.f32 0.0, %v2129
  %2131 = vmatmul.bf16.gmra.mxu0 %v1327
  %v2132 = vpop.f32.mrf.mxu0
  %v2133 = vadd.f32 0.0, %v2132
  %v2134 = vpop.f32.mrf.mxu0
  %v2135 = vadd.f32 0.0, %v2134
  %2136 = vmatmul.bf16.gmra.mxu0 %v1335
  %v2137 = vpop.f32.mrf.mxu0
  %v2138 = vadd.f32 0.0, %v2137
  %v2139 = vpop.f32.mrf.mxu0
  %v2140 = vadd.f32 0.0, %v2139
  %2141 = vmatmul.bf16.gmra.mxu0 %v1343
  %v2142 = vpop.f32.mrf.mxu0
  %v2143 = vadd.f32 0.0, %v2142
  %v2144 = vpop.f32.mrf.mxu0
  %v2145 = vadd.f32 0.0, %v2144
  %2146 = vmatmul.bf16.gmra.mxu0 %v1351
  %v2147 = vpop.f32.mrf.mxu0
  %v2148 = vadd.f32 0.0, %v2147
  %v2149 = vpop.f32.mrf.mxu0
  %v2150 = vadd.f32 0.0, %v2149
  %2151 = vmatmul.bf16.gmra.mxu0 %v1359
  %v2152 = vpop.f32.mrf.mxu0
  %v2153 = vadd.f32 0.0, %v2152
  %v2154 = vpop.f32.mrf.mxu0
  %v2155 = vadd.f32 0.0, %v2154
  %2156 = vmatmul.bf16.gmra.mxu0 %v1367
  %v2157 = vpop.f32.mrf.mxu0
  %v2158 = vadd.f32 0.0, %v2157
  %v2159 = vpop.f32.mrf.mxu0
  %v2160 = vadd.f32 0.0, %v2159
  %2161 = vmatmul.bf16.gmra.mxu0 %v1375
  %v2162 = vpop.f32.mrf.mxu0
  %v2163 = vadd.f32 0.0, %v2162
  %v2164 = vpop.f32.mrf.mxu0
  %v2165 = vadd.f32 0.0, %v2164
  %2166 = vmatmul.bf16.gmra.mxu0 %v1383
  %v2167 = vpop.f32.mrf.mxu0
  %v2168 = vadd.f32 0.0, %v2167
  %v2169 = vpop.f32.mrf.mxu0
  %v2170 = vadd.f32 0.0, %v2169
  %2171 = vmatmul.bf16.gmra.mxu0 %v1391
  %v2172 = vpop.f32.mrf.mxu0
  %v2173 = vadd.f32 0.0, %v2172
  %v2174 = vpop.f32.mrf.mxu0
  %v2175 = vadd.f32 0.0, %v2174
  %2176 = vmatmul.bf16.gmra.mxu0 %v1399
  %v2177 = vpop.f32.mrf.mxu0
  %v2178 = vadd.f32 0.0, %v2177
  %v2179 = vpop.f32.mrf.mxu0
  %v2180 = vadd.f32 0.0, %v2179
  %2181 = vmatmul.bf16.gmra.mxu0 %v1407
  %v2182 = vpop.f32.mrf.mxu0
  %v2183 = vadd.f32 0.0, %v2182
  %v2184 = vpop.f32.mrf.mxu0
  %v2185 = vadd.f32 0.0, %v2184
  %2186 = vmatmul.bf16.gmra.mxu0 %v1415
  %v2187 = vpop.f32.mrf.mxu0
  %v2188 = vadd.f32 0.0, %v2187
  %v2189 = vpop.f32.mrf.mxu0
  %v2190 = vadd.f32 0.0, %v2189
  %2191 = vmatmul.bf16.gmra.mxu0 %v1423
  %v2192 = vpop.f32.mrf.mxu0
  %v2193 = vadd.f32 0.0, %v2192
  %v2194 = vpop.f32.mrf.mxu0
  %v2195 = vadd.f32 0.0, %v2194
  %2196 = vmatmul.bf16.gmra.mxu0 %v1431
  %v2197 = vpop.f32.mrf.mxu0
  %v2198 = vadd.f32 0.0, %v2197
  %v2199 = vpop.f32.mrf.mxu0
  %v2200 = vadd.f32 0.0, %v2199
  %2201 = vmatmul.bf16.gmra.mxu0 %v1439
  %v2202 = vpop.f32.mrf.mxu0
  %v2203 = vadd.f32 0.0, %v2202
  %v2204 = vpop.f32.mrf.mxu0
  %v2205 = vadd.f32 0.0, %v2204
  %2206 = vmatmul.bf16.gmra.mxu0 %v1447
  %v2207 = vpop.f32.mrf.mxu0
  %v2208 = vadd.f32 0.0, %v2207
  %v2209 = vpop.f32.mrf.mxu0
  %v2210 = vadd.f32 0.0, %v2209
  %2211 = vmatmul.bf16.gmra.mxu0 %v1455
  %v2212 = vpop.f32.mrf.mxu0
  %v2213 = vadd.f32 0.0, %v2212
  %v2214 = vpop.f32.mrf.mxu0
  %v2215 = vadd.f32 0.0, %v2214
  %2216 = vmatmul.bf16.gmra.mxu0 %v1463
  %v2217 = vpop.f32.mrf.mxu0
  %v2218 = vadd.f32 0.0, %v2217
  %v2219 = vpop.f32.mrf.mxu0
  %v2220 = vadd.f32 0.0, %v2219
  %2221 = vmatmul.bf16.gmra.mxu0 %v1471
  %v2222 = vpop.f32.mrf.mxu0
  %v2223 = vadd.f32 0.0, %v2222
  %v2224 = vpop.f32.mrf.mxu0
  %v2225 = vadd.f32 0.0, %v2224
  %2226 = vmatmul.bf16.gmra.mxu0 %v1479
  %v2227 = vpop.f32.mrf.mxu0
  %v2228 = vadd.f32 0.0, %v2227
  %v2229 = vpop.f32.mrf.mxu0
  %v2230 = vadd.f32 0.0, %v2229
  %2231 = vdwg.mxu0
  %2232 = vmatpush.bf16.msra.mxu0 %v1950
  %2233 = vmatpush.bf16.msra.mxu0 %v1949
  %2234 = vmatpush.bf16.msra.mxu0 %v1948
  %2235 = vmatpush.bf16.msra.mxu0 %v1947
  %2236 = vmatpush.bf16.msra.mxu0 %v1946
  %2237 = vmatpush.bf16.msra.mxu0 %v1945
  %2238 = vmatpush.bf16.msra.mxu0 %v1944
  %2239 = vmatpush.bf16.msra.mxu0 %v1943
  %2240 = vmatmul.bf16.gmra.mxu0 %v1232
  %v2241 = vpop.f32.mrf.mxu0
  %v2242 = vadd.f32 %v2073, %v2241
  %v2243 = vpop.f32.mrf.mxu0
  %v2244 = vadd.f32 %v2075, %v2243
  %2245 = vmatmul.bf16.gmra.mxu0 %v1240
  %v2246 = vpop.f32.mrf.mxu0
  %v2247 = vadd.f32 %v2078, %v2246
  %v2248 = vpop.f32.mrf.mxu0
  %v2249 = vadd.f32 %v2080, %v2248
  %2250 = vmatmul.bf16.gmra.mxu0 %v1248
  %v2251 = vpop.f32.mrf.mxu0
  %v2252 = vadd.f32 %v2083, %v2251
  %v2253 = vpop.f32.mrf.mxu0
  %v2254 = vadd.f32 %v2085, %v2253
  %2255 = vmatmul.bf16.gmra.mxu0 %v1256
  %v2256 = vpop.f32.mrf.mxu0
  %v2257 = vadd.f32 %v2088, %v2256
  %v2258 = vpop.f32.mrf.mxu0
  %v2259 = vadd.f32 %v2090, %v2258
  %2260 = vmatmul.bf16.gmra.mxu0 %v1264
  %v2261 = vpop.f32.mrf.mxu0
  %v2262 = vadd.f32 %v2093, %v2261
  %v2263 = vpop.f32.mrf.mxu0
  %v2264 = vadd.f32 %v2095, %v2263
  %2265 = vmatmul.bf16.gmra.mxu0 %v1272
  %v2266 = vpop.f32.mrf.mxu0
  %v2267 = vadd.f32 %v2098, %v2266
  %v2268 = vpop.f32.mrf.mxu0
  %v2269 = vadd.f32 %v2100, %v2268
  %2270 = vmatmul.bf16.gmra.mxu0 %v1280
  %v2271 = vpop.f32.mrf.mxu0
  %v2272 = vadd.f32 %v2103, %v2271
  %v2273 = vpop.f32.mrf.mxu0
  %v2274 = vadd.f32 %v2105, %v2273
  %2275 = vmatmul.bf16.gmra.mxu0 %v1288
  %v2276 = vpop.f32.mrf.mxu0
  %v2277 = vadd.f32 %v2108, %v2276
  %v2278 = vpop.f32.mrf.mxu0
  %v2279 = vadd.f32 %v2110, %v2278
  %2280 = vmatmul.bf16.gmra.mxu0 %v1296
  %v2281 = vpop.f32.mrf.mxu0
  %v2282 = vadd.f32 %v2113, %v2281
  %v2283 = vpop.f32.mrf.mxu0
  %v2284 = vadd.f32 %v2115, %v2283
  %2285 = vmatmul.bf16.gmra.mxu0 %v1304
  %v2286 = vpop.f32.mrf.mxu0
  %v2287 = vadd.f32 %v2118, %v2286
  %v2288 = vpop.f32.mrf.mxu0
  %v2289 = vadd.f32 %v2120, %v2288
  %2290 = vmatmul.bf16.gmra.mxu0 %v1312
  %v2291 = vpop.f32.mrf.mxu0
  %v2292 = vadd.f32 %v2123, %v2291
  %v2293 = vpop.f32.mrf.mxu0
  %v2294 = vadd.f32 %v2125, %v2293
  %2295 = vmatmul.bf16.gmra.mxu0 %v1320
  %v2296 = vpop.f32.mrf.mxu0
  %v2297 = vadd.f32 %v2128, %v2296
  %v2298 = vpop.f32.mrf.mxu0
  %v2299 = vadd.f32 %v2130, %v2298
  %2300 = vmatmul.bf16.gmra.mxu0 %v1328
  %v2301 = vpop.f32.mrf.mxu0
  %v2302 = vadd.f32 %v2133, %v2301
  %v2303 = vpop.f32.mrf.mxu0
  %v2304 = vadd.f32 %v2135, %v2303
  %2305 = vmatmul.bf16.gmra.mxu0 %v1336
  %v2306 = vpop.f32.mrf.mxu0
  %v2307 = vadd.f32 %v2138, %v2306
  %v2308 = vpop.f32.mrf.mxu0
  %v2309 = vadd.f32 %v2140, %v2308
  %2310 = vmatmul.bf16.gmra.mxu0 %v1344
  %v2311 = vpop.f32.mrf.mxu0
  %v2312 = vadd.f32 %v2143, %v2311
  %v2313 = vpop.f32.mrf.mxu0
  %v2314 = vadd.f32 %v2145, %v2313
  %2315 = vmatmul.bf16.gmra.mxu0 %v1352
  %v2316 = vpop.f32.mrf.mxu0
  %v2317 = vadd.f32 %v2148, %v2316
  %v2318 = vpop.f32.mrf.mxu0
  %v2319 = vadd.f32 %v2150, %v2318
  %2320 = vmatmul.bf16.gmra.mxu0 %v1360
  %v2321 = vpop.f32.mrf.mxu0
  %v2322 = vadd.f32 %v2153, %v2321
  %v2323 = vpop.f32.mrf.mxu0
  %v2324 = vadd.f32 %v2155, %v2323
  %2325 = vmatmul.bf16.gmra.mxu0 %v1368
  %v2326 = vpop.f32.mrf.mxu0
  %v2327 = vadd.f32 %v2158, %v2326
  %v2328 = vpop.f32.mrf.mxu0
  %v2329 = vadd.f32 %v2160, %v2328
  %2330 = vmatmul.bf16.gmra.mxu0 %v1376
  %v2331 = vpop.f32.mrf.mxu0
  %v2332 = vadd.f32 %v2163, %v2331
  %v2333 = vpop.f32.mrf.mxu0
  %v2334 = vadd.f32 %v2165, %v2333
  %2335 = vmatmul.bf16.gmra.mxu0 %v1384
  %v2336 = vpop.f32.mrf.mxu0
  %v2337 = vadd.f32 %v2168, %v2336
  %v2338 = vpop.f32.mrf.mxu0
  %v2339 = vadd.f32 %v2170, %v2338
  %2340 = vmatmul.bf16.gmra.mxu0 %v1392
  %v2341 = vpop.f32.mrf.mxu0
  %v2342 = vadd.f32 %v2173, %v2341
  %v2343 = vpop.f32.mrf.mxu0
  %v2344 = vadd.f32 %v2175, %v2343
  %2345 = vmatmul.bf16.gmra.mxu0 %v1400
  %v2346 = vpop.f32.mrf.mxu0
  %v2347 = vadd.f32 %v2178, %v2346
  %v2348 = vpop.f32.mrf.mxu0
  %v2349 = vadd.f32 %v2180, %v2348
  %2350 = vmatmul.bf16.gmra.mxu0 %v1408
  %v2351 = vpop.f32.mrf.mxu0
  %v2352 = vadd.f32 %v2183, %v2351
  %v2353 = vpop.f32.mrf.mxu0
  %v2354 = vadd.f32 %v2185, %v2353
  %2355 = vmatmul.bf16.gmra.mxu0 %v1416
  %v2356 = vpop.f32.mrf.mxu0
  %v2357 = vadd.f32 %v2188, %v2356
  %v2358 = vpop.f32.mrf.mxu0
  %v2359 = vadd.f32 %v2190, %v2358
  %2360 = vmatmul.bf16.gmra.mxu0 %v1424
  %v2361 = vpop.f32.mrf.mxu0
  %v2362 = vadd.f32 %v2193, %v2361
  %v2363 = vpop.f32.mrf.mxu0
  %v2364 = vadd.f32 %v2195, %v2363
  %2365 = vmatmul.bf16.gmra.mxu0 %v1432
  %v2366 = vpop.f32.mrf.mxu0
  %v2367 = vadd.f32 %v2198, %v2366
  %v2368 = vpop.f32.mrf.mxu0
  %v2369 = vadd.f32 %v2200, %v2368
  %2370 = vmatmul.bf16.gmra.mxu0 %v1440
  %v2371 = vpop.f32.mrf.mxu0
  %v2372 = vadd.f32 %v2203, %v2371
  %v2373 = vpop.f32.mrf.mxu0
  %v2374 = vadd.f32 %v2205, %v2373
  %2375 = vmatmul.bf16.gmra.mxu0 %v1448
  %v2376 = vpop.f32.mrf.mxu0
  %v2377 = vadd.f32 %v2208, %v2376
  %v2378 = vpop.f32.mrf.mxu0
  %v2379 = vadd.f32 %v2210, %v2378
  %2380 = vmatmul.bf16.gmra.mxu0 %v1456
  %v2381 = vpop.f32.mrf.mxu0
  %v2382 = vadd.f32 %v2213, %v2381
  %v2383 = vpop.f32.mrf.mxu0
  %v2384 = vadd.f32 %v2215, %v2383
  %2385 = vmatmul.bf16.gmra.mxu0 %v1464
  %v2386 = vpop.f32.mrf.mxu0
  %v2387 = vadd.f32 %v2218, %v2386
  %v2388 = vpop.f32.mrf.mxu0
  %v2389 = vadd.f32 %v2220, %v2388
  %2390 = vmatmul.bf16.gmra.mxu0 %v1472
  %v2391 = vpop.f32.mrf.mxu0
  %v2392 = vadd.f32 %v2223, %v2391
  %v2393 = vpop.f32.mrf.mxu0
  %v2394 = vadd.f32 %v2225, %v2393
  %2395 = vmatmul.bf16.gmra.mxu0 %v1480
  %v2396 = vpop.f32.mrf.mxu0
  %v2397 = vadd.f32 %v2228, %v2396
  %v2398 = vpop.f32.mrf.mxu0
  %v2399 = vadd.f32 %v2230, %v2398
  %2400 = vdwg.mxu0
  %2401 = vmatpush.bf16.msra.mxu0 %v1958
  %2402 = vmatpush.bf16.msra.mxu0 %v1957
  %2403 = vmatpush.bf16.msra.mxu0 %v1956
  %2404 = vmatpush.bf16.msra.mxu0 %v1955
  %2405 = vmatpush.bf16.msra.mxu0 %v1954
  %2406 = vmatpush.bf16.msra.mxu0 %v1953
  %2407 = vmatpush.bf16.msra.mxu0 %v1952
  %2408 = vmatpush.bf16.msra.mxu0 %v1951
  %2409 = vmatmul.bf16.gmra.mxu0 %v1233
  %v2410 = vpop.f32.mrf.mxu0
  %v2411 = vadd.f32 %v2242, %v2410
  %v2412 = vpop.f32.mrf.mxu0
  %v2413 = vadd.f32 %v2244, %v2412
  %2414 = vmatmul.bf16.gmra.mxu0 %v1241
  %v2415 = vpop.f32.mrf.mxu0
  %v2416 = vadd.f32 %v2247, %v2415
  %v2417 = vpop.f32.mrf.mxu0
  %v2418 = vadd.f32 %v2249, %v2417
  %2419 = vmatmul.bf16.gmra.mxu0 %v1249
  %v2420 = vpop.f32.mrf.mxu0
  %v2421 = vadd.f32 %v2252, %v2420
  %v2422 = vpop.f32.mrf.mxu0
  %v2423 = vadd.f32 %v2254, %v2422
  %2424 = vmatmul.bf16.gmra.mxu0 %v1257
  %v2425 = vpop.f32.mrf.mxu0
  %v2426 = vadd.f32 %v2257, %v2425
  %v2427 = vpop.f32.mrf.mxu0
  %v2428 = vadd.f32 %v2259, %v2427
  %2429 = vmatmul.bf16.gmra.mxu0 %v1265
  %v2430 = vpop.f32.mrf.mxu0
  %v2431 = vadd.f32 %v2262, %v2430
  %v2432 = vpop.f32.mrf.mxu0
  %v2433 = vadd.f32 %v2264, %v2432
  %2434 = vmatmul.bf16.gmra.mxu0 %v1273
  %v2435 = vpop.f32.mrf.mxu0
  %v2436 = vadd.f32 %v2267, %v2435
  %v2437 = vpop.f32.mrf.mxu0
  %v2438 = vadd.f32 %v2269, %v2437
  %2439 = vmatmul.bf16.gmra.mxu0 %v1281
  %v2440 = vpop.f32.mrf.mxu0
  %v2441 = vadd.f32 %v2272, %v2440
  %v2442 = vpop.f32.mrf.mxu0
  %v2443 = vadd.f32 %v2274, %v2442
  %2444 = vmatmul.bf16.gmra.mxu0 %v1289
  %v2445 = vpop.f32.mrf.mxu0
  %v2446 = vadd.f32 %v2277, %v2445
  %v2447 = vpop.f32.mrf.mxu0
  %v2448 = vadd.f32 %v2279, %v2447
  %2449 = vmatmul.bf16.gmra.mxu0 %v1297
  %v2450 = vpop.f32.mrf.mxu0
  %v2451 = vadd.f32 %v2282, %v2450
  %v2452 = vpop.f32.mrf.mxu0
  %v2453 = vadd.f32 %v2284, %v2452
  %2454 = vmatmul.bf16.gmra.mxu0 %v1305
  %v2455 = vpop.f32.mrf.mxu0
  %v2456 = vadd.f32 %v2287, %v2455
  %v2457 = vpop.f32.mrf.mxu0
  %v2458 = vadd.f32 %v2289, %v2457
  %2459 = vmatmul.bf16.gmra.mxu0 %v1313
  %v2460 = vpop.f32.mrf.mxu0
  %v2461 = vadd.f32 %v2292, %v2460
  %v2462 = vpop.f32.mrf.mxu0
  %v2463 = vadd.f32 %v2294, %v2462
  %2464 = vmatmul.bf16.gmra.mxu0 %v1321
  %v2465 = vpop.f32.mrf.mxu0
  %v2466 = vadd.f32 %v2297, %v2465
  %v2467 = vpop.f32.mrf.mxu0
  %v2468 = vadd.f32 %v2299, %v2467
  %2469 = vmatmul.bf16.gmra.mxu0 %v1329
  %v2470 = vpop.f32.mrf.mxu0
  %v2471 = vadd.f32 %v2302, %v2470
  %v2472 = vpop.f32.mrf.mxu0
  %v2473 = vadd.f32 %v2304, %v2472
  %2474 = vmatmul.bf16.gmra.mxu0 %v1337
  %v2475 = vpop.f32.mrf.mxu0
  %v2476 = vadd.f32 %v2307, %v2475
  %v2477 = vpop.f32.mrf.mxu0
  %v2478 = vadd.f32 %v2309, %v2477
  %2479 = vmatmul.bf16.gmra.mxu0 %v1345
  %v2480 = vpop.f32.mrf.mxu0
  %v2481 = vadd.f32 %v2312, %v2480
  %v2482 = vpop.f32.mrf.mxu0
  %v2483 = vadd.f32 %v2314, %v2482
  %2484 = vmatmul.bf16.gmra.mxu0 %v1353
  %v2485 = vpop.f32.mrf.mxu0
  %v2486 = vadd.f32 %v2317, %v2485
  %v2487 = vpop.f32.mrf.mxu0
  %v2488 = vadd.f32 %v2319, %v2487
  %2489 = vmatmul.bf16.gmra.mxu0 %v1361
  %v2490 = vpop.f32.mrf.mxu0
  %v2491 = vadd.f32 %v2322, %v2490
  %v2492 = vpop.f32.mrf.mxu0
  %v2493 = vadd.f32 %v2324, %v2492
  %2494 = vmatmul.bf16.gmra.mxu0 %v1369
  %v2495 = vpop.f32.mrf.mxu0
  %v2496 = vadd.f32 %v2327, %v2495
  %v2497 = vpop.f32.mrf.mxu0
  %v2498 = vadd.f32 %v2329, %v2497
  %2499 = vmatmul.bf16.gmra.mxu0 %v1377
  %v2500 = vpop.f32.mrf.mxu0
  %v2501 = vadd.f32 %v2332, %v2500
  %v2502 = vpop.f32.mrf.mxu0
  %v2503 = vadd.f32 %v2334, %v2502
  %2504 = vmatmul.bf16.gmra.mxu0 %v1385
  %v2505 = vpop.f32.mrf.mxu0
  %v2506 = vadd.f32 %v2337, %v2505
  %v2507 = vpop.f32.mrf.mxu0
  %v2508 = vadd.f32 %v2339, %v2507
  %2509 = vmatmul.bf16.gmra.mxu0 %v1393
  %v2510 = vpop.f32.mrf.mxu0
  %v2511 = vadd.f32 %v2342, %v2510
  %v2512 = vpop.f32.mrf.mxu0
  %v2513 = vadd.f32 %v2344, %v2512
  %2514 = vmatmul.bf16.gmra.mxu0 %v1401
  %v2515 = vpop.f32.mrf.mxu0
  %v2516 = vadd.f32 %v2347, %v2515
  %v2517 = vpop.f32.mrf.mxu0
  %v2518 = vadd.f32 %v2349, %v2517
  %2519 = vmatmul.bf16.gmra.mxu0 %v1409
  %v2520 = vpop.f32.mrf.mxu0
  %v2521 = vadd.f32 %v2352, %v2520
  %v2522 = vpop.f32.mrf.mxu0
  %v2523 = vadd.f32 %v2354, %v2522
  %2524 = vmatmul.bf16.gmra.mxu0 %v1417
  %v2525 = vpop.f32.mrf.mxu0
  %v2526 = vadd.f32 %v2357, %v2525
  %v2527 = vpop.f32.mrf.mxu0
  %v2528 = vadd.f32 %v2359, %v2527
  %2529 = vmatmul.bf16.gmra.mxu0 %v1425
  %v2530 = vpop.f32.mrf.mxu0
  %v2531 = vadd.f32 %v2362, %v2530
  %v2532 = vpop.f32.mrf.mxu0
  %v2533 = vadd.f32 %v2364, %v2532
  %2534 = vmatmul.bf16.gmra.mxu0 %v1433
  %v2535 = vpop.f32.mrf.mxu0
  %v2536 = vadd.f32 %v2367, %v2535
  %v2537 = vpop.f32.mrf.mxu0
  %v2538 = vadd.f32 %v2369, %v2537
  %2539 = vmatmul.bf16.gmra.mxu0 %v1441
  %v2540 = vpop.f32.mrf.mxu0
  %v2541 = vadd.f32 %v2372, %v2540
  %v2542 = vpop.f32.mrf.mxu0
  %v2543 = vadd.f32 %v2374, %v2542
  %2544 = vmatmul.bf16.gmra.mxu0 %v1449
  %v2545 = vpop.f32.mrf.mxu0
  %v2546 = vadd.f32 %v2377, %v2545
  %v2547 = vpop.f32.mrf.mxu0
  %v2548 = vadd.f32 %v2379, %v2547
  %2549 = vmatmul.bf16.gmra.mxu0 %v1457
  %v2550 = vpop.f32.mrf.mxu0
  %v2551 = vadd.f32 %v2382, %v2550
  %v2552 = vpop.f32.mrf.mxu0
  %v2553 = vadd.f32 %v2384, %v2552
  %2554 = vmatmul.bf16.gmra.mxu0 %v1465
  %v2555 = vpop.f32.mrf.mxu0
  %v2556 = vadd.f32 %v2387, %v2555
  %v2557 = vpop.f32.mrf.mxu0
  %v2558 = vadd.f32 %v2389, %v2557
  %2559 = vmatmul.bf16.gmra.mxu0 %v1473
  %v2560 = vpop.f32.mrf.mxu0
  %v2561 = vadd.f32 %v2392, %v2560
  %v2562 = vpop.f32.mrf.mxu0
  %v2563 = vadd.f32 %v2394, %v2562
  %2564 = vmatmul.bf16.gmra.mxu0 %v1481
  %v2565 = vpop.f32.mrf.mxu0
  %v2566 = vadd.f32 %v2397, %v2565
  %v2567 = vpop.f32.mrf.mxu0
  %v2568 = vadd.f32 %v2399, %v2567
  %2569 = vdwg.mxu0
  %2570 = vmatpush.bf16.msra.mxu0 %v1966
  %2571 = vmatpush.bf16.msra.mxu0 %v1965
  %2572 = vmatpush.bf16.msra.mxu0 %v1964
  %2573 = vmatpush.bf16.msra.mxu0 %v1963
  %2574 = vmatpush.bf16.msra.mxu0 %v1962
  %2575 = vmatpush.bf16.msra.mxu0 %v1961
  %2576 = vmatpush.bf16.msra.mxu0 %v1960
  %2577 = vmatpush.bf16.msra.mxu0 %v1959
  %2578 = vmatmul.bf16.gmra.mxu0 %v1234
  %v2579 = vpop.f32.mrf.mxu0
  %v2580 = vadd.f32 %v2411, %v2579
  %v2581 = vpop.f32.mrf.mxu0
  %v2582 = vadd.f32 %v2413, %v2581
  %2583 = vmatmul.bf16.gmra.mxu0 %v1242
  %v2584 = vpop.f32.mrf.mxu0
  %v2585 = vadd.f32 %v2416, %v2584
  %v2586 = vpop.f32.mrf.mxu0
  %v2587 = vadd.f32 %v2418, %v2586
  %2588 = vmatmul.bf16.gmra.mxu0 %v1250
  %v2589 = vpop.f32.mrf.mxu0
  %v2590 = vadd.f32 %v2421, %v2589
  %v2591 = vpop.f32.mrf.mxu0
  %v2592 = vadd.f32 %v2423, %v2591
  %2593 = vmatmul.bf16.gmra.mxu0 %v1258
  %v2594 = vpop.f32.mrf.mxu0
  %v2595 = vadd.f32 %v2426, %v2594
  %v2596 = vpop.f32.mrf.mxu0
  %v2597 = vadd.f32 %v2428, %v2596
  %2598 = vmatmul.bf16.gmra.mxu0 %v1266
  %v2599 = vpop.f32.mrf.mxu0
  %v2600 = vadd.f32 %v2431, %v2599
  %v2601 = vpop.f32.mrf.mxu0
  %v2602 = vadd.f32 %v2433, %v2601
  %2603 = vmatmul.bf16.gmra.mxu0 %v1274
  %v2604 = vpop.f32.mrf.mxu0
  %v2605 = vadd.f32 %v2436, %v2604
  %v2606 = vpop.f32.mrf.mxu0
  %v2607 = vadd.f32 %v2438, %v2606
  %2608 = vmatmul.bf16.gmra.mxu0 %v1282
  %v2609 = vpop.f32.mrf.mxu0
  %v2610 = vadd.f32 %v2441, %v2609
  %v2611 = vpop.f32.mrf.mxu0
  %v2612 = vadd.f32 %v2443, %v2611
  %2613 = vmatmul.bf16.gmra.mxu0 %v1290
  %v2614 = vpop.f32.mrf.mxu0
  %v2615 = vadd.f32 %v2446, %v2614
  %v2616 = vpop.f32.mrf.mxu0
  %v2617 = vadd.f32 %v2448, %v2616
  %2618 = vmatmul.bf16.gmra.mxu0 %v1298
  %v2619 = vpop.f32.mrf.mxu0
  %v2620 = vadd.f32 %v2451, %v2619
  %v2621 = vpop.f32.mrf.mxu0
  %v2622 = vadd.f32 %v2453, %v2621
  %2623 = vmatmul.bf16.gmra.mxu0 %v1306
  %v2624 = vpop.f32.mrf.mxu0
  %v2625 = vadd.f32 %v2456, %v2624
  %v2626 = vpop.f32.mrf.mxu0
  %v2627 = vadd.f32 %v2458, %v2626
  %2628 = vmatmul.bf16.gmra.mxu0 %v1314
  %v2629 = vpop.f32.mrf.mxu0
  %v2630 = vadd.f32 %v2461, %v2629
  %v2631 = vpop.f32.mrf.mxu0
  %v2632 = vadd.f32 %v2463, %v2631
  %2633 = vmatmul.bf16.gmra.mxu0 %v1322
  %v2634 = vpop.f32.mrf.mxu0
  %v2635 = vadd.f32 %v2466, %v2634
  %v2636 = vpop.f32.mrf.mxu0
  %v2637 = vadd.f32 %v2468, %v2636
  %2638 = vmatmul.bf16.gmra.mxu0 %v1330
  %v2639 = vpop.f32.mrf.mxu0
  %v2640 = vadd.f32 %v2471, %v2639
  %v2641 = vpop.f32.mrf.mxu0
  %v2642 = vadd.f32 %v2473, %v2641
  %2643 = vmatmul.bf16.gmra.mxu0 %v1338
  %v2644 = vpop.f32.mrf.mxu0
  %v2645 = vadd.f32 %v2476, %v2644
  %v2646 = vpop.f32.mrf.mxu0
  %v2647 = vadd.f32 %v2478, %v2646
  %2648 = vmatmul.bf16.gmra.mxu0 %v1346
  %v2649 = vpop.f32.mrf.mxu0
  %v2650 = vadd.f32 %v2481, %v2649
  %v2651 = vpop.f32.mrf.mxu0
  %v2652 = vadd.f32 %v2483, %v2651
  %2653 = vmatmul.bf16.gmra.mxu0 %v1354
  %v2654 = vpop.f32.mrf.mxu0
  %v2655 = vadd.f32 %v2486, %v2654
  %v2656 = vpop.f32.mrf.mxu0
  %v2657 = vadd.f32 %v2488, %v2656
  %2658 = vmatmul.bf16.gmra.mxu0 %v1362
  %v2659 = vpop.f32.mrf.mxu0
  %v2660 = vadd.f32 %v2491, %v2659
  %v2661 = vpop.f32.mrf.mxu0
  %v2662 = vadd.f32 %v2493, %v2661
  %2663 = vmatmul.bf16.gmra.mxu0 %v1370
  %v2664 = vpop.f32.mrf.mxu0
  %v2665 = vadd.f32 %v2496, %v2664
  %v2666 = vpop.f32.mrf.mxu0
  %v2667 = vadd.f32 %v2498, %v2666
  %2668 = vmatmul.bf16.gmra.mxu0 %v1378
  %v2669 = vpop.f32.mrf.mxu0
  %v2670 = vadd.f32 %v2501, %v2669
  %v2671 = vpop.f32.mrf.mxu0
  %v2672 = vadd.f32 %v2503, %v2671
  %2673 = vmatmul.bf16.gmra.mxu0 %v1386
  %v2674 = vpop.f32.mrf.mxu0
  %v2675 = vadd.f32 %v2506, %v2674
  %v2676 = vpop.f32.mrf.mxu0
  %v2677 = vadd.f32 %v2508, %v2676
  %2678 = vmatmul.bf16.gmra.mxu0 %v1394
  %v2679 = vpop.f32.mrf.mxu0
  %v2680 = vadd.f32 %v2511, %v2679
  %v2681 = vpop.f32.mrf.mxu0
  %v2682 = vadd.f32 %v2513, %v2681
  %2683 = vmatmul.bf16.gmra.mxu0 %v1402
  %v2684 = vpop.f32.mrf.mxu0
  %v2685 = vadd.f32 %v2516, %v2684
  %v2686 = vpop.f32.mrf.mxu0
  %v2687 = vadd.f32 %v2518, %v2686
  %2688 = vmatmul.bf16.gmra.mxu0 %v1410
  %v2689 = vpop.f32.mrf.mxu0
  %v2690 = vadd.f32 %v2521, %v2689
  %v2691 = vpop.f32.mrf.mxu0
  %v2692 = vadd.f32 %v2523, %v2691
  %2693 = vmatmul.bf16.gmra.mxu0 %v1418
  %v2694 = vpop.f32.mrf.mxu0
  %v2695 = vadd.f32 %v2526, %v2694
  %v2696 = vpop.f32.mrf.mxu0
  %v2697 = vadd.f32 %v2528, %v2696
  %2698 = vmatmul.bf16.gmra.mxu0 %v1426
  %v2699 = vpop.f32.mrf.mxu0
  %v2700 = vadd.f32 %v2531, %v2699
  %v2701 = vpop.f32.mrf.mxu0
  %v2702 = vadd.f32 %v2533, %v2701
  %2703 = vmatmul.bf16.gmra.mxu0 %v1434
  %v2704 = vpop.f32.mrf.mxu0
  %v2705 = vadd.f32 %v2536, %v2704
  %v2706 = vpop.f32.mrf.mxu0
  %v2707 = vadd.f32 %v2538, %v2706
  %2708 = vmatmul.bf16.gmra.mxu0 %v1442
  %v2709 = vpop.f32.mrf.mxu0
  %v2710 = vadd.f32 %v2541, %v2709
  %v2711 = vpop.f32.mrf.mxu0
  %v2712 = vadd.f32 %v2543, %v2711
  %2713 = vmatmul.bf16.gmra.mxu0 %v1450
  %v2714 = vpop.f32.mrf.mxu0
  %v2715 = vadd.f32 %v2546, %v2714
  %v2716 = vpop.f32.mrf.mxu0
  %v2717 = vadd.f32 %v2548, %v2716
  %2718 = vmatmul.bf16.gmra.mxu0 %v1458
  %v2719 = vpop.f32.mrf.mxu0
  %v2720 = vadd.f32 %v2551, %v2719
  %v2721 = vpop.f32.mrf.mxu0
  %v2722 = vadd.f32 %v2553, %v2721
  %2723 = vmatmul.bf16.gmra.mxu0 %v1466
  %v2724 = vpop.f32.mrf.mxu0
  %v2725 = vadd.f32 %v2556, %v2724
  %v2726 = vpop.f32.mrf.mxu0
  %v2727 = vadd.f32 %v2558, %v2726
  %2728 = vmatmul.bf16.gmra.mxu0 %v1474
  %v2729 = vpop.f32.mrf.mxu0
  %v2730 = vadd.f32 %v2561, %v2729
  %v2731 = vpop.f32.mrf.mxu0
  %v2732 = vadd.f32 %v2563, %v2731
  %2733 = vmatmul.bf16.gmra.mxu0 %v1482
  %v2734 = vpop.f32.mrf.mxu0
  %v2735 = vadd.f32 %v2566, %v2734
  %v2736 = vpop.f32.mrf.mxu0
  %v2737 = vadd.f32 %v2568, %v2736
  %2738 = vdwg.mxu0
  %2739 = vmatpush.bf16.msra.mxu0 %v1974
  %2740 = vmatpush.bf16.msra.mxu0 %v1973
  %2741 = vmatpush.bf16.msra.mxu0 %v1972
  %2742 = vmatpush.bf16.msra.mxu0 %v1971
  %2743 = vmatpush.bf16.msra.mxu0 %v1970
  %2744 = vmatpush.bf16.msra.mxu0 %v1969
  %2745 = vmatpush.bf16.msra.mxu0 %v1968
  %2746 = vmatpush.bf16.msra.mxu0 %v1967
  %2747 = vmatmul.bf16.gmra.mxu0 %v1235
  %v2748 = vpop.f32.mrf.mxu0
  %v2749 = vadd.f32 %v2580, %v2748
  %v2750 = vpop.f32.mrf.mxu0
  %v2751 = vadd.f32 %v2582, %v2750
  %2752 = vmatmul.bf16.gmra.mxu0 %v1243
  %v2753 = vpop.f32.mrf.mxu0
  %v2754 = vadd.f32 %v2585, %v2753
  %v2755 = vpop.f32.mrf.mxu0
  %v2756 = vadd.f32 %v2587, %v2755
  %2757 = vmatmul.bf16.gmra.mxu0 %v1251
  %v2758 = vpop.f32.mrf.mxu0
  %v2759 = vadd.f32 %v2590, %v2758
  %v2760 = vpop.f32.mrf.mxu0
  %v2761 = vadd.f32 %v2592, %v2760
  %2762 = vmatmul.bf16.gmra.mxu0 %v1259
  %v2763 = vpop.f32.mrf.mxu0
  %v2764 = vadd.f32 %v2595, %v2763
  %v2765 = vpop.f32.mrf.mxu0
  %v2766 = vadd.f32 %v2597, %v2765
  %2767 = vmatmul.bf16.gmra.mxu0 %v1267
  %v2768 = vpop.f32.mrf.mxu0
  %v2769 = vadd.f32 %v2600, %v2768
  %v2770 = vpop.f32.mrf.mxu0
  %v2771 = vadd.f32 %v2602, %v2770
  %2772 = vmatmul.bf16.gmra.mxu0 %v1275
  %v2773 = vpop.f32.mrf.mxu0
  %v2774 = vadd.f32 %v2605, %v2773
  %v2775 = vpop.f32.mrf.mxu0
  %v2776 = vadd.f32 %v2607, %v2775
  %2777 = vmatmul.bf16.gmra.mxu0 %v1283
  %v2778 = vpop.f32.mrf.mxu0
  %v2779 = vadd.f32 %v2610, %v2778
  %v2780 = vpop.f32.mrf.mxu0
  %v2781 = vadd.f32 %v2612, %v2780
  %2782 = vmatmul.bf16.gmra.mxu0 %v1291
  %v2783 = vpop.f32.mrf.mxu0
  %v2784 = vadd.f32 %v2615, %v2783
  %v2785 = vpop.f32.mrf.mxu0
  %v2786 = vadd.f32 %v2617, %v2785
  %2787 = vmatmul.bf16.gmra.mxu0 %v1299
  %v2788 = vpop.f32.mrf.mxu0
  %v2789 = vadd.f32 %v2620, %v2788
  %v2790 = vpop.f32.mrf.mxu0
  %v2791 = vadd.f32 %v2622, %v2790
  %2792 = vmatmul.bf16.gmra.mxu0 %v1307
  %v2793 = vpop.f32.mrf.mxu0
  %v2794 = vadd.f32 %v2625, %v2793
  %v2795 = vpop.f32.mrf.mxu0
  %v2796 = vadd.f32 %v2627, %v2795
  %2797 = vmatmul.bf16.gmra.mxu0 %v1315
  %v2798 = vpop.f32.mrf.mxu0
  %v2799 = vadd.f32 %v2630, %v2798
  %v2800 = vpop.f32.mrf.mxu0
  %v2801 = vadd.f32 %v2632, %v2800
  %2802 = vmatmul.bf16.gmra.mxu0 %v1323
  %v2803 = vpop.f32.mrf.mxu0
  %v2804 = vadd.f32 %v2635, %v2803
  %v2805 = vpop.f32.mrf.mxu0
  %v2806 = vadd.f32 %v2637, %v2805
  %2807 = vmatmul.bf16.gmra.mxu0 %v1331
  %v2808 = vpop.f32.mrf.mxu0
  %v2809 = vadd.f32 %v2640, %v2808
  %v2810 = vpop.f32.mrf.mxu0
  %v2811 = vadd.f32 %v2642, %v2810
  %2812 = vmatmul.bf16.gmra.mxu0 %v1339
  %v2813 = vpop.f32.mrf.mxu0
  %v2814 = vadd.f32 %v2645, %v2813
  %v2815 = vpop.f32.mrf.mxu0
  %v2816 = vadd.f32 %v2647, %v2815
  %2817 = vmatmul.bf16.gmra.mxu0 %v1347
  %v2818 = vpop.f32.mrf.mxu0
  %v2819 = vadd.f32 %v2650, %v2818
  %v2820 = vpop.f32.mrf.mxu0
  %v2821 = vadd.f32 %v2652, %v2820
  %2822 = vmatmul.bf16.gmra.mxu0 %v1355
  %v2823 = vpop.f32.mrf.mxu0
  %v2824 = vadd.f32 %v2655, %v2823
  %v2825 = vpop.f32.mrf.mxu0
  %v2826 = vadd.f32 %v2657, %v2825
  %2827 = vmatmul.bf16.gmra.mxu0 %v1363
  %v2828 = vpop.f32.mrf.mxu0
  %v2829 = vadd.f32 %v2660, %v2828
  %v2830 = vpop.f32.mrf.mxu0
  %v2831 = vadd.f32 %v2662, %v2830
  %2832 = vmatmul.bf16.gmra.mxu0 %v1371
  %v2833 = vpop.f32.mrf.mxu0
  %v2834 = vadd.f32 %v2665, %v2833
  %v2835 = vpop.f32.mrf.mxu0
  %v2836 = vadd.f32 %v2667, %v2835
  %2837 = vmatmul.bf16.gmra.mxu0 %v1379
  %v2838 = vpop.f32.mrf.mxu0
  %v2839 = vadd.f32 %v2670, %v2838
  %v2840 = vpop.f32.mrf.mxu0
  %v2841 = vadd.f32 %v2672, %v2840
  %2842 = vmatmul.bf16.gmra.mxu0 %v1387
  %v2843 = vpop.f32.mrf.mxu0
  %v2844 = vadd.f32 %v2675, %v2843
  %v2845 = vpop.f32.mrf.mxu0
  %v2846 = vadd.f32 %v2677, %v2845
  %2847 = vmatmul.bf16.gmra.mxu0 %v1395
  %v2848 = vpop.f32.mrf.mxu0
  %v2849 = vadd.f32 %v2680, %v2848
  %v2850 = vpop.f32.mrf.mxu0
  %v2851 = vadd.f32 %v2682, %v2850
  %2852 = vmatmul.bf16.gmra.mxu0 %v1403
  %v2853 = vpop.f32.mrf.mxu0
  %v2854 = vadd.f32 %v2685, %v2853
  %v2855 = vpop.f32.mrf.mxu0
  %v2856 = vadd.f32 %v2687, %v2855
  %2857 = vmatmul.bf16.gmra.mxu0 %v1411
  %v2858 = vpop.f32.mrf.mxu0
  %v2859 = vadd.f32 %v2690, %v2858
  %v2860 = vpop.f32.mrf.mxu0
  %v2861 = vadd.f32 %v2692, %v2860
  %2862 = vmatmul.bf16.gmra.mxu0 %v1419
  %v2863 = vpop.f32.mrf.mxu0
  %v2864 = vadd.f32 %v2695, %v2863
  %v2865 = vpop.f32.mrf.mxu0
  %v2866 = vadd.f32 %v2697, %v2865
  %2867 = vmatmul.bf16.gmra.mxu0 %v1427
  %v2868 = vpop.f32.mrf.mxu0
  %v2869 = vadd.f32 %v2700, %v2868
  %v2870 = vpop.f32.mrf.mxu0
  %v2871 = vadd.f32 %v2702, %v2870
  %2872 = vmatmul.bf16.gmra.mxu0 %v1435
  %v2873 = vpop.f32.mrf.mxu0
  %v2874 = vadd.f32 %v2705, %v2873
  %v2875 = vpop.f32.mrf.mxu0
  %v2876 = vadd.f32 %v2707, %v2875
  %2877 = vmatmul.bf16.gmra.mxu0 %v1443
  %v2878 = vpop.f32.mrf.mxu0
  %v2879 = vadd.f32 %v2710, %v2878
  %v2880 = vpop.f32.mrf.mxu0
  %v2881 = vadd.f32 %v2712, %v2880
  %2882 = vmatmul.bf16.gmra.mxu0 %v1451
  %v2883 = vpop.f32.mrf.mxu0
  %v2884 = vadd.f32 %v2715, %v2883
  %v2885 = vpop.f32.mrf.mxu0
  %v2886 = vadd.f32 %v2717, %v2885
  %2887 = vmatmul.bf16.gmra.mxu0 %v1459
  %v2888 = vpop.f32.mrf.mxu0
  %v2889 = vadd.f32 %v2720, %v2888
  %v2890 = vpop.f32.mrf.mxu0
  %v2891 = vadd.f32 %v2722, %v2890
  %2892 = vmatmul.bf16.gmra.mxu0 %v1467
  %v2893 = vpop.f32.mrf.mxu0
  %v2894 = vadd.f32 %v2725, %v2893
  %v2895 = vpop.f32.mrf.mxu0
  %v2896 = vadd.f32 %v2727, %v2895
  %2897 = vmatmul.bf16.gmra.mxu0 %v1475
  %v2898 = vpop.f32.mrf.mxu0
  %v2899 = vadd.f32 %v2730, %v2898
  %v2900 = vpop.f32.mrf.mxu0
  %v2901 = vadd.f32 %v2732, %v2900
  %2902 = vmatmul.bf16.gmra.mxu0 %v1483
  %v2903 = vpop.f32.mrf.mxu0
  %v2904 = vadd.f32 %v2735, %v2903
  %v2905 = vpop.f32.mrf.mxu0
  %v2906 = vadd.f32 %v2737, %v2905
  %2907 = vdwg.mxu0
  %2908 = vmatpush.bf16.msra.mxu0 %v1982
  %2909 = vmatpush.bf16.msra.mxu0 %v1981
  %2910 = vmatpush.bf16.msra.mxu0 %v1980
  %2911 = vmatpush.bf16.msra.mxu0 %v1979
  %2912 = vmatpush.bf16.msra.mxu0 %v1978
  %2913 = vmatpush.bf16.msra.mxu0 %v1977
  %2914 = vmatpush.bf16.msra.mxu0 %v1976
  %2915 = vmatpush.bf16.msra.mxu0 %v1975
  %2916 = vmatmul.bf16.gmra.mxu0 %v1236
  %v2917 = vpop.f32.mrf.mxu0
  %v2918 = vadd.f32 %v2749, %v2917
  %v2919 = vpop.f32.mrf.mxu0
  %v2920 = vadd.f32 %v2751, %v2919
  %2921 = vmatmul.bf16.gmra.mxu0 %v1244
  %v2922 = vpop.f32.mrf.mxu0
  %v2923 = vadd.f32 %v2754, %v2922
  %v2924 = vpop.f32.mrf.mxu0
  %v2925 = vadd.f32 %v2756, %v2924
  %2926 = vmatmul.bf16.gmra.mxu0 %v1252
  %v2927 = vpop.f32.mrf.mxu0
  %v2928 = vadd.f32 %v2759, %v2927
  %v2929 = vpop.f32.mrf.mxu0
  %v2930 = vadd.f32 %v2761, %v2929
  %2931 = vmatmul.bf16.gmra.mxu0 %v1260
  %v2932 = vpop.f32.mrf.mxu0
  %v2933 = vadd.f32 %v2764, %v2932
  %v2934 = vpop.f32.mrf.mxu0
  %v2935 = vadd.f32 %v2766, %v2934
  %2936 = vmatmul.bf16.gmra.mxu0 %v1268
  %v2937 = vpop.f32.mrf.mxu0
  %v2938 = vadd.f32 %v2769, %v2937
  %v2939 = vpop.f32.mrf.mxu0
  %v2940 = vadd.f32 %v2771, %v2939
  %2941 = vmatmul.bf16.gmra.mxu0 %v1276
  %v2942 = vpop.f32.mrf.mxu0
  %v2943 = vadd.f32 %v2774, %v2942
  %v2944 = vpop.f32.mrf.mxu0
  %v2945 = vadd.f32 %v2776, %v2944
  %2946 = vmatmul.bf16.gmra.mxu0 %v1284
  %v2947 = vpop.f32.mrf.mxu0
  %v2948 = vadd.f32 %v2779, %v2947
  %v2949 = vpop.f32.mrf.mxu0
  %v2950 = vadd.f32 %v2781, %v2949
  %2951 = vmatmul.bf16.gmra.mxu0 %v1292
  %v2952 = vpop.f32.mrf.mxu0
  %v2953 = vadd.f32 %v2784, %v2952
  %v2954 = vpop.f32.mrf.mxu0
  %v2955 = vadd.f32 %v2786, %v2954
  %2956 = vmatmul.bf16.gmra.mxu0 %v1300
  %v2957 = vpop.f32.mrf.mxu0
  %v2958 = vadd.f32 %v2789, %v2957
  %v2959 = vpop.f32.mrf.mxu0
  %v2960 = vadd.f32 %v2791, %v2959
  %2961 = vmatmul.bf16.gmra.mxu0 %v1308
  %v2962 = vpop.f32.mrf.mxu0
  %v2963 = vadd.f32 %v2794, %v2962
  %v2964 = vpop.f32.mrf.mxu0
  %v2965 = vadd.f32 %v2796, %v2964
  %2966 = vmatmul.bf16.gmra.mxu0 %v1316
  %v2967 = vpop.f32.mrf.mxu0
  %v2968 = vadd.f32 %v2799, %v2967
  %v2969 = vpop.f32.mrf.mxu0
  %v2970 = vadd.f32 %v2801, %v2969
  %2971 = vmatmul.bf16.gmra.mxu0 %v1324
  %v2972 = vpop.f32.mrf.mxu0
  %v2973 = vadd.f32 %v2804, %v2972
  %v2974 = vpop.f32.mrf.mxu0
  %v2975 = vadd.f32 %v2806, %v2974
  %2976 = vmatmul.bf16.gmra.mxu0 %v1332
  %v2977 = vpop.f32.mrf.mxu0
  %v2978 = vadd.f32 %v2809, %v2977
  %v2979 = vpop.f32.mrf.mxu0
  %v2980 = vadd.f32 %v2811, %v2979
  %2981 = vmatmul.bf16.gmra.mxu0 %v1340
  %v2982 = vpop.f32.mrf.mxu0
  %v2983 = vadd.f32 %v2814, %v2982
  %v2984 = vpop.f32.mrf.mxu0
  %v2985 = vadd.f32 %v2816, %v2984
  %2986 = vmatmul.bf16.gmra.mxu0 %v1348
  %v2987 = vpop.f32.mrf.mxu0
  %v2988 = vadd.f32 %v2819, %v2987
  %v2989 = vpop.f32.mrf.mxu0
  %v2990 = vadd.f32 %v2821, %v2989
  %2991 = vmatmul.bf16.gmra.mxu0 %v1356
  %v2992 = vpop.f32.mrf.mxu0
  %v2993 = vadd.f32 %v2824, %v2992
  %v2994 = vpop.f32.mrf.mxu0
  %v2995 = vadd.f32 %v2826, %v2994
  %2996 = vmatmul.bf16.gmra.mxu0 %v1364
  %v2997 = vpop.f32.mrf.mxu0
  %v2998 = vadd.f32 %v2829, %v2997
  %v2999 = vpop.f32.mrf.mxu0
  %v3000 = vadd.f32 %v2831, %v2999
  %3001 = vmatmul.bf16.gmra.mxu0 %v1372
  %v3002 = vpop.f32.mrf.mxu0
  %v3003 = vadd.f32 %v2834, %v3002
  %v3004 = vpop.f32.mrf.mxu0
  %v3005 = vadd.f32 %v2836, %v3004
  %3006 = vmatmul.bf16.gmra.mxu0 %v1380
  %v3007 = vpop.f32.mrf.mxu0
  %v3008 = vadd.f32 %v2839, %v3007
  %v3009 = vpop.f32.mrf.mxu0
  %v3010 = vadd.f32 %v2841, %v3009
  %3011 = vmatmul.bf16.gmra.mxu0 %v1388
  %v3012 = vpop.f32.mrf.mxu0
  %v3013 = vadd.f32 %v2844, %v3012
  %v3014 = vpop.f32.mrf.mxu0
  %v3015 = vadd.f32 %v2846, %v3014
  %3016 = vmatmul.bf16.gmra.mxu0 %v1396
  %v3017 = vpop.f32.mrf.mxu0
  %v3018 = vadd.f32 %v2849, %v3017
  %v3019 = vpop.f32.mrf.mxu0
  %v3020 = vadd.f32 %v2851, %v3019
  %3021 = vmatmul.bf16.gmra.mxu0 %v1404
  %v3022 = vpop.f32.mrf.mxu0
  %v3023 = vadd.f32 %v2854, %v3022
  %v3024 = vpop.f32.mrf.mxu0
  %v3025 = vadd.f32 %v2856, %v3024
  %3026 = vmatmul.bf16.gmra.mxu0 %v1412
  %v3027 = vpop.f32.mrf.mxu0
  %v3028 = vadd.f32 %v2859, %v3027
  %v3029 = vpop.f32.mrf.mxu0
  %v3030 = vadd.f32 %v2861, %v3029
  %3031 = vmatmul.bf16.gmra.mxu0 %v1420
  %v3032 = vpop.f32.mrf.mxu0
  %v3033 = vadd.f32 %v2864, %v3032
  %v3034 = vpop.f32.mrf.mxu0
  %v3035 = vadd.f32 %v2866, %v3034
  %3036 = vmatmul.bf16.gmra.mxu0 %v1428
  %v3037 = vpop.f32.mrf.mxu0
  %v3038 = vadd.f32 %v2869, %v3037
  %v3039 = vpop.f32.mrf.mxu0
  %v3040 = vadd.f32 %v2871, %v3039
  %3041 = vmatmul.bf16.gmra.mxu0 %v1436
  %v3042 = vpop.f32.mrf.mxu0
  %v3043 = vadd.f32 %v2874, %v3042
  %v3044 = vpop.f32.mrf.mxu0
  %v3045 = vadd.f32 %v2876, %v3044
  %3046 = vmatmul.bf16.gmra.mxu0 %v1444
  %v3047 = vpop.f32.mrf.mxu0
  %v3048 = vadd.f32 %v2879, %v3047
  %v3049 = vpop.f32.mrf.mxu0
  %v3050 = vadd.f32 %v2881, %v3049
  %3051 = vmatmul.bf16.gmra.mxu0 %v1452
  %v3052 = vpop.f32.mrf.mxu0
  %v3053 = vadd.f32 %v2884, %v3052
  %v3054 = vpop.f32.mrf.mxu0
  %v3055 = vadd.f32 %v2886, %v3054
  %3056 = vmatmul.bf16.gmra.mxu0 %v1460
  %v3057 = vpop.f32.mrf.mxu0
  %v3058 = vadd.f32 %v2889, %v3057
  %v3059 = vpop.f32.mrf.mxu0
  %v3060 = vadd.f32 %v2891, %v3059
  %3061 = vmatmul.bf16.gmra.mxu0 %v1468
  %v3062 = vpop.f32.mrf.mxu0
  %v3063 = vadd.f32 %v2894, %v3062
  %v3064 = vpop.f32.mrf.mxu0
  %v3065 = vadd.f32 %v2896, %v3064
  %3066 = vmatmul.bf16.gmra.mxu0 %v1476
  %v3067 = vpop.f32.mrf.mxu0
  %v3068 = vadd.f32 %v2899, %v3067
  %v3069 = vpop.f32.mrf.mxu0
  %v3070 = vadd.f32 %v2901, %v3069
  %3071 = vmatmul.bf16.gmra.mxu0 %v1484
  %v3072 = vpop.f32.mrf.mxu0
  %v3073 = vadd.f32 %v2904, %v3072
  %v3074 = vpop.f32.mrf.mxu0
  %v3075 = vadd.f32 %v2906, %v3074
  %3076 = vdwg.mxu0
  %3077 = vmatpush.bf16.msra.mxu0 %v1990
  %3078 = vmatpush.bf16.msra.mxu0 %v1989
  %3079 = vmatpush.bf16.msra.mxu0 %v1988
  %3080 = vmatpush.bf16.msra.mxu0 %v1987
  %3081 = vmatpush.bf16.msra.mxu0 %v1986
  %3082 = vmatpush.bf16.msra.mxu0 %v1985
  %3083 = vmatpush.bf16.msra.mxu0 %v1984
  %3084 = vmatpush.bf16.msra.mxu0 %v1983
  %3085 = vmatmul.bf16.gmra.mxu0 %v1237
  %v3086 = vpop.f32.mrf.mxu0
  %v3087 = vadd.f32 %v2918, %v3086
  %v3088 = vpop.f32.mrf.mxu0
  %v3089 = vadd.f32 %v2920, %v3088
  %3090 = vmatmul.bf16.gmra.mxu0 %v1245
  %v3091 = vpop.f32.mrf.mxu0
  %v3092 = vadd.f32 %v2923, %v3091
  %v3093 = vpop.f32.mrf.mxu0
  %v3094 = vadd.f32 %v2925, %v3093
  %3095 = vmatmul.bf16.gmra.mxu0 %v1253
  %v3096 = vpop.f32.mrf.mxu0
  %v3097 = vadd.f32 %v2928, %v3096
  %v3098 = vpop.f32.mrf.mxu0
  %v3099 = vadd.f32 %v2930, %v3098
  %3100 = vmatmul.bf16.gmra.mxu0 %v1261
  %v3101 = vpop.f32.mrf.mxu0
  %v3102 = vadd.f32 %v2933, %v3101
  %v3103 = vpop.f32.mrf.mxu0
  %v3104 = vadd.f32 %v2935, %v3103
  %3105 = vmatmul.bf16.gmra.mxu0 %v1269
  %v3106 = vpop.f32.mrf.mxu0
  %v3107 = vadd.f32 %v2938, %v3106
  %v3108 = vpop.f32.mrf.mxu0
  %v3109 = vadd.f32 %v2940, %v3108
  %3110 = vmatmul.bf16.gmra.mxu0 %v1277
  %v3111 = vpop.f32.mrf.mxu0
  %v3112 = vadd.f32 %v2943, %v3111
  %v3113 = vpop.f32.mrf.mxu0
  %v3114 = vadd.f32 %v2945, %v3113
  %3115 = vmatmul.bf16.gmra.mxu0 %v1285
  %v3116 = vpop.f32.mrf.mxu0
  %v3117 = vadd.f32 %v2948, %v3116
  %v3118 = vpop.f32.mrf.mxu0
  %v3119 = vadd.f32 %v2950, %v3118
  %3120 = vmatmul.bf16.gmra.mxu0 %v1293
  %v3121 = vpop.f32.mrf.mxu0
  %v3122 = vadd.f32 %v2953, %v3121
  %v3123 = vpop.f32.mrf.mxu0
  %v3124 = vadd.f32 %v2955, %v3123
  %3125 = vmatmul.bf16.gmra.mxu0 %v1301
  %v3126 = vpop.f32.mrf.mxu0
  %v3127 = vadd.f32 %v2958, %v3126
  %v3128 = vpop.f32.mrf.mxu0
  %v3129 = vadd.f32 %v2960, %v3128
  %3130 = vmatmul.bf16.gmra.mxu0 %v1309
  %v3131 = vpop.f32.mrf.mxu0
  %v3132 = vadd.f32 %v2963, %v3131
  %v3133 = vpop.f32.mrf.mxu0
  %v3134 = vadd.f32 %v2965, %v3133
  %3135 = vmatmul.bf16.gmra.mxu0 %v1317
  %v3136 = vpop.f32.mrf.mxu0
  %v3137 = vadd.f32 %v2968, %v3136
  %v3138 = vpop.f32.mrf.mxu0
  %v3139 = vadd.f32 %v2970, %v3138
  %3140 = vmatmul.bf16.gmra.mxu0 %v1325
  %v3141 = vpop.f32.mrf.mxu0
  %v3142 = vadd.f32 %v2973, %v3141
  %v3143 = vpop.f32.mrf.mxu0
  %v3144 = vadd.f32 %v2975, %v3143
  %3145 = vmatmul.bf16.gmra.mxu0 %v1333
  %v3146 = vpop.f32.mrf.mxu0
  %v3147 = vadd.f32 %v2978, %v3146
  %v3148 = vpop.f32.mrf.mxu0
  %v3149 = vadd.f32 %v2980, %v3148
  %3150 = vmatmul.bf16.gmra.mxu0 %v1341
  %v3151 = vpop.f32.mrf.mxu0
  %v3152 = vadd.f32 %v2983, %v3151
  %v3153 = vpop.f32.mrf.mxu0
  %v3154 = vadd.f32 %v2985, %v3153
  %3155 = vmatmul.bf16.gmra.mxu0 %v1349
  %v3156 = vpop.f32.mrf.mxu0
  %v3157 = vadd.f32 %v2988, %v3156
  %v3158 = vpop.f32.mrf.mxu0
  %v3159 = vadd.f32 %v2990, %v3158
  %3160 = vmatmul.bf16.gmra.mxu0 %v1357
  %v3161 = vpop.f32.mrf.mxu0
  %v3162 = vadd.f32 %v2993, %v3161
  %v3163 = vpop.f32.mrf.mxu0
  %v3164 = vadd.f32 %v2995, %v3163
  %3165 = vmatmul.bf16.gmra.mxu0 %v1365
  %v3166 = vpop.f32.mrf.mxu0
  %v3167 = vadd.f32 %v2998, %v3166
  %v3168 = vpop.f32.mrf.mxu0
  %v3169 = vadd.f32 %v3000, %v3168
  %3170 = vmatmul.bf16.gmra.mxu0 %v1373
  %v3171 = vpop.f32.mrf.mxu0
  %v3172 = vadd.f32 %v3003, %v3171
  %v3173 = vpop.f32.mrf.mxu0
  %v3174 = vadd.f32 %v3005, %v3173
  %3175 = vmatmul.bf16.gmra.mxu0 %v1381
  %v3176 = vpop.f32.mrf.mxu0
  %v3177 = vadd.f32 %v3008, %v3176
  %v3178 = vpop.f32.mrf.mxu0
  %v3179 = vadd.f32 %v3010, %v3178
  %3180 = vmatmul.bf16.gmra.mxu0 %v1389
  %v3181 = vpop.f32.mrf.mxu0
  %v3182 = vadd.f32 %v3013, %v3181
  %v3183 = vpop.f32.mrf.mxu0
  %v3184 = vadd.f32 %v3015, %v3183
  %3185 = vmatmul.bf16.gmra.mxu0 %v1397
  %v3186 = vpop.f32.mrf.mxu0
  %v3187 = vadd.f32 %v3018, %v3186
  %v3188 = vpop.f32.mrf.mxu0
  %v3189 = vadd.f32 %v3020, %v3188
  %3190 = vmatmul.bf16.gmra.mxu0 %v1405
  %v3191 = vpop.f32.mrf.mxu0
  %v3192 = vadd.f32 %v3023, %v3191
  %v3193 = vpop.f32.mrf.mxu0
  %v3194 = vadd.f32 %v3025, %v3193
  %3195 = vmatmul.bf16.gmra.mxu0 %v1413
  %v3196 = vpop.f32.mrf.mxu0
  %v3197 = vadd.f32 %v3028, %v3196
  %v3198 = vpop.f32.mrf.mxu0
  %v3199 = vadd.f32 %v3030, %v3198
  %3200 = vmatmul.bf16.gmra.mxu0 %v1421
  %v3201 = vpop.f32.mrf.mxu0
  %v3202 = vadd.f32 %v3033, %v3201
  %v3203 = vpop.f32.mrf.mxu0
  %v3204 = vadd.f32 %v3035, %v3203
  %3205 = vmatmul.bf16.gmra.mxu0 %v1429
  %v3206 = vpop.f32.mrf.mxu0
  %v3207 = vadd.f32 %v3038, %v3206
  %v3208 = vpop.f32.mrf.mxu0
  %v3209 = vadd.f32 %v3040, %v3208
  %3210 = vmatmul.bf16.gmra.mxu0 %v1437
  %v3211 = vpop.f32.mrf.mxu0
  %v3212 = vadd.f32 %v3043, %v3211
  %v3213 = vpop.f32.mrf.mxu0
  %v3214 = vadd.f32 %v3045, %v3213
  %3215 = vmatmul.bf16.gmra.mxu0 %v1445
  %v3216 = vpop.f32.mrf.mxu0
  %v3217 = vadd.f32 %v3048, %v3216
  %v3218 = vpop.f32.mrf.mxu0
  %v3219 = vadd.f32 %v3050, %v3218
  %3220 = vmatmul.bf16.gmra.mxu0 %v1453
  %v3221 = vpop.f32.mrf.mxu0
  %v3222 = vadd.f32 %v3053, %v3221
  %v3223 = vpop.f32.mrf.mxu0
  %v3224 = vadd.f32 %v3055, %v3223
  %3225 = vmatmul.bf16.gmra.mxu0 %v1461
  %v3226 = vpop.f32.mrf.mxu0
  %v3227 = vadd.f32 %v3058, %v3226
  %v3228 = vpop.f32.mrf.mxu0
  %v3229 = vadd.f32 %v3060, %v3228
  %3230 = vmatmul.bf16.gmra.mxu0 %v1469
  %v3231 = vpop.f32.mrf.mxu0
  %v3232 = vadd.f32 %v3063, %v3231
  %v3233 = vpop.f32.mrf.mxu0
  %v3234 = vadd.f32 %v3065, %v3233
  %3235 = vmatmul.bf16.gmra.mxu0 %v1477
  %v3236 = vpop.f32.mrf.mxu0
  %v3237 = vadd.f32 %v3068, %v3236
  %v3238 = vpop.f32.mrf.mxu0
  %v3239 = vadd.f32 %v3070, %v3238
  %3240 = vmatmul.bf16.gmra.mxu0 %v1485
  %v3241 = vpop.f32.mrf.mxu0
  %v3242 = vadd.f32 %v3073, %v3241
  %v3243 = vpop.f32.mrf.mxu0
  %v3244 = vadd.f32 %v3075, %v3243
  %3245 = vdwg.mxu0
  %3246 = vmatpush.bf16.msra.mxu0 %v1998
  %3247 = vmatpush.bf16.msra.mxu0 %v1997
  %3248 = vmatpush.bf16.msra.mxu0 %v1996
  %3249 = vmatpush.bf16.msra.mxu0 %v1995
  %3250 = vmatpush.bf16.msra.mxu0 %v1994
  %3251 = vmatpush.bf16.msra.mxu0 %v1993
  %3252 = vmatpush.bf16.msra.mxu0 %v1992
  %3253 = vmatpush.bf16.msra.mxu0 %v1991
  %3254 = vmatmul.bf16.gmra.mxu0 %v1238
  %v3255 = vpop.f32.mrf.mxu0
  %v3256 = vadd.f32 %v3087, %v3255
  %v3257 = vpop.f32.mrf.mxu0
  %v3258 = vadd.f32 %v3089, %v3257
  %3259 = vmatmul.bf16.gmra.mxu0 %v1246
  %v3260 = vpop.f32.mrf.mxu0
  %v3261 = vadd.f32 %v3092, %v3260
  %v3262 = vpop.f32.mrf.mxu0
  %v3263 = vadd.f32 %v3094, %v3262
  %3264 = vmatmul.bf16.gmra.mxu0 %v1254
  %v3265 = vpop.f32.mrf.mxu0
  %v3266 = vadd.f32 %v3097, %v3265
  %v3267 = vpop.f32.mrf.mxu0
  %v3268 = vadd.f32 %v3099, %v3267
  %3269 = vmatmul.bf16.gmra.mxu0 %v1262
  %v3270 = vpop.f32.mrf.mxu0
  %v3271 = vadd.f32 %v3102, %v3270
  %v3272 = vpop.f32.mrf.mxu0
  %v3273 = vadd.f32 %v3104, %v3272
  %3274 = vmatmul.bf16.gmra.mxu0 %v1270
  %v3275 = vpop.f32.mrf.mxu0
  %v3276 = vadd.f32 %v3107, %v3275
  %v3277 = vpop.f32.mrf.mxu0
  %v3278 = vadd.f32 %v3109, %v3277
  %3279 = vmatmul.bf16.gmra.mxu0 %v1278
  %v3280 = vpop.f32.mrf.mxu0
  %v3281 = vadd.f32 %v3112, %v3280
  %v3282 = vpop.f32.mrf.mxu0
  %v3283 = vadd.f32 %v3114, %v3282
  %3284 = vmatmul.bf16.gmra.mxu0 %v1286
  %v3285 = vpop.f32.mrf.mxu0
  %v3286 = vadd.f32 %v3117, %v3285
  %v3287 = vpop.f32.mrf.mxu0
  %v3288 = vadd.f32 %v3119, %v3287
  %3289 = vmatmul.bf16.gmra.mxu0 %v1294
  %v3290 = vpop.f32.mrf.mxu0
  %v3291 = vadd.f32 %v3122, %v3290
  %v3292 = vpop.f32.mrf.mxu0
  %v3293 = vadd.f32 %v3124, %v3292
  %3294 = vmatmul.bf16.gmra.mxu0 %v1302
  %v3295 = vpop.f32.mrf.mxu0
  %v3296 = vadd.f32 %v3127, %v3295
  %v3297 = vpop.f32.mrf.mxu0
  %v3298 = vadd.f32 %v3129, %v3297
  %3299 = vmatmul.bf16.gmra.mxu0 %v1310
  %v3300 = vpop.f32.mrf.mxu0
  %v3301 = vadd.f32 %v3132, %v3300
  %v3302 = vpop.f32.mrf.mxu0
  %v3303 = vadd.f32 %v3134, %v3302
  %3304 = vmatmul.bf16.gmra.mxu0 %v1318
  %v3305 = vpop.f32.mrf.mxu0
  %v3306 = vadd.f32 %v3137, %v3305
  %v3307 = vpop.f32.mrf.mxu0
  %v3308 = vadd.f32 %v3139, %v3307
  %3309 = vmatmul.bf16.gmra.mxu0 %v1326
  %v3310 = vpop.f32.mrf.mxu0
  %v3311 = vadd.f32 %v3142, %v3310
  %v3312 = vpop.f32.mrf.mxu0
  %v3313 = vadd.f32 %v3144, %v3312
  %3314 = vmatmul.bf16.gmra.mxu0 %v1334
  %v3315 = vpop.f32.mrf.mxu0
  %v3316 = vadd.f32 %v3147, %v3315
  %v3317 = vpop.f32.mrf.mxu0
  %v3318 = vadd.f32 %v3149, %v3317
  %3319 = vmatmul.bf16.gmra.mxu0 %v1342
  %v3320 = vpop.f32.mrf.mxu0
  %v3321 = vadd.f32 %v3152, %v3320
  %v3322 = vpop.f32.mrf.mxu0
  %v3323 = vadd.f32 %v3154, %v3322
  %3324 = vmatmul.bf16.gmra.mxu0 %v1350
  %v3325 = vpop.f32.mrf.mxu0
  %v3326 = vadd.f32 %v3157, %v3325
  %v3327 = vpop.f32.mrf.mxu0
  %v3328 = vadd.f32 %v3159, %v3327
  %3329 = vmatmul.bf16.gmra.mxu0 %v1358
  %v3330 = vpop.f32.mrf.mxu0
  %v3331 = vadd.f32 %v3162, %v3330
  %v3332 = vpop.f32.mrf.mxu0
  %v3333 = vadd.f32 %v3164, %v3332
  %3334 = vmatmul.bf16.gmra.mxu0 %v1366
  %v3335 = vpop.f32.mrf.mxu0
  %v3336 = vadd.f32 %v3167, %v3335
  %v3337 = vpop.f32.mrf.mxu0
  %v3338 = vadd.f32 %v3169, %v3337
  %3339 = vmatmul.bf16.gmra.mxu0 %v1374
  %v3340 = vpop.f32.mrf.mxu0
  %v3341 = vadd.f32 %v3172, %v3340
  %v3342 = vpop.f32.mrf.mxu0
  %v3343 = vadd.f32 %v3174, %v3342
  %3344 = vmatmul.bf16.gmra.mxu0 %v1382
  %v3345 = vpop.f32.mrf.mxu0
  %v3346 = vadd.f32 %v3177, %v3345
  %v3347 = vpop.f32.mrf.mxu0
  %v3348 = vadd.f32 %v3179, %v3347
  %3349 = vmatmul.bf16.gmra.mxu0 %v1390
  %v3350 = vpop.f32.mrf.mxu0
  %v3351 = vadd.f32 %v3182, %v3350
  %v3352 = vpop.f32.mrf.mxu0
  %v3353 = vadd.f32 %v3184, %v3352
  %3354 = vmatmul.bf16.gmra.mxu0 %v1398
  %v3355 = vpop.f32.mrf.mxu0
  %v3356 = vadd.f32 %v3187, %v3355
  %v3357 = vpop.f32.mrf.mxu0
  %v3358 = vadd.f32 %v3189, %v3357
  %3359 = vmatmul.bf16.gmra.mxu0 %v1406
  %v3360 = vpop.f32.mrf.mxu0
  %v3361 = vadd.f32 %v3192, %v3360
  %v3362 = vpop.f32.mrf.mxu0
  %v3363 = vadd.f32 %v3194, %v3362
  %3364 = vmatmul.bf16.gmra.mxu0 %v1414
  %v3365 = vpop.f32.mrf.mxu0
  %v3366 = vadd.f32 %v3197, %v3365
  %v3367 = vpop.f32.mrf.mxu0
  %v3368 = vadd.f32 %v3199, %v3367
  %3369 = vmatmul.bf16.gmra.mxu0 %v1422
  %v3370 = vpop.f32.mrf.mxu0
  %v3371 = vadd.f32 %v3202, %v3370
  %v3372 = vpop.f32.mrf.mxu0
  %v3373 = vadd.f32 %v3204, %v3372
  %3374 = vmatmul.bf16.gmra.mxu0 %v1430
  %v3375 = vpop.f32.mrf.mxu0
  %v3376 = vadd.f32 %v3207, %v3375
  %v3377 = vpop.f32.mrf.mxu0
  %v3378 = vadd.f32 %v3209, %v3377
  %3379 = vmatmul.bf16.gmra.mxu0 %v1438
  %v3380 = vpop.f32.mrf.mxu0
  %v3381 = vadd.f32 %v3212, %v3380
  %v3382 = vpop.f32.mrf.mxu0
  %v3383 = vadd.f32 %v3214, %v3382
  %3384 = vmatmul.bf16.gmra.mxu0 %v1446
  %v3385 = vpop.f32.mrf.mxu0
  %v3386 = vadd.f32 %v3217, %v3385
  %v3387 = vpop.f32.mrf.mxu0
  %v3388 = vadd.f32 %v3219, %v3387
  %3389 = vmatmul.bf16.gmra.mxu0 %v1454
  %v3390 = vpop.f32.mrf.mxu0
  %v3391 = vadd.f32 %v3222, %v3390
  %v3392 = vpop.f32.mrf.mxu0
  %v3393 = vadd.f32 %v3224, %v3392
  %3394 = vmatmul.bf16.gmra.mxu0 %v1462
  %v3395 = vpop.f32.mrf.mxu0
  %v3396 = vadd.f32 %v3227, %v3395
  %v3397 = vpop.f32.mrf.mxu0
  %v3398 = vadd.f32 %v3229, %v3397
  %3399 = vmatmul.bf16.gmra.mxu0 %v1470
  %v3400 = vpop.f32.mrf.mxu0
  %v3401 = vadd.f32 %v3232, %v3400
  %v3402 = vpop.f32.mrf.mxu0
  %v3403 = vadd.f32 %v3234, %v3402
  %3404 = vmatmul.bf16.gmra.mxu0 %v1478
  %v3405 = vpop.f32.mrf.mxu0
  %v3406 = vadd.f32 %v3237, %v3405
  %v3407 = vpop.f32.mrf.mxu0
  %v3408 = vadd.f32 %v3239, %v3407
  %3409 = vmatmul.bf16.gmra.mxu0 %v1486
  %v3410 = vpop.f32.mrf.mxu0
  %v3411 = vadd.f32 %v3242, %v3410
  %v3412 = vpop.f32.mrf.mxu0
  %v3413 = vadd.f32 %v3244, %v3412
  %3414 = vdwg.mxu0
  %v3415 = vadd.f32 %v1487, %v3256
  %v3416 = vadd.f32 %v1488, %v3258
  %v3417 = vadd.f32 %v1489, %v3261
  %v3418 = vadd.f32 %v1490, %v3263
  %v3419 = vadd.f32 %v1491, %v3266
  %v3420 = vadd.f32 %v1492, %v3268
  %v3421 = vadd.f32 %v1493, %v3271
  %v3422 = vadd.f32 %v1494, %v3273
  %v3423 = vadd.f32 %v1495, %v3276
  %v3424 = vadd.f32 %v1496, %v3278
  %v3425 = vadd.f32 %v1497, %v3281
  %v3426 = vadd.f32 %v1498, %v3283
  %v3427 = vadd.f32 %v1499, %v3286
  %v3428 = vadd.f32 %v1500, %v3288
  %v3429 = vadd.f32 %v1501, %v3291
  %v3430 = vadd.f32 %v1502, %v3293
  %v3431 = vadd.f32 %v1503, %v3296
  %v3432 = vadd.f32 %v1504, %v3298
  %v3433 = vadd.f32 %v1505, %v3301
  %v3434 = vadd.f32 %v1506, %v3303
  %v3435 = vadd.f32 %v1507, %v3306
  %v3436 = vadd.f32 %v1508, %v3308
  %v3437 = vadd.f32 %v1509, %v3311
  %v3438 = vadd.f32 %v1510, %v3313
  %v3439 = vadd.f32 %v1511, %v3316
  %v3440 = vadd.f32 %v1512, %v3318
  %v3441 = vadd.f32 %v1513, %v3321
  %v3442 = vadd.f32 %v1514, %v3323
  %v3443 = vadd.f32 %v1515, %v3326
  %v3444 = vadd.f32 %v1516, %v3328
  %v3445 = vadd.f32 %v1517, %v3331
  %v3446 = vadd.f32 %v1518, %v3333
  %v3447 = vadd.f32 %v1519, %v3336
  %v3448 = vadd.f32 %v1520, %v3338
  %v3449 = vadd.f32 %v1521, %v3341
  %v3450 = vadd.f32 %v1522, %v3343
  %v3451 = vadd.f32 %v1523, %v3346
  %v3452 = vadd.f32 %v1524, %v3348
  %v3453 = vadd.f32 %v1525, %v3351
  %v3454 = vadd.f32 %v1526, %v3353
  %v3455 = vadd.f32 %v1527, %v3356
  %v3456 = vadd.f32 %v1528, %v3358
  %v3457 = vadd.f32 %v1529, %v3361
  %v3458 = vadd.f32 %v1530, %v3363
  %v3459 = vadd.f32 %v1531, %v3366
  %v3460 = vadd.f32 %v1532, %v3368
  %v3461 = vadd.f32 %v1533, %v3371
  %v3462 = vadd.f32 %v1534, %v3373
  %v3463 = vadd.f32 %v1535, %v3376
  %v3464 = vadd.f32 %v1536, %v3378
  %v3465 = vadd.f32 %v1537, %v3381
  %v3466 = vadd.f32 %v1538, %v3383
  %v3467 = vadd.f32 %v1539, %v3386
  %v3468 = vadd.f32 %v1540, %v3388
  %v3469 = vadd.f32 %v1541, %v3391
  %v3470 = vadd.f32 %v1542, %v3393
  %v3471 = vadd.f32 %v1543, %v3396
  %v3472 = vadd.f32 %v1544, %v3398
  %v3473 = vadd.f32 %v1545, %v3401
  %v3474 = vadd.f32 %v1546, %v3403
  %v3475 = vadd.f32 %v1547, %v3406
  %v3476 = vadd.f32 %v1548, %v3408
  %v3477 = vadd.f32 %v1549, %v3411
  %v3478 = vadd.f32 %v1550, %v3413
  %v3479 = vld [vmem:[%s1 + $0x4] sm:$0xf]
  %v3480 = vld [vmem:[%s1 + $0x10] sm:$0xf]
  %v3481 = vld [vmem:[%s1 + $0x1c] sm:$0xf]
  %v3482 = vld [vmem:[%s1 + $0x28] sm:$0xf]
  %v3483 = vld [vmem:[%s1 + $0x34] sm:$0xf]
  %v3484 = vld [vmem:[%s1 + $0x40] sm:$0xf]
  %v3485 = vld [vmem:[%s1 + $0x4c] sm:$0xf]
  %v3486 = vld [vmem:[%s1 + $0x58] sm:$0xf]
  %v3487 = vld [vmem:[%s1 + $0x64] sm:$0xf]
  %v3488 = vld [vmem:[%s1 + $0x70] sm:$0xf]
  %v3489 = vld [vmem:[%s1 + $0x7c] sm:$0xf]
  %v3490 = vld [vmem:[%s1 + $0x88] sm:$0xf]
  %v3491 = vld [vmem:[%s1 + $0x94] sm:$0xf]
  %v3492 = vld [vmem:[%s1 + $0xa0] sm:$0xf]
  %v3493 = vld [vmem:[%s1 + $0xac] sm:$0xf]
  %v3494 = vld [vmem:[%s1 + $0xb8] sm:$0xf]
  %v3495 = vld [vmem:[%s1 + $0xc4] sm:$0xf]
  %v3496 = vld [vmem:[%s1 + $0xd0] sm:$0xf]
  %v3497 = vld [vmem:[%s1 + $0xdc] sm:$0xf]
  %v3498 = vld [vmem:[%s1 + $0xe8] sm:$0xf]
  %v3499 = vld [vmem:[%s1 + $0xf4] sm:$0xf]
  %v3500 = vld [vmem:[%s1 + $0x100] sm:$0xf]
  %v3501 = vld [vmem:[%s1 + $0x10c] sm:$0xf]
  %v3502 = vld [vmem:[%s1 + $0x118] sm:$0xf]
  %v3503 = vld [vmem:[%s1 + $0x124] sm:$0xf]
  %v3504 = vld [vmem:[%s1 + $0x130] sm:$0xf]
  %v3505 = vld [vmem:[%s1 + $0x13c] sm:$0xf]
  %v3506 = vld [vmem:[%s1 + $0x148] sm:$0xf]
  %v3507 = vld [vmem:[%s1 + $0x154] sm:$0xf]
  %v3508 = vld [vmem:[%s1 + $0x160] sm:$0xf]
  %v3509 = vld [vmem:[%s1 + $0x16c] sm:$0xf]
  %v3510 = vld [vmem:[%s1 + $0x178] sm:$0xf]
  %v3511 = vld [vmem:[%s1 + $0x184] sm:$0xf]
  %v3512 = vld [vmem:[%s1 + $0x190] sm:$0xf]
  %v3513 = vld [vmem:[%s1 + $0x19c] sm:$0xf]
  %v3514 = vld [vmem:[%s1 + $0x1a8] sm:$0xf]
  %v3515 = vld [vmem:[%s1 + $0x1b4] sm:$0xf]
  %v3516 = vld [vmem:[%s1 + $0x1c0] sm:$0xf]
  %v3517 = vld [vmem:[%s1 + $0x1cc] sm:$0xf]
  %v3518 = vld [vmem:[%s1 + $0x1d8] sm:$0xf]
  %v3519 = vld [vmem:[%s1 + $0x1e4] sm:$0xf]
  %v3520 = vld [vmem:[%s1 + $0x1f0] sm:$0xf]
  %v3521 = vld [vmem:[%s1 + $0x1fc] sm:$0xf]
  %v3522 = vld [vmem:[%s1 + $0x208] sm:$0xf]
  %v3523 = vld [vmem:[%s1 + $0x214] sm:$0xf]
  %v3524 = vld [vmem:[%s1 + $0x220] sm:$0xf]
  %v3525 = vld [vmem:[%s1 + $0x22c] sm:$0xf]
  %v3526 = vld [vmem:[%s1 + $0x238] sm:$0xf]
  %v3527 = vld [vmem:[%s1 + $0x244] sm:$0xf]
  %v3528 = vld [vmem:[%s1 + $0x250] sm:$0xf]
  %v3529 = vld [vmem:[%s1 + $0x25c] sm:$0xf]
  %v3530 = vld [vmem:[%s1 + $0x268] sm:$0xf]
  %v3531 = vld [vmem:[%s1 + $0x274] sm:$0xf]
  %v3532 = vld [vmem:[%s1 + $0x280] sm:$0xf]
  %v3533 = vld [vmem:[%s1 + $0x28c] sm:$0xf]
  %v3534 = vld [vmem:[%s1 + $0x298] sm:$0xf]
  %v3535 = vld [vmem:[%s1 + $0x2a4] sm:$0xf]
  %v3536 = vld [vmem:[%s1 + $0x2b0] sm:$0xf]
  %v3537 = vld [vmem:[%s1 + $0x2bc] sm:$0xf]
  %v3538 = vld [vmem:[%s1 + $0x2c8] sm:$0xf]
  %v3539 = vld [vmem:[%s1 + $0x2d4] sm:$0xf]
  %v3540 = vld [vmem:[%s1 + $0x2e0] sm:$0xf]
  %v3541 = vld [vmem:[%s1 + $0x2ec] sm:$0xf]
  %v3542 = vld [vmem:[%s1 + $0x2f8] sm:$0xf]
  %v3543 = vld [vmem:[%s1 + $0x304] sm:$0xf]
  %v3544 = vld [vmem:[%s1 + $0x310] sm:$0xf]
  %v3545 = vld [vmem:[%s1 + $0x31c] sm:$0xf]
  %v3546 = vld [vmem:[%s1 + $0x328] sm:$0xf]
  %v3547 = vld [vmem:[%s1 + $0x334] sm:$0xf]
  %v3548 = vld [vmem:[%s1 + $0x340] sm:$0xf]
  %v3549 = vld [vmem:[%s1 + $0x34c] sm:$0xf]
  %v3550 = vld [vmem:[%s1 + $0x358] sm:$0xf]
  %v3551 = vld [vmem:[%s1 + $0x364] sm:$0xf]
  %v3552 = vld [vmem:[%s1 + $0x370] sm:$0xf]
  %v3553 = vld [vmem:[%s1 + $0x37c] sm:$0xf]
  %v3554 = vld [vmem:[%s1 + $0x388] sm:$0xf]
  %v3555 = vld [vmem:[%s1 + $0x394] sm:$0xf]
  %v3556 = vld [vmem:[%s1 + $0x3a0] sm:$0xf]
  %v3557 = vld [vmem:[%s1 + $0x3ac] sm:$0xf]
  %v3558 = vld [vmem:[%s1 + $0x3b8] sm:$0xf]
  %v3559 = vld [vmem:[%s1 + $0x3c4] sm:$0xf]
  %v3560 = vld [vmem:[%s1 + $0x3d0] sm:$0xf]
  %v3561 = vld [vmem:[%s1 + $0x3dc] sm:$0xf]
  %v3562 = vld [vmem:[%s1 + $0x3e8] sm:$0xf]
  %v3563 = vld [vmem:[%s1 + $0x3f4] sm:$0xf]
  %v3564 = vld [vmem:[%s1 + $0x400] sm:$0xf]
  %v3565 = vld [vmem:[%s1 + $0x40c] sm:$0xf]
  %v3566 = vld [vmem:[%s1 + $0x418] sm:$0xf]
  %v3567 = vld [vmem:[%s1 + $0x424] sm:$0xf]
  %v3568 = vld [vmem:[%s1 + $0x430] sm:$0xf]
  %v3569 = vld [vmem:[%s1 + $0x43c] sm:$0xf]
  %v3570 = vld [vmem:[%s1 + $0x448] sm:$0xf]
  %v3571 = vld [vmem:[%s1 + $0x454] sm:$0xf]
  %v3572 = vld [vmem:[%s1 + $0x460] sm:$0xf]
  %v3573 = vld [vmem:[%s1 + $0x46c] sm:$0xf]
  %v3574 = vld [vmem:[%s1 + $0x478] sm:$0xf]
  %v3575 = vld [vmem:[%s1 + $0x484] sm:$0xf]
  %v3576 = vld [vmem:[%s1 + $0x490] sm:$0xf]
  %v3577 = vld [vmem:[%s1 + $0x49c] sm:$0xf]
  %v3578 = vld [vmem:[%s1 + $0x4a8] sm:$0xf]
  %v3579 = vld [vmem:[%s1 + $0x4b4] sm:$0xf]
  %v3580 = vld [vmem:[%s1 + $0x4c0] sm:$0xf]
  %v3581 = vld [vmem:[%s1 + $0x4cc] sm:$0xf]
  %v3582 = vld [vmem:[%s1 + $0x4d8] sm:$0xf]
  %v3583 = vld [vmem:[%s1 + $0x4e4] sm:$0xf]
  %v3584 = vld [vmem:[%s1 + $0x4f0] sm:$0xf]
  %v3585 = vld [vmem:[%s1 + $0x4fc] sm:$0xf]
  %v3586 = vld [vmem:[%s1 + $0x508] sm:$0xf]
  %v3587 = vld [vmem:[%s1 + $0x514] sm:$0xf]
  %v3588 = vld [vmem:[%s1 + $0x520] sm:$0xf]
  %v3589 = vld [vmem:[%s1 + $0x52c] sm:$0xf]
  %v3590 = vld [vmem:[%s1 + $0x538] sm:$0xf]
  %v3591 = vld [vmem:[%s1 + $0x544] sm:$0xf]
  %v3592 = vld [vmem:[%s1 + $0x550] sm:$0xf]
  %v3593 = vld [vmem:[%s1 + $0x55c] sm:$0xf]
  %v3594 = vld [vmem:[%s1 + $0x568] sm:$0xf]
  %v3595 = vld [vmem:[%s1 + $0x574] sm:$0xf]
  %v3596 = vld [vmem:[%s1 + $0x580] sm:$0xf]
  %v3597 = vld [vmem:[%s1 + $0x58c] sm:$0xf]
  %v3598 = vld [vmem:[%s1 + $0x598] sm:$0xf]
  %v3599 = vld [vmem:[%s1 + $0x5a4] sm:$0xf]
  %v3600 = vld [vmem:[%s1 + $0x5b0] sm:$0xf]
  %v3601 = vld [vmem:[%s1 + $0x5bc] sm:$0xf]
  %v3602 = vld [vmem:[%s1 + $0x5c8] sm:$0xf]
  %v3603 = vld [vmem:[%s1 + $0x5d4] sm:$0xf]
  %v3604 = vld [vmem:[%s1 + $0x5e0] sm:$0xf]
  %v3605 = vld [vmem:[%s1 + $0x5ec] sm:$0xf]
  %v3606 = vld [vmem:[%s1 + $0x5f8] sm:$0xf]
  %v3735 = vunpack.c.l.b16 %v3479
  %v3736 = vunpack.c.l.b16 %v3480
  %v3737 = vunpack.c.l.b16 %v3481
  %v3738 = vunpack.c.l.b16 %v3482
  %v3739 = vunpack.c.l.b16 %v3483
  %v3740 = vunpack.c.l.b16 %v3484
  %v3741 = vunpack.c.l.b16 %v3485
  %v3742 = vunpack.c.l.b16 %v3486
  %v3743 = vunpack.c.l.b16 %v3487
  %v3744 = vunpack.c.l.b16 %v3488
  %v3745 = vunpack.c.l.b16 %v3489
  %v3746 = vunpack.c.l.b16 %v3490
  %v3747 = vunpack.c.l.b16 %v3491
  %v3748 = vunpack.c.l.b16 %v3492
  %v3749 = vunpack.c.l.b16 %v3493
  %v3750 = vunpack.c.l.b16 %v3494
  %v3751 = vunpack.c.l.b16 %v3495
  %v3752 = vunpack.c.l.b16 %v3496
  %v3753 = vunpack.c.l.b16 %v3497
  %v3754 = vunpack.c.l.b16 %v3498
  %v3755 = vunpack.c.l.b16 %v3499
  %v3756 = vunpack.c.l.b16 %v3500
  %v3757 = vunpack.c.l.b16 %v3501
  %v3758 = vunpack.c.l.b16 %v3502
  %v3759 = vunpack.c.l.b16 %v3503
  %v3760 = vunpack.c.l.b16 %v3504
  %v3761 = vunpack.c.l.b16 %v3505
  %v3762 = vunpack.c.l.b16 %v3506
  %v3763 = vunpack.c.l.b16 %v3507
  %v3764 = vunpack.c.l.b16 %v3508
  %v3765 = vunpack.c.l.b16 %v3509
  %v3766 = vunpack.c.l.b16 %v3510
  %v3767 = vunpack.c.l.b16 %v3511
  %v3768 = vunpack.c.l.b16 %v3512
  %v3769 = vunpack.c.l.b16 %v3513
  %v3770 = vunpack.c.l.b16 %v3514
  %v3771 = vunpack.c.l.b16 %v3515
  %v3772 = vunpack.c.l.b16 %v3516
  %v3773 = vunpack.c.l.b16 %v3517
  %v3774 = vunpack.c.l.b16 %v3518
  %v3775 = vunpack.c.l.b16 %v3519
  %v3776 = vunpack.c.l.b16 %v3520
  %v3777 = vunpack.c.l.b16 %v3521
  %v3778 = vunpack.c.l.b16 %v3522
  %v3779 = vunpack.c.l.b16 %v3523
  %v3780 = vunpack.c.l.b16 %v3524
  %v3781 = vunpack.c.l.b16 %v3525
  %v3782 = vunpack.c.l.b16 %v3526
  %v3783 = vunpack.c.l.b16 %v3527
  %v3784 = vunpack.c.l.b16 %v3528
  %v3785 = vunpack.c.l.b16 %v3529
  %v3786 = vunpack.c.l.b16 %v3530
  %v3787 = vunpack.c.l.b16 %v3531
  %v3788 = vunpack.c.l.b16 %v3532
  %v3789 = vunpack.c.l.b16 %v3533
  %v3790 = vunpack.c.l.b16 %v3534
  %v3791 = vunpack.c.l.b16 %v3535
  %v3792 = vunpack.c.l.b16 %v3536
  %v3793 = vunpack.c.l.b16 %v3537
  %v3794 = vunpack.c.l.b16 %v3538
  %v3795 = vunpack.c.l.b16 %v3539
  %v3796 = vunpack.c.l.b16 %v3540
  %v3797 = vunpack.c.l.b16 %v3541
  %v3798 = vunpack.c.l.b16 %v3542
  %v3799 = vunpack.c.l.b16 %v3543
  %v3800 = vunpack.c.l.b16 %v3544
  %v3801 = vunpack.c.l.b16 %v3545
  %v3802 = vunpack.c.l.b16 %v3546
  %v3803 = vunpack.c.l.b16 %v3547
  %v3804 = vunpack.c.l.b16 %v3548
  %v3805 = vunpack.c.l.b16 %v3549
  %v3806 = vunpack.c.l.b16 %v3550
  %v3807 = vunpack.c.l.b16 %v3551
  %v3808 = vunpack.c.l.b16 %v3552
  %v3809 = vunpack.c.l.b16 %v3553
  %v3810 = vunpack.c.l.b16 %v3554
  %v3811 = vunpack.c.l.b16 %v3555
  %v3812 = vunpack.c.l.b16 %v3556
  %v3813 = vunpack.c.l.b16 %v3557
  %v3814 = vunpack.c.l.b16 %v3558
  %v3815 = vunpack.c.l.b16 %v3559
  %v3816 = vunpack.c.l.b16 %v3560
  %v3817 = vunpack.c.l.b16 %v3561
  %v3818 = vunpack.c.l.b16 %v3562
  %v3819 = vunpack.c.l.b16 %v3563
  %v3820 = vunpack.c.l.b16 %v3564
  %v3821 = vunpack.c.l.b16 %v3565
  %v3822 = vunpack.c.l.b16 %v3566
  %v3823 = vunpack.c.l.b16 %v3567
  %v3824 = vunpack.c.l.b16 %v3568
  %v3825 = vunpack.c.l.b16 %v3569
  %v3826 = vunpack.c.l.b16 %v3570
  %v3827 = vunpack.c.l.b16 %v3571
  %v3828 = vunpack.c.l.b16 %v3572
  %v3829 = vunpack.c.l.b16 %v3573
  %v3830 = vunpack.c.l.b16 %v3574
  %v3831 = vunpack.c.l.b16 %v3575
  %v3832 = vunpack.c.l.b16 %v3576
  %v3833 = vunpack.c.l.b16 %v3577
  %v3834 = vunpack.c.l.b16 %v3578
  %v3835 = vunpack.c.l.b16 %v3579
  %v3836 = vunpack.c.l.b16 %v3580
  %v3837 = vunpack.c.l.b16 %v3581
  %v3838 = vunpack.c.l.b16 %v3582
  %v3839 = vunpack.c.l.b16 %v3583
  %v3840 = vunpack.c.l.b16 %v3584
  %v3841 = vunpack.c.l.b16 %v3585
  %v3842 = vunpack.c.l.b16 %v3586
  %v3843 = vunpack.c.l.b16 %v3587
  %v3844 = vunpack.c.l.b16 %v3588
  %v3845 = vunpack.c.l.b16 %v3589
  %v3846 = vunpack.c.l.b16 %v3590
  %v3847 = vunpack.c.l.b16 %v3591
  %v3848 = vunpack.c.l.b16 %v3592
  %v3849 = vunpack.c.l.b16 %v3593
  %v3850 = vunpack.c.l.b16 %v3594
  %v3851 = vunpack.c.l.b16 %v3595
  %v3852 = vunpack.c.l.b16 %v3596
  %v3853 = vunpack.c.l.b16 %v3597
  %v3854 = vunpack.c.l.b16 %v3598
  %v3855 = vunpack.c.l.b16 %v3599
  %v3856 = vunpack.c.l.b16 %v3600
  %v3857 = vunpack.c.l.b16 %v3601
  %v3858 = vunpack.c.l.b16 %v3602
  %v3859 = vunpack.c.l.b16 %v3603
  %v3860 = vunpack.c.l.b16 %v3604
  %v3861 = vunpack.c.l.b16 %v3605
  %v3862 = vunpack.c.l.b16 %v3606
  %v3863 = vpack.c.b16 %v3736, %v3735
  %v3864 = vpack.c.b16 %v3738, %v3737
  %v3865 = vpack.c.b16 %v3740, %v3739
  %v3866 = vpack.c.b16 %v3742, %v3741
  %v3867 = vpack.c.b16 %v3744, %v3743
  %v3868 = vpack.c.b16 %v3746, %v3745
  %v3869 = vpack.c.b16 %v3748, %v3747
  %v3870 = vpack.c.b16 %v3750, %v3749
  %v3871 = vpack.c.b16 %v3752, %v3751
  %v3872 = vpack.c.b16 %v3754, %v3753
  %v3873 = vpack.c.b16 %v3756, %v3755
  %v3874 = vpack.c.b16 %v3758, %v3757
  %v3875 = vpack.c.b16 %v3760, %v3759
  %v3876 = vpack.c.b16 %v3762, %v3761
  %v3877 = vpack.c.b16 %v3764, %v3763
  %v3878 = vpack.c.b16 %v3766, %v3765
  %v3879 = vpack.c.b16 %v3768, %v3767
  %v3880 = vpack.c.b16 %v3770, %v3769
  %v3881 = vpack.c.b16 %v3772, %v3771
  %v3882 = vpack.c.b16 %v3774, %v3773
  %v3883 = vpack.c.b16 %v3776, %v3775
  %v3884 = vpack.c.b16 %v3778, %v3777
  %v3885 = vpack.c.b16 %v3780, %v3779
  %v3886 = vpack.c.b16 %v3782, %v3781
  %v3887 = vpack.c.b16 %v3784, %v3783
  %v3888 = vpack.c.b16 %v3786, %v3785
  %v3889 = vpack.c.b16 %v3788, %v3787
  %v3890 = vpack.c.b16 %v3790, %v3789
  %v3891 = vpack.c.b16 %v3792, %v3791
  %v3892 = vpack.c.b16 %v3794, %v3793
  %v3893 = vpack.c.b16 %v3796, %v3795
  %v3894 = vpack.c.b16 %v3798, %v3797
  %v3895 = vpack.c.b16 %v3800, %v3799
  %v3896 = vpack.c.b16 %v3802, %v3801
  %v3897 = vpack.c.b16 %v3804, %v3803
  %v3898 = vpack.c.b16 %v3806, %v3805
  %v3899 = vpack.c.b16 %v3808, %v3807
  %v3900 = vpack.c.b16 %v3810, %v3809
  %v3901 = vpack.c.b16 %v3812, %v3811
  %v3902 = vpack.c.b16 %v3814, %v3813
  %v3903 = vpack.c.b16 %v3816, %v3815
  %v3904 = vpack.c.b16 %v3818, %v3817
  %v3905 = vpack.c.b16 %v3820, %v3819
  %v3906 = vpack.c.b16 %v3822, %v3821
  %v3907 = vpack.c.b16 %v3824, %v3823
  %v3908 = vpack.c.b16 %v3826, %v3825
  %v3909 = vpack.c.b16 %v3828, %v3827
  %v3910 = vpack.c.b16 %v3830, %v3829
  %v3911 = vpack.c.b16 %v3832, %v3831
  %v3912 = vpack.c.b16 %v3834, %v3833
  %v3913 = vpack.c.b16 %v3836, %v3835
  %v3914 = vpack.c.b16 %v3838, %v3837
  %v3915 = vpack.c.b16 %v3840, %v3839
  %v3916 = vpack.c.b16 %v3842, %v3841
  %v3917 = vpack.c.b16 %v3844, %v3843
  %v3918 = vpack.c.b16 %v3846, %v3845
  %v3919 = vpack.c.b16 %v3848, %v3847
  %v3920 = vpack.c.b16 %v3850, %v3849
  %v3921 = vpack.c.b16 %v3852, %v3851
  %v3922 = vpack.c.b16 %v3854, %v3853
  %v3923 = vpack.c.b16 %v3856, %v3855
  %v3924 = vpack.c.b16 %v3858, %v3857
  %v3925 = vpack.c.b16 %v3860, %v3859
  %v3926 = vpack.c.b16 %v3862, %v3861
  %3991 = vmatpush.bf16.msra.mxu0 %v3870
  %3992 = vmatpush.bf16.msra.mxu0 %v3869
  %3993 = vmatpush.bf16.msra.mxu0 %v3868
  %3994 = vmatpush.bf16.msra.mxu0 %v3867
  %3995 = vmatpush.bf16.msra.mxu0 %v3866
  %3996 = vmatpush.bf16.msra.mxu0 %v3865
  %3997 = vmatpush.bf16.msra.mxu0 %v3864
  %3998 = vmatpush.bf16.msra.mxu0 %v3863
  %3999 = vmatmul.bf16.gmra.mxu0 %v1231
  %v4000 = vpop.f32.mrf.mxu0
  %v4001 = vadd.f32 0.0, %v4000
  %v4002 = vpop.f32.mrf.mxu0
  %v4003 = vadd.f32 0.0, %v4002
  %4004 = vmatmul.bf16.gmra.mxu0 %v1239
  %v4005 = vpop.f32.mrf.mxu0
  %v4006 = vadd.f32 0.0, %v4005
  %v4007 = vpop.f32.mrf.mxu0
  %v4008 = vadd.f32 0.0, %v4007
  %4009 = vmatmul.bf16.gmra.mxu0 %v1247
  %v4010 = vpop.f32.mrf.mxu0
  %v4011 = vadd.f32 0.0, %v4010
  %v4012 = vpop.f32.mrf.mxu0
  %v4013 = vadd.f32 0.0, %v4012
  %4014 = vmatmul.bf16.gmra.mxu0 %v1255
  %v4015 = vpop.f32.mrf.mxu0
  %v4016 = vadd.f32 0.0, %v4015
  %v4017 = vpop.f32.mrf.mxu0
  %v4018 = vadd.f32 0.0, %v4017
  %4019 = vmatmul.bf16.gmra.mxu0 %v1263
  %v4020 = vpop.f32.mrf.mxu0
  %v4021 = vadd.f32 0.0, %v4020
  %v4022 = vpop.f32.mrf.mxu0
  %v4023 = vadd.f32 0.0, %v4022
  %4024 = vmatmul.bf16.gmra.mxu0 %v1271
  %v4025 = vpop.f32.mrf.mxu0
  %v4026 = vadd.f32 0.0, %v4025
  %v4027 = vpop.f32.mrf.mxu0
  %v4028 = vadd.f32 0.0, %v4027
  %4029 = vmatmul.bf16.gmra.mxu0 %v1279
  %v4030 = vpop.f32.mrf.mxu0
  %v4031 = vadd.f32 0.0, %v4030
  %v4032 = vpop.f32.mrf.mxu0
  %v4033 = vadd.f32 0.0, %v4032
  %4034 = vmatmul.bf16.gmra.mxu0 %v1287
  %v4035 = vpop.f32.mrf.mxu0
  %v4036 = vadd.f32 0.0, %v4035
  %v4037 = vpop.f32.mrf.mxu0
  %v4038 = vadd.f32 0.0, %v4037
  %4039 = vmatmul.bf16.gmra.mxu0 %v1295
  %v4040 = vpop.f32.mrf.mxu0
  %v4041 = vadd.f32 0.0, %v4040
  %v4042 = vpop.f32.mrf.mxu0
  %v4043 = vadd.f32 0.0, %v4042
  %4044 = vmatmul.bf16.gmra.mxu0 %v1303
  %v4045 = vpop.f32.mrf.mxu0
  %v4046 = vadd.f32 0.0, %v4045
  %v4047 = vpop.f32.mrf.mxu0
  %v4048 = vadd.f32 0.0, %v4047
  %4049 = vmatmul.bf16.gmra.mxu0 %v1311
  %v4050 = vpop.f32.mrf.mxu0
  %v4051 = vadd.f32 0.0, %v4050
  %v4052 = vpop.f32.mrf.mxu0
  %v4053 = vadd.f32 0.0, %v4052
  %4054 = vmatmul.bf16.gmra.mxu0 %v1319
  %v4055 = vpop.f32.mrf.mxu0
  %v4056 = vadd.f32 0.0, %v4055
  %v4057 = vpop.f32.mrf.mxu0
  %v4058 = vadd.f32 0.0, %v4057
  %4059 = vmatmul.bf16.gmra.mxu0 %v1327
  %v4060 = vpop.f32.mrf.mxu0
  %v4061 = vadd.f32 0.0, %v4060
  %v4062 = vpop.f32.mrf.mxu0
  %v4063 = vadd.f32 0.0, %v4062
  %4064 = vmatmul.bf16.gmra.mxu0 %v1335
  %v4065 = vpop.f32.mrf.mxu0
  %v4066 = vadd.f32 0.0, %v4065
  %v4067 = vpop.f32.mrf.mxu0
  %v4068 = vadd.f32 0.0, %v4067
  %4069 = vmatmul.bf16.gmra.mxu0 %v1343
  %v4070 = vpop.f32.mrf.mxu0
  %v4071 = vadd.f32 0.0, %v4070
  %v4072 = vpop.f32.mrf.mxu0
  %v4073 = vadd.f32 0.0, %v4072
  %4074 = vmatmul.bf16.gmra.mxu0 %v1351
  %v4075 = vpop.f32.mrf.mxu0
  %v4076 = vadd.f32 0.0, %v4075
  %v4077 = vpop.f32.mrf.mxu0
  %v4078 = vadd.f32 0.0, %v4077
  %4079 = vmatmul.bf16.gmra.mxu0 %v1359
  %v4080 = vpop.f32.mrf.mxu0
  %v4081 = vadd.f32 0.0, %v4080
  %v4082 = vpop.f32.mrf.mxu0
  %v4083 = vadd.f32 0.0, %v4082
  %4084 = vmatmul.bf16.gmra.mxu0 %v1367
  %v4085 = vpop.f32.mrf.mxu0
  %v4086 = vadd.f32 0.0, %v4085
  %v4087 = vpop.f32.mrf.mxu0
  %v4088 = vadd.f32 0.0, %v4087
  %4089 = vmatmul.bf16.gmra.mxu0 %v1375
  %v4090 = vpop.f32.mrf.mxu0
  %v4091 = vadd.f32 0.0, %v4090
  %v4092 = vpop.f32.mrf.mxu0
  %v4093 = vadd.f32 0.0, %v4092
  %4094 = vmatmul.bf16.gmra.mxu0 %v1383
  %v4095 = vpop.f32.mrf.mxu0
  %v4096 = vadd.f32 0.0, %v4095
  %v4097 = vpop.f32.mrf.mxu0
  %v4098 = vadd.f32 0.0, %v4097
  %4099 = vmatmul.bf16.gmra.mxu0 %v1391
  %v4100 = vpop.f32.mrf.mxu0
  %v4101 = vadd.f32 0.0, %v4100
  %v4102 = vpop.f32.mrf.mxu0
  %v4103 = vadd.f32 0.0, %v4102
  %4104 = vmatmul.bf16.gmra.mxu0 %v1399
  %v4105 = vpop.f32.mrf.mxu0
  %v4106 = vadd.f32 0.0, %v4105
  %v4107 = vpop.f32.mrf.mxu0
  %v4108 = vadd.f32 0.0, %v4107
  %4109 = vmatmul.bf16.gmra.mxu0 %v1407
  %v4110 = vpop.f32.mrf.mxu0
  %v4111 = vadd.f32 0.0, %v4110
  %v4112 = vpop.f32.mrf.mxu0
  %v4113 = vadd.f32 0.0, %v4112
  %4114 = vmatmul.bf16.gmra.mxu0 %v1415
  %v4115 = vpop.f32.mrf.mxu0
  %v4116 = vadd.f32 0.0, %v4115
  %v4117 = vpop.f32.mrf.mxu0
  %v4118 = vadd.f32 0.0, %v4117
  %4119 = vmatmul.bf16.gmra.mxu0 %v1423
  %v4120 = vpop.f32.mrf.mxu0
  %v4121 = vadd.f32 0.0, %v4120
  %v4122 = vpop.f32.mrf.mxu0
  %v4123 = vadd.f32 0.0, %v4122
  %4124 = vmatmul.bf16.gmra.mxu0 %v1431
  %v4125 = vpop.f32.mrf.mxu0
  %v4126 = vadd.f32 0.0, %v4125
  %v4127 = vpop.f32.mrf.mxu0
  %v4128 = vadd.f32 0.0, %v4127
  %4129 = vmatmul.bf16.gmra.mxu0 %v1439
  %v4130 = vpop.f32.mrf.mxu0
  %v4131 = vadd.f32 0.0, %v4130
  %v4132 = vpop.f32.mrf.mxu0
  %v4133 = vadd.f32 0.0, %v4132
  %4134 = vmatmul.bf16.gmra.mxu0 %v1447
  %v4135 = vpop.f32.mrf.mxu0
  %v4136 = vadd.f32 0.0, %v4135
  %v4137 = vpop.f32.mrf.mxu0
  %v4138 = vadd.f32 0.0, %v4137
  %4139 = vmatmul.bf16.gmra.mxu0 %v1455
  %v4140 = vpop.f32.mrf.mxu0
  %v4141 = vadd.f32 0.0, %v4140
  %v4142 = vpop.f32.mrf.mxu0
  %v4143 = vadd.f32 0.0, %v4142
  %4144 = vmatmul.bf16.gmra.mxu0 %v1463
  %v4145 = vpop.f32.mrf.mxu0
  %v4146 = vadd.f32 0.0, %v4145
  %v4147 = vpop.f32.mrf.mxu0
  %v4148 = vadd.f32 0.0, %v4147
  %4149 = vmatmul.bf16.gmra.mxu0 %v1471
  %v4150 = vpop.f32.mrf.mxu0
  %v4151 = vadd.f32 0.0, %v4150
  %v4152 = vpop.f32.mrf.mxu0
  %v4153 = vadd.f32 0.0, %v4152
  %4154 = vmatmul.bf16.gmra.mxu0 %v1479
  %v4155 = vpop.f32.mrf.mxu0
  %v4156 = vadd.f32 0.0, %v4155
  %v4157 = vpop.f32.mrf.mxu0
  %v4158 = vadd.f32 0.0, %v4157
  %4159 = vdwg.mxu0
  %4160 = vmatpush.bf16.msra.mxu0 %v3878
  %4161 = vmatpush.bf16.msra.mxu0 %v3877
  %4162 = vmatpush.bf16.msra.mxu0 %v3876
  %4163 = vmatpush.bf16.msra.mxu0 %v3875
  %4164 = vmatpush.bf16.msra.mxu0 %v3874
  %4165 = vmatpush.bf16.msra.mxu0 %v3873
  %4166 = vmatpush.bf16.msra.mxu0 %v3872
  %4167 = vmatpush.bf16.msra.mxu0 %v3871
  %4168 = vmatmul.bf16.gmra.mxu0 %v1232
  %v4169 = vpop.f32.mrf.mxu0
  %v4170 = vadd.f32 %v4001, %v4169
  %v4171 = vpop.f32.mrf.mxu0
  %v4172 = vadd.f32 %v4003, %v4171
  %4173 = vmatmul.bf16.gmra.mxu0 %v1240
  %v4174 = vpop.f32.mrf.mxu0
  %v4175 = vadd.f32 %v4006, %v4174
  %v4176 = vpop.f32.mrf.mxu0
  %v4177 = vadd.f32 %v4008, %v4176
  %4178 = vmatmul.bf16.gmra.mxu0 %v1248
  %v4179 = vpop.f32.mrf.mxu0
  %v4180 = vadd.f32 %v4011, %v4179
  %v4181 = vpop.f32.mrf.mxu0
  %v4182 = vadd.f32 %v4013, %v4181
  %4183 = vmatmul.bf16.gmra.mxu0 %v1256
  %v4184 = vpop.f32.mrf.mxu0
  %v4185 = vadd.f32 %v4016, %v4184
  %v4186 = vpop.f32.mrf.mxu0
  %v4187 = vadd.f32 %v4018, %v4186
  %4188 = vmatmul.bf16.gmra.mxu0 %v1264
  %v4189 = vpop.f32.mrf.mxu0
  %v4190 = vadd.f32 %v4021, %v4189
  %v4191 = vpop.f32.mrf.mxu0
  %v4192 = vadd.f32 %v4023, %v4191
  %4193 = vmatmul.bf16.gmra.mxu0 %v1272
  %v4194 = vpop.f32.mrf.mxu0
  %v4195 = vadd.f32 %v4026, %v4194
  %v4196 = vpop.f32.mrf.mxu0
  %v4197 = vadd.f32 %v4028, %v4196
  %4198 = vmatmul.bf16.gmra.mxu0 %v1280
  %v4199 = vpop.f32.mrf.mxu0
  %v4200 = vadd.f32 %v4031, %v4199
  %v4201 = vpop.f32.mrf.mxu0
  %v4202 = vadd.f32 %v4033, %v4201
  %4203 = vmatmul.bf16.gmra.mxu0 %v1288
  %v4204 = vpop.f32.mrf.mxu0
  %v4205 = vadd.f32 %v4036, %v4204
  %v4206 = vpop.f32.mrf.mxu0
  %v4207 = vadd.f32 %v4038, %v4206
  %4208 = vmatmul.bf16.gmra.mxu0 %v1296
  %v4209 = vpop.f32.mrf.mxu0
  %v4210 = vadd.f32 %v4041, %v4209
  %v4211 = vpop.f32.mrf.mxu0
  %v4212 = vadd.f32 %v4043, %v4211
  %4213 = vmatmul.bf16.gmra.mxu0 %v1304
  %v4214 = vpop.f32.mrf.mxu0
  %v4215 = vadd.f32 %v4046, %v4214
  %v4216 = vpop.f32.mrf.mxu0
  %v4217 = vadd.f32 %v4048, %v4216
  %4218 = vmatmul.bf16.gmra.mxu0 %v1312
  %v4219 = vpop.f32.mrf.mxu0
  %v4220 = vadd.f32 %v4051, %v4219
  %v4221 = vpop.f32.mrf.mxu0
  %v4222 = vadd.f32 %v4053, %v4221
  %4223 = vmatmul.bf16.gmra.mxu0 %v1320
  %v4224 = vpop.f32.mrf.mxu0
  %v4225 = vadd.f32 %v4056, %v4224
  %v4226 = vpop.f32.mrf.mxu0
  %v4227 = vadd.f32 %v4058, %v4226
  %4228 = vmatmul.bf16.gmra.mxu0 %v1328
  %v4229 = vpop.f32.mrf.mxu0
  %v4230 = vadd.f32 %v4061, %v4229
  %v4231 = vpop.f32.mrf.mxu0
  %v4232 = vadd.f32 %v4063, %v4231
  %4233 = vmatmul.bf16.gmra.mxu0 %v1336
  %v4234 = vpop.f32.mrf.mxu0
  %v4235 = vadd.f32 %v4066, %v4234
  %v4236 = vpop.f32.mrf.mxu0
  %v4237 = vadd.f32 %v4068, %v4236
  %4238 = vmatmul.bf16.gmra.mxu0 %v1344
  %v4239 = vpop.f32.mrf.mxu0
  %v4240 = vadd.f32 %v4071, %v4239
  %v4241 = vpop.f32.mrf.mxu0
  %v4242 = vadd.f32 %v4073, %v4241
  %4243 = vmatmul.bf16.gmra.mxu0 %v1352
  %v4244 = vpop.f32.mrf.mxu0
  %v4245 = vadd.f32 %v4076, %v4244
  %v4246 = vpop.f32.mrf.mxu0
  %v4247 = vadd.f32 %v4078, %v4246
  %4248 = vmatmul.bf16.gmra.mxu0 %v1360
  %v4249 = vpop.f32.mrf.mxu0
  %v4250 = vadd.f32 %v4081, %v4249
  %v4251 = vpop.f32.mrf.mxu0
  %v4252 = vadd.f32 %v4083, %v4251
  %4253 = vmatmul.bf16.gmra.mxu0 %v1368
  %v4254 = vpop.f32.mrf.mxu0
  %v4255 = vadd.f32 %v4086, %v4254
  %v4256 = vpop.f32.mrf.mxu0
  %v4257 = vadd.f32 %v4088, %v4256
  %4258 = vmatmul.bf16.gmra.mxu0 %v1376
  %v4259 = vpop.f32.mrf.mxu0
  %v4260 = vadd.f32 %v4091, %v4259
  %v4261 = vpop.f32.mrf.mxu0
  %v4262 = vadd.f32 %v4093, %v4261
  %4263 = vmatmul.bf16.gmra.mxu0 %v1384
  %v4264 = vpop.f32.mrf.mxu0
  %v4265 = vadd.f32 %v4096, %v4264
  %v4266 = vpop.f32.mrf.mxu0
  %v4267 = vadd.f32 %v4098, %v4266
  %4268 = vmatmul.bf16.gmra.mxu0 %v1392
  %v4269 = vpop.f32.mrf.mxu0
  %v4270 = vadd.f32 %v4101, %v4269
  %v4271 = vpop.f32.mrf.mxu0
  %v4272 = vadd.f32 %v4103, %v4271
  %4273 = vmatmul.bf16.gmra.mxu0 %v1400
  %v4274 = vpop.f32.mrf.mxu0
  %v4275 = vadd.f32 %v4106, %v4274
  %v4276 = vpop.f32.mrf.mxu0
  %v4277 = vadd.f32 %v4108, %v4276
  %4278 = vmatmul.bf16.gmra.mxu0 %v1408
  %v4279 = vpop.f32.mrf.mxu0
  %v4280 = vadd.f32 %v4111, %v4279
  %v4281 = vpop.f32.mrf.mxu0
  %v4282 = vadd.f32 %v4113, %v4281
  %4283 = vmatmul.bf16.gmra.mxu0 %v1416
  %v4284 = vpop.f32.mrf.mxu0
  %v4285 = vadd.f32 %v4116, %v4284
  %v4286 = vpop.f32.mrf.mxu0
  %v4287 = vadd.f32 %v4118, %v4286
  %4288 = vmatmul.bf16.gmra.mxu0 %v1424
  %v4289 = vpop.f32.mrf.mxu0
  %v4290 = vadd.f32 %v4121, %v4289
  %v4291 = vpop.f32.mrf.mxu0
  %v4292 = vadd.f32 %v4123, %v4291
  %4293 = vmatmul.bf16.gmra.mxu0 %v1432
  %v4294 = vpop.f32.mrf.mxu0
  %v4295 = vadd.f32 %v4126, %v4294
  %v4296 = vpop.f32.mrf.mxu0
  %v4297 = vadd.f32 %v4128, %v4296
  %4298 = vmatmul.bf16.gmra.mxu0 %v1440
  %v4299 = vpop.f32.mrf.mxu0
  %v4300 = vadd.f32 %v4131, %v4299
  %v4301 = vpop.f32.mrf.mxu0
  %v4302 = vadd.f32 %v4133, %v4301
  %4303 = vmatmul.bf16.gmra.mxu0 %v1448
  %v4304 = vpop.f32.mrf.mxu0
  %v4305 = vadd.f32 %v4136, %v4304
  %v4306 = vpop.f32.mrf.mxu0
  %v4307 = vadd.f32 %v4138, %v4306
  %4308 = vmatmul.bf16.gmra.mxu0 %v1456
  %v4309 = vpop.f32.mrf.mxu0
  %v4310 = vadd.f32 %v4141, %v4309
  %v4311 = vpop.f32.mrf.mxu0
  %v4312 = vadd.f32 %v4143, %v4311
  %4313 = vmatmul.bf16.gmra.mxu0 %v1464
  %v4314 = vpop.f32.mrf.mxu0
  %v4315 = vadd.f32 %v4146, %v4314
  %v4316 = vpop.f32.mrf.mxu0
  %v4317 = vadd.f32 %v4148, %v4316
  %4318 = vmatmul.bf16.gmra.mxu0 %v1472
  %v4319 = vpop.f32.mrf.mxu0
  %v4320 = vadd.f32 %v4151, %v4319
  %v4321 = vpop.f32.mrf.mxu0
  %v4322 = vadd.f32 %v4153, %v4321
  %4323 = vmatmul.bf16.gmra.mxu0 %v1480
  %v4324 = vpop.f32.mrf.mxu0
  %v4325 = vadd.f32 %v4156, %v4324
  %v4326 = vpop.f32.mrf.mxu0
  %v4327 = vadd.f32 %v4158, %v4326
  %4328 = vdwg.mxu0
  %4329 = vmatpush.bf16.msra.mxu0 %v3886
  %4330 = vmatpush.bf16.msra.mxu0 %v3885
  %4331 = vmatpush.bf16.msra.mxu0 %v3884
  %4332 = vmatpush.bf16.msra.mxu0 %v3883
  %4333 = vmatpush.bf16.msra.mxu0 %v3882
  %4334 = vmatpush.bf16.msra.mxu0 %v3881
  %4335 = vmatpush.bf16.msra.mxu0 %v3880
  %4336 = vmatpush.bf16.msra.mxu0 %v3879
  %4337 = vmatmul.bf16.gmra.mxu0 %v1233
  %v4338 = vpop.f32.mrf.mxu0
  %v4339 = vadd.f32 %v4170, %v4338
  %v4340 = vpop.f32.mrf.mxu0
  %v4341 = vadd.f32 %v4172, %v4340
  %4342 = vmatmul.bf16.gmra.mxu0 %v1241
  %v4343 = vpop.f32.mrf.mxu0
  %v4344 = vadd.f32 %v4175, %v4343
  %v4345 = vpop.f32.mrf.mxu0
  %v4346 = vadd.f32 %v4177, %v4345
  %4347 = vmatmul.bf16.gmra.mxu0 %v1249
  %v4348 = vpop.f32.mrf.mxu0
  %v4349 = vadd.f32 %v4180, %v4348
  %v4350 = vpop.f32.mrf.mxu0
  %v4351 = vadd.f32 %v4182, %v4350
  %4352 = vmatmul.bf16.gmra.mxu0 %v1257
  %v4353 = vpop.f32.mrf.mxu0
  %v4354 = vadd.f32 %v4185, %v4353
  %v4355 = vpop.f32.mrf.mxu0
  %v4356 = vadd.f32 %v4187, %v4355
  %4357 = vmatmul.bf16.gmra.mxu0 %v1265
  %v4358 = vpop.f32.mrf.mxu0
  %v4359 = vadd.f32 %v4190, %v4358
  %v4360 = vpop.f32.mrf.mxu0
  %v4361 = vadd.f32 %v4192, %v4360
  %4362 = vmatmul.bf16.gmra.mxu0 %v1273
  %v4363 = vpop.f32.mrf.mxu0
  %v4364 = vadd.f32 %v4195, %v4363
  %v4365 = vpop.f32.mrf.mxu0
  %v4366 = vadd.f32 %v4197, %v4365
  %4367 = vmatmul.bf16.gmra.mxu0 %v1281
  %v4368 = vpop.f32.mrf.mxu0
  %v4369 = vadd.f32 %v4200, %v4368
  %v4370 = vpop.f32.mrf.mxu0
  %v4371 = vadd.f32 %v4202, %v4370
  %4372 = vmatmul.bf16.gmra.mxu0 %v1289
  %v4373 = vpop.f32.mrf.mxu0
  %v4374 = vadd.f32 %v4205, %v4373
  %v4375 = vpop.f32.mrf.mxu0
  %v4376 = vadd.f32 %v4207, %v4375
  %4377 = vmatmul.bf16.gmra.mxu0 %v1297
  %v4378 = vpop.f32.mrf.mxu0
  %v4379 = vadd.f32 %v4210, %v4378
  %v4380 = vpop.f32.mrf.mxu0
  %v4381 = vadd.f32 %v4212, %v4380
  %4382 = vmatmul.bf16.gmra.mxu0 %v1305
  %v4383 = vpop.f32.mrf.mxu0
  %v4384 = vadd.f32 %v4215, %v4383
  %v4385 = vpop.f32.mrf.mxu0
  %v4386 = vadd.f32 %v4217, %v4385
  %4387 = vmatmul.bf16.gmra.mxu0 %v1313
  %v4388 = vpop.f32.mrf.mxu0
  %v4389 = vadd.f32 %v4220, %v4388
  %v4390 = vpop.f32.mrf.mxu0
  %v4391 = vadd.f32 %v4222, %v4390
  %4392 = vmatmul.bf16.gmra.mxu0 %v1321
  %v4393 = vpop.f32.mrf.mxu0
  %v4394 = vadd.f32 %v4225, %v4393
  %v4395 = vpop.f32.mrf.mxu0
  %v4396 = vadd.f32 %v4227, %v4395
  %4397 = vmatmul.bf16.gmra.mxu0 %v1329
  %v4398 = vpop.f32.mrf.mxu0
  %v4399 = vadd.f32 %v4230, %v4398
  %v4400 = vpop.f32.mrf.mxu0
  %v4401 = vadd.f32 %v4232, %v4400
  %4402 = vmatmul.bf16.gmra.mxu0 %v1337
  %v4403 = vpop.f32.mrf.mxu0
  %v4404 = vadd.f32 %v4235, %v4403
  %v4405 = vpop.f32.mrf.mxu0
  %v4406 = vadd.f32 %v4237, %v4405
  %4407 = vmatmul.bf16.gmra.mxu0 %v1345
  %v4408 = vpop.f32.mrf.mxu0
  %v4409 = vadd.f32 %v4240, %v4408
  %v4410 = vpop.f32.mrf.mxu0
  %v4411 = vadd.f32 %v4242, %v4410
  %4412 = vmatmul.bf16.gmra.mxu0 %v1353
  %v4413 = vpop.f32.mrf.mxu0
  %v4414 = vadd.f32 %v4245, %v4413
  %v4415 = vpop.f32.mrf.mxu0
  %v4416 = vadd.f32 %v4247, %v4415
  %4417 = vmatmul.bf16.gmra.mxu0 %v1361
  %v4418 = vpop.f32.mrf.mxu0
  %v4419 = vadd.f32 %v4250, %v4418
  %v4420 = vpop.f32.mrf.mxu0
  %v4421 = vadd.f32 %v4252, %v4420
  %4422 = vmatmul.bf16.gmra.mxu0 %v1369
  %v4423 = vpop.f32.mrf.mxu0
  %v4424 = vadd.f32 %v4255, %v4423
  %v4425 = vpop.f32.mrf.mxu0
  %v4426 = vadd.f32 %v4257, %v4425
  %4427 = vmatmul.bf16.gmra.mxu0 %v1377
  %v4428 = vpop.f32.mrf.mxu0
  %v4429 = vadd.f32 %v4260, %v4428
  %v4430 = vpop.f32.mrf.mxu0
  %v4431 = vadd.f32 %v4262, %v4430
  %4432 = vmatmul.bf16.gmra.mxu0 %v1385
  %v4433 = vpop.f32.mrf.mxu0
  %v4434 = vadd.f32 %v4265, %v4433
  %v4435 = vpop.f32.mrf.mxu0
  %v4436 = vadd.f32 %v4267, %v4435
  %4437 = vmatmul.bf16.gmra.mxu0 %v1393
  %v4438 = vpop.f32.mrf.mxu0
  %v4439 = vadd.f32 %v4270, %v4438
  %v4440 = vpop.f32.mrf.mxu0
  %v4441 = vadd.f32 %v4272, %v4440
  %4442 = vmatmul.bf16.gmra.mxu0 %v1401
  %v4443 = vpop.f32.mrf.mxu0
  %v4444 = vadd.f32 %v4275, %v4443
  %v4445 = vpop.f32.mrf.mxu0
  %v4446 = vadd.f32 %v4277, %v4445
  %4447 = vmatmul.bf16.gmra.mxu0 %v1409
  %v4448 = vpop.f32.mrf.mxu0
  %v4449 = vadd.f32 %v4280, %v4448
  %v4450 = vpop.f32.mrf.mxu0
  %v4451 = vadd.f32 %v4282, %v4450
  %4452 = vmatmul.bf16.gmra.mxu0 %v1417
  %v4453 = vpop.f32.mrf.mxu0
  %v4454 = vadd.f32 %v4285, %v4453
  %v4455 = vpop.f32.mrf.mxu0
  %v4456 = vadd.f32 %v4287, %v4455
  %4457 = vmatmul.bf16.gmra.mxu0 %v1425
  %v4458 = vpop.f32.mrf.mxu0
  %v4459 = vadd.f32 %v4290, %v4458
  %v4460 = vpop.f32.mrf.mxu0
  %v4461 = vadd.f32 %v4292, %v4460
  %4462 = vmatmul.bf16.gmra.mxu0 %v1433
  %v4463 = vpop.f32.mrf.mxu0
  %v4464 = vadd.f32 %v4295, %v4463
  %v4465 = vpop.f32.mrf.mxu0
  %v4466 = vadd.f32 %v4297, %v4465
  %4467 = vmatmul.bf16.gmra.mxu0 %v1441
  %v4468 = vpop.f32.mrf.mxu0
  %v4469 = vadd.f32 %v4300, %v4468
  %v4470 = vpop.f32.mrf.mxu0
  %v4471 = vadd.f32 %v4302, %v4470
  %4472 = vmatmul.bf16.gmra.mxu0 %v1449
  %v4473 = vpop.f32.mrf.mxu0
  %v4474 = vadd.f32 %v4305, %v4473
  %v4475 = vpop.f32.mrf.mxu0
  %v4476 = vadd.f32 %v4307, %v4475
  %4477 = vmatmul.bf16.gmra.mxu0 %v1457
  %v4478 = vpop.f32.mrf.mxu0
  %v4479 = vadd.f32 %v4310, %v4478
  %v4480 = vpop.f32.mrf.mxu0
  %v4481 = vadd.f32 %v4312, %v4480
  %4482 = vmatmul.bf16.gmra.mxu0 %v1465
  %v4483 = vpop.f32.mrf.mxu0
  %v4484 = vadd.f32 %v4315, %v4483
  %v4485 = vpop.f32.mrf.mxu0
  %v4486 = vadd.f32 %v4317, %v4485
  %4487 = vmatmul.bf16.gmra.mxu0 %v1473
  %v4488 = vpop.f32.mrf.mxu0
  %v4489 = vadd.f32 %v4320, %v4488
  %v4490 = vpop.f32.mrf.mxu0
  %v4491 = vadd.f32 %v4322, %v4490
  %4492 = vmatmul.bf16.gmra.mxu0 %v1481
  %v4493 = vpop.f32.mrf.mxu0
  %v4494 = vadd.f32 %v4325, %v4493
  %v4495 = vpop.f32.mrf.mxu0
  %v4496 = vadd.f32 %v4327, %v4495
  %4497 = vdwg.mxu0
  %4498 = vmatpush.bf16.msra.mxu0 %v3894
  %4499 = vmatpush.bf16.msra.mxu0 %v3893
  %4500 = vmatpush.bf16.msra.mxu0 %v3892
  %4501 = vmatpush.bf16.msra.mxu0 %v3891
  %4502 = vmatpush.bf16.msra.mxu0 %v3890
  %4503 = vmatpush.bf16.msra.mxu0 %v3889
  %4504 = vmatpush.bf16.msra.mxu0 %v3888
  %4505 = vmatpush.bf16.msra.mxu0 %v3887
  %4506 = vmatmul.bf16.gmra.mxu0 %v1234
  %v4507 = vpop.f32.mrf.mxu0
  %v4508 = vadd.f32 %v4339, %v4507
  %v4509 = vpop.f32.mrf.mxu0
  %v4510 = vadd.f32 %v4341, %v4509
  %4511 = vmatmul.bf16.gmra.mxu0 %v1242
  %v4512 = vpop.f32.mrf.mxu0
  %v4513 = vadd.f32 %v4344, %v4512
  %v4514 = vpop.f32.mrf.mxu0
  %v4515 = vadd.f32 %v4346, %v4514
  %4516 = vmatmul.bf16.gmra.mxu0 %v1250
  %v4517 = vpop.f32.mrf.mxu0
  %v4518 = vadd.f32 %v4349, %v4517
  %v4519 = vpop.f32.mrf.mxu0
  %v4520 = vadd.f32 %v4351, %v4519
  %4521 = vmatmul.bf16.gmra.mxu0 %v1258
  %v4522 = vpop.f32.mrf.mxu0
  %v4523 = vadd.f32 %v4354, %v4522
  %v4524 = vpop.f32.mrf.mxu0
  %v4525 = vadd.f32 %v4356, %v4524
  %4526 = vmatmul.bf16.gmra.mxu0 %v1266
  %v4527 = vpop.f32.mrf.mxu0
  %v4528 = vadd.f32 %v4359, %v4527
  %v4529 = vpop.f32.mrf.mxu0
  %v4530 = vadd.f32 %v4361, %v4529
  %4531 = vmatmul.bf16.gmra.mxu0 %v1274
  %v4532 = vpop.f32.mrf.mxu0
  %v4533 = vadd.f32 %v4364, %v4532
  %v4534 = vpop.f32.mrf.mxu0
  %v4535 = vadd.f32 %v4366, %v4534
  %4536 = vmatmul.bf16.gmra.mxu0 %v1282
  %v4537 = vpop.f32.mrf.mxu0
  %v4538 = vadd.f32 %v4369, %v4537
  %v4539 = vpop.f32.mrf.mxu0
  %v4540 = vadd.f32 %v4371, %v4539
  %4541 = vmatmul.bf16.gmra.mxu0 %v1290
  %v4542 = vpop.f32.mrf.mxu0
  %v4543 = vadd.f32 %v4374, %v4542
  %v4544 = vpop.f32.mrf.mxu0
  %v4545 = vadd.f32 %v4376, %v4544
  %4546 = vmatmul.bf16.gmra.mxu0 %v1298
  %v4547 = vpop.f32.mrf.mxu0
  %v4548 = vadd.f32 %v4379, %v4547
  %v4549 = vpop.f32.mrf.mxu0
  %v4550 = vadd.f32 %v4381, %v4549
  %4551 = vmatmul.bf16.gmra.mxu0 %v1306
  %v4552 = vpop.f32.mrf.mxu0
  %v4553 = vadd.f32 %v4384, %v4552
  %v4554 = vpop.f32.mrf.mxu0
  %v4555 = vadd.f32 %v4386, %v4554
  %4556 = vmatmul.bf16.gmra.mxu0 %v1314
  %v4557 = vpop.f32.mrf.mxu0
  %v4558 = vadd.f32 %v4389, %v4557
  %v4559 = vpop.f32.mrf.mxu0
  %v4560 = vadd.f32 %v4391, %v4559
  %4561 = vmatmul.bf16.gmra.mxu0 %v1322
  %v4562 = vpop.f32.mrf.mxu0
  %v4563 = vadd.f32 %v4394, %v4562
  %v4564 = vpop.f32.mrf.mxu0
  %v4565 = vadd.f32 %v4396, %v4564
  %4566 = vmatmul.bf16.gmra.mxu0 %v1330
  %v4567 = vpop.f32.mrf.mxu0
  %v4568 = vadd.f32 %v4399, %v4567
  %v4569 = vpop.f32.mrf.mxu0
  %v4570 = vadd.f32 %v4401, %v4569
  %4571 = vmatmul.bf16.gmra.mxu0 %v1338
  %v4572 = vpop.f32.mrf.mxu0
  %v4573 = vadd.f32 %v4404, %v4572
  %v4574 = vpop.f32.mrf.mxu0
  %v4575 = vadd.f32 %v4406, %v4574
  %4576 = vmatmul.bf16.gmra.mxu0 %v1346
  %v4577 = vpop.f32.mrf.mxu0
  %v4578 = vadd.f32 %v4409, %v4577
  %v4579 = vpop.f32.mrf.mxu0
  %v4580 = vadd.f32 %v4411, %v4579
  %4581 = vmatmul.bf16.gmra.mxu0 %v1354
  %v4582 = vpop.f32.mrf.mxu0
  %v4583 = vadd.f32 %v4414, %v4582
  %v4584 = vpop.f32.mrf.mxu0
  %v4585 = vadd.f32 %v4416, %v4584
  %4586 = vmatmul.bf16.gmra.mxu0 %v1362
  %v4587 = vpop.f32.mrf.mxu0
  %v4588 = vadd.f32 %v4419, %v4587
  %v4589 = vpop.f32.mrf.mxu0
  %v4590 = vadd.f32 %v4421, %v4589
  %4591 = vmatmul.bf16.gmra.mxu0 %v1370
  %v4592 = vpop.f32.mrf.mxu0
  %v4593 = vadd.f32 %v4424, %v4592
  %v4594 = vpop.f32.mrf.mxu0
  %v4595 = vadd.f32 %v4426, %v4594
  %4596 = vmatmul.bf16.gmra.mxu0 %v1378
  %v4597 = vpop.f32.mrf.mxu0
  %v4598 = vadd.f32 %v4429, %v4597
  %v4599 = vpop.f32.mrf.mxu0
  %v4600 = vadd.f32 %v4431, %v4599
  %4601 = vmatmul.bf16.gmra.mxu0 %v1386
  %v4602 = vpop.f32.mrf.mxu0
  %v4603 = vadd.f32 %v4434, %v4602
  %v4604 = vpop.f32.mrf.mxu0
  %v4605 = vadd.f32 %v4436, %v4604
  %4606 = vmatmul.bf16.gmra.mxu0 %v1394
  %v4607 = vpop.f32.mrf.mxu0
  %v4608 = vadd.f32 %v4439, %v4607
  %v4609 = vpop.f32.mrf.mxu0
  %v4610 = vadd.f32 %v4441, %v4609
  %4611 = vmatmul.bf16.gmra.mxu0 %v1402
  %v4612 = vpop.f32.mrf.mxu0
  %v4613 = vadd.f32 %v4444, %v4612
  %v4614 = vpop.f32.mrf.mxu0
  %v4615 = vadd.f32 %v4446, %v4614
  %4616 = vmatmul.bf16.gmra.mxu0 %v1410
  %v4617 = vpop.f32.mrf.mxu0
  %v4618 = vadd.f32 %v4449, %v4617
  %v4619 = vpop.f32.mrf.mxu0
  %v4620 = vadd.f32 %v4451, %v4619
  %4621 = vmatmul.bf16.gmra.mxu0 %v1418
  %v4622 = vpop.f32.mrf.mxu0
  %v4623 = vadd.f32 %v4454, %v4622
  %v4624 = vpop.f32.mrf.mxu0
  %v4625 = vadd.f32 %v4456, %v4624
  %4626 = vmatmul.bf16.gmra.mxu0 %v1426
  %v4627 = vpop.f32.mrf.mxu0
  %v4628 = vadd.f32 %v4459, %v4627
  %v4629 = vpop.f32.mrf.mxu0
  %v4630 = vadd.f32 %v4461, %v4629
  %4631 = vmatmul.bf16.gmra.mxu0 %v1434
  %v4632 = vpop.f32.mrf.mxu0
  %v4633 = vadd.f32 %v4464, %v4632
  %v4634 = vpop.f32.mrf.mxu0
  %v4635 = vadd.f32 %v4466, %v4634
  %4636 = vmatmul.bf16.gmra.mxu0 %v1442
  %v4637 = vpop.f32.mrf.mxu0
  %v4638 = vadd.f32 %v4469, %v4637
  %v4639 = vpop.f32.mrf.mxu0
  %v4640 = vadd.f32 %v4471, %v4639
  %4641 = vmatmul.bf16.gmra.mxu0 %v1450
  %v4642 = vpop.f32.mrf.mxu0
  %v4643 = vadd.f32 %v4474, %v4642
  %v4644 = vpop.f32.mrf.mxu0
  %v4645 = vadd.f32 %v4476, %v4644
  %4646 = vmatmul.bf16.gmra.mxu0 %v1458
  %v4647 = vpop.f32.mrf.mxu0
  %v4648 = vadd.f32 %v4479, %v4647
  %v4649 = vpop.f32.mrf.mxu0
  %v4650 = vadd.f32 %v4481, %v4649
  %4651 = vmatmul.bf16.gmra.mxu0 %v1466
  %v4652 = vpop.f32.mrf.mxu0
  %v4653 = vadd.f32 %v4484, %v4652
  %v4654 = vpop.f32.mrf.mxu0
  %v4655 = vadd.f32 %v4486, %v4654
  %4656 = vmatmul.bf16.gmra.mxu0 %v1474
  %v4657 = vpop.f32.mrf.mxu0
  %v4658 = vadd.f32 %v4489, %v4657
  %v4659 = vpop.f32.mrf.mxu0
  %v4660 = vadd.f32 %v4491, %v4659
  %4661 = vmatmul.bf16.gmra.mxu0 %v1482
  %v4662 = vpop.f32.mrf.mxu0
  %v4663 = vadd.f32 %v4494, %v4662
  %v4664 = vpop.f32.mrf.mxu0
  %v4665 = vadd.f32 %v4496, %v4664
  %4666 = vdwg.mxu0
  %4667 = vmatpush.bf16.msra.mxu0 %v3902
  %4668 = vmatpush.bf16.msra.mxu0 %v3901
  %4669 = vmatpush.bf16.msra.mxu0 %v3900
  %4670 = vmatpush.bf16.msra.mxu0 %v3899
  %4671 = vmatpush.bf16.msra.mxu0 %v3898
  %4672 = vmatpush.bf16.msra.mxu0 %v3897
  %4673 = vmatpush.bf16.msra.mxu0 %v3896
  %4674 = vmatpush.bf16.msra.mxu0 %v3895
  %4675 = vmatmul.bf16.gmra.mxu0 %v1235
  %v4676 = vpop.f32.mrf.mxu0
  %v4677 = vadd.f32 %v4508, %v4676
  %v4678 = vpop.f32.mrf.mxu0
  %v4679 = vadd.f32 %v4510, %v4678
  %4680 = vmatmul.bf16.gmra.mxu0 %v1243
  %v4681 = vpop.f32.mrf.mxu0
  %v4682 = vadd.f32 %v4513, %v4681
  %v4683 = vpop.f32.mrf.mxu0
  %v4684 = vadd.f32 %v4515, %v4683
  %4685 = vmatmul.bf16.gmra.mxu0 %v1251
  %v4686 = vpop.f32.mrf.mxu0
  %v4687 = vadd.f32 %v4518, %v4686
  %v4688 = vpop.f32.mrf.mxu0
  %v4689 = vadd.f32 %v4520, %v4688
  %4690 = vmatmul.bf16.gmra.mxu0 %v1259
  %v4691 = vpop.f32.mrf.mxu0
  %v4692 = vadd.f32 %v4523, %v4691
  %v4693 = vpop.f32.mrf.mxu0
  %v4694 = vadd.f32 %v4525, %v4693
  %4695 = vmatmul.bf16.gmra.mxu0 %v1267
  %v4696 = vpop.f32.mrf.mxu0
  %v4697 = vadd.f32 %v4528, %v4696
  %v4698 = vpop.f32.mrf.mxu0
  %v4699 = vadd.f32 %v4530, %v4698
  %4700 = vmatmul.bf16.gmra.mxu0 %v1275
  %v4701 = vpop.f32.mrf.mxu0
  %v4702 = vadd.f32 %v4533, %v4701
  %v4703 = vpop.f32.mrf.mxu0
  %v4704 = vadd.f32 %v4535, %v4703
  %4705 = vmatmul.bf16.gmra.mxu0 %v1283
  %v4706 = vpop.f32.mrf.mxu0
  %v4707 = vadd.f32 %v4538, %v4706
  %v4708 = vpop.f32.mrf.mxu0
  %v4709 = vadd.f32 %v4540, %v4708
  %4710 = vmatmul.bf16.gmra.mxu0 %v1291
  %v4711 = vpop.f32.mrf.mxu0
  %v4712 = vadd.f32 %v4543, %v4711
  %v4713 = vpop.f32.mrf.mxu0
  %v4714 = vadd.f32 %v4545, %v4713
  %4715 = vmatmul.bf16.gmra.mxu0 %v1299
  %v4716 = vpop.f32.mrf.mxu0
  %v4717 = vadd.f32 %v4548, %v4716
  %v4718 = vpop.f32.mrf.mxu0
  %v4719 = vadd.f32 %v4550, %v4718
  %4720 = vmatmul.bf16.gmra.mxu0 %v1307
  %v4721 = vpop.f32.mrf.mxu0
  %v4722 = vadd.f32 %v4553, %v4721
  %v4723 = vpop.f32.mrf.mxu0
  %v4724 = vadd.f32 %v4555, %v4723
  %4725 = vmatmul.bf16.gmra.mxu0 %v1315
  %v4726 = vpop.f32.mrf.mxu0
  %v4727 = vadd.f32 %v4558, %v4726
  %v4728 = vpop.f32.mrf.mxu0
  %v4729 = vadd.f32 %v4560, %v4728
  %4730 = vmatmul.bf16.gmra.mxu0 %v1323
  %v4731 = vpop.f32.mrf.mxu0
  %v4732 = vadd.f32 %v4563, %v4731
  %v4733 = vpop.f32.mrf.mxu0
  %v4734 = vadd.f32 %v4565, %v4733
  %4735 = vmatmul.bf16.gmra.mxu0 %v1331
  %v4736 = vpop.f32.mrf.mxu0
  %v4737 = vadd.f32 %v4568, %v4736
  %v4738 = vpop.f32.mrf.mxu0
  %v4739 = vadd.f32 %v4570, %v4738
  %4740 = vmatmul.bf16.gmra.mxu0 %v1339
  %v4741 = vpop.f32.mrf.mxu0
  %v4742 = vadd.f32 %v4573, %v4741
  %v4743 = vpop.f32.mrf.mxu0
  %v4744 = vadd.f32 %v4575, %v4743
  %4745 = vmatmul.bf16.gmra.mxu0 %v1347
  %v4746 = vpop.f32.mrf.mxu0
  %v4747 = vadd.f32 %v4578, %v4746
  %v4748 = vpop.f32.mrf.mxu0
  %v4749 = vadd.f32 %v4580, %v4748
  %4750 = vmatmul.bf16.gmra.mxu0 %v1355
  %v4751 = vpop.f32.mrf.mxu0
  %v4752 = vadd.f32 %v4583, %v4751
  %v4753 = vpop.f32.mrf.mxu0
  %v4754 = vadd.f32 %v4585, %v4753
  %4755 = vmatmul.bf16.gmra.mxu0 %v1363
  %v4756 = vpop.f32.mrf.mxu0
  %v4757 = vadd.f32 %v4588, %v4756
  %v4758 = vpop.f32.mrf.mxu0
  %v4759 = vadd.f32 %v4590, %v4758
  %4760 = vmatmul.bf16.gmra.mxu0 %v1371
  %v4761 = vpop.f32.mrf.mxu0
  %v4762 = vadd.f32 %v4593, %v4761
  %v4763 = vpop.f32.mrf.mxu0
  %v4764 = vadd.f32 %v4595, %v4763
  %4765 = vmatmul.bf16.gmra.mxu0 %v1379
  %v4766 = vpop.f32.mrf.mxu0
  %v4767 = vadd.f32 %v4598, %v4766
  %v4768 = vpop.f32.mrf.mxu0
  %v4769 = vadd.f32 %v4600, %v4768
  %4770 = vmatmul.bf16.gmra.mxu0 %v1387
  %v4771 = vpop.f32.mrf.mxu0
  %v4772 = vadd.f32 %v4603, %v4771
  %v4773 = vpop.f32.mrf.mxu0
  %v4774 = vadd.f32 %v4605, %v4773
  %4775 = vmatmul.bf16.gmra.mxu0 %v1395
  %v4776 = vpop.f32.mrf.mxu0
  %v4777 = vadd.f32 %v4608, %v4776
  %v4778 = vpop.f32.mrf.mxu0
  %v4779 = vadd.f32 %v4610, %v4778
  %4780 = vmatmul.bf16.gmra.mxu0 %v1403
  %v4781 = vpop.f32.mrf.mxu0
  %v4782 = vadd.f32 %v4613, %v4781
  %v4783 = vpop.f32.mrf.mxu0
  %v4784 = vadd.f32 %v4615, %v4783
  %4785 = vmatmul.bf16.gmra.mxu0 %v1411
  %v4786 = vpop.f32.mrf.mxu0
  %v4787 = vadd.f32 %v4618, %v4786
  %v4788 = vpop.f32.mrf.mxu0
  %v4789 = vadd.f32 %v4620, %v4788
  %4790 = vmatmul.bf16.gmra.mxu0 %v1419
  %v4791 = vpop.f32.mrf.mxu0
  %v4792 = vadd.f32 %v4623, %v4791
  %v4793 = vpop.f32.mrf.mxu0
  %v4794 = vadd.f32 %v4625, %v4793
  %4795 = vmatmul.bf16.gmra.mxu0 %v1427
  %v4796 = vpop.f32.mrf.mxu0
  %v4797 = vadd.f32 %v4628, %v4796
  %v4798 = vpop.f32.mrf.mxu0
  %v4799 = vadd.f32 %v4630, %v4798
  %4800 = vmatmul.bf16.gmra.mxu0 %v1435
  %v4801 = vpop.f32.mrf.mxu0
  %v4802 = vadd.f32 %v4633, %v4801
  %v4803 = vpop.f32.mrf.mxu0
  %v4804 = vadd.f32 %v4635, %v4803
  %4805 = vmatmul.bf16.gmra.mxu0 %v1443
  %v4806 = vpop.f32.mrf.mxu0
  %v4807 = vadd.f32 %v4638, %v4806
  %v4808 = vpop.f32.mrf.mxu0
  %v4809 = vadd.f32 %v4640, %v4808
  %4810 = vmatmul.bf16.gmra.mxu0 %v1451
  %v4811 = vpop.f32.mrf.mxu0
  %v4812 = vadd.f32 %v4643, %v4811
  %v4813 = vpop.f32.mrf.mxu0
  %v4814 = vadd.f32 %v4645, %v4813
  %4815 = vmatmul.bf16.gmra.mxu0 %v1459
  %v4816 = vpop.f32.mrf.mxu0
  %v4817 = vadd.f32 %v4648, %v4816
  %v4818 = vpop.f32.mrf.mxu0
  %v4819 = vadd.f32 %v4650, %v4818
  %4820 = vmatmul.bf16.gmra.mxu0 %v1467
  %v4821 = vpop.f32.mrf.mxu0
  %v4822 = vadd.f32 %v4653, %v4821
  %v4823 = vpop.f32.mrf.mxu0
  %v4824 = vadd.f32 %v4655, %v4823
  %4825 = vmatmul.bf16.gmra.mxu0 %v1475
  %v4826 = vpop.f32.mrf.mxu0
  %v4827 = vadd.f32 %v4658, %v4826
  %v4828 = vpop.f32.mrf.mxu0
  %v4829 = vadd.f32 %v4660, %v4828
  %4830 = vmatmul.bf16.gmra.mxu0 %v1483
  %v4831 = vpop.f32.mrf.mxu0
  %v4832 = vadd.f32 %v4663, %v4831
  %v4833 = vpop.f32.mrf.mxu0
  %v4834 = vadd.f32 %v4665, %v4833
  %4835 = vdwg.mxu0
  %4836 = vmatpush.bf16.msra.mxu0 %v3910
  %4837 = vmatpush.bf16.msra.mxu0 %v3909
  %4838 = vmatpush.bf16.msra.mxu0 %v3908
  %4839 = vmatpush.bf16.msra.mxu0 %v3907
  %4840 = vmatpush.bf16.msra.mxu0 %v3906
  %4841 = vmatpush.bf16.msra.mxu0 %v3905
  %4842 = vmatpush.bf16.msra.mxu0 %v3904
  %4843 = vmatpush.bf16.msra.mxu0 %v3903
  %4844 = vmatmul.bf16.gmra.mxu0 %v1236
  %v4845 = vpop.f32.mrf.mxu0
  %v4846 = vadd.f32 %v4677, %v4845
  %v4847 = vpop.f32.mrf.mxu0
  %v4848 = vadd.f32 %v4679, %v4847
  %4849 = vmatmul.bf16.gmra.mxu0 %v1244
  %v4850 = vpop.f32.mrf.mxu0
  %v4851 = vadd.f32 %v4682, %v4850
  %v4852 = vpop.f32.mrf.mxu0
  %v4853 = vadd.f32 %v4684, %v4852
  %4854 = vmatmul.bf16.gmra.mxu0 %v1252
  %v4855 = vpop.f32.mrf.mxu0
  %v4856 = vadd.f32 %v4687, %v4855
  %v4857 = vpop.f32.mrf.mxu0
  %v4858 = vadd.f32 %v4689, %v4857
  %4859 = vmatmul.bf16.gmra.mxu0 %v1260
  %v4860 = vpop.f32.mrf.mxu0
  %v4861 = vadd.f32 %v4692, %v4860
  %v4862 = vpop.f32.mrf.mxu0
  %v4863 = vadd.f32 %v4694, %v4862
  %4864 = vmatmul.bf16.gmra.mxu0 %v1268
  %v4865 = vpop.f32.mrf.mxu0
  %v4866 = vadd.f32 %v4697, %v4865
  %v4867 = vpop.f32.mrf.mxu0
  %v4868 = vadd.f32 %v4699, %v4867
  %4869 = vmatmul.bf16.gmra.mxu0 %v1276
  %v4870 = vpop.f32.mrf.mxu0
  %v4871 = vadd.f32 %v4702, %v4870
  %v4872 = vpop.f32.mrf.mxu0
  %v4873 = vadd.f32 %v4704, %v4872
  %4874 = vmatmul.bf16.gmra.mxu0 %v1284
  %v4875 = vpop.f32.mrf.mxu0
  %v4876 = vadd.f32 %v4707, %v4875
  %v4877 = vpop.f32.mrf.mxu0
  %v4878 = vadd.f32 %v4709, %v4877
  %4879 = vmatmul.bf16.gmra.mxu0 %v1292
  %v4880 = vpop.f32.mrf.mxu0
  %v4881 = vadd.f32 %v4712, %v4880
  %v4882 = vpop.f32.mrf.mxu0
  %v4883 = vadd.f32 %v4714, %v4882
  %4884 = vmatmul.bf16.gmra.mxu0 %v1300
  %v4885 = vpop.f32.mrf.mxu0
  %v4886 = vadd.f32 %v4717, %v4885
  %v4887 = vpop.f32.mrf.mxu0
  %v4888 = vadd.f32 %v4719, %v4887
  %4889 = vmatmul.bf16.gmra.mxu0 %v1308
  %v4890 = vpop.f32.mrf.mxu0
  %v4891 = vadd.f32 %v4722, %v4890
  %v4892 = vpop.f32.mrf.mxu0
  %v4893 = vadd.f32 %v4724, %v4892
  %4894 = vmatmul.bf16.gmra.mxu0 %v1316
  %v4895 = vpop.f32.mrf.mxu0
  %v4896 = vadd.f32 %v4727, %v4895
  %v4897 = vpop.f32.mrf.mxu0
  %v4898 = vadd.f32 %v4729, %v4897
  %4899 = vmatmul.bf16.gmra.mxu0 %v1324
  %v4900 = vpop.f32.mrf.mxu0
  %v4901 = vadd.f32 %v4732, %v4900
  %v4902 = vpop.f32.mrf.mxu0
  %v4903 = vadd.f32 %v4734, %v4902
  %4904 = vmatmul.bf16.gmra.mxu0 %v1332
  %v4905 = vpop.f32.mrf.mxu0
  %v4906 = vadd.f32 %v4737, %v4905
  %v4907 = vpop.f32.mrf.mxu0
  %v4908 = vadd.f32 %v4739, %v4907
  %4909 = vmatmul.bf16.gmra.mxu0 %v1340
  %v4910 = vpop.f32.mrf.mxu0
  %v4911 = vadd.f32 %v4742, %v4910
  %v4912 = vpop.f32.mrf.mxu0
  %v4913 = vadd.f32 %v4744, %v4912
  %4914 = vmatmul.bf16.gmra.mxu0 %v1348
  %v4915 = vpop.f32.mrf.mxu0
  %v4916 = vadd.f32 %v4747, %v4915
  %v4917 = vpop.f32.mrf.mxu0
  %v4918 = vadd.f32 %v4749, %v4917
  %4919 = vmatmul.bf16.gmra.mxu0 %v1356
  %v4920 = vpop.f32.mrf.mxu0
  %v4921 = vadd.f32 %v4752, %v4920
  %v4922 = vpop.f32.mrf.mxu0
  %v4923 = vadd.f32 %v4754, %v4922
  %4924 = vmatmul.bf16.gmra.mxu0 %v1364
  %v4925 = vpop.f32.mrf.mxu0
  %v4926 = vadd.f32 %v4757, %v4925
  %v4927 = vpop.f32.mrf.mxu0
  %v4928 = vadd.f32 %v4759, %v4927
  %4929 = vmatmul.bf16.gmra.mxu0 %v1372
  %v4930 = vpop.f32.mrf.mxu0
  %v4931 = vadd.f32 %v4762, %v4930
  %v4932 = vpop.f32.mrf.mxu0
  %v4933 = vadd.f32 %v4764, %v4932
  %4934 = vmatmul.bf16.gmra.mxu0 %v1380
  %v4935 = vpop.f32.mrf.mxu0
  %v4936 = vadd.f32 %v4767, %v4935
  %v4937 = vpop.f32.mrf.mxu0
  %v4938 = vadd.f32 %v4769, %v4937
  %4939 = vmatmul.bf16.gmra.mxu0 %v1388
  %v4940 = vpop.f32.mrf.mxu0
  %v4941 = vadd.f32 %v4772, %v4940
  %v4942 = vpop.f32.mrf.mxu0
  %v4943 = vadd.f32 %v4774, %v4942
  %4944 = vmatmul.bf16.gmra.mxu0 %v1396
  %v4945 = vpop.f32.mrf.mxu0
  %v4946 = vadd.f32 %v4777, %v4945
  %v4947 = vpop.f32.mrf.mxu0
  %v4948 = vadd.f32 %v4779, %v4947
  %4949 = vmatmul.bf16.gmra.mxu0 %v1404
  %v4950 = vpop.f32.mrf.mxu0
  %v4951 = vadd.f32 %v4782, %v4950
  %v4952 = vpop.f32.mrf.mxu0
  %v4953 = vadd.f32 %v4784, %v4952
  %4954 = vmatmul.bf16.gmra.mxu0 %v1412
  %v4955 = vpop.f32.mrf.mxu0
  %v4956 = vadd.f32 %v4787, %v4955
  %v4957 = vpop.f32.mrf.mxu0
  %v4958 = vadd.f32 %v4789, %v4957
  %4959 = vmatmul.bf16.gmra.mxu0 %v1420
  %v4960 = vpop.f32.mrf.mxu0
  %v4961 = vadd.f32 %v4792, %v4960
  %v4962 = vpop.f32.mrf.mxu0
  %v4963 = vadd.f32 %v4794, %v4962
  %4964 = vmatmul.bf16.gmra.mxu0 %v1428
  %v4965 = vpop.f32.mrf.mxu0
  %v4966 = vadd.f32 %v4797, %v4965
  %v4967 = vpop.f32.mrf.mxu0
  %v4968 = vadd.f32 %v4799, %v4967
  %4969 = vmatmul.bf16.gmra.mxu0 %v1436
  %v4970 = vpop.f32.mrf.mxu0
  %v4971 = vadd.f32 %v4802, %v4970
  %v4972 = vpop.f32.mrf.mxu0
  %v4973 = vadd.f32 %v4804, %v4972
  %4974 = vmatmul.bf16.gmra.mxu0 %v1444
  %v4975 = vpop.f32.mrf.mxu0
  %v4976 = vadd.f32 %v4807, %v4975
  %v4977 = vpop.f32.mrf.mxu0
  %v4978 = vadd.f32 %v4809, %v4977
  %4979 = vmatmul.bf16.gmra.mxu0 %v1452
  %v4980 = vpop.f32.mrf.mxu0
  %v4981 = vadd.f32 %v4812, %v4980
  %v4982 = vpop.f32.mrf.mxu0
  %v4983 = vadd.f32 %v4814, %v4982
  %4984 = vmatmul.bf16.gmra.mxu0 %v1460
  %v4985 = vpop.f32.mrf.mxu0
  %v4986 = vadd.f32 %v4817, %v4985
  %v4987 = vpop.f32.mrf.mxu0
  %v4988 = vadd.f32 %v4819, %v4987
  %4989 = vmatmul.bf16.gmra.mxu0 %v1468
  %v4990 = vpop.f32.mrf.mxu0
  %v4991 = vadd.f32 %v4822, %v4990
  %v4992 = vpop.f32.mrf.mxu0
  %v4993 = vadd.f32 %v4824, %v4992
  %4994 = vmatmul.bf16.gmra.mxu0 %v1476
  %v4995 = vpop.f32.mrf.mxu0
  %v4996 = vadd.f32 %v4827, %v4995
  %v4997 = vpop.f32.mrf.mxu0
  %v4998 = vadd.f32 %v4829, %v4997
  %4999 = vmatmul.bf16.gmra.mxu0 %v1484
  %v5000 = vpop.f32.mrf.mxu0
  %v5001 = vadd.f32 %v4832, %v5000
  %v5002 = vpop.f32.mrf.mxu0
  %v5003 = vadd.f32 %v4834, %v5002
  %5004 = vdwg.mxu0
  %5005 = vmatpush.bf16.msra.mxu0 %v3918
  %5006 = vmatpush.bf16.msra.mxu0 %v3917
  %5007 = vmatpush.bf16.msra.mxu0 %v3916
  %5008 = vmatpush.bf16.msra.mxu0 %v3915
  %5009 = vmatpush.bf16.msra.mxu0 %v3914
  %5010 = vmatpush.bf16.msra.mxu0 %v3913
  %5011 = vmatpush.bf16.msra.mxu0 %v3912
  %5012 = vmatpush.bf16.msra.mxu0 %v3911
  %5013 = vmatmul.bf16.gmra.mxu0 %v1237
  %v5014 = vpop.f32.mrf.mxu0
  %v5015 = vadd.f32 %v4846, %v5014
  %v5016 = vpop.f32.mrf.mxu0
  %v5017 = vadd.f32 %v4848, %v5016
  %5018 = vmatmul.bf16.gmra.mxu0 %v1245
  %v5019 = vpop.f32.mrf.mxu0
  %v5020 = vadd.f32 %v4851, %v5019
  %v5021 = vpop.f32.mrf.mxu0
  %v5022 = vadd.f32 %v4853, %v5021
  %5023 = vmatmul.bf16.gmra.mxu0 %v1253
  %v5024 = vpop.f32.mrf.mxu0
  %v5025 = vadd.f32 %v4856, %v5024
  %v5026 = vpop.f32.mrf.mxu0
  %v5027 = vadd.f32 %v4858, %v5026
  %5028 = vmatmul.bf16.gmra.mxu0 %v1261
  %v5029 = vpop.f32.mrf.mxu0
  %v5030 = vadd.f32 %v4861, %v5029
  %v5031 = vpop.f32.mrf.mxu0
  %v5032 = vadd.f32 %v4863, %v5031
  %5033 = vmatmul.bf16.gmra.mxu0 %v1269
  %v5034 = vpop.f32.mrf.mxu0
  %v5035 = vadd.f32 %v4866, %v5034
  %v5036 = vpop.f32.mrf.mxu0
  %v5037 = vadd.f32 %v4868, %v5036
  %5038 = vmatmul.bf16.gmra.mxu0 %v1277
  %v5039 = vpop.f32.mrf.mxu0
  %v5040 = vadd.f32 %v4871, %v5039
  %v5041 = vpop.f32.mrf.mxu0
  %v5042 = vadd.f32 %v4873, %v5041
  %5043 = vmatmul.bf16.gmra.mxu0 %v1285
  %v5044 = vpop.f32.mrf.mxu0
  %v5045 = vadd.f32 %v4876, %v5044
  %v5046 = vpop.f32.mrf.mxu0
  %v5047 = vadd.f32 %v4878, %v5046
  %5048 = vmatmul.bf16.gmra.mxu0 %v1293
  %v5049 = vpop.f32.mrf.mxu0
  %v5050 = vadd.f32 %v4881, %v5049
  %v5051 = vpop.f32.mrf.mxu0
  %v5052 = vadd.f32 %v4883, %v5051
  %5053 = vmatmul.bf16.gmra.mxu0 %v1301
  %v5054 = vpop.f32.mrf.mxu0
  %v5055 = vadd.f32 %v4886, %v5054
  %v5056 = vpop.f32.mrf.mxu0
  %v5057 = vadd.f32 %v4888, %v5056
  %5058 = vmatmul.bf16.gmra.mxu0 %v1309
  %v5059 = vpop.f32.mrf.mxu0
  %v5060 = vadd.f32 %v4891, %v5059
  %v5061 = vpop.f32.mrf.mxu0
  %v5062 = vadd.f32 %v4893, %v5061
  %5063 = vmatmul.bf16.gmra.mxu0 %v1317
  %v5064 = vpop.f32.mrf.mxu0
  %v5065 = vadd.f32 %v4896, %v5064
  %v5066 = vpop.f32.mrf.mxu0
  %v5067 = vadd.f32 %v4898, %v5066
  %5068 = vmatmul.bf16.gmra.mxu0 %v1325
  %v5069 = vpop.f32.mrf.mxu0
  %v5070 = vadd.f32 %v4901, %v5069
  %v5071 = vpop.f32.mrf.mxu0
  %v5072 = vadd.f32 %v4903, %v5071
  %5073 = vmatmul.bf16.gmra.mxu0 %v1333
  %v5074 = vpop.f32.mrf.mxu0
  %v5075 = vadd.f32 %v4906, %v5074
  %v5076 = vpop.f32.mrf.mxu0
  %v5077 = vadd.f32 %v4908, %v5076
  %5078 = vmatmul.bf16.gmra.mxu0 %v1341
  %v5079 = vpop.f32.mrf.mxu0
  %v5080 = vadd.f32 %v4911, %v5079
  %v5081 = vpop.f32.mrf.mxu0
  %v5082 = vadd.f32 %v4913, %v5081
  %5083 = vmatmul.bf16.gmra.mxu0 %v1349
  %v5084 = vpop.f32.mrf.mxu0
  %v5085 = vadd.f32 %v4916, %v5084
  %v5086 = vpop.f32.mrf.mxu0
  %v5087 = vadd.f32 %v4918, %v5086
  %5088 = vmatmul.bf16.gmra.mxu0 %v1357
  %v5089 = vpop.f32.mrf.mxu0
  %v5090 = vadd.f32 %v4921, %v5089
  %v5091 = vpop.f32.mrf.mxu0
  %v5092 = vadd.f32 %v4923, %v5091
  %5093 = vmatmul.bf16.gmra.mxu0 %v1365
  %v5094 = vpop.f32.mrf.mxu0
  %v5095 = vadd.f32 %v4926, %v5094
  %v5096 = vpop.f32.mrf.mxu0
  %v5097 = vadd.f32 %v4928, %v5096
  %5098 = vmatmul.bf16.gmra.mxu0 %v1373
  %v5099 = vpop.f32.mrf.mxu0
  %v5100 = vadd.f32 %v4931, %v5099
  %v5101 = vpop.f32.mrf.mxu0
  %v5102 = vadd.f32 %v4933, %v5101
  %5103 = vmatmul.bf16.gmra.mxu0 %v1381
  %v5104 = vpop.f32.mrf.mxu0
  %v5105 = vadd.f32 %v4936, %v5104
  %v5106 = vpop.f32.mrf.mxu0
  %v5107 = vadd.f32 %v4938, %v5106
  %5108 = vmatmul.bf16.gmra.mxu0 %v1389
  %v5109 = vpop.f32.mrf.mxu0
  %v5110 = vadd.f32 %v4941, %v5109
  %v5111 = vpop.f32.mrf.mxu0
  %v5112 = vadd.f32 %v4943, %v5111
  %5113 = vmatmul.bf16.gmra.mxu0 %v1397
  %v5114 = vpop.f32.mrf.mxu0
  %v5115 = vadd.f32 %v4946, %v5114
  %v5116 = vpop.f32.mrf.mxu0
  %v5117 = vadd.f32 %v4948, %v5116
  %5118 = vmatmul.bf16.gmra.mxu0 %v1405
  %v5119 = vpop.f32.mrf.mxu0
  %v5120 = vadd.f32 %v4951, %v5119
  %v5121 = vpop.f32.mrf.mxu0
  %v5122 = vadd.f32 %v4953, %v5121
  %5123 = vmatmul.bf16.gmra.mxu0 %v1413
  %v5124 = vpop.f32.mrf.mxu0
  %v5125 = vadd.f32 %v4956, %v5124
  %v5126 = vpop.f32.mrf.mxu0
  %v5127 = vadd.f32 %v4958, %v5126
  %5128 = vmatmul.bf16.gmra.mxu0 %v1421
  %v5129 = vpop.f32.mrf.mxu0
  %v5130 = vadd.f32 %v4961, %v5129
  %v5131 = vpop.f32.mrf.mxu0
  %v5132 = vadd.f32 %v4963, %v5131
  %5133 = vmatmul.bf16.gmra.mxu0 %v1429
  %v5134 = vpop.f32.mrf.mxu0
  %v5135 = vadd.f32 %v4966, %v5134
  %v5136 = vpop.f32.mrf.mxu0
  %v5137 = vadd.f32 %v4968, %v5136
  %5138 = vmatmul.bf16.gmra.mxu0 %v1437
  %v5139 = vpop.f32.mrf.mxu0
  %v5140 = vadd.f32 %v4971, %v5139
  %v5141 = vpop.f32.mrf.mxu0
  %v5142 = vadd.f32 %v4973, %v5141
  %5143 = vmatmul.bf16.gmra.mxu0 %v1445
  %v5144 = vpop.f32.mrf.mxu0
  %v5145 = vadd.f32 %v4976, %v5144
  %v5146 = vpop.f32.mrf.mxu0
  %v5147 = vadd.f32 %v4978, %v5146
  %5148 = vmatmul.bf16.gmra.mxu0 %v1453
  %v5149 = vpop.f32.mrf.mxu0
  %v5150 = vadd.f32 %v4981, %v5149
  %v5151 = vpop.f32.mrf.mxu0
  %v5152 = vadd.f32 %v4983, %v5151
  %5153 = vmatmul.bf16.gmra.mxu0 %v1461
  %v5154 = vpop.f32.mrf.mxu0
  %v5155 = vadd.f32 %v4986, %v5154
  %v5156 = vpop.f32.mrf.mxu0
  %v5157 = vadd.f32 %v4988, %v5156
  %5158 = vmatmul.bf16.gmra.mxu0 %v1469
  %v5159 = vpop.f32.mrf.mxu0
  %v5160 = vadd.f32 %v4991, %v5159
  %v5161 = vpop.f32.mrf.mxu0
  %v5162 = vadd.f32 %v4993, %v5161
  %5163 = vmatmul.bf16.gmra.mxu0 %v1477
  %v5164 = vpop.f32.mrf.mxu0
  %v5165 = vadd.f32 %v4996, %v5164
  %v5166 = vpop.f32.mrf.mxu0
  %v5167 = vadd.f32 %v4998, %v5166
  %5168 = vmatmul.bf16.gmra.mxu0 %v1485
  %v5169 = vpop.f32.mrf.mxu0
  %v5170 = vadd.f32 %v5001, %v5169
  %v5171 = vpop.f32.mrf.mxu0
  %v5172 = vadd.f32 %v5003, %v5171
  %5173 = vdwg.mxu0
  %5174 = vmatpush.bf16.msra.mxu0 %v3926
  %5175 = vmatpush.bf16.msra.mxu0 %v3925
  %5176 = vmatpush.bf16.msra.mxu0 %v3924
  %5177 = vmatpush.bf16.msra.mxu0 %v3923
  %5178 = vmatpush.bf16.msra.mxu0 %v3922
  %5179 = vmatpush.bf16.msra.mxu0 %v3921
  %5180 = vmatpush.bf16.msra.mxu0 %v3920
  %5181 = vmatpush.bf16.msra.mxu0 %v3919
  %5182 = vmatmul.bf16.gmra.mxu0 %v1238
  %v5183 = vpop.f32.mrf.mxu0
  %v5184 = vadd.f32 %v5015, %v5183
  %v5185 = vpop.f32.mrf.mxu0
  %v5186 = vadd.f32 %v5017, %v5185
  %5187 = vmatmul.bf16.gmra.mxu0 %v1246
  %v5188 = vpop.f32.mrf.mxu0
  %v5189 = vadd.f32 %v5020, %v5188
  %v5190 = vpop.f32.mrf.mxu0
  %v5191 = vadd.f32 %v5022, %v5190
  %5192 = vmatmul.bf16.gmra.mxu0 %v1254
  %v5193 = vpop.f32.mrf.mxu0
  %v5194 = vadd.f32 %v5025, %v5193
  %v5195 = vpop.f32.mrf.mxu0
  %v5196 = vadd.f32 %v5027, %v5195
  %5197 = vmatmul.bf16.gmra.mxu0 %v1262
  %v5198 = vpop.f32.mrf.mxu0
  %v5199 = vadd.f32 %v5030, %v5198
  %v5200 = vpop.f32.mrf.mxu0
  %v5201 = vadd.f32 %v5032, %v5200
  %5202 = vmatmul.bf16.gmra.mxu0 %v1270
  %v5203 = vpop.f32.mrf.mxu0
  %v5204 = vadd.f32 %v5035, %v5203
  %v5205 = vpop.f32.mrf.mxu0
  %v5206 = vadd.f32 %v5037, %v5205
  %5207 = vmatmul.bf16.gmra.mxu0 %v1278
  %v5208 = vpop.f32.mrf.mxu0
  %v5209 = vadd.f32 %v5040, %v5208
  %v5210 = vpop.f32.mrf.mxu0
  %v5211 = vadd.f32 %v5042, %v5210
  %5212 = vmatmul.bf16.gmra.mxu0 %v1286
  %v5213 = vpop.f32.mrf.mxu0
  %v5214 = vadd.f32 %v5045, %v5213
  %v5215 = vpop.f32.mrf.mxu0
  %v5216 = vadd.f32 %v5047, %v5215
  %5217 = vmatmul.bf16.gmra.mxu0 %v1294
  %v5218 = vpop.f32.mrf.mxu0
  %v5219 = vadd.f32 %v5050, %v5218
  %v5220 = vpop.f32.mrf.mxu0
  %v5221 = vadd.f32 %v5052, %v5220
  %5222 = vmatmul.bf16.gmra.mxu0 %v1302
  %v5223 = vpop.f32.mrf.mxu0
  %v5224 = vadd.f32 %v5055, %v5223
  %v5225 = vpop.f32.mrf.mxu0
  %v5226 = vadd.f32 %v5057, %v5225
  %5227 = vmatmul.bf16.gmra.mxu0 %v1310
  %v5228 = vpop.f32.mrf.mxu0
  %v5229 = vadd.f32 %v5060, %v5228
  %v5230 = vpop.f32.mrf.mxu0
  %v5231 = vadd.f32 %v5062, %v5230
  %5232 = vmatmul.bf16.gmra.mxu0 %v1318
  %v5233 = vpop.f32.mrf.mxu0
  %v5234 = vadd.f32 %v5065, %v5233
  %v5235 = vpop.f32.mrf.mxu0
  %v5236 = vadd.f32 %v5067, %v5235
  %5237 = vmatmul.bf16.gmra.mxu0 %v1326
  %v5238 = vpop.f32.mrf.mxu0
  %v5239 = vadd.f32 %v5070, %v5238
  %v5240 = vpop.f32.mrf.mxu0
  %v5241 = vadd.f32 %v5072, %v5240
  %5242 = vmatmul.bf16.gmra.mxu0 %v1334
  %v5243 = vpop.f32.mrf.mxu0
  %v5244 = vadd.f32 %v5075, %v5243
  %v5245 = vpop.f32.mrf.mxu0
  %v5246 = vadd.f32 %v5077, %v5245
  %5247 = vmatmul.bf16.gmra.mxu0 %v1342
  %v5248 = vpop.f32.mrf.mxu0
  %v5249 = vadd.f32 %v5080, %v5248
  %v5250 = vpop.f32.mrf.mxu0
  %v5251 = vadd.f32 %v5082, %v5250
  %5252 = vmatmul.bf16.gmra.mxu0 %v1350
  %v5253 = vpop.f32.mrf.mxu0
  %v5254 = vadd.f32 %v5085, %v5253
  %v5255 = vpop.f32.mrf.mxu0
  %v5256 = vadd.f32 %v5087, %v5255
  %5257 = vmatmul.bf16.gmra.mxu0 %v1358
  %v5258 = vpop.f32.mrf.mxu0
  %v5259 = vadd.f32 %v5090, %v5258
  %v5260 = vpop.f32.mrf.mxu0
  %v5261 = vadd.f32 %v5092, %v5260
  %5262 = vmatmul.bf16.gmra.mxu0 %v1366
  %v5263 = vpop.f32.mrf.mxu0
  %v5264 = vadd.f32 %v5095, %v5263
  %v5265 = vpop.f32.mrf.mxu0
  %v5266 = vadd.f32 %v5097, %v5265
  %5267 = vmatmul.bf16.gmra.mxu0 %v1374
  %v5268 = vpop.f32.mrf.mxu0
  %v5269 = vadd.f32 %v5100, %v5268
  %v5270 = vpop.f32.mrf.mxu0
  %v5271 = vadd.f32 %v5102, %v5270
  %5272 = vmatmul.bf16.gmra.mxu0 %v1382
  %v5273 = vpop.f32.mrf.mxu0
  %v5274 = vadd.f32 %v5105, %v5273
  %v5275 = vpop.f32.mrf.mxu0
  %v5276 = vadd.f32 %v5107, %v5275
  %5277 = vmatmul.bf16.gmra.mxu0 %v1390
  %v5278 = vpop.f32.mrf.mxu0
  %v5279 = vadd.f32 %v5110, %v5278
  %v5280 = vpop.f32.mrf.mxu0
  %v5281 = vadd.f32 %v5112, %v5280
  %5282 = vmatmul.bf16.gmra.mxu0 %v1398
  %v5283 = vpop.f32.mrf.mxu0
  %v5284 = vadd.f32 %v5115, %v5283
  %v5285 = vpop.f32.mrf.mxu0
  %v5286 = vadd.f32 %v5117, %v5285
  %5287 = vmatmul.bf16.gmra.mxu0 %v1406
  %v5288 = vpop.f32.mrf.mxu0
  %v5289 = vadd.f32 %v5120, %v5288
  %v5290 = vpop.f32.mrf.mxu0
  %v5291 = vadd.f32 %v5122, %v5290
  %5292 = vmatmul.bf16.gmra.mxu0 %v1414
  %v5293 = vpop.f32.mrf.mxu0
  %v5294 = vadd.f32 %v5125, %v5293
  %v5295 = vpop.f32.mrf.mxu0
  %v5296 = vadd.f32 %v5127, %v5295
  %5297 = vmatmul.bf16.gmra.mxu0 %v1422
  %v5298 = vpop.f32.mrf.mxu0
  %v5299 = vadd.f32 %v5130, %v5298
  %v5300 = vpop.f32.mrf.mxu0
  %v5301 = vadd.f32 %v5132, %v5300
  %5302 = vmatmul.bf16.gmra.mxu0 %v1430
  %v5303 = vpop.f32.mrf.mxu0
  %v5304 = vadd.f32 %v5135, %v5303
  %v5305 = vpop.f32.mrf.mxu0
  %v5306 = vadd.f32 %v5137, %v5305
  %5307 = vmatmul.bf16.gmra.mxu0 %v1438
  %v5308 = vpop.f32.mrf.mxu0
  %v5309 = vadd.f32 %v5140, %v5308
  %v5310 = vpop.f32.mrf.mxu0
  %v5311 = vadd.f32 %v5142, %v5310
  %5312 = vmatmul.bf16.gmra.mxu0 %v1446
  %v5313 = vpop.f32.mrf.mxu0
  %v5314 = vadd.f32 %v5145, %v5313
  %v5315 = vpop.f32.mrf.mxu0
  %v5316 = vadd.f32 %v5147, %v5315
  %5317 = vmatmul.bf16.gmra.mxu0 %v1454
  %v5318 = vpop.f32.mrf.mxu0
  %v5319 = vadd.f32 %v5150, %v5318
  %v5320 = vpop.f32.mrf.mxu0
  %v5321 = vadd.f32 %v5152, %v5320
  %5322 = vmatmul.bf16.gmra.mxu0 %v1462
  %v5323 = vpop.f32.mrf.mxu0
  %v5324 = vadd.f32 %v5155, %v5323
  %v5325 = vpop.f32.mrf.mxu0
  %v5326 = vadd.f32 %v5157, %v5325
  %5327 = vmatmul.bf16.gmra.mxu0 %v1470
  %v5328 = vpop.f32.mrf.mxu0
  %v5329 = vadd.f32 %v5160, %v5328
  %v5330 = vpop.f32.mrf.mxu0
  %v5331 = vadd.f32 %v5162, %v5330
  %5332 = vmatmul.bf16.gmra.mxu0 %v1478
  %v5333 = vpop.f32.mrf.mxu0
  %v5334 = vadd.f32 %v5165, %v5333
  %v5335 = vpop.f32.mrf.mxu0
  %v5336 = vadd.f32 %v5167, %v5335
  %5337 = vmatmul.bf16.gmra.mxu0 %v1486
  %v5338 = vpop.f32.mrf.mxu0
  %v5339 = vadd.f32 %v5170, %v5338
  %v5340 = vpop.f32.mrf.mxu0
  %v5341 = vadd.f32 %v5172, %v5340
  %5342 = vdwg.mxu0
  %v5343 = vadd.f32 %v3415, %v5184
  %v5344 = vadd.f32 %v3416, %v5186
  %v5345 = vadd.f32 %v3417, %v5189
  %v5346 = vadd.f32 %v3418, %v5191
  %v5347 = vadd.f32 %v3419, %v5194
  %v5348 = vadd.f32 %v3420, %v5196
  %v5349 = vadd.f32 %v3421, %v5199
  %v5350 = vadd.f32 %v3422, %v5201
  %v5351 = vadd.f32 %v3423, %v5204
  %v5352 = vadd.f32 %v3424, %v5206
  %v5353 = vadd.f32 %v3425, %v5209
  %v5354 = vadd.f32 %v3426, %v5211
  %v5355 = vadd.f32 %v3427, %v5214
  %v5356 = vadd.f32 %v3428, %v5216
  %v5357 = vadd.f32 %v3429, %v5219
  %v5358 = vadd.f32 %v3430, %v5221
  %v5359 = vadd.f32 %v3431, %v5224
  %v5360 = vadd.f32 %v3432, %v5226
  %v5361 = vadd.f32 %v3433, %v5229
  %v5362 = vadd.f32 %v3434, %v5231
  %v5363 = vadd.f32 %v3435, %v5234
  %v5364 = vadd.f32 %v3436, %v5236
  %v5365 = vadd.f32 %v3437, %v5239
  %v5366 = vadd.f32 %v3438, %v5241
  %v5367 = vadd.f32 %v3439, %v5244
  %v5368 = vadd.f32 %v3440, %v5246
  %v5369 = vadd.f32 %v3441, %v5249
  %v5370 = vadd.f32 %v3442, %v5251
  %v5371 = vadd.f32 %v3443, %v5254
  %v5372 = vadd.f32 %v3444, %v5256
  %v5373 = vadd.f32 %v3445, %v5259
  %v5374 = vadd.f32 %v3446, %v5261
  %v5375 = vadd.f32 %v3447, %v5264
  %v5376 = vadd.f32 %v3448, %v5266
  %v5377 = vadd.f32 %v3449, %v5269
  %v5378 = vadd.f32 %v3450, %v5271
  %v5379 = vadd.f32 %v3451, %v5274
  %v5380 = vadd.f32 %v3452, %v5276
  %v5381 = vadd.f32 %v3453, %v5279
  %v5382 = vadd.f32 %v3454, %v5281
  %v5383 = vadd.f32 %v3455, %v5284
  %v5384 = vadd.f32 %v3456, %v5286
  %v5385 = vadd.f32 %v3457, %v5289
  %v5386 = vadd.f32 %v3458, %v5291
  %v5387 = vadd.f32 %v3459, %v5294
  %v5388 = vadd.f32 %v3460, %v5296
  %v5389 = vadd.f32 %v3461, %v5299
  %v5390 = vadd.f32 %v3462, %v5301
  %v5391 = vadd.f32 %v3463, %v5304
  %v5392 = vadd.f32 %v3464, %v5306
  %v5393 = vadd.f32 %v3465, %v5309
  %v5394 = vadd.f32 %v3466, %v5311
  %v5395 = vadd.f32 %v3467, %v5314
  %v5396 = vadd.f32 %v3468, %v5316
  %v5397 = vadd.f32 %v3469, %v5319
  %v5398 = vadd.f32 %v3470, %v5321
  %v5399 = vadd.f32 %v3471, %v5324
  %v5400 = vadd.f32 %v3472, %v5326
  %v5401 = vadd.f32 %v3473, %v5329
  %v5402 = vadd.f32 %v3474, %v5331
  %v5403 = vadd.f32 %v3475, %v5334
  %v5404 = vadd.f32 %v3476, %v5336
  %v5405 = vadd.f32 %v3477, %v5339
  %v5406 = vadd.f32 %v3478, %v5341
  %v5407 = vld [vmem:[%s1 + $0x8] sm:$0xf]
  %v5408 = vld [vmem:[%s1 + $0x14] sm:$0xf]
  %v5409 = vld [vmem:[%s1 + $0x20] sm:$0xf]
  %v5410 = vld [vmem:[%s1 + $0x2c] sm:$0xf]
  %v5411 = vld [vmem:[%s1 + $0x38] sm:$0xf]
  %v5412 = vld [vmem:[%s1 + $0x44] sm:$0xf]
  %v5413 = vld [vmem:[%s1 + $0x50] sm:$0xf]
  %v5414 = vld [vmem:[%s1 + $0x5c] sm:$0xf]
  %v5415 = vld [vmem:[%s1 + $0x68] sm:$0xf]
  %v5416 = vld [vmem:[%s1 + $0x74] sm:$0xf]
  %v5417 = vld [vmem:[%s1 + $0x80] sm:$0xf]
  %v5418 = vld [vmem:[%s1 + $0x8c] sm:$0xf]
  %v5419 = vld [vmem:[%s1 + $0x98] sm:$0xf]
  %v5420 = vld [vmem:[%s1 + $0xa4] sm:$0xf]
  %v5421 = vld [vmem:[%s1 + $0xb0] sm:$0xf]
  %v5422 = vld [vmem:[%s1 + $0xbc] sm:$0xf]
  %v5423 = vld [vmem:[%s1 + $0xc8] sm:$0xf]
  %v5424 = vld [vmem:[%s1 + $0xd4] sm:$0xf]
  %v5425 = vld [vmem:[%s1 + $0xe0] sm:$0xf]
  %v5426 = vld [vmem:[%s1 + $0xec] sm:$0xf]
  %v5427 = vld [vmem:[%s1 + $0xf8] sm:$0xf]
  %v5428 = vld [vmem:[%s1 + $0x104] sm:$0xf]
  %v5429 = vld [vmem:[%s1 + $0x110] sm:$0xf]
  %v5430 = vld [vmem:[%s1 + $0x11c] sm:$0xf]
  %v5431 = vld [vmem:[%s1 + $0x128] sm:$0xf]
  %v5432 = vld [vmem:[%s1 + $0x134] sm:$0xf]
  %v5433 = vld [vmem:[%s1 + $0x140] sm:$0xf]
  %v5434 = vld [vmem:[%s1 + $0x14c] sm:$0xf]
  %v5435 = vld [vmem:[%s1 + $0x158] sm:$0xf]
  %v5436 = vld [vmem:[%s1 + $0x164] sm:$0xf]
  %v5437 = vld [vmem:[%s1 + $0x170] sm:$0xf]
  %v5438 = vld [vmem:[%s1 + $0x17c] sm:$0xf]
  %v5439 = vld [vmem:[%s1 + $0x188] sm:$0xf]
  %v5440 = vld [vmem:[%s1 + $0x194] sm:$0xf]
  %v5441 = vld [vmem:[%s1 + $0x1a0] sm:$0xf]
  %v5442 = vld [vmem:[%s1 + $0x1ac] sm:$0xf]
  %v5443 = vld [vmem:[%s1 + $0x1b8] sm:$0xf]
  %v5444 = vld [vmem:[%s1 + $0x1c4] sm:$0xf]
  %v5445 = vld [vmem:[%s1 + $0x1d0] sm:$0xf]
  %v5446 = vld [vmem:[%s1 + $0x1dc] sm:$0xf]
  %v5447 = vld [vmem:[%s1 + $0x1e8] sm:$0xf]
  %v5448 = vld [vmem:[%s1 + $0x1f4] sm:$0xf]
  %v5449 = vld [vmem:[%s1 + $0x200] sm:$0xf]
  %v5450 = vld [vmem:[%s1 + $0x20c] sm:$0xf]
  %v5451 = vld [vmem:[%s1 + $0x218] sm:$0xf]
  %v5452 = vld [vmem:[%s1 + $0x224] sm:$0xf]
  %v5453 = vld [vmem:[%s1 + $0x230] sm:$0xf]
  %v5454 = vld [vmem:[%s1 + $0x23c] sm:$0xf]
  %v5455 = vld [vmem:[%s1 + $0x248] sm:$0xf]
  %v5456 = vld [vmem:[%s1 + $0x254] sm:$0xf]
  %v5457 = vld [vmem:[%s1 + $0x260] sm:$0xf]
  %v5458 = vld [vmem:[%s1 + $0x26c] sm:$0xf]
  %v5459 = vld [vmem:[%s1 + $0x278] sm:$0xf]
  %v5460 = vld [vmem:[%s1 + $0x284] sm:$0xf]
  %v5461 = vld [vmem:[%s1 + $0x290] sm:$0xf]
  %v5462 = vld [vmem:[%s1 + $0x29c] sm:$0xf]
  %v5463 = vld [vmem:[%s1 + $0x2a8] sm:$0xf]
  %v5464 = vld [vmem:[%s1 + $0x2b4] sm:$0xf]
  %v5465 = vld [vmem:[%s1 + $0x2c0] sm:$0xf]
  %v5466 = vld [vmem:[%s1 + $0x2cc] sm:$0xf]
  %v5467 = vld [vmem:[%s1 + $0x2d8] sm:$0xf]
  %v5468 = vld [vmem:[%s1 + $0x2e4] sm:$0xf]
  %v5469 = vld [vmem:[%s1 + $0x2f0] sm:$0xf]
  %v5470 = vld [vmem:[%s1 + $0x2fc] sm:$0xf]
  %v5471 = vld [vmem:[%s1 + $0x308] sm:$0xf]
  %v5472 = vld [vmem:[%s1 + $0x314] sm:$0xf]
  %v5473 = vld [vmem:[%s1 + $0x320] sm:$0xf]
  %v5474 = vld [vmem:[%s1 + $0x32c] sm:$0xf]
  %v5475 = vld [vmem:[%s1 + $0x338] sm:$0xf]
  %v5476 = vld [vmem:[%s1 + $0x344] sm:$0xf]
  %v5477 = vld [vmem:[%s1 + $0x350] sm:$0xf]
  %v5478 = vld [vmem:[%s1 + $0x35c] sm:$0xf]
  %v5479 = vld [vmem:[%s1 + $0x368] sm:$0xf]
  %v5480 = vld [vmem:[%s1 + $0x374] sm:$0xf]
  %v5481 = vld [vmem:[%s1 + $0x380] sm:$0xf]
  %v5482 = vld [vmem:[%s1 + $0x38c] sm:$0xf]
  %v5483 = vld [vmem:[%s1 + $0x398] sm:$0xf]
  %v5484 = vld [vmem:[%s1 + $0x3a4] sm:$0xf]
  %v5485 = vld [vmem:[%s1 + $0x3b0] sm:$0xf]
  %v5486 = vld [vmem:[%s1 + $0x3bc] sm:$0xf]
  %v5487 = vld [vmem:[%s1 + $0x3c8] sm:$0xf]
  %v5488 = vld [vmem:[%s1 + $0x3d4] sm:$0xf]
  %v5489 = vld [vmem:[%s1 + $0x3e0] sm:$0xf]
  %v5490 = vld [vmem:[%s1 + $0x3ec] sm:$0xf]
  %v5491 = vld [vmem:[%s1 + $0x3f8] sm:$0xf]
  %v5492 = vld [vmem:[%s1 + $0x404] sm:$0xf]
  %v5493 = vld [vmem:[%s1 + $0x410] sm:$0xf]
  %v5494 = vld [vmem:[%s1 + $0x41c] sm:$0xf]
  %v5495 = vld [vmem:[%s1 + $0x428] sm:$0xf]
  %v5496 = vld [vmem:[%s1 + $0x434] sm:$0xf]
  %v5497 = vld [vmem:[%s1 + $0x440] sm:$0xf]
  %v5498 = vld [vmem:[%s1 + $0x44c] sm:$0xf]
  %v5499 = vld [vmem:[%s1 + $0x458] sm:$0xf]
  %v5500 = vld [vmem:[%s1 + $0x464] sm:$0xf]
  %v5501 = vld [vmem:[%s1 + $0x470] sm:$0xf]
  %v5502 = vld [vmem:[%s1 + $0x47c] sm:$0xf]
  %v5503 = vld [vmem:[%s1 + $0x488] sm:$0xf]
  %v5504 = vld [vmem:[%s1 + $0x494] sm:$0xf]
  %v5505 = vld [vmem:[%s1 + $0x4a0] sm:$0xf]
  %v5506 = vld [vmem:[%s1 + $0x4ac] sm:$0xf]
  %v5507 = vld [vmem:[%s1 + $0x4b8] sm:$0xf]
  %v5508 = vld [vmem:[%s1 + $0x4c4] sm:$0xf]
  %v5509 = vld [vmem:[%s1 + $0x4d0] sm:$0xf]
  %v5510 = vld [vmem:[%s1 + $0x4dc] sm:$0xf]
  %v5511 = vld [vmem:[%s1 + $0x4e8] sm:$0xf]
  %v5512 = vld [vmem:[%s1 + $0x4f4] sm:$0xf]
  %v5513 = vld [vmem:[%s1 + $0x500] sm:$0xf]
  %v5514 = vld [vmem:[%s1 + $0x50c] sm:$0xf]
  %v5515 = vld [vmem:[%s1 + $0x518] sm:$0xf]
  %v5516 = vld [vmem:[%s1 + $0x524] sm:$0xf]
  %v5517 = vld [vmem:[%s1 + $0x530] sm:$0xf]
  %v5518 = vld [vmem:[%s1 + $0x53c] sm:$0xf]
  %v5519 = vld [vmem:[%s1 + $0x548] sm:$0xf]
  %v5520 = vld [vmem:[%s1 + $0x554] sm:$0xf]
  %v5521 = vld [vmem:[%s1 + $0x560] sm:$0xf]
  %v5522 = vld [vmem:[%s1 + $0x56c] sm:$0xf]
  %v5523 = vld [vmem:[%s1 + $0x578] sm:$0xf]
  %v5524 = vld [vmem:[%s1 + $0x584] sm:$0xf]
  %v5525 = vld [vmem:[%s1 + $0x590] sm:$0xf]
  %v5526 = vld [vmem:[%s1 + $0x59c] sm:$0xf]
  %v5527 = vld [vmem:[%s1 + $0x5a8] sm:$0xf]
  %v5528 = vld [vmem:[%s1 + $0x5b4] sm:$0xf]
  %v5529 = vld [vmem:[%s1 + $0x5c0] sm:$0xf]
  %v5530 = vld [vmem:[%s1 + $0x5cc] sm:$0xf]
  %v5531 = vld [vmem:[%s1 + $0x5d8] sm:$0xf]
  %v5532 = vld [vmem:[%s1 + $0x5e4] sm:$0xf]
  %v5533 = vld [vmem:[%s1 + $0x5f0] sm:$0xf]
  %v5534 = vld [vmem:[%s1 + $0x5fc] sm:$0xf]
  %v5663 = vunpack.c.l.b16 %v5407
  %v5664 = vunpack.c.l.b16 %v5408
  %v5665 = vunpack.c.l.b16 %v5409
  %v5666 = vunpack.c.l.b16 %v5410
  %v5667 = vunpack.c.l.b16 %v5411
  %v5668 = vunpack.c.l.b16 %v5412
  %v5669 = vunpack.c.l.b16 %v5413
  %v5670 = vunpack.c.l.b16 %v5414
  %v5671 = vunpack.c.l.b16 %v5415
  %v5672 = vunpack.c.l.b16 %v5416
  %v5673 = vunpack.c.l.b16 %v5417
  %v5674 = vunpack.c.l.b16 %v5418
  %v5675 = vunpack.c.l.b16 %v5419
  %v5676 = vunpack.c.l.b16 %v5420
  %v5677 = vunpack.c.l.b16 %v5421
  %v5678 = vunpack.c.l.b16 %v5422
  %v5679 = vunpack.c.l.b16 %v5423
  %v5680 = vunpack.c.l.b16 %v5424
  %v5681 = vunpack.c.l.b16 %v5425
  %v5682 = vunpack.c.l.b16 %v5426
  %v5683 = vunpack.c.l.b16 %v5427
  %v5684 = vunpack.c.l.b16 %v5428
  %v5685 = vunpack.c.l.b16 %v5429
  %v5686 = vunpack.c.l.b16 %v5430
  %v5687 = vunpack.c.l.b16 %v5431
  %v5688 = vunpack.c.l.b16 %v5432
  %v5689 = vunpack.c.l.b16 %v5433
  %v5690 = vunpack.c.l.b16 %v5434
  %v5691 = vunpack.c.l.b16 %v5435
  %v5692 = vunpack.c.l.b16 %v5436
  %v5693 = vunpack.c.l.b16 %v5437
  %v5694 = vunpack.c.l.b16 %v5438
  %v5695 = vunpack.c.l.b16 %v5439
  %v5696 = vunpack.c.l.b16 %v5440
  %v5697 = vunpack.c.l.b16 %v5441
  %v5698 = vunpack.c.l.b16 %v5442
  %v5699 = vunpack.c.l.b16 %v5443
  %v5700 = vunpack.c.l.b16 %v5444
  %v5701 = vunpack.c.l.b16 %v5445
  %v5702 = vunpack.c.l.b16 %v5446
  %v5703 = vunpack.c.l.b16 %v5447
  %v5704 = vunpack.c.l.b16 %v5448
  %v5705 = vunpack.c.l.b16 %v5449
  %v5706 = vunpack.c.l.b16 %v5450
  %v5707 = vunpack.c.l.b16 %v5451
  %v5708 = vunpack.c.l.b16 %v5452
  %v5709 = vunpack.c.l.b16 %v5453
  %v5710 = vunpack.c.l.b16 %v5454
  %v5711 = vunpack.c.l.b16 %v5455
  %v5712 = vunpack.c.l.b16 %v5456
  %v5713 = vunpack.c.l.b16 %v5457
  %v5714 = vunpack.c.l.b16 %v5458
  %v5715 = vunpack.c.l.b16 %v5459
  %v5716 = vunpack.c.l.b16 %v5460
  %v5717 = vunpack.c.l.b16 %v5461
  %v5718 = vunpack.c.l.b16 %v5462
  %v5719 = vunpack.c.l.b16 %v5463
  %v5720 = vunpack.c.l.b16 %v5464
  %v5721 = vunpack.c.l.b16 %v5465
  %v5722 = vunpack.c.l.b16 %v5466
  %v5723 = vunpack.c.l.b16 %v5467
  %v5724 = vunpack.c.l.b16 %v5468
  %v5725 = vunpack.c.l.b16 %v5469
  %v5726 = vunpack.c.l.b16 %v5470
  %v5727 = vunpack.c.l.b16 %v5471
  %v5728 = vunpack.c.l.b16 %v5472
  %v5729 = vunpack.c.l.b16 %v5473
  %v5730 = vunpack.c.l.b16 %v5474
  %v5731 = vunpack.c.l.b16 %v5475
  %v5732 = vunpack.c.l.b16 %v5476
  %v5733 = vunpack.c.l.b16 %v5477
  %v5734 = vunpack.c.l.b16 %v5478
  %v5735 = vunpack.c.l.b16 %v5479
  %v5736 = vunpack.c.l.b16 %v5480
  %v5737 = vunpack.c.l.b16 %v5481
  %v5738 = vunpack.c.l.b16 %v5482
  %v5739 = vunpack.c.l.b16 %v5483
  %v5740 = vunpack.c.l.b16 %v5484
  %v5741 = vunpack.c.l.b16 %v5485
  %v5742 = vunpack.c.l.b16 %v5486
  %v5743 = vunpack.c.l.b16 %v5487
  %v5744 = vunpack.c.l.b16 %v5488
  %v5745 = vunpack.c.l.b16 %v5489
  %v5746 = vunpack.c.l.b16 %v5490
  %v5747 = vunpack.c.l.b16 %v5491
  %v5748 = vunpack.c.l.b16 %v5492
  %v5749 = vunpack.c.l.b16 %v5493
  %v5750 = vunpack.c.l.b16 %v5494
  %v5751 = vunpack.c.l.b16 %v5495
  %v5752 = vunpack.c.l.b16 %v5496
  %v5753 = vunpack.c.l.b16 %v5497
  %v5754 = vunpack.c.l.b16 %v5498
  %v5755 = vunpack.c.l.b16 %v5499
  %v5756 = vunpack.c.l.b16 %v5500
  %v5757 = vunpack.c.l.b16 %v5501
  %v5758 = vunpack.c.l.b16 %v5502
  %v5759 = vunpack.c.l.b16 %v5503
  %v5760 = vunpack.c.l.b16 %v5504
  %v5761 = vunpack.c.l.b16 %v5505
  %v5762 = vunpack.c.l.b16 %v5506
  %v5763 = vunpack.c.l.b16 %v5507
  %v5764 = vunpack.c.l.b16 %v5508
  %v5765 = vunpack.c.l.b16 %v5509
  %v5766 = vunpack.c.l.b16 %v5510
  %v5767 = vunpack.c.l.b16 %v5511
  %v5768 = vunpack.c.l.b16 %v5512
  %v5769 = vunpack.c.l.b16 %v5513
  %v5770 = vunpack.c.l.b16 %v5514
  %v5771 = vunpack.c.l.b16 %v5515
  %v5772 = vunpack.c.l.b16 %v5516
  %v5773 = vunpack.c.l.b16 %v5517
  %v5774 = vunpack.c.l.b16 %v5518
  %v5775 = vunpack.c.l.b16 %v5519
  %v5776 = vunpack.c.l.b16 %v5520
  %v5777 = vunpack.c.l.b16 %v5521
  %v5778 = vunpack.c.l.b16 %v5522
  %v5779 = vunpack.c.l.b16 %v5523
  %v5780 = vunpack.c.l.b16 %v5524
  %v5781 = vunpack.c.l.b16 %v5525
  %v5782 = vunpack.c.l.b16 %v5526
  %v5783 = vunpack.c.l.b16 %v5527
  %v5784 = vunpack.c.l.b16 %v5528
  %v5785 = vunpack.c.l.b16 %v5529
  %v5786 = vunpack.c.l.b16 %v5530
  %v5787 = vunpack.c.l.b16 %v5531
  %v5788 = vunpack.c.l.b16 %v5532
  %v5789 = vunpack.c.l.b16 %v5533
  %v5790 = vunpack.c.l.b16 %v5534
  %v5791 = vpack.c.b16 %v5664, %v5663
  %v5792 = vpack.c.b16 %v5666, %v5665
  %v5793 = vpack.c.b16 %v5668, %v5667
  %v5794 = vpack.c.b16 %v5670, %v5669
  %v5795 = vpack.c.b16 %v5672, %v5671
  %v5796 = vpack.c.b16 %v5674, %v5673
  %v5797 = vpack.c.b16 %v5676, %v5675
  %v5798 = vpack.c.b16 %v5678, %v5677
  %v5799 = vpack.c.b16 %v5680, %v5679
  %v5800 = vpack.c.b16 %v5682, %v5681
  %v5801 = vpack.c.b16 %v5684, %v5683
  %v5802 = vpack.c.b16 %v5686, %v5685
  %v5803 = vpack.c.b16 %v5688, %v5687
  %v5804 = vpack.c.b16 %v5690, %v5689
  %v5805 = vpack.c.b16 %v5692, %v5691
  %v5806 = vpack.c.b16 %v5694, %v5693
  %v5807 = vpack.c.b16 %v5696, %v5695
  %v5808 = vpack.c.b16 %v5698, %v5697
  %v5809 = vpack.c.b16 %v5700, %v5699
  %v5810 = vpack.c.b16 %v5702, %v5701
  %v5811 = vpack.c.b16 %v5704, %v5703
  %v5812 = vpack.c.b16 %v5706, %v5705
  %v5813 = vpack.c.b16 %v5708, %v5707
  %v5814 = vpack.c.b16 %v5710, %v5709
  %v5815 = vpack.c.b16 %v5712, %v5711
  %v5816 = vpack.c.b16 %v5714, %v5713
  %v5817 = vpack.c.b16 %v5716, %v5715
  %v5818 = vpack.c.b16 %v5718, %v5717
  %v5819 = vpack.c.b16 %v5720, %v5719
  %v5820 = vpack.c.b16 %v5722, %v5721
  %v5821 = vpack.c.b16 %v5724, %v5723
  %v5822 = vpack.c.b16 %v5726, %v5725
  %v5823 = vpack.c.b16 %v5728, %v5727
  %v5824 = vpack.c.b16 %v5730, %v5729
  %v5825 = vpack.c.b16 %v5732, %v5731
  %v5826 = vpack.c.b16 %v5734, %v5733
  %v5827 = vpack.c.b16 %v5736, %v5735
  %v5828 = vpack.c.b16 %v5738, %v5737
  %v5829 = vpack.c.b16 %v5740, %v5739
  %v5830 = vpack.c.b16 %v5742, %v5741
  %v5831 = vpack.c.b16 %v5744, %v5743
  %v5832 = vpack.c.b16 %v5746, %v5745
  %v5833 = vpack.c.b16 %v5748, %v5747
  %v5834 = vpack.c.b16 %v5750, %v5749
  %v5835 = vpack.c.b16 %v5752, %v5751
  %v5836 = vpack.c.b16 %v5754, %v5753
  %v5837 = vpack.c.b16 %v5756, %v5755
  %v5838 = vpack.c.b16 %v5758, %v5757
  %v5839 = vpack.c.b16 %v5760, %v5759
  %v5840 = vpack.c.b16 %v5762, %v5761
  %v5841 = vpack.c.b16 %v5764, %v5763
  %v5842 = vpack.c.b16 %v5766, %v5765
  %v5843 = vpack.c.b16 %v5768, %v5767
  %v5844 = vpack.c.b16 %v5770, %v5769
  %v5845 = vpack.c.b16 %v5772, %v5771
  %v5846 = vpack.c.b16 %v5774, %v5773
  %v5847 = vpack.c.b16 %v5776, %v5775
  %v5848 = vpack.c.b16 %v5778, %v5777
  %v5849 = vpack.c.b16 %v5780, %v5779
  %v5850 = vpack.c.b16 %v5782, %v5781
  %v5851 = vpack.c.b16 %v5784, %v5783
  %v5852 = vpack.c.b16 %v5786, %v5785
  %v5853 = vpack.c.b16 %v5788, %v5787
  %v5854 = vpack.c.b16 %v5790, %v5789
  %5919 = vmatpush.bf16.msra.mxu0 %v5798
  %5920 = vmatpush.bf16.msra.mxu0 %v5797
  %5921 = vmatpush.bf16.msra.mxu0 %v5796
  %5922 = vmatpush.bf16.msra.mxu0 %v5795
  %5923 = vmatpush.bf16.msra.mxu0 %v5794
  %5924 = vmatpush.bf16.msra.mxu0 %v5793
  %5925 = vmatpush.bf16.msra.mxu0 %v5792
  %5926 = vmatpush.bf16.msra.mxu0 %v5791
  %5927 = vmatmul.bf16.gmra.mxu0 %v1231
  %v5928 = vpop.f32.mrf.mxu0
  %v5929 = vadd.f32 0.0, %v5928
  %v5930 = vpop.f32.mrf.mxu0
  %v5931 = vadd.f32 0.0, %v5930
  %5932 = vmatmul.bf16.gmra.mxu0 %v1239
  %v5933 = vpop.f32.mrf.mxu0
  %v5934 = vadd.f32 0.0, %v5933
  %v5935 = vpop.f32.mrf.mxu0
  %v5936 = vadd.f32 0.0, %v5935
  %5937 = vmatmul.bf16.gmra.mxu0 %v1247
  %v5938 = vpop.f32.mrf.mxu0
  %v5939 = vadd.f32 0.0, %v5938
  %v5940 = vpop.f32.mrf.mxu0
  %v5941 = vadd.f32 0.0, %v5940
  %5942 = vmatmul.bf16.gmra.mxu0 %v1255
  %v5943 = vpop.f32.mrf.mxu0
  %v5944 = vadd.f32 0.0, %v5943
  %v5945 = vpop.f32.mrf.mxu0
  %v5946 = vadd.f32 0.0, %v5945
  %5947 = vmatmul.bf16.gmra.mxu0 %v1263
  %v5948 = vpop.f32.mrf.mxu0
  %v5949 = vadd.f32 0.0, %v5948
  %v5950 = vpop.f32.mrf.mxu0
  %v5951 = vadd.f32 0.0, %v5950
  %5952 = vmatmul.bf16.gmra.mxu0 %v1271
  %v5953 = vpop.f32.mrf.mxu0
  %v5954 = vadd.f32 0.0, %v5953
  %v5955 = vpop.f32.mrf.mxu0
  %v5956 = vadd.f32 0.0, %v5955
  %5957 = vmatmul.bf16.gmra.mxu0 %v1279
  %v5958 = vpop.f32.mrf.mxu0
  %v5959 = vadd.f32 0.0, %v5958
  %v5960 = vpop.f32.mrf.mxu0
  %v5961 = vadd.f32 0.0, %v5960
  %5962 = vmatmul.bf16.gmra.mxu0 %v1287
  %v5963 = vpop.f32.mrf.mxu0
  %v5964 = vadd.f32 0.0, %v5963
  %v5965 = vpop.f32.mrf.mxu0
  %v5966 = vadd.f32 0.0, %v5965
  %5967 = vmatmul.bf16.gmra.mxu0 %v1295
  %v5968 = vpop.f32.mrf.mxu0
  %v5969 = vadd.f32 0.0, %v5968
  %v5970 = vpop.f32.mrf.mxu0
  %v5971 = vadd.f32 0.0, %v5970
  %5972 = vmatmul.bf16.gmra.mxu0 %v1303
  %v5973 = vpop.f32.mrf.mxu0
  %v5974 = vadd.f32 0.0, %v5973
  %v5975 = vpop.f32.mrf.mxu0
  %v5976 = vadd.f32 0.0, %v5975
  %5977 = vmatmul.bf16.gmra.mxu0 %v1311
  %v5978 = vpop.f32.mrf.mxu0
  %v5979 = vadd.f32 0.0, %v5978
  %v5980 = vpop.f32.mrf.mxu0
  %v5981 = vadd.f32 0.0, %v5980
  %5982 = vmatmul.bf16.gmra.mxu0 %v1319
  %v5983 = vpop.f32.mrf.mxu0
  %v5984 = vadd.f32 0.0, %v5983
  %v5985 = vpop.f32.mrf.mxu0
  %v5986 = vadd.f32 0.0, %v5985
  %5987 = vmatmul.bf16.gmra.mxu0 %v1327
  %v5988 = vpop.f32.mrf.mxu0
  %v5989 = vadd.f32 0.0, %v5988
  %v5990 = vpop.f32.mrf.mxu0
  %v5991 = vadd.f32 0.0, %v5990
  %5992 = vmatmul.bf16.gmra.mxu0 %v1335
  %v5993 = vpop.f32.mrf.mxu0
  %v5994 = vadd.f32 0.0, %v5993
  %v5995 = vpop.f32.mrf.mxu0
  %v5996 = vadd.f32 0.0, %v5995
  %5997 = vmatmul.bf16.gmra.mxu0 %v1343
  %v5998 = vpop.f32.mrf.mxu0
  %v5999 = vadd.f32 0.0, %v5998
  %v6000 = vpop.f32.mrf.mxu0
  %v6001 = vadd.f32 0.0, %v6000
  %6002 = vmatmul.bf16.gmra.mxu0 %v1351
  %v6003 = vpop.f32.mrf.mxu0
  %v6004 = vadd.f32 0.0, %v6003
  %v6005 = vpop.f32.mrf.mxu0
  %v6006 = vadd.f32 0.0, %v6005
  %6007 = vmatmul.bf16.gmra.mxu0 %v1359
  %v6008 = vpop.f32.mrf.mxu0
  %v6009 = vadd.f32 0.0, %v6008
  %v6010 = vpop.f32.mrf.mxu0
  %v6011 = vadd.f32 0.0, %v6010
  %6012 = vmatmul.bf16.gmra.mxu0 %v1367
  %v6013 = vpop.f32.mrf.mxu0
  %v6014 = vadd.f32 0.0, %v6013
  %v6015 = vpop.f32.mrf.mxu0
  %v6016 = vadd.f32 0.0, %v6015
  %6017 = vmatmul.bf16.gmra.mxu0 %v1375
  %v6018 = vpop.f32.mrf.mxu0
  %v6019 = vadd.f32 0.0, %v6018
  %v6020 = vpop.f32.mrf.mxu0
  %v6021 = vadd.f32 0.0, %v6020
  %6022 = vmatmul.bf16.gmra.mxu0 %v1383
  %v6023 = vpop.f32.mrf.mxu0
  %v6024 = vadd.f32 0.0, %v6023
  %v6025 = vpop.f32.mrf.mxu0
  %v6026 = vadd.f32 0.0, %v6025
  %6027 = vmatmul.bf16.gmra.mxu0 %v1391
  %v6028 = vpop.f32.mrf.mxu0
  %v6029 = vadd.f32 0.0, %v6028
  %v6030 = vpop.f32.mrf.mxu0
  %v6031 = vadd.f32 0.0, %v6030
  %6032 = vmatmul.bf16.gmra.mxu0 %v1399
  %v6033 = vpop.f32.mrf.mxu0
  %v6034 = vadd.f32 0.0, %v6033
  %v6035 = vpop.f32.mrf.mxu0
  %v6036 = vadd.f32 0.0, %v6035
  %6037 = vmatmul.bf16.gmra.mxu0 %v1407
  %v6038 = vpop.f32.mrf.mxu0
  %v6039 = vadd.f32 0.0, %v6038
  %v6040 = vpop.f32.mrf.mxu0
  %v6041 = vadd.f32 0.0, %v6040
  %6042 = vmatmul.bf16.gmra.mxu0 %v1415
  %v6043 = vpop.f32.mrf.mxu0
  %v6044 = vadd.f32 0.0, %v6043
  %v6045 = vpop.f32.mrf.mxu0
  %v6046 = vadd.f32 0.0, %v6045
  %6047 = vmatmul.bf16.gmra.mxu0 %v1423
  %v6048 = vpop.f32.mrf.mxu0
  %v6049 = vadd.f32 0.0, %v6048
  %v6050 = vpop.f32.mrf.mxu0
  %v6051 = vadd.f32 0.0, %v6050
  %6052 = vmatmul.bf16.gmra.mxu0 %v1431
  %v6053 = vpop.f32.mrf.mxu0
  %v6054 = vadd.f32 0.0, %v6053
  %v6055 = vpop.f32.mrf.mxu0
  %v6056 = vadd.f32 0.0, %v6055
  %6057 = vmatmul.bf16.gmra.mxu0 %v1439
  %v6058 = vpop.f32.mrf.mxu0
  %v6059 = vadd.f32 0.0, %v6058
  %v6060 = vpop.f32.mrf.mxu0
  %v6061 = vadd.f32 0.0, %v6060
  %6062 = vmatmul.bf16.gmra.mxu0 %v1447
  %v6063 = vpop.f32.mrf.mxu0
  %v6064 = vadd.f32 0.0, %v6063
  %v6065 = vpop.f32.mrf.mxu0
  %v6066 = vadd.f32 0.0, %v6065
  %6067 = vmatmul.bf16.gmra.mxu0 %v1455
  %v6068 = vpop.f32.mrf.mxu0
  %v6069 = vadd.f32 0.0, %v6068
  %v6070 = vpop.f32.mrf.mxu0
  %v6071 = vadd.f32 0.0, %v6070
  %6072 = vmatmul.bf16.gmra.mxu0 %v1463
  %v6073 = vpop.f32.mrf.mxu0
  %v6074 = vadd.f32 0.0, %v6073
  %v6075 = vpop.f32.mrf.mxu0
  %v6076 = vadd.f32 0.0, %v6075
  %6077 = vmatmul.bf16.gmra.mxu0 %v1471
  %v6078 = vpop.f32.mrf.mxu0
  %v6079 = vadd.f32 0.0, %v6078
  %v6080 = vpop.f32.mrf.mxu0
  %v6081 = vadd.f32 0.0, %v6080
  %6082 = vmatmul.bf16.gmra.mxu0 %v1479
  %v6083 = vpop.f32.mrf.mxu0
  %v6084 = vadd.f32 0.0, %v6083
  %v6085 = vpop.f32.mrf.mxu0
  %v6086 = vadd.f32 0.0, %v6085
  %6087 = vdwg.mxu0
  %6088 = vmatpush.bf16.msra.mxu0 %v5806
  %6089 = vmatpush.bf16.msra.mxu0 %v5805
  %6090 = vmatpush.bf16.msra.mxu0 %v5804
  %6091 = vmatpush.bf16.msra.mxu0 %v5803
  %6092 = vmatpush.bf16.msra.mxu0 %v5802
  %6093 = vmatpush.bf16.msra.mxu0 %v5801
  %6094 = vmatpush.bf16.msra.mxu0 %v5800
  %6095 = vmatpush.bf16.msra.mxu0 %v5799
  %6096 = vmatmul.bf16.gmra.mxu0 %v1232
  %v6097 = vpop.f32.mrf.mxu0
  %v6098 = vadd.f32 %v5929, %v6097
  %v6099 = vpop.f32.mrf.mxu0
  %v6100 = vadd.f32 %v5931, %v6099
  %6101 = vmatmul.bf16.gmra.mxu0 %v1240
  %v6102 = vpop.f32.mrf.mxu0
  %v6103 = vadd.f32 %v5934, %v6102
  %v6104 = vpop.f32.mrf.mxu0
  %v6105 = vadd.f32 %v5936, %v6104
  %6106 = vmatmul.bf16.gmra.mxu0 %v1248
  %v6107 = vpop.f32.mrf.mxu0
  %v6108 = vadd.f32 %v5939, %v6107
  %v6109 = vpop.f32.mrf.mxu0
  %v6110 = vadd.f32 %v5941, %v6109
  %6111 = vmatmul.bf16.gmra.mxu0 %v1256
  %v6112 = vpop.f32.mrf.mxu0
  %v6113 = vadd.f32 %v5944, %v6112
  %v6114 = vpop.f32.mrf.mxu0
  %v6115 = vadd.f32 %v5946, %v6114
  %6116 = vmatmul.bf16.gmra.mxu0 %v1264
  %v6117 = vpop.f32.mrf.mxu0
  %v6118 = vadd.f32 %v5949, %v6117
  %v6119 = vpop.f32.mrf.mxu0
  %v6120 = vadd.f32 %v5951, %v6119
  %6121 = vmatmul.bf16.gmra.mxu0 %v1272
  %v6122 = vpop.f32.mrf.mxu0
  %v6123 = vadd.f32 %v5954, %v6122
  %v6124 = vpop.f32.mrf.mxu0
  %v6125 = vadd.f32 %v5956, %v6124
  %6126 = vmatmul.bf16.gmra.mxu0 %v1280
  %v6127 = vpop.f32.mrf.mxu0
  %v6128 = vadd.f32 %v5959, %v6127
  %v6129 = vpop.f32.mrf.mxu0
  %v6130 = vadd.f32 %v5961, %v6129
  %6131 = vmatmul.bf16.gmra.mxu0 %v1288
  %v6132 = vpop.f32.mrf.mxu0
  %v6133 = vadd.f32 %v5964, %v6132
  %v6134 = vpop.f32.mrf.mxu0
  %v6135 = vadd.f32 %v5966, %v6134
  %6136 = vmatmul.bf16.gmra.mxu0 %v1296
  %v6137 = vpop.f32.mrf.mxu0
  %v6138 = vadd.f32 %v5969, %v6137
  %v6139 = vpop.f32.mrf.mxu0
  %v6140 = vadd.f32 %v5971, %v6139
  %6141 = vmatmul.bf16.gmra.mxu0 %v1304
  %v6142 = vpop.f32.mrf.mxu0
  %v6143 = vadd.f32 %v5974, %v6142
  %v6144 = vpop.f32.mrf.mxu0
  %v6145 = vadd.f32 %v5976, %v6144
  %6146 = vmatmul.bf16.gmra.mxu0 %v1312
  %v6147 = vpop.f32.mrf.mxu0
  %v6148 = vadd.f32 %v5979, %v6147
  %v6149 = vpop.f32.mrf.mxu0
  %v6150 = vadd.f32 %v5981, %v6149
  %6151 = vmatmul.bf16.gmra.mxu0 %v1320
  %v6152 = vpop.f32.mrf.mxu0
  %v6153 = vadd.f32 %v5984, %v6152
  %v6154 = vpop.f32.mrf.mxu0
  %v6155 = vadd.f32 %v5986, %v6154
  %6156 = vmatmul.bf16.gmra.mxu0 %v1328
  %v6157 = vpop.f32.mrf.mxu0
  %v6158 = vadd.f32 %v5989, %v6157
  %v6159 = vpop.f32.mrf.mxu0
  %v6160 = vadd.f32 %v5991, %v6159
  %6161 = vmatmul.bf16.gmra.mxu0 %v1336
  %v6162 = vpop.f32.mrf.mxu0
  %v6163 = vadd.f32 %v5994, %v6162
  %v6164 = vpop.f32.mrf.mxu0
  %v6165 = vadd.f32 %v5996, %v6164
  %6166 = vmatmul.bf16.gmra.mxu0 %v1344
  %v6167 = vpop.f32.mrf.mxu0
  %v6168 = vadd.f32 %v5999, %v6167
  %v6169 = vpop.f32.mrf.mxu0
  %v6170 = vadd.f32 %v6001, %v6169
  %6171 = vmatmul.bf16.gmra.mxu0 %v1352
  %v6172 = vpop.f32.mrf.mxu0
  %v6173 = vadd.f32 %v6004, %v6172
  %v6174 = vpop.f32.mrf.mxu0
  %v6175 = vadd.f32 %v6006, %v6174
  %6176 = vmatmul.bf16.gmra.mxu0 %v1360
  %v6177 = vpop.f32.mrf.mxu0
  %v6178 = vadd.f32 %v6009, %v6177
  %v6179 = vpop.f32.mrf.mxu0
  %v6180 = vadd.f32 %v6011, %v6179
  %6181 = vmatmul.bf16.gmra.mxu0 %v1368
  %v6182 = vpop.f32.mrf.mxu0
  %v6183 = vadd.f32 %v6014, %v6182
  %v6184 = vpop.f32.mrf.mxu0
  %v6185 = vadd.f32 %v6016, %v6184
  %6186 = vmatmul.bf16.gmra.mxu0 %v1376
  %v6187 = vpop.f32.mrf.mxu0
  %v6188 = vadd.f32 %v6019, %v6187
  %v6189 = vpop.f32.mrf.mxu0
  %v6190 = vadd.f32 %v6021, %v6189
  %6191 = vmatmul.bf16.gmra.mxu0 %v1384
  %v6192 = vpop.f32.mrf.mxu0
  %v6193 = vadd.f32 %v6024, %v6192
  %v6194 = vpop.f32.mrf.mxu0
  %v6195 = vadd.f32 %v6026, %v6194
  %6196 = vmatmul.bf16.gmra.mxu0 %v1392
  %v6197 = vpop.f32.mrf.mxu0
  %v6198 = vadd.f32 %v6029, %v6197
  %v6199 = vpop.f32.mrf.mxu0
  %v6200 = vadd.f32 %v6031, %v6199
  %6201 = vmatmul.bf16.gmra.mxu0 %v1400
  %v6202 = vpop.f32.mrf.mxu0
  %v6203 = vadd.f32 %v6034, %v6202
  %v6204 = vpop.f32.mrf.mxu0
  %v6205 = vadd.f32 %v6036, %v6204
  %6206 = vmatmul.bf16.gmra.mxu0 %v1408
  %v6207 = vpop.f32.mrf.mxu0
  %v6208 = vadd.f32 %v6039, %v6207
  %v6209 = vpop.f32.mrf.mxu0
  %v6210 = vadd.f32 %v6041, %v6209
  %6211 = vmatmul.bf16.gmra.mxu0 %v1416
  %v6212 = vpop.f32.mrf.mxu0
  %v6213 = vadd.f32 %v6044, %v6212
  %v6214 = vpop.f32.mrf.mxu0
  %v6215 = vadd.f32 %v6046, %v6214
  %6216 = vmatmul.bf16.gmra.mxu0 %v1424
  %v6217 = vpop.f32.mrf.mxu0
  %v6218 = vadd.f32 %v6049, %v6217
  %v6219 = vpop.f32.mrf.mxu0
  %v6220 = vadd.f32 %v6051, %v6219
  %6221 = vmatmul.bf16.gmra.mxu0 %v1432
  %v6222 = vpop.f32.mrf.mxu0
  %v6223 = vadd.f32 %v6054, %v6222
  %v6224 = vpop.f32.mrf.mxu0
  %v6225 = vadd.f32 %v6056, %v6224
  %6226 = vmatmul.bf16.gmra.mxu0 %v1440
  %v6227 = vpop.f32.mrf.mxu0
  %v6228 = vadd.f32 %v6059, %v6227
  %v6229 = vpop.f32.mrf.mxu0
  %v6230 = vadd.f32 %v6061, %v6229
  %6231 = vmatmul.bf16.gmra.mxu0 %v1448
  %v6232 = vpop.f32.mrf.mxu0
  %v6233 = vadd.f32 %v6064, %v6232
  %v6234 = vpop.f32.mrf.mxu0
  %v6235 = vadd.f32 %v6066, %v6234
  %6236 = vmatmul.bf16.gmra.mxu0 %v1456
  %v6237 = vpop.f32.mrf.mxu0
  %v6238 = vadd.f32 %v6069, %v6237
  %v6239 = vpop.f32.mrf.mxu0
  %v6240 = vadd.f32 %v6071, %v6239
  %6241 = vmatmul.bf16.gmra.mxu0 %v1464
  %v6242 = vpop.f32.mrf.mxu0
  %v6243 = vadd.f32 %v6074, %v6242
  %v6244 = vpop.f32.mrf.mxu0
  %v6245 = vadd.f32 %v6076, %v6244
  %6246 = vmatmul.bf16.gmra.mxu0 %v1472
  %v6247 = vpop.f32.mrf.mxu0
  %v6248 = vadd.f32 %v6079, %v6247
  %v6249 = vpop.f32.mrf.mxu0
  %v6250 = vadd.f32 %v6081, %v6249
  %6251 = vmatmul.bf16.gmra.mxu0 %v1480
  %v6252 = vpop.f32.mrf.mxu0
  %v6253 = vadd.f32 %v6084, %v6252
  %v6254 = vpop.f32.mrf.mxu0
  %v6255 = vadd.f32 %v6086, %v6254
  %6256 = vdwg.mxu0
  %6257 = vmatpush.bf16.msra.mxu0 %v5814
  %6258 = vmatpush.bf16.msra.mxu0 %v5813
  %6259 = vmatpush.bf16.msra.mxu0 %v5812
  %6260 = vmatpush.bf16.msra.mxu0 %v5811
  %6261 = vmatpush.bf16.msra.mxu0 %v5810
  %6262 = vmatpush.bf16.msra.mxu0 %v5809
  %6263 = vmatpush.bf16.msra.mxu0 %v5808
  %6264 = vmatpush.bf16.msra.mxu0 %v5807
  %6265 = vmatmul.bf16.gmra.mxu0 %v1233
  %v6266 = vpop.f32.mrf.mxu0
  %v6267 = vadd.f32 %v6098, %v6266
  %v6268 = vpop.f32.mrf.mxu0
  %v6269 = vadd.f32 %v6100, %v6268
  %6270 = vmatmul.bf16.gmra.mxu0 %v1241
  %v6271 = vpop.f32.mrf.mxu0
  %v6272 = vadd.f32 %v6103, %v6271
  %v6273 = vpop.f32.mrf.mxu0
  %v6274 = vadd.f32 %v6105, %v6273
  %6275 = vmatmul.bf16.gmra.mxu0 %v1249
  %v6276 = vpop.f32.mrf.mxu0
  %v6277 = vadd.f32 %v6108, %v6276
  %v6278 = vpop.f32.mrf.mxu0
  %v6279 = vadd.f32 %v6110, %v6278
  %6280 = vmatmul.bf16.gmra.mxu0 %v1257
  %v6281 = vpop.f32.mrf.mxu0
  %v6282 = vadd.f32 %v6113, %v6281
  %v6283 = vpop.f32.mrf.mxu0
  %v6284 = vadd.f32 %v6115, %v6283
  %6285 = vmatmul.bf16.gmra.mxu0 %v1265
  %v6286 = vpop.f32.mrf.mxu0
  %v6287 = vadd.f32 %v6118, %v6286
  %v6288 = vpop.f32.mrf.mxu0
  %v6289 = vadd.f32 %v6120, %v6288
  %6290 = vmatmul.bf16.gmra.mxu0 %v1273
  %v6291 = vpop.f32.mrf.mxu0
  %v6292 = vadd.f32 %v6123, %v6291
  %v6293 = vpop.f32.mrf.mxu0
  %v6294 = vadd.f32 %v6125, %v6293
  %6295 = vmatmul.bf16.gmra.mxu0 %v1281
  %v6296 = vpop.f32.mrf.mxu0
  %v6297 = vadd.f32 %v6128, %v6296
  %v6298 = vpop.f32.mrf.mxu0
  %v6299 = vadd.f32 %v6130, %v6298
  %6300 = vmatmul.bf16.gmra.mxu0 %v1289
  %v6301 = vpop.f32.mrf.mxu0
  %v6302 = vadd.f32 %v6133, %v6301
  %v6303 = vpop.f32.mrf.mxu0
  %v6304 = vadd.f32 %v6135, %v6303
  %6305 = vmatmul.bf16.gmra.mxu0 %v1297
  %v6306 = vpop.f32.mrf.mxu0
  %v6307 = vadd.f32 %v6138, %v6306
  %v6308 = vpop.f32.mrf.mxu0
  %v6309 = vadd.f32 %v6140, %v6308
  %6310 = vmatmul.bf16.gmra.mxu0 %v1305
  %v6311 = vpop.f32.mrf.mxu0
  %v6312 = vadd.f32 %v6143, %v6311
  %v6313 = vpop.f32.mrf.mxu0
  %v6314 = vadd.f32 %v6145, %v6313
  %6315 = vmatmul.bf16.gmra.mxu0 %v1313
  %v6316 = vpop.f32.mrf.mxu0
  %v6317 = vadd.f32 %v6148, %v6316
  %v6318 = vpop.f32.mrf.mxu0
  %v6319 = vadd.f32 %v6150, %v6318
  %6320 = vmatmul.bf16.gmra.mxu0 %v1321
  %v6321 = vpop.f32.mrf.mxu0
  %v6322 = vadd.f32 %v6153, %v6321
  %v6323 = vpop.f32.mrf.mxu0
  %v6324 = vadd.f32 %v6155, %v6323
  %6325 = vmatmul.bf16.gmra.mxu0 %v1329
  %v6326 = vpop.f32.mrf.mxu0
  %v6327 = vadd.f32 %v6158, %v6326
  %v6328 = vpop.f32.mrf.mxu0
  %v6329 = vadd.f32 %v6160, %v6328
  %6330 = vmatmul.bf16.gmra.mxu0 %v1337
  %v6331 = vpop.f32.mrf.mxu0
  %v6332 = vadd.f32 %v6163, %v6331
  %v6333 = vpop.f32.mrf.mxu0
  %v6334 = vadd.f32 %v6165, %v6333
  %6335 = vmatmul.bf16.gmra.mxu0 %v1345
  %v6336 = vpop.f32.mrf.mxu0
  %v6337 = vadd.f32 %v6168, %v6336
  %v6338 = vpop.f32.mrf.mxu0
  %v6339 = vadd.f32 %v6170, %v6338
  %6340 = vmatmul.bf16.gmra.mxu0 %v1353
  %v6341 = vpop.f32.mrf.mxu0
  %v6342 = vadd.f32 %v6173, %v6341
  %v6343 = vpop.f32.mrf.mxu0
  %v6344 = vadd.f32 %v6175, %v6343
  %6345 = vmatmul.bf16.gmra.mxu0 %v1361
  %v6346 = vpop.f32.mrf.mxu0
  %v6347 = vadd.f32 %v6178, %v6346
  %v6348 = vpop.f32.mrf.mxu0
  %v6349 = vadd.f32 %v6180, %v6348
  %6350 = vmatmul.bf16.gmra.mxu0 %v1369
  %v6351 = vpop.f32.mrf.mxu0
  %v6352 = vadd.f32 %v6183, %v6351
  %v6353 = vpop.f32.mrf.mxu0
  %v6354 = vadd.f32 %v6185, %v6353
  %6355 = vmatmul.bf16.gmra.mxu0 %v1377
  %v6356 = vpop.f32.mrf.mxu0
  %v6357 = vadd.f32 %v6188, %v6356
  %v6358 = vpop.f32.mrf.mxu0
  %v6359 = vadd.f32 %v6190, %v6358
  %6360 = vmatmul.bf16.gmra.mxu0 %v1385
  %v6361 = vpop.f32.mrf.mxu0
  %v6362 = vadd.f32 %v6193, %v6361
  %v6363 = vpop.f32.mrf.mxu0
  %v6364 = vadd.f32 %v6195, %v6363
  %6365 = vmatmul.bf16.gmra.mxu0 %v1393
  %v6366 = vpop.f32.mrf.mxu0
  %v6367 = vadd.f32 %v6198, %v6366
  %v6368 = vpop.f32.mrf.mxu0
  %v6369 = vadd.f32 %v6200, %v6368
  %6370 = vmatmul.bf16.gmra.mxu0 %v1401
  %v6371 = vpop.f32.mrf.mxu0
  %v6372 = vadd.f32 %v6203, %v6371
  %v6373 = vpop.f32.mrf.mxu0
  %v6374 = vadd.f32 %v6205, %v6373
  %6375 = vmatmul.bf16.gmra.mxu0 %v1409
  %v6376 = vpop.f32.mrf.mxu0
  %v6377 = vadd.f32 %v6208, %v6376
  %v6378 = vpop.f32.mrf.mxu0
  %v6379 = vadd.f32 %v6210, %v6378
  %6380 = vmatmul.bf16.gmra.mxu0 %v1417
  %v6381 = vpop.f32.mrf.mxu0
  %v6382 = vadd.f32 %v6213, %v6381
  %v6383 = vpop.f32.mrf.mxu0
  %v6384 = vadd.f32 %v6215, %v6383
  %6385 = vmatmul.bf16.gmra.mxu0 %v1425
  %v6386 = vpop.f32.mrf.mxu0
  %v6387 = vadd.f32 %v6218, %v6386
  %v6388 = vpop.f32.mrf.mxu0
  %v6389 = vadd.f32 %v6220, %v6388
  %6390 = vmatmul.bf16.gmra.mxu0 %v1433
  %v6391 = vpop.f32.mrf.mxu0
  %v6392 = vadd.f32 %v6223, %v6391
  %v6393 = vpop.f32.mrf.mxu0
  %v6394 = vadd.f32 %v6225, %v6393
  %6395 = vmatmul.bf16.gmra.mxu0 %v1441
  %v6396 = vpop.f32.mrf.mxu0
  %v6397 = vadd.f32 %v6228, %v6396
  %v6398 = vpop.f32.mrf.mxu0
  %v6399 = vadd.f32 %v6230, %v6398
  %6400 = vmatmul.bf16.gmra.mxu0 %v1449
  %v6401 = vpop.f32.mrf.mxu0
  %v6402 = vadd.f32 %v6233, %v6401
  %v6403 = vpop.f32.mrf.mxu0
  %v6404 = vadd.f32 %v6235, %v6403
  %6405 = vmatmul.bf16.gmra.mxu0 %v1457
  %v6406 = vpop.f32.mrf.mxu0
  %v6407 = vadd.f32 %v6238, %v6406
  %v6408 = vpop.f32.mrf.mxu0
  %v6409 = vadd.f32 %v6240, %v6408
  %6410 = vmatmul.bf16.gmra.mxu0 %v1465
  %v6411 = vpop.f32.mrf.mxu0
  %v6412 = vadd.f32 %v6243, %v6411
  %v6413 = vpop.f32.mrf.mxu0
  %v6414 = vadd.f32 %v6245, %v6413
  %6415 = vmatmul.bf16.gmra.mxu0 %v1473
  %v6416 = vpop.f32.mrf.mxu0
  %v6417 = vadd.f32 %v6248, %v6416
  %v6418 = vpop.f32.mrf.mxu0
  %v6419 = vadd.f32 %v6250, %v6418
  %6420 = vmatmul.bf16.gmra.mxu0 %v1481
  %v6421 = vpop.f32.mrf.mxu0
  %v6422 = vadd.f32 %v6253, %v6421
  %v6423 = vpop.f32.mrf.mxu0
  %v6424 = vadd.f32 %v6255, %v6423
  %6425 = vdwg.mxu0
  %6426 = vmatpush.bf16.msra.mxu0 %v5822
  %6427 = vmatpush.bf16.msra.mxu0 %v5821
  %6428 = vmatpush.bf16.msra.mxu0 %v5820
  %6429 = vmatpush.bf16.msra.mxu0 %v5819
  %6430 = vmatpush.bf16.msra.mxu0 %v5818
  %6431 = vmatpush.bf16.msra.mxu0 %v5817
  %6432 = vmatpush.bf16.msra.mxu0 %v5816
  %6433 = vmatpush.bf16.msra.mxu0 %v5815
  %6434 = vmatmul.bf16.gmra.mxu0 %v1234
  %v6435 = vpop.f32.mrf.mxu0
  %v6436 = vadd.f32 %v6267, %v6435
  %v6437 = vpop.f32.mrf.mxu0
  %v6438 = vadd.f32 %v6269, %v6437
  %6439 = vmatmul.bf16.gmra.mxu0 %v1242
  %v6440 = vpop.f32.mrf.mxu0
  %v6441 = vadd.f32 %v6272, %v6440
  %v6442 = vpop.f32.mrf.mxu0
  %v6443 = vadd.f32 %v6274, %v6442
  %6444 = vmatmul.bf16.gmra.mxu0 %v1250
  %v6445 = vpop.f32.mrf.mxu0
  %v6446 = vadd.f32 %v6277, %v6445
  %v6447 = vpop.f32.mrf.mxu0
  %v6448 = vadd.f32 %v6279, %v6447
  %6449 = vmatmul.bf16.gmra.mxu0 %v1258
  %v6450 = vpop.f32.mrf.mxu0
  %v6451 = vadd.f32 %v6282, %v6450
  %v6452 = vpop.f32.mrf.mxu0
  %v6453 = vadd.f32 %v6284, %v6452
  %6454 = vmatmul.bf16.gmra.mxu0 %v1266
  %v6455 = vpop.f32.mrf.mxu0
  %v6456 = vadd.f32 %v6287, %v6455
  %v6457 = vpop.f32.mrf.mxu0
  %v6458 = vadd.f32 %v6289, %v6457
  %6459 = vmatmul.bf16.gmra.mxu0 %v1274
  %v6460 = vpop.f32.mrf.mxu0
  %v6461 = vadd.f32 %v6292, %v6460
  %v6462 = vpop.f32.mrf.mxu0
  %v6463 = vadd.f32 %v6294, %v6462
  %6464 = vmatmul.bf16.gmra.mxu0 %v1282
  %v6465 = vpop.f32.mrf.mxu0
  %v6466 = vadd.f32 %v6297, %v6465
  %v6467 = vpop.f32.mrf.mxu0
  %v6468 = vadd.f32 %v6299, %v6467
  %6469 = vmatmul.bf16.gmra.mxu0 %v1290
  %v6470 = vpop.f32.mrf.mxu0
  %v6471 = vadd.f32 %v6302, %v6470
  %v6472 = vpop.f32.mrf.mxu0
  %v6473 = vadd.f32 %v6304, %v6472
  %6474 = vmatmul.bf16.gmra.mxu0 %v1298
  %v6475 = vpop.f32.mrf.mxu0
  %v6476 = vadd.f32 %v6307, %v6475
  %v6477 = vpop.f32.mrf.mxu0
  %v6478 = vadd.f32 %v6309, %v6477
  %6479 = vmatmul.bf16.gmra.mxu0 %v1306
  %v6480 = vpop.f32.mrf.mxu0
  %v6481 = vadd.f32 %v6312, %v6480
  %v6482 = vpop.f32.mrf.mxu0
  %v6483 = vadd.f32 %v6314, %v6482
  %6484 = vmatmul.bf16.gmra.mxu0 %v1314
  %v6485 = vpop.f32.mrf.mxu0
  %v6486 = vadd.f32 %v6317, %v6485
  %v6487 = vpop.f32.mrf.mxu0
  %v6488 = vadd.f32 %v6319, %v6487
  %6489 = vmatmul.bf16.gmra.mxu0 %v1322
  %v6490 = vpop.f32.mrf.mxu0
  %v6491 = vadd.f32 %v6322, %v6490
  %v6492 = vpop.f32.mrf.mxu0
  %v6493 = vadd.f32 %v6324, %v6492
  %6494 = vmatmul.bf16.gmra.mxu0 %v1330
  %v6495 = vpop.f32.mrf.mxu0
  %v6496 = vadd.f32 %v6327, %v6495
  %v6497 = vpop.f32.mrf.mxu0
  %v6498 = vadd.f32 %v6329, %v6497
  %6499 = vmatmul.bf16.gmra.mxu0 %v1338
  %v6500 = vpop.f32.mrf.mxu0
  %v6501 = vadd.f32 %v6332, %v6500
  %v6502 = vpop.f32.mrf.mxu0
  %v6503 = vadd.f32 %v6334, %v6502
  %6504 = vmatmul.bf16.gmra.mxu0 %v1346
  %v6505 = vpop.f32.mrf.mxu0
  %v6506 = vadd.f32 %v6337, %v6505
  %v6507 = vpop.f32.mrf.mxu0
  %v6508 = vadd.f32 %v6339, %v6507
  %6509 = vmatmul.bf16.gmra.mxu0 %v1354
  %v6510 = vpop.f32.mrf.mxu0
  %v6511 = vadd.f32 %v6342, %v6510
  %v6512 = vpop.f32.mrf.mxu0
  %v6513 = vadd.f32 %v6344, %v6512
  %6514 = vmatmul.bf16.gmra.mxu0 %v1362
  %v6515 = vpop.f32.mrf.mxu0
  %v6516 = vadd.f32 %v6347, %v6515
  %v6517 = vpop.f32.mrf.mxu0
  %v6518 = vadd.f32 %v6349, %v6517
  %6519 = vmatmul.bf16.gmra.mxu0 %v1370
  %v6520 = vpop.f32.mrf.mxu0
  %v6521 = vadd.f32 %v6352, %v6520
  %v6522 = vpop.f32.mrf.mxu0
  %v6523 = vadd.f32 %v6354, %v6522
  %6524 = vmatmul.bf16.gmra.mxu0 %v1378
  %v6525 = vpop.f32.mrf.mxu0
  %v6526 = vadd.f32 %v6357, %v6525
  %v6527 = vpop.f32.mrf.mxu0
  %v6528 = vadd.f32 %v6359, %v6527
  %6529 = vmatmul.bf16.gmra.mxu0 %v1386
  %v6530 = vpop.f32.mrf.mxu0
  %v6531 = vadd.f32 %v6362, %v6530
  %v6532 = vpop.f32.mrf.mxu0
  %v6533 = vadd.f32 %v6364, %v6532
  %6534 = vmatmul.bf16.gmra.mxu0 %v1394
  %v6535 = vpop.f32.mrf.mxu0
  %v6536 = vadd.f32 %v6367, %v6535
  %v6537 = vpop.f32.mrf.mxu0
  %v6538 = vadd.f32 %v6369, %v6537
  %6539 = vmatmul.bf16.gmra.mxu0 %v1402
  %v6540 = vpop.f32.mrf.mxu0
  %v6541 = vadd.f32 %v6372, %v6540
  %v6542 = vpop.f32.mrf.mxu0
  %v6543 = vadd.f32 %v6374, %v6542
  %6544 = vmatmul.bf16.gmra.mxu0 %v1410
  %v6545 = vpop.f32.mrf.mxu0
  %v6546 = vadd.f32 %v6377, %v6545
  %v6547 = vpop.f32.mrf.mxu0
  %v6548 = vadd.f32 %v6379, %v6547
  %6549 = vmatmul.bf16.gmra.mxu0 %v1418
  %v6550 = vpop.f32.mrf.mxu0
  %v6551 = vadd.f32 %v6382, %v6550
  %v6552 = vpop.f32.mrf.mxu0
  %v6553 = vadd.f32 %v6384, %v6552
  %6554 = vmatmul.bf16.gmra.mxu0 %v1426
  %v6555 = vpop.f32.mrf.mxu0
  %v6556 = vadd.f32 %v6387, %v6555
  %v6557 = vpop.f32.mrf.mxu0
  %v6558 = vadd.f32 %v6389, %v6557
  %6559 = vmatmul.bf16.gmra.mxu0 %v1434
  %v6560 = vpop.f32.mrf.mxu0
  %v6561 = vadd.f32 %v6392, %v6560
  %v6562 = vpop.f32.mrf.mxu0
  %v6563 = vadd.f32 %v6394, %v6562
  %6564 = vmatmul.bf16.gmra.mxu0 %v1442
  %v6565 = vpop.f32.mrf.mxu0
  %v6566 = vadd.f32 %v6397, %v6565
  %v6567 = vpop.f32.mrf.mxu0
  %v6568 = vadd.f32 %v6399, %v6567
  %6569 = vmatmul.bf16.gmra.mxu0 %v1450
  %v6570 = vpop.f32.mrf.mxu0
  %v6571 = vadd.f32 %v6402, %v6570
  %v6572 = vpop.f32.mrf.mxu0
  %v6573 = vadd.f32 %v6404, %v6572
  %6574 = vmatmul.bf16.gmra.mxu0 %v1458
  %v6575 = vpop.f32.mrf.mxu0
  %v6576 = vadd.f32 %v6407, %v6575
  %v6577 = vpop.f32.mrf.mxu0
  %v6578 = vadd.f32 %v6409, %v6577
  %6579 = vmatmul.bf16.gmra.mxu0 %v1466
  %v6580 = vpop.f32.mrf.mxu0
  %v6581 = vadd.f32 %v6412, %v6580
  %v6582 = vpop.f32.mrf.mxu0
  %v6583 = vadd.f32 %v6414, %v6582
  %6584 = vmatmul.bf16.gmra.mxu0 %v1474
  %v6585 = vpop.f32.mrf.mxu0
  %v6586 = vadd.f32 %v6417, %v6585
  %v6587 = vpop.f32.mrf.mxu0
  %v6588 = vadd.f32 %v6419, %v6587
  %6589 = vmatmul.bf16.gmra.mxu0 %v1482
  %v6590 = vpop.f32.mrf.mxu0
  %v6591 = vadd.f32 %v6422, %v6590
  %v6592 = vpop.f32.mrf.mxu0
  %v6593 = vadd.f32 %v6424, %v6592
  %6594 = vdwg.mxu0
  %6595 = vmatpush.bf16.msra.mxu0 %v5830
  %6596 = vmatpush.bf16.msra.mxu0 %v5829
  %6597 = vmatpush.bf16.msra.mxu0 %v5828
  %6598 = vmatpush.bf16.msra.mxu0 %v5827
  %6599 = vmatpush.bf16.msra.mxu0 %v5826
  %6600 = vmatpush.bf16.msra.mxu0 %v5825
  %6601 = vmatpush.bf16.msra.mxu0 %v5824
  %6602 = vmatpush.bf16.msra.mxu0 %v5823
  %6603 = vmatmul.bf16.gmra.mxu0 %v1235
  %v6604 = vpop.f32.mrf.mxu0
  %v6605 = vadd.f32 %v6436, %v6604
  %v6606 = vpop.f32.mrf.mxu0
  %v6607 = vadd.f32 %v6438, %v6606
  %6608 = vmatmul.bf16.gmra.mxu0 %v1243
  %v6609 = vpop.f32.mrf.mxu0
  %v6610 = vadd.f32 %v6441, %v6609
  %v6611 = vpop.f32.mrf.mxu0
  %v6612 = vadd.f32 %v6443, %v6611
  %6613 = vmatmul.bf16.gmra.mxu0 %v1251
  %v6614 = vpop.f32.mrf.mxu0
  %v6615 = vadd.f32 %v6446, %v6614
  %v6616 = vpop.f32.mrf.mxu0
  %v6617 = vadd.f32 %v6448, %v6616
  %6618 = vmatmul.bf16.gmra.mxu0 %v1259
  %v6619 = vpop.f32.mrf.mxu0
  %v6620 = vadd.f32 %v6451, %v6619
  %v6621 = vpop.f32.mrf.mxu0
  %v6622 = vadd.f32 %v6453, %v6621
  %6623 = vmatmul.bf16.gmra.mxu0 %v1267
  %v6624 = vpop.f32.mrf.mxu0
  %v6625 = vadd.f32 %v6456, %v6624
  %v6626 = vpop.f32.mrf.mxu0
  %v6627 = vadd.f32 %v6458, %v6626
  %6628 = vmatmul.bf16.gmra.mxu0 %v1275
  %v6629 = vpop.f32.mrf.mxu0
  %v6630 = vadd.f32 %v6461, %v6629
  %v6631 = vpop.f32.mrf.mxu0
  %v6632 = vadd.f32 %v6463, %v6631
  %6633 = vmatmul.bf16.gmra.mxu0 %v1283
  %v6634 = vpop.f32.mrf.mxu0
  %v6635 = vadd.f32 %v6466, %v6634
  %v6636 = vpop.f32.mrf.mxu0
  %v6637 = vadd.f32 %v6468, %v6636
  %6638 = vmatmul.bf16.gmra.mxu0 %v1291
  %v6639 = vpop.f32.mrf.mxu0
  %v6640 = vadd.f32 %v6471, %v6639
  %v6641 = vpop.f32.mrf.mxu0
  %v6642 = vadd.f32 %v6473, %v6641
  %6643 = vmatmul.bf16.gmra.mxu0 %v1299
  %v6644 = vpop.f32.mrf.mxu0
  %v6645 = vadd.f32 %v6476, %v6644
  %v6646 = vpop.f32.mrf.mxu0
  %v6647 = vadd.f32 %v6478, %v6646
  %6648 = vmatmul.bf16.gmra.mxu0 %v1307
  %v6649 = vpop.f32.mrf.mxu0
  %v6650 = vadd.f32 %v6481, %v6649
  %v6651 = vpop.f32.mrf.mxu0
  %v6652 = vadd.f32 %v6483, %v6651
  %6653 = vmatmul.bf16.gmra.mxu0 %v1315
  %v6654 = vpop.f32.mrf.mxu0
  %v6655 = vadd.f32 %v6486, %v6654
  %v6656 = vpop.f32.mrf.mxu0
  %v6657 = vadd.f32 %v6488, %v6656
  %6658 = vmatmul.bf16.gmra.mxu0 %v1323
  %v6659 = vpop.f32.mrf.mxu0
  %v6660 = vadd.f32 %v6491, %v6659
  %v6661 = vpop.f32.mrf.mxu0
  %v6662 = vadd.f32 %v6493, %v6661
  %6663 = vmatmul.bf16.gmra.mxu0 %v1331
  %v6664 = vpop.f32.mrf.mxu0
  %v6665 = vadd.f32 %v6496, %v6664
  %v6666 = vpop.f32.mrf.mxu0
  %v6667 = vadd.f32 %v6498, %v6666
  %6668 = vmatmul.bf16.gmra.mxu0 %v1339
  %v6669 = vpop.f32.mrf.mxu0
  %v6670 = vadd.f32 %v6501, %v6669
  %v6671 = vpop.f32.mrf.mxu0
  %v6672 = vadd.f32 %v6503, %v6671
  %6673 = vmatmul.bf16.gmra.mxu0 %v1347
  %v6674 = vpop.f32.mrf.mxu0
  %v6675 = vadd.f32 %v6506, %v6674
  %v6676 = vpop.f32.mrf.mxu0
  %v6677 = vadd.f32 %v6508, %v6676
  %6678 = vmatmul.bf16.gmra.mxu0 %v1355
  %v6679 = vpop.f32.mrf.mxu0
  %v6680 = vadd.f32 %v6511, %v6679
  %v6681 = vpop.f32.mrf.mxu0
  %v6682 = vadd.f32 %v6513, %v6681
  %6683 = vmatmul.bf16.gmra.mxu0 %v1363
  %v6684 = vpop.f32.mrf.mxu0
  %v6685 = vadd.f32 %v6516, %v6684
  %v6686 = vpop.f32.mrf.mxu0
  %v6687 = vadd.f32 %v6518, %v6686
  %6688 = vmatmul.bf16.gmra.mxu0 %v1371
  %v6689 = vpop.f32.mrf.mxu0
  %v6690 = vadd.f32 %v6521, %v6689
  %v6691 = vpop.f32.mrf.mxu0
  %v6692 = vadd.f32 %v6523, %v6691
  %6693 = vmatmul.bf16.gmra.mxu0 %v1379
  %v6694 = vpop.f32.mrf.mxu0
  %v6695 = vadd.f32 %v6526, %v6694
  %v6696 = vpop.f32.mrf.mxu0
  %v6697 = vadd.f32 %v6528, %v6696
  %6698 = vmatmul.bf16.gmra.mxu0 %v1387
  %v6699 = vpop.f32.mrf.mxu0
  %v6700 = vadd.f32 %v6531, %v6699
  %v6701 = vpop.f32.mrf.mxu0
  %v6702 = vadd.f32 %v6533, %v6701
  %6703 = vmatmul.bf16.gmra.mxu0 %v1395
  %v6704 = vpop.f32.mrf.mxu0
  %v6705 = vadd.f32 %v6536, %v6704
  %v6706 = vpop.f32.mrf.mxu0
  %v6707 = vadd.f32 %v6538, %v6706
  %6708 = vmatmul.bf16.gmra.mxu0 %v1403
  %v6709 = vpop.f32.mrf.mxu0
  %v6710 = vadd.f32 %v6541, %v6709
  %v6711 = vpop.f32.mrf.mxu0
  %v6712 = vadd.f32 %v6543, %v6711
  %6713 = vmatmul.bf16.gmra.mxu0 %v1411
  %v6714 = vpop.f32.mrf.mxu0
  %v6715 = vadd.f32 %v6546, %v6714
  %v6716 = vpop.f32.mrf.mxu0
  %v6717 = vadd.f32 %v6548, %v6716
  %6718 = vmatmul.bf16.gmra.mxu0 %v1419
  %v6719 = vpop.f32.mrf.mxu0
  %v6720 = vadd.f32 %v6551, %v6719
  %v6721 = vpop.f32.mrf.mxu0
  %v6722 = vadd.f32 %v6553, %v6721
  %6723 = vmatmul.bf16.gmra.mxu0 %v1427
  %v6724 = vpop.f32.mrf.mxu0
  %v6725 = vadd.f32 %v6556, %v6724
  %v6726 = vpop.f32.mrf.mxu0
  %v6727 = vadd.f32 %v6558, %v6726
  %6728 = vmatmul.bf16.gmra.mxu0 %v1435
  %v6729 = vpop.f32.mrf.mxu0
  %v6730 = vadd.f32 %v6561, %v6729
  %v6731 = vpop.f32.mrf.mxu0
  %v6732 = vadd.f32 %v6563, %v6731
  %6733 = vmatmul.bf16.gmra.mxu0 %v1443
  %v6734 = vpop.f32.mrf.mxu0
  %v6735 = vadd.f32 %v6566, %v6734
  %v6736 = vpop.f32.mrf.mxu0
  %v6737 = vadd.f32 %v6568, %v6736
  %6738 = vmatmul.bf16.gmra.mxu0 %v1451
  %v6739 = vpop.f32.mrf.mxu0
  %v6740 = vadd.f32 %v6571, %v6739
  %v6741 = vpop.f32.mrf.mxu0
  %v6742 = vadd.f32 %v6573, %v6741
  %6743 = vmatmul.bf16.gmra.mxu0 %v1459
  %v6744 = vpop.f32.mrf.mxu0
  %v6745 = vadd.f32 %v6576, %v6744
  %v6746 = vpop.f32.mrf.mxu0
  %v6747 = vadd.f32 %v6578, %v6746
  %6748 = vmatmul.bf16.gmra.mxu0 %v1467
  %v6749 = vpop.f32.mrf.mxu0
  %v6750 = vadd.f32 %v6581, %v6749
  %v6751 = vpop.f32.mrf.mxu0
  %v6752 = vadd.f32 %v6583, %v6751
  %6753 = vmatmul.bf16.gmra.mxu0 %v1475
  %v6754 = vpop.f32.mrf.mxu0
  %v6755 = vadd.f32 %v6586, %v6754
  %v6756 = vpop.f32.mrf.mxu0
  %v6757 = vadd.f32 %v6588, %v6756
  %6758 = vmatmul.bf16.gmra.mxu0 %v1483
  %v6759 = vpop.f32.mrf.mxu0
  %v6760 = vadd.f32 %v6591, %v6759
  %v6761 = vpop.f32.mrf.mxu0
  %v6762 = vadd.f32 %v6593, %v6761
  %6763 = vdwg.mxu0
  %6764 = vmatpush.bf16.msra.mxu0 %v5838
  %6765 = vmatpush.bf16.msra.mxu0 %v5837
  %6766 = vmatpush.bf16.msra.mxu0 %v5836
  %6767 = vmatpush.bf16.msra.mxu0 %v5835
  %6768 = vmatpush.bf16.msra.mxu0 %v5834
  %6769 = vmatpush.bf16.msra.mxu0 %v5833
  %6770 = vmatpush.bf16.msra.mxu0 %v5832
  %6771 = vmatpush.bf16.msra.mxu0 %v5831
  %6772 = vmatmul.bf16.gmra.mxu0 %v1236
  %v6773 = vpop.f32.mrf.mxu0
  %v6774 = vadd.f32 %v6605, %v6773
  %v6775 = vpop.f32.mrf.mxu0
  %v6776 = vadd.f32 %v6607, %v6775
  %6777 = vmatmul.bf16.gmra.mxu0 %v1244
  %v6778 = vpop.f32.mrf.mxu0
  %v6779 = vadd.f32 %v6610, %v6778
  %v6780 = vpop.f32.mrf.mxu0
  %v6781 = vadd.f32 %v6612, %v6780
  %6782 = vmatmul.bf16.gmra.mxu0 %v1252
  %v6783 = vpop.f32.mrf.mxu0
  %v6784 = vadd.f32 %v6615, %v6783
  %v6785 = vpop.f32.mrf.mxu0
  %v6786 = vadd.f32 %v6617, %v6785
  %6787 = vmatmul.bf16.gmra.mxu0 %v1260
  %v6788 = vpop.f32.mrf.mxu0
  %v6789 = vadd.f32 %v6620, %v6788
  %v6790 = vpop.f32.mrf.mxu0
  %v6791 = vadd.f32 %v6622, %v6790
  %6792 = vmatmul.bf16.gmra.mxu0 %v1268
  %v6793 = vpop.f32.mrf.mxu0
  %v6794 = vadd.f32 %v6625, %v6793
  %v6795 = vpop.f32.mrf.mxu0
  %v6796 = vadd.f32 %v6627, %v6795
  %6797 = vmatmul.bf16.gmra.mxu0 %v1276
  %v6798 = vpop.f32.mrf.mxu0
  %v6799 = vadd.f32 %v6630, %v6798
  %v6800 = vpop.f32.mrf.mxu0
  %v6801 = vadd.f32 %v6632, %v6800
  %6802 = vmatmul.bf16.gmra.mxu0 %v1284
  %v6803 = vpop.f32.mrf.mxu0
  %v6804 = vadd.f32 %v6635, %v6803
  %v6805 = vpop.f32.mrf.mxu0
  %v6806 = vadd.f32 %v6637, %v6805
  %6807 = vmatmul.bf16.gmra.mxu0 %v1292
  %v6808 = vpop.f32.mrf.mxu0
  %v6809 = vadd.f32 %v6640, %v6808
  %v6810 = vpop.f32.mrf.mxu0
  %v6811 = vadd.f32 %v6642, %v6810
  %6812 = vmatmul.bf16.gmra.mxu0 %v1300
  %v6813 = vpop.f32.mrf.mxu0
  %v6814 = vadd.f32 %v6645, %v6813
  %v6815 = vpop.f32.mrf.mxu0
  %v6816 = vadd.f32 %v6647, %v6815
  %6817 = vmatmul.bf16.gmra.mxu0 %v1308
  %v6818 = vpop.f32.mrf.mxu0
  %v6819 = vadd.f32 %v6650, %v6818
  %v6820 = vpop.f32.mrf.mxu0
  %v6821 = vadd.f32 %v6652, %v6820
  %6822 = vmatmul.bf16.gmra.mxu0 %v1316
  %v6823 = vpop.f32.mrf.mxu0
  %v6824 = vadd.f32 %v6655, %v6823
  %v6825 = vpop.f32.mrf.mxu0
  %v6826 = vadd.f32 %v6657, %v6825
  %6827 = vmatmul.bf16.gmra.mxu0 %v1324
  %v6828 = vpop.f32.mrf.mxu0
  %v6829 = vadd.f32 %v6660, %v6828
  %v6830 = vpop.f32.mrf.mxu0
  %v6831 = vadd.f32 %v6662, %v6830
  %6832 = vmatmul.bf16.gmra.mxu0 %v1332
  %v6833 = vpop.f32.mrf.mxu0
  %v6834 = vadd.f32 %v6665, %v6833
  %v6835 = vpop.f32.mrf.mxu0
  %v6836 = vadd.f32 %v6667, %v6835
  %6837 = vmatmul.bf16.gmra.mxu0 %v1340
  %v6838 = vpop.f32.mrf.mxu0
  %v6839 = vadd.f32 %v6670, %v6838
  %v6840 = vpop.f32.mrf.mxu0
  %v6841 = vadd.f32 %v6672, %v6840
  %6842 = vmatmul.bf16.gmra.mxu0 %v1348
  %v6843 = vpop.f32.mrf.mxu0
  %v6844 = vadd.f32 %v6675, %v6843
  %v6845 = vpop.f32.mrf.mxu0
  %v6846 = vadd.f32 %v6677, %v6845
  %6847 = vmatmul.bf16.gmra.mxu0 %v1356
  %v6848 = vpop.f32.mrf.mxu0
  %v6849 = vadd.f32 %v6680, %v6848
  %v6850 = vpop.f32.mrf.mxu0
  %v6851 = vadd.f32 %v6682, %v6850
  %6852 = vmatmul.bf16.gmra.mxu0 %v1364
  %v6853 = vpop.f32.mrf.mxu0
  %v6854 = vadd.f32 %v6685, %v6853
  %v6855 = vpop.f32.mrf.mxu0
  %v6856 = vadd.f32 %v6687, %v6855
  %6857 = vmatmul.bf16.gmra.mxu0 %v1372
  %v6858 = vpop.f32.mrf.mxu0
  %v6859 = vadd.f32 %v6690, %v6858
  %v6860 = vpop.f32.mrf.mxu0
  %v6861 = vadd.f32 %v6692, %v6860
  %6862 = vmatmul.bf16.gmra.mxu0 %v1380
  %v6863 = vpop.f32.mrf.mxu0
  %v6864 = vadd.f32 %v6695, %v6863
  %v6865 = vpop.f32.mrf.mxu0
  %v6866 = vadd.f32 %v6697, %v6865
  %6867 = vmatmul.bf16.gmra.mxu0 %v1388
  %v6868 = vpop.f32.mrf.mxu0
  %v6869 = vadd.f32 %v6700, %v6868
  %v6870 = vpop.f32.mrf.mxu0
  %v6871 = vadd.f32 %v6702, %v6870
  %6872 = vmatmul.bf16.gmra.mxu0 %v1396
  %v6873 = vpop.f32.mrf.mxu0
  %v6874 = vadd.f32 %v6705, %v6873
  %v6875 = vpop.f32.mrf.mxu0
  %v6876 = vadd.f32 %v6707, %v6875
  %6877 = vmatmul.bf16.gmra.mxu0 %v1404
  %v6878 = vpop.f32.mrf.mxu0
  %v6879 = vadd.f32 %v6710, %v6878
  %v6880 = vpop.f32.mrf.mxu0
  %v6881 = vadd.f32 %v6712, %v6880
  %6882 = vmatmul.bf16.gmra.mxu0 %v1412
  %v6883 = vpop.f32.mrf.mxu0
  %v6884 = vadd.f32 %v6715, %v6883
  %v6885 = vpop.f32.mrf.mxu0
  %v6886 = vadd.f32 %v6717, %v6885
  %6887 = vmatmul.bf16.gmra.mxu0 %v1420
  %v6888 = vpop.f32.mrf.mxu0
  %v6889 = vadd.f32 %v6720, %v6888
  %v6890 = vpop.f32.mrf.mxu0
  %v6891 = vadd.f32 %v6722, %v6890
  %6892 = vmatmul.bf16.gmra.mxu0 %v1428
  %v6893 = vpop.f32.mrf.mxu0
  %v6894 = vadd.f32 %v6725, %v6893
  %v6895 = vpop.f32.mrf.mxu0
  %v6896 = vadd.f32 %v6727, %v6895
  %6897 = vmatmul.bf16.gmra.mxu0 %v1436
  %v6898 = vpop.f32.mrf.mxu0
  %v6899 = vadd.f32 %v6730, %v6898
  %v6900 = vpop.f32.mrf.mxu0
  %v6901 = vadd.f32 %v6732, %v6900
  %6902 = vmatmul.bf16.gmra.mxu0 %v1444
  %v6903 = vpop.f32.mrf.mxu0
  %v6904 = vadd.f32 %v6735, %v6903
  %v6905 = vpop.f32.mrf.mxu0
  %v6906 = vadd.f32 %v6737, %v6905
  %6907 = vmatmul.bf16.gmra.mxu0 %v1452
  %v6908 = vpop.f32.mrf.mxu0
  %v6909 = vadd.f32 %v6740, %v6908
  %v6910 = vpop.f32.mrf.mxu0
  %v6911 = vadd.f32 %v6742, %v6910
  %6912 = vmatmul.bf16.gmra.mxu0 %v1460
  %v6913 = vpop.f32.mrf.mxu0
  %v6914 = vadd.f32 %v6745, %v6913
  %v6915 = vpop.f32.mrf.mxu0
  %v6916 = vadd.f32 %v6747, %v6915
  %6917 = vmatmul.bf16.gmra.mxu0 %v1468
  %v6918 = vpop.f32.mrf.mxu0
  %v6919 = vadd.f32 %v6750, %v6918
  %v6920 = vpop.f32.mrf.mxu0
  %v6921 = vadd.f32 %v6752, %v6920
  %6922 = vmatmul.bf16.gmra.mxu0 %v1476
  %v6923 = vpop.f32.mrf.mxu0
  %v6924 = vadd.f32 %v6755, %v6923
  %v6925 = vpop.f32.mrf.mxu0
  %v6926 = vadd.f32 %v6757, %v6925
  %6927 = vmatmul.bf16.gmra.mxu0 %v1484
  %v6928 = vpop.f32.mrf.mxu0
  %v6929 = vadd.f32 %v6760, %v6928
  %v6930 = vpop.f32.mrf.mxu0
  %v6931 = vadd.f32 %v6762, %v6930
  %6932 = vdwg.mxu0
  %6933 = vmatpush.bf16.msra.mxu0 %v5846
  %6934 = vmatpush.bf16.msra.mxu0 %v5845
  %6935 = vmatpush.bf16.msra.mxu0 %v5844
  %6936 = vmatpush.bf16.msra.mxu0 %v5843
  %6937 = vmatpush.bf16.msra.mxu0 %v5842
  %6938 = vmatpush.bf16.msra.mxu0 %v5841
  %6939 = vmatpush.bf16.msra.mxu0 %v5840
  %6940 = vmatpush.bf16.msra.mxu0 %v5839
  %6941 = vmatmul.bf16.gmra.mxu0 %v1237
  %v6942 = vpop.f32.mrf.mxu0
  %v6943 = vadd.f32 %v6774, %v6942
  %v6944 = vpop.f32.mrf.mxu0
  %v6945 = vadd.f32 %v6776, %v6944
  %6946 = vmatmul.bf16.gmra.mxu0 %v1245
  %v6947 = vpop.f32.mrf.mxu0
  %v6948 = vadd.f32 %v6779, %v6947
  %v6949 = vpop.f32.mrf.mxu0
  %v6950 = vadd.f32 %v6781, %v6949
  %6951 = vmatmul.bf16.gmra.mxu0 %v1253
  %v6952 = vpop.f32.mrf.mxu0
  %v6953 = vadd.f32 %v6784, %v6952
  %v6954 = vpop.f32.mrf.mxu0
  %v6955 = vadd.f32 %v6786, %v6954
  %6956 = vmatmul.bf16.gmra.mxu0 %v1261
  %v6957 = vpop.f32.mrf.mxu0
  %v6958 = vadd.f32 %v6789, %v6957
  %v6959 = vpop.f32.mrf.mxu0
  %v6960 = vadd.f32 %v6791, %v6959
  %6961 = vmatmul.bf16.gmra.mxu0 %v1269
  %v6962 = vpop.f32.mrf.mxu0
  %v6963 = vadd.f32 %v6794, %v6962
  %v6964 = vpop.f32.mrf.mxu0
  %v6965 = vadd.f32 %v6796, %v6964
  %6966 = vmatmul.bf16.gmra.mxu0 %v1277
  %v6967 = vpop.f32.mrf.mxu0
  %v6968 = vadd.f32 %v6799, %v6967
  %v6969 = vpop.f32.mrf.mxu0
  %v6970 = vadd.f32 %v6801, %v6969
  %6971 = vmatmul.bf16.gmra.mxu0 %v1285
  %v6972 = vpop.f32.mrf.mxu0
  %v6973 = vadd.f32 %v6804, %v6972
  %v6974 = vpop.f32.mrf.mxu0
  %v6975 = vadd.f32 %v6806, %v6974
  %6976 = vmatmul.bf16.gmra.mxu0 %v1293
  %v6977 = vpop.f32.mrf.mxu0
  %v6978 = vadd.f32 %v6809, %v6977
  %v6979 = vpop.f32.mrf.mxu0
  %v6980 = vadd.f32 %v6811, %v6979
  %6981 = vmatmul.bf16.gmra.mxu0 %v1301
  %v6982 = vpop.f32.mrf.mxu0
  %v6983 = vadd.f32 %v6814, %v6982
  %v6984 = vpop.f32.mrf.mxu0
  %v6985 = vadd.f32 %v6816, %v6984
  %6986 = vmatmul.bf16.gmra.mxu0 %v1309
  %v6987 = vpop.f32.mrf.mxu0
  %v6988 = vadd.f32 %v6819, %v6987
  %v6989 = vpop.f32.mrf.mxu0
  %v6990 = vadd.f32 %v6821, %v6989
  %6991 = vmatmul.bf16.gmra.mxu0 %v1317
  %v6992 = vpop.f32.mrf.mxu0
  %v6993 = vadd.f32 %v6824, %v6992
  %v6994 = vpop.f32.mrf.mxu0
  %v6995 = vadd.f32 %v6826, %v6994
  %6996 = vmatmul.bf16.gmra.mxu0 %v1325
  %v6997 = vpop.f32.mrf.mxu0
  %v6998 = vadd.f32 %v6829, %v6997
  %v6999 = vpop.f32.mrf.mxu0
  %v7000 = vadd.f32 %v6831, %v6999
  %7001 = vmatmul.bf16.gmra.mxu0 %v1333
  %v7002 = vpop.f32.mrf.mxu0
  %v7003 = vadd.f32 %v6834, %v7002
  %v7004 = vpop.f32.mrf.mxu0
  %v7005 = vadd.f32 %v6836, %v7004
  %7006 = vmatmul.bf16.gmra.mxu0 %v1341
  %v7007 = vpop.f32.mrf.mxu0
  %v7008 = vadd.f32 %v6839, %v7007
  %v7009 = vpop.f32.mrf.mxu0
  %v7010 = vadd.f32 %v6841, %v7009
  %7011 = vmatmul.bf16.gmra.mxu0 %v1349
  %v7012 = vpop.f32.mrf.mxu0
  %v7013 = vadd.f32 %v6844, %v7012
  %v7014 = vpop.f32.mrf.mxu0
  %v7015 = vadd.f32 %v6846, %v7014
  %7016 = vmatmul.bf16.gmra.mxu0 %v1357
  %v7017 = vpop.f32.mrf.mxu0
  %v7018 = vadd.f32 %v6849, %v7017
  %v7019 = vpop.f32.mrf.mxu0
  %v7020 = vadd.f32 %v6851, %v7019
  %7021 = vmatmul.bf16.gmra.mxu0 %v1365
  %v7022 = vpop.f32.mrf.mxu0
  %v7023 = vadd.f32 %v6854, %v7022
  %v7024 = vpop.f32.mrf.mxu0
  %v7025 = vadd.f32 %v6856, %v7024
  %7026 = vmatmul.bf16.gmra.mxu0 %v1373
  %v7027 = vpop.f32.mrf.mxu0
  %v7028 = vadd.f32 %v6859, %v7027
  %v7029 = vpop.f32.mrf.mxu0
  %v7030 = vadd.f32 %v6861, %v7029
  %7031 = vmatmul.bf16.gmra.mxu0 %v1381
  %v7032 = vpop.f32.mrf.mxu0
  %v7033 = vadd.f32 %v6864, %v7032
  %v7034 = vpop.f32.mrf.mxu0
  %v7035 = vadd.f32 %v6866, %v7034
  %7036 = vmatmul.bf16.gmra.mxu0 %v1389
  %v7037 = vpop.f32.mrf.mxu0
  %v7038 = vadd.f32 %v6869, %v7037
  %v7039 = vpop.f32.mrf.mxu0
  %v7040 = vadd.f32 %v6871, %v7039
  %7041 = vmatmul.bf16.gmra.mxu0 %v1397
  %v7042 = vpop.f32.mrf.mxu0
  %v7043 = vadd.f32 %v6874, %v7042
  %v7044 = vpop.f32.mrf.mxu0
  %v7045 = vadd.f32 %v6876, %v7044
  %7046 = vmatmul.bf16.gmra.mxu0 %v1405
  %v7047 = vpop.f32.mrf.mxu0
  %v7048 = vadd.f32 %v6879, %v7047
  %v7049 = vpop.f32.mrf.mxu0
  %v7050 = vadd.f32 %v6881, %v7049
  %7051 = vmatmul.bf16.gmra.mxu0 %v1413
  %v7052 = vpop.f32.mrf.mxu0
  %v7053 = vadd.f32 %v6884, %v7052
  %v7054 = vpop.f32.mrf.mxu0
  %v7055 = vadd.f32 %v6886, %v7054
  %7056 = vmatmul.bf16.gmra.mxu0 %v1421
  %v7057 = vpop.f32.mrf.mxu0
  %v7058 = vadd.f32 %v6889, %v7057
  %v7059 = vpop.f32.mrf.mxu0
  %v7060 = vadd.f32 %v6891, %v7059
  %7061 = vmatmul.bf16.gmra.mxu0 %v1429
  %v7062 = vpop.f32.mrf.mxu0
  %v7063 = vadd.f32 %v6894, %v7062
  %v7064 = vpop.f32.mrf.mxu0
  %v7065 = vadd.f32 %v6896, %v7064
  %7066 = vmatmul.bf16.gmra.mxu0 %v1437
  %v7067 = vpop.f32.mrf.mxu0
  %v7068 = vadd.f32 %v6899, %v7067
  %v7069 = vpop.f32.mrf.mxu0
  %v7070 = vadd.f32 %v6901, %v7069
  %7071 = vmatmul.bf16.gmra.mxu0 %v1445
  %v7072 = vpop.f32.mrf.mxu0
  %v7073 = vadd.f32 %v6904, %v7072
  %v7074 = vpop.f32.mrf.mxu0
  %v7075 = vadd.f32 %v6906, %v7074
  %7076 = vmatmul.bf16.gmra.mxu0 %v1453
  %v7077 = vpop.f32.mrf.mxu0
  %v7078 = vadd.f32 %v6909, %v7077
  %v7079 = vpop.f32.mrf.mxu0
  %v7080 = vadd.f32 %v6911, %v7079
  %7081 = vmatmul.bf16.gmra.mxu0 %v1461
  %v7082 = vpop.f32.mrf.mxu0
  %v7083 = vadd.f32 %v6914, %v7082
  %v7084 = vpop.f32.mrf.mxu0
  %v7085 = vadd.f32 %v6916, %v7084
  %7086 = vmatmul.bf16.gmra.mxu0 %v1469
  %v7087 = vpop.f32.mrf.mxu0
  %v7088 = vadd.f32 %v6919, %v7087
  %v7089 = vpop.f32.mrf.mxu0
  %v7090 = vadd.f32 %v6921, %v7089
  %7091 = vmatmul.bf16.gmra.mxu0 %v1477
  %v7092 = vpop.f32.mrf.mxu0
  %v7093 = vadd.f32 %v6924, %v7092
  %v7094 = vpop.f32.mrf.mxu0
  %v7095 = vadd.f32 %v6926, %v7094
  %7096 = vmatmul.bf16.gmra.mxu0 %v1485
  %v7097 = vpop.f32.mrf.mxu0
  %v7098 = vadd.f32 %v6929, %v7097
  %v7099 = vpop.f32.mrf.mxu0
  %v7100 = vadd.f32 %v6931, %v7099
  %7101 = vdwg.mxu0
  %7102 = vmatpush.bf16.msra.mxu0 %v5854
  %7103 = vmatpush.bf16.msra.mxu0 %v5853
  %7104 = vmatpush.bf16.msra.mxu0 %v5852
  %7105 = vmatpush.bf16.msra.mxu0 %v5851
  %7106 = vmatpush.bf16.msra.mxu0 %v5850
  %7107 = vmatpush.bf16.msra.mxu0 %v5849
  %7108 = vmatpush.bf16.msra.mxu0 %v5848
  %7109 = vmatpush.bf16.msra.mxu0 %v5847
  %7110 = vmatmul.bf16.gmra.mxu0 %v1238
  %v7111 = vpop.f32.mrf.mxu0
  %v7112 = vadd.f32 %v6943, %v7111
  %v7113 = vpop.f32.mrf.mxu0
  %v7114 = vadd.f32 %v6945, %v7113
  %7115 = vmatmul.bf16.gmra.mxu0 %v1246
  %v7116 = vpop.f32.mrf.mxu0
  %v7117 = vadd.f32 %v6948, %v7116
  %v7118 = vpop.f32.mrf.mxu0
  %v7119 = vadd.f32 %v6950, %v7118
  %7120 = vmatmul.bf16.gmra.mxu0 %v1254
  %v7121 = vpop.f32.mrf.mxu0
  %v7122 = vadd.f32 %v6953, %v7121
  %v7123 = vpop.f32.mrf.mxu0
  %v7124 = vadd.f32 %v6955, %v7123
  %7125 = vmatmul.bf16.gmra.mxu0 %v1262
  %v7126 = vpop.f32.mrf.mxu0
  %v7127 = vadd.f32 %v6958, %v7126
  %v7128 = vpop.f32.mrf.mxu0
  %v7129 = vadd.f32 %v6960, %v7128
  %7130 = vmatmul.bf16.gmra.mxu0 %v1270
  %v7131 = vpop.f32.mrf.mxu0
  %v7132 = vadd.f32 %v6963, %v7131
  %v7133 = vpop.f32.mrf.mxu0
  %v7134 = vadd.f32 %v6965, %v7133
  %7135 = vmatmul.bf16.gmra.mxu0 %v1278
  %v7136 = vpop.f32.mrf.mxu0
  %v7137 = vadd.f32 %v6968, %v7136
  %v7138 = vpop.f32.mrf.mxu0
  %v7139 = vadd.f32 %v6970, %v7138
  %7140 = vmatmul.bf16.gmra.mxu0 %v1286
  %v7141 = vpop.f32.mrf.mxu0
  %v7142 = vadd.f32 %v6973, %v7141
  %v7143 = vpop.f32.mrf.mxu0
  %v7144 = vadd.f32 %v6975, %v7143
  %7145 = vmatmul.bf16.gmra.mxu0 %v1294
  %v7146 = vpop.f32.mrf.mxu0
  %v7147 = vadd.f32 %v6978, %v7146
  %v7148 = vpop.f32.mrf.mxu0
  %v7149 = vadd.f32 %v6980, %v7148
  %7150 = vmatmul.bf16.gmra.mxu0 %v1302
  %v7151 = vpop.f32.mrf.mxu0
  %v7152 = vadd.f32 %v6983, %v7151
  %v7153 = vpop.f32.mrf.mxu0
  %v7154 = vadd.f32 %v6985, %v7153
  %7155 = vmatmul.bf16.gmra.mxu0 %v1310
  %v7156 = vpop.f32.mrf.mxu0
  %v7157 = vadd.f32 %v6988, %v7156
  %v7158 = vpop.f32.mrf.mxu0
  %v7159 = vadd.f32 %v6990, %v7158
  %7160 = vmatmul.bf16.gmra.mxu0 %v1318
  %v7161 = vpop.f32.mrf.mxu0
  %v7162 = vadd.f32 %v6993, %v7161
  %v7163 = vpop.f32.mrf.mxu0
  %v7164 = vadd.f32 %v6995, %v7163
  %7165 = vmatmul.bf16.gmra.mxu0 %v1326
  %v7166 = vpop.f32.mrf.mxu0
  %v7167 = vadd.f32 %v6998, %v7166
  %v7168 = vpop.f32.mrf.mxu0
  %v7169 = vadd.f32 %v7000, %v7168
  %7170 = vmatmul.bf16.gmra.mxu0 %v1334
  %v7171 = vpop.f32.mrf.mxu0
  %v7172 = vadd.f32 %v7003, %v7171
  %v7173 = vpop.f32.mrf.mxu0
  %v7174 = vadd.f32 %v7005, %v7173
  %7175 = vmatmul.bf16.gmra.mxu0 %v1342
  %v7176 = vpop.f32.mrf.mxu0
  %v7177 = vadd.f32 %v7008, %v7176
  %v7178 = vpop.f32.mrf.mxu0
  %v7179 = vadd.f32 %v7010, %v7178
  %7180 = vmatmul.bf16.gmra.mxu0 %v1350
  %v7181 = vpop.f32.mrf.mxu0
  %v7182 = vadd.f32 %v7013, %v7181
  %v7183 = vpop.f32.mrf.mxu0
  %v7184 = vadd.f32 %v7015, %v7183
  %7185 = vmatmul.bf16.gmra.mxu0 %v1358
  %v7186 = vpop.f32.mrf.mxu0
  %v7187 = vadd.f32 %v7018, %v7186
  %v7188 = vpop.f32.mrf.mxu0
  %v7189 = vadd.f32 %v7020, %v7188
  %7190 = vmatmul.bf16.gmra.mxu0 %v1366
  %v7191 = vpop.f32.mrf.mxu0
  %v7192 = vadd.f32 %v7023, %v7191
  %v7193 = vpop.f32.mrf.mxu0
  %v7194 = vadd.f32 %v7025, %v7193
  %7195 = vmatmul.bf16.gmra.mxu0 %v1374
  %v7196 = vpop.f32.mrf.mxu0
  %v7197 = vadd.f32 %v7028, %v7196
  %v7198 = vpop.f32.mrf.mxu0
  %v7199 = vadd.f32 %v7030, %v7198
  %7200 = vmatmul.bf16.gmra.mxu0 %v1382
  %v7201 = vpop.f32.mrf.mxu0
  %v7202 = vadd.f32 %v7033, %v7201
  %v7203 = vpop.f32.mrf.mxu0
  %v7204 = vadd.f32 %v7035, %v7203
  %7205 = vmatmul.bf16.gmra.mxu0 %v1390
  %v7206 = vpop.f32.mrf.mxu0
  %v7207 = vadd.f32 %v7038, %v7206
  %v7208 = vpop.f32.mrf.mxu0
  %v7209 = vadd.f32 %v7040, %v7208
  %7210 = vmatmul.bf16.gmra.mxu0 %v1398
  %v7211 = vpop.f32.mrf.mxu0
  %v7212 = vadd.f32 %v7043, %v7211
  %v7213 = vpop.f32.mrf.mxu0
  %v7214 = vadd.f32 %v7045, %v7213
  %7215 = vmatmul.bf16.gmra.mxu0 %v1406
  %v7216 = vpop.f32.mrf.mxu0
  %v7217 = vadd.f32 %v7048, %v7216
  %v7218 = vpop.f32.mrf.mxu0
  %v7219 = vadd.f32 %v7050, %v7218
  %7220 = vmatmul.bf16.gmra.mxu0 %v1414
  %v7221 = vpop.f32.mrf.mxu0
  %v7222 = vadd.f32 %v7053, %v7221
  %v7223 = vpop.f32.mrf.mxu0
  %v7224 = vadd.f32 %v7055, %v7223
  %7225 = vmatmul.bf16.gmra.mxu0 %v1422
  %v7226 = vpop.f32.mrf.mxu0
  %v7227 = vadd.f32 %v7058, %v7226
  %v7228 = vpop.f32.mrf.mxu0
  %v7229 = vadd.f32 %v7060, %v7228
  %7230 = vmatmul.bf16.gmra.mxu0 %v1430
  %v7231 = vpop.f32.mrf.mxu0
  %v7232 = vadd.f32 %v7063, %v7231
  %v7233 = vpop.f32.mrf.mxu0
  %v7234 = vadd.f32 %v7065, %v7233
  %7235 = vmatmul.bf16.gmra.mxu0 %v1438
  %v7236 = vpop.f32.mrf.mxu0
  %v7237 = vadd.f32 %v7068, %v7236
  %v7238 = vpop.f32.mrf.mxu0
  %v7239 = vadd.f32 %v7070, %v7238
  %7240 = vmatmul.bf16.gmra.mxu0 %v1446
  %v7241 = vpop.f32.mrf.mxu0
  %v7242 = vadd.f32 %v7073, %v7241
  %v7243 = vpop.f32.mrf.mxu0
  %v7244 = vadd.f32 %v7075, %v7243
  %7245 = vmatmul.bf16.gmra.mxu0 %v1454
  %v7246 = vpop.f32.mrf.mxu0
  %v7247 = vadd.f32 %v7078, %v7246
  %v7248 = vpop.f32.mrf.mxu0
  %v7249 = vadd.f32 %v7080, %v7248
  %7250 = vmatmul.bf16.gmra.mxu0 %v1462
  %v7251 = vpop.f32.mrf.mxu0
  %v7252 = vadd.f32 %v7083, %v7251
  %v7253 = vpop.f32.mrf.mxu0
  %v7254 = vadd.f32 %v7085, %v7253
  %7255 = vmatmul.bf16.gmra.mxu0 %v1470
  %v7256 = vpop.f32.mrf.mxu0
  %v7257 = vadd.f32 %v7088, %v7256
  %v7258 = vpop.f32.mrf.mxu0
  %v7259 = vadd.f32 %v7090, %v7258
  %7260 = vmatmul.bf16.gmra.mxu0 %v1478
  %v7261 = vpop.f32.mrf.mxu0
  %v7262 = vadd.f32 %v7093, %v7261
  %v7263 = vpop.f32.mrf.mxu0
  %v7264 = vadd.f32 %v7095, %v7263
  %7265 = vmatmul.bf16.gmra.mxu0 %v1486
  %v7266 = vpop.f32.mrf.mxu0
  %v7267 = vadd.f32 %v7098, %v7266
  %v7268 = vpop.f32.mrf.mxu0
  %v7269 = vadd.f32 %v7100, %v7268
  %7270 = vdwg.mxu0
  %v7271 = vadd.f32 %v5343, %v7112
  %v7272 = vadd.f32 %v5344, %v7114
  %v7273 = vadd.f32 %v5345, %v7117
  %v7274 = vadd.f32 %v5346, %v7119
  %v7275 = vadd.f32 %v5347, %v7122
  %v7276 = vadd.f32 %v5348, %v7124
  %v7277 = vadd.f32 %v5349, %v7127
  %v7278 = vadd.f32 %v5350, %v7129
  %v7279 = vadd.f32 %v5351, %v7132
  %v7280 = vadd.f32 %v5352, %v7134
  %v7281 = vadd.f32 %v5353, %v7137
  %v7282 = vadd.f32 %v5354, %v7139
  %v7283 = vadd.f32 %v5355, %v7142
  %v7284 = vadd.f32 %v5356, %v7144
  %v7285 = vadd.f32 %v5357, %v7147
  %v7286 = vadd.f32 %v5358, %v7149
  %v7287 = vadd.f32 %v5359, %v7152
  %v7288 = vadd.f32 %v5360, %v7154
  %v7289 = vadd.f32 %v5361, %v7157
  %v7290 = vadd.f32 %v5362, %v7159
  %v7291 = vadd.f32 %v5363, %v7162
  %v7292 = vadd.f32 %v5364, %v7164
  %v7293 = vadd.f32 %v5365, %v7167
  %v7294 = vadd.f32 %v5366, %v7169
  %v7295 = vadd.f32 %v5367, %v7172
  %v7296 = vadd.f32 %v5368, %v7174
  %v7297 = vadd.f32 %v5369, %v7177
  %v7298 = vadd.f32 %v5370, %v7179
  %v7299 = vadd.f32 %v5371, %v7182
  %v7300 = vadd.f32 %v5372, %v7184
  %v7301 = vadd.f32 %v5373, %v7187
  %v7302 = vadd.f32 %v5374, %v7189
  %v7303 = vadd.f32 %v5375, %v7192
  %v7304 = vadd.f32 %v5376, %v7194
  %v7305 = vadd.f32 %v5377, %v7197
  %v7306 = vadd.f32 %v5378, %v7199
  %v7307 = vadd.f32 %v5379, %v7202
  %v7308 = vadd.f32 %v5380, %v7204
  %v7309 = vadd.f32 %v5381, %v7207
  %v7310 = vadd.f32 %v5382, %v7209
  %v7311 = vadd.f32 %v5383, %v7212
  %v7312 = vadd.f32 %v5384, %v7214
  %v7313 = vadd.f32 %v5385, %v7217
  %v7314 = vadd.f32 %v5386, %v7219
  %v7315 = vadd.f32 %v5387, %v7222
  %v7316 = vadd.f32 %v5388, %v7224
  %v7317 = vadd.f32 %v5389, %v7227
  %v7318 = vadd.f32 %v5390, %v7229
  %v7319 = vadd.f32 %v5391, %v7232
  %v7320 = vadd.f32 %v5392, %v7234
  %v7321 = vadd.f32 %v5393, %v7237
  %v7322 = vadd.f32 %v5394, %v7239
  %v7323 = vadd.f32 %v5395, %v7242
  %v7324 = vadd.f32 %v5396, %v7244
  %v7325 = vadd.f32 %v5397, %v7247
  %v7326 = vadd.f32 %v5398, %v7249
  %v7327 = vadd.f32 %v5399, %v7252
  %v7328 = vadd.f32 %v5400, %v7254
  %v7329 = vadd.f32 %v5401, %v7257
  %v7330 = vadd.f32 %v5402, %v7259
  %v7331 = vadd.f32 %v5403, %v7262
  %v7332 = vadd.f32 %v5404, %v7264
  %v7333 = vadd.f32 %v5405, %v7267
  %v7334 = vadd.f32 %v5406, %v7269
  %7335 = vst [vmem:[%s2] sm:$0xff] %v7271
  %7336 = vst [vmem:[%s2 + $0x8] sm:$0xff] %v7272
  %7337 = vst [vmem:[%s2 + $0x10] sm:$0xff] %v7273
  %7338 = vst [vmem:[%s2 + $0x18] sm:$0xff] %v7274
  %7339 = vst [vmem:[%s2 + $0x20] sm:$0xff] %v7275
  %7340 = vst [vmem:[%s2 + $0x28] sm:$0xff] %v7276
  %7341 = vst [vmem:[%s2 + $0x30] sm:$0xff] %v7277
  %7342 = vst [vmem:[%s2 + $0x38] sm:$0xff] %v7278
  %7343 = vst [vmem:[%s2 + $0x40] sm:$0xff] %v7279
  %7344 = vst [vmem:[%s2 + $0x48] sm:$0xff] %v7280
  %7345 = vst [vmem:[%s2 + $0x50] sm:$0xff] %v7281
  %7346 = vst [vmem:[%s2 + $0x58] sm:$0xff] %v7282
  %7347 = vst [vmem:[%s2 + $0x60] sm:$0xff] %v7283
  %7348 = vst [vmem:[%s2 + $0x68] sm:$0xff] %v7284
  %7349 = vst [vmem:[%s2 + $0x70] sm:$0xff] %v7285
  %7350 = vst [vmem:[%s2 + $0x78] sm:$0xff] %v7286
  %7351 = vst [vmem:[%s2 + $0x80] sm:$0xff] %v7287
  %7352 = vst [vmem:[%s2 + $0x88] sm:$0xff] %v7288
  %7353 = vst [vmem:[%s2 + $0x90] sm:$0xff] %v7289
  %7354 = vst [vmem:[%s2 + $0x98] sm:$0xff] %v7290
  %7355 = vst [vmem:[%s2 + $0xa0] sm:$0xff] %v7291
  %7356 = vst [vmem:[%s2 + $0xa8] sm:$0xff] %v7292
  %7357 = vst [vmem:[%s2 + $0xb0] sm:$0xff] %v7293
  %7358 = vst [vmem:[%s2 + $0xb8] sm:$0xff] %v7294
  %7359 = vst [vmem:[%s2 + $0xc0] sm:$0xff] %v7295
  %7360 = vst [vmem:[%s2 + $0xc8] sm:$0xff] %v7296
  %7361 = vst [vmem:[%s2 + $0xd0] sm:$0xff] %v7297
  %7362 = vst [vmem:[%s2 + $0xd8] sm:$0xff] %v7298
  %7363 = vst [vmem:[%s2 + $0xe0] sm:$0xff] %v7299
  %7364 = vst [vmem:[%s2 + $0xe8] sm:$0xff] %v7300
  %7365 = vst [vmem:[%s2 + $0xf0] sm:$0xff] %v7301
  %7366 = vst [vmem:[%s2 + $0xf8] sm:$0xff] %v7302
  %7367 = vst [vmem:[%s2 + $0x100] sm:$0xff] %v7303
  %7368 = vst [vmem:[%s2 + $0x108] sm:$0xff] %v7304
  %7369 = vst [vmem:[%s2 + $0x110] sm:$0xff] %v7305
  %7370 = vst [vmem:[%s2 + $0x118] sm:$0xff] %v7306
  %7371 = vst [vmem:[%s2 + $0x120] sm:$0xff] %v7307
  %7372 = vst [vmem:[%s2 + $0x128] sm:$0xff] %v7308
  %7373 = vst [vmem:[%s2 + $0x130] sm:$0xff] %v7309
  %7374 = vst [vmem:[%s2 + $0x138] sm:$0xff] %v7310
  %7375 = vst [vmem:[%s2 + $0x140] sm:$0xff] %v7311
  %7376 = vst [vmem:[%s2 + $0x148] sm:$0xff] %v7312
  %7377 = vst [vmem:[%s2 + $0x150] sm:$0xff] %v7313
  %7378 = vst [vmem:[%s2 + $0x158] sm:$0xff] %v7314
  %7379 = vst [vmem:[%s2 + $0x160] sm:$0xff] %v7315
  %7380 = vst [vmem:[%s2 + $0x168] sm:$0xff] %v7316
  %7381 = vst [vmem:[%s2 + $0x170] sm:$0xff] %v7317
  %7382 = vst [vmem:[%s2 + $0x178] sm:$0xff] %v7318
  %7383 = vst [vmem:[%s2 + $0x180] sm:$0xff] %v7319
  %7384 = vst [vmem:[%s2 + $0x188] sm:$0xff] %v7320
  %7385 = vst [vmem:[%s2 + $0x190] sm:$0xff] %v7321
  %7386 = vst [vmem:[%s2 + $0x198] sm:$0xff] %v7322
  %7387 = vst [vmem:[%s2 + $0x1a0] sm:$0xff] %v7323
  %7388 = vst [vmem:[%s2 + $0x1a8] sm:$0xff] %v7324
  %7389 = vst [vmem:[%s2 + $0x1b0] sm:$0xff] %v7325
  %7390 = vst [vmem:[%s2 + $0x1b8] sm:$0xff] %v7326
  %7391 = vst [vmem:[%s2 + $0x1c0] sm:$0xff] %v7327
  %7392 = vst [vmem:[%s2 + $0x1c8] sm:$0xff] %v7328
  %7393 = vst [vmem:[%s2 + $0x1d0] sm:$0xff] %v7329
  %7394 = vst [vmem:[%s2 + $0x1d8] sm:$0xff] %v7330
  %7395 = vst [vmem:[%s2 + $0x1e0] sm:$0xff] %v7331
  %7396 = vst [vmem:[%s2 + $0x1e8] sm:$0xff] %v7332
  %7397 = vst [vmem:[%s2 + $0x1f0] sm:$0xff] %v7333
  %7398 = vst [vmem:[%s2 + $0x1f8] sm:$0xff] %v7334
  // Predicated region
  $region14: #{lightgcn_layer.1} parent=0 // pred_check
    %p7399 = pneg %p11
  $region15: #{lightgcn_layer.1} parent=0 // pred_check_branch
    %7401 = sbr.rel (%p7399) target = $region17
  $region16: #{lightgcn_layer.1} parent=0 // pred_region
    %v7402 = vld [vmem:[%s2] sm:$0xff]
    %v7403 = vld [vmem:[%s2 + $0x8] sm:$0xff]
    %v7404 = vld [vmem:[%s2 + $0x10] sm:$0xff]
    %v7405 = vld [vmem:[%s2 + $0x18] sm:$0xff]
    %v7406 = vld [vmem:[%s2 + $0x20] sm:$0xff]
    %v7407 = vld [vmem:[%s2 + $0x28] sm:$0xff]
    %v7408 = vld [vmem:[%s2 + $0x30] sm:$0xff]
    %v7409 = vld [vmem:[%s2 + $0x38] sm:$0xff]
    %v7410 = vld [vmem:[%s2 + $0x40] sm:$0xff]
    %v7411 = vld [vmem:[%s2 + $0x48] sm:$0xff]
    %v7412 = vld [vmem:[%s2 + $0x50] sm:$0xff]
    %v7413 = vld [vmem:[%s2 + $0x58] sm:$0xff]
    %v7414 = vld [vmem:[%s2 + $0x60] sm:$0xff]
    %v7415 = vld [vmem:[%s2 + $0x68] sm:$0xff]
    %v7416 = vld [vmem:[%s2 + $0x70] sm:$0xff]
    %v7417 = vld [vmem:[%s2 + $0x78] sm:$0xff]
    %v7418 = vld [vmem:[%s2 + $0x80] sm:$0xff]
    %v7419 = vld [vmem:[%s2 + $0x88] sm:$0xff]
    %v7420 = vld [vmem:[%s2 + $0x90] sm:$0xff]
    %v7421 = vld [vmem:[%s2 + $0x98] sm:$0xff]
    %v7422 = vld [vmem:[%s2 + $0xa0] sm:$0xff]
    %v7423 = vld [vmem:[%s2 + $0xa8] sm:$0xff]
    %v7424 = vld [vmem:[%s2 + $0xb0] sm:$0xff]
    %v7425 = vld [vmem:[%s2 + $0xb8] sm:$0xff]
    %v7426 = vld [vmem:[%s2 + $0xc0] sm:$0xff]
    %v7427 = vld [vmem:[%s2 + $0xc8] sm:$0xff]
    %v7428 = vld [vmem:[%s2 + $0xd0] sm:$0xff]
    %v7429 = vld [vmem:[%s2 + $0xd8] sm:$0xff]
    %v7430 = vld [vmem:[%s2 + $0xe0] sm:$0xff]
    %v7431 = vld [vmem:[%s2 + $0xe8] sm:$0xff]
    %v7432 = vld [vmem:[%s2 + $0xf0] sm:$0xff]
    %v7433 = vld [vmem:[%s2 + $0xf8] sm:$0xff]
    %v7434 = vld [vmem:[%s2 + $0x100] sm:$0xff]
    %v7435 = vld [vmem:[%s2 + $0x108] sm:$0xff]
    %v7436 = vld [vmem:[%s2 + $0x110] sm:$0xff]
    %v7437 = vld [vmem:[%s2 + $0x118] sm:$0xff]
    %v7438 = vld [vmem:[%s2 + $0x120] sm:$0xff]
    %v7439 = vld [vmem:[%s2 + $0x128] sm:$0xff]
    %v7440 = vld [vmem:[%s2 + $0x130] sm:$0xff]
    %v7441 = vld [vmem:[%s2 + $0x138] sm:$0xff]
    %v7442 = vld [vmem:[%s2 + $0x140] sm:$0xff]
    %v7443 = vld [vmem:[%s2 + $0x148] sm:$0xff]
    %v7444 = vld [vmem:[%s2 + $0x150] sm:$0xff]
    %v7445 = vld [vmem:[%s2 + $0x158] sm:$0xff]
    %v7446 = vld [vmem:[%s2 + $0x160] sm:$0xff]
    %v7447 = vld [vmem:[%s2 + $0x168] sm:$0xff]
    %v7448 = vld [vmem:[%s2 + $0x170] sm:$0xff]
    %v7449 = vld [vmem:[%s2 + $0x178] sm:$0xff]
    %v7450 = vld [vmem:[%s2 + $0x180] sm:$0xff]
    %v7451 = vld [vmem:[%s2 + $0x188] sm:$0xff]
    %v7452 = vld [vmem:[%s2 + $0x190] sm:$0xff]
    %v7453 = vld [vmem:[%s2 + $0x198] sm:$0xff]
    %v7454 = vld [vmem:[%s2 + $0x1a0] sm:$0xff]
    %v7455 = vld [vmem:[%s2 + $0x1a8] sm:$0xff]
    %v7456 = vld [vmem:[%s2 + $0x1b0] sm:$0xff]
    %v7457 = vld [vmem:[%s2 + $0x1b8] sm:$0xff]
    %v7458 = vld [vmem:[%s2 + $0x1c0] sm:$0xff]
    %v7459 = vld [vmem:[%s2 + $0x1c8] sm:$0xff]
    %v7460 = vld [vmem:[%s2 + $0x1d0] sm:$0xff]
    %v7461 = vld [vmem:[%s2 + $0x1d8] sm:$0xff]
    %v7462 = vld [vmem:[%s2 + $0x1e0] sm:$0xff]
    %v7463 = vld [vmem:[%s2 + $0x1e8] sm:$0xff]
    %v7464 = vld [vmem:[%s2 + $0x1f0] sm:$0xff]
    %v7465 = vld [vmem:[%s2 + $0x1f8] sm:$0xff]
    %v7466 = vmax.f32 %v7402, 1.0
    %v7467 = vmax.f32 %v7403, 1.0
    %v7468 = vmax.f32 %v7404, 1.0
    %v7469 = vmax.f32 %v7405, 1.0
    %v7470 = vmax.f32 %v7406, 1.0
    %v7471 = vmax.f32 %v7407, 1.0
    %v7472 = vmax.f32 %v7408, 1.0
    %v7473 = vmax.f32 %v7409, 1.0
    %v7474 = vmax.f32 %v7410, 1.0
    %v7475 = vmax.f32 %v7411, 1.0
    %v7476 = vmax.f32 %v7412, 1.0
    %v7477 = vmax.f32 %v7413, 1.0
    %v7478 = vmax.f32 %v7414, 1.0
    %v7479 = vmax.f32 %v7415, 1.0
    %v7480 = vmax.f32 %v7416, 1.0
    %v7481 = vmax.f32 %v7417, 1.0
    %v7482 = vmax.f32 %v7418, 1.0
    %v7483 = vmax.f32 %v7419, 1.0
    %v7484 = vmax.f32 %v7420, 1.0
    %v7485 = vmax.f32 %v7421, 1.0
    %v7486 = vmax.f32 %v7422, 1.0
    %v7487 = vmax.f32 %v7423, 1.0
    %v7488 = vmax.f32 %v7424, 1.0
    %v7489 = vmax.f32 %v7425, 1.0
    %v7490 = vmax.f32 %v7426, 1.0
    %v7491 = vmax.f32 %v7427, 1.0
    %v7492 = vmax.f32 %v7428, 1.0
    %v7493 = vmax.f32 %v7429, 1.0
    %v7494 = vmax.f32 %v7430, 1.0
    %v7495 = vmax.f32 %v7431, 1.0
    %v7496 = vmax.f32 %v7432, 1.0
    %v7497 = vmax.f32 %v7433, 1.0
    %v7498 = vmax.f32 %v7434, 1.0
    %v7499 = vmax.f32 %v7435, 1.0
    %v7500 = vmax.f32 %v7436, 1.0
    %v7501 = vmax.f32 %v7437, 1.0
    %v7502 = vmax.f32 %v7438, 1.0
    %v7503 = vmax.f32 %v7439, 1.0
    %v7504 = vmax.f32 %v7440, 1.0
    %v7505 = vmax.f32 %v7441, 1.0
    %v7506 = vmax.f32 %v7442, 1.0
    %v7507 = vmax.f32 %v7443, 1.0
    %v7508 = vmax.f32 %v7444, 1.0
    %v7509 = vmax.f32 %v7445, 1.0
    %v7510 = vmax.f32 %v7446, 1.0
    %v7511 = vmax.f32 %v7447, 1.0
    %v7512 = vmax.f32 %v7448, 1.0
    %v7513 = vmax.f32 %v7449, 1.0
    %v7514 = vmax.f32 %v7450, 1.0
    %v7515 = vmax.f32 %v7451, 1.0
    %v7516 = vmax.f32 %v7452, 1.0
    %v7517 = vmax.f32 %v7453, 1.0
    %v7518 = vmax.f32 %v7454, 1.0
    %v7519 = vmax.f32 %v7455, 1.0
    %v7520 = vmax.f32 %v7456, 1.0
    %v7521 = vmax.f32 %v7457, 1.0
    %v7522 = vmax.f32 %v7458, 1.0
    %v7523 = vmax.f32 %v7459, 1.0
    %v7524 = vmax.f32 %v7460, 1.0
    %v7525 = vmax.f32 %v7461, 1.0
    %v7526 = vmax.f32 %v7462, 1.0
    %v7527 = vmax.f32 %v7463, 1.0
    %v7528 = vmax.f32 %v7464, 1.0
    %v7529 = vmax.f32 %v7465, 1.0
    %v7530 = vrcp.pop %v7466
    %v7531 = vmul.f32 %v7466, %v7530
    %v7532 = vsub.f32 1.0, %v7531
    %v7533 = vmul.f32 %v7530, %v7532
    %v7534 = vadd.f32 %v7530, %v7533
    %vm7535 = vweird.f32 %v7466
    %vm7536 = vweird.f32 %v7530
    %vm7537 = vmor %vm7535, %vm7536
    %v7538 = vsel %vm7537, %v7530, %v7534
    %v7539 = vand.u32 2147483647, %v7466
    %vm7540 = vcmp.eq.f32.partialorder %v7539, 8.507059e+37
    %v7541 = vand.u32 %v7466, 2147483648
    %v7542 = vor.u32 1.1754944e-38, %v7541
    %v7543 = vsel %vm7540, %v7542, %v7538
    %v7544 = vmul.f32 1.0, %v7543
    %v7545 = vrcp.pop %v7467
    %v7546 = vmul.f32 %v7467, %v7545
    %v7547 = vsub.f32 1.0, %v7546
    %v7548 = vmul.f32 %v7545, %v7547
    %v7549 = vadd.f32 %v7545, %v7548
    %vm7550 = vweird.f32 %v7467
    %vm7551 = vweird.f32 %v7545
    %vm7552 = vmor %vm7550, %vm7551
    %v7553 = vsel %vm7552, %v7545, %v7549
    %v7554 = vand.u32 2147483647, %v7467
    %vm7555 = vcmp.eq.f32.partialorder %v7554, 8.507059e+37
    %v7556 = vand.u32 %v7467, 2147483648
    %v7557 = vor.u32 1.1754944e-38, %v7556
    %v7558 = vsel %vm7555, %v7557, %v7553
    %v7559 = vmul.f32 1.0, %v7558
    %v7560 = vrcp.pop %v7468
    %v7561 = vmul.f32 %v7468, %v7560
    %v7562 = vsub.f32 1.0, %v7561
    %v7563 = vmul.f32 %v7560, %v7562
    %v7564 = vadd.f32 %v7560, %v7563
    %vm7565 = vweird.f32 %v7468
    %vm7566 = vweird.f32 %v7560
    %vm7567 = vmor %vm7565, %vm7566
    %v7568 = vsel %vm7567, %v7560, %v7564
    %v7569 = vand.u32 2147483647, %v7468
    %vm7570 = vcmp.eq.f32.partialorder %v7569, 8.507059e+37
    %v7571 = vand.u32 %v7468, 2147483648
    %v7572 = vor.u32 1.1754944e-38, %v7571
    %v7573 = vsel %vm7570, %v7572, %v7568
    %v7574 = vmul.f32 1.0, %v7573
    %v7575 = vrcp.pop %v7469
    %v7576 = vmul.f32 %v7469, %v7575
    %v7577 = vsub.f32 1.0, %v7576
    %v7578 = vmul.f32 %v7575, %v7577
    %v7579 = vadd.f32 %v7575, %v7578
    %vm7580 = vweird.f32 %v7469
    %vm7581 = vweird.f32 %v7575
    %vm7582 = vmor %vm7580, %vm7581
    %v7583 = vsel %vm7582, %v7575, %v7579
    %v7584 = vand.u32 2147483647, %v7469
    %vm7585 = vcmp.eq.f32.partialorder %v7584, 8.507059e+37
    %v7586 = vand.u32 %v7469, 2147483648
    %v7587 = vor.u32 1.1754944e-38, %v7586
    %v7588 = vsel %vm7585, %v7587, %v7583
    %v7589 = vmul.f32 1.0, %v7588
    %v7590 = vrcp.pop %v7470
    %v7591 = vmul.f32 %v7470, %v7590
    %v7592 = vsub.f32 1.0, %v7591
    %v7593 = vmul.f32 %v7590, %v7592
    %v7594 = vadd.f32 %v7590, %v7593
    %vm7595 = vweird.f32 %v7470
    %vm7596 = vweird.f32 %v7590
    %vm7597 = vmor %vm7595, %vm7596
    %v7598 = vsel %vm7597, %v7590, %v7594
    %v7599 = vand.u32 2147483647, %v7470
    %vm7600 = vcmp.eq.f32.partialorder %v7599, 8.507059e+37
    %v7601 = vand.u32 %v7470, 2147483648
    %v7602 = vor.u32 1.1754944e-38, %v7601
    %v7603 = vsel %vm7600, %v7602, %v7598
    %v7604 = vmul.f32 1.0, %v7603
    %v7605 = vrcp.pop %v7471
    %v7606 = vmul.f32 %v7471, %v7605
    %v7607 = vsub.f32 1.0, %v7606
    %v7608 = vmul.f32 %v7605, %v7607
    %v7609 = vadd.f32 %v7605, %v7608
    %vm7610 = vweird.f32 %v7471
    %vm7611 = vweird.f32 %v7605
    %vm7612 = vmor %vm7610, %vm7611
    %v7613 = vsel %vm7612, %v7605, %v7609
    %v7614 = vand.u32 2147483647, %v7471
    %vm7615 = vcmp.eq.f32.partialorder %v7614, 8.507059e+37
    %v7616 = vand.u32 %v7471, 2147483648
    %v7617 = vor.u32 1.1754944e-38, %v7616
    %v7618 = vsel %vm7615, %v7617, %v7613
    %v7619 = vmul.f32 1.0, %v7618
    %v7620 = vrcp.pop %v7472
    %v7621 = vmul.f32 %v7472, %v7620
    %v7622 = vsub.f32 1.0, %v7621
    %v7623 = vmul.f32 %v7620, %v7622
    %v7624 = vadd.f32 %v7620, %v7623
    %vm7625 = vweird.f32 %v7472
    %vm7626 = vweird.f32 %v7620
    %vm7627 = vmor %vm7625, %vm7626
    %v7628 = vsel %vm7627, %v7620, %v7624
    %v7629 = vand.u32 2147483647, %v7472
    %vm7630 = vcmp.eq.f32.partialorder %v7629, 8.507059e+37
    %v7631 = vand.u32 %v7472, 2147483648
    %v7632 = vor.u32 1.1754944e-38, %v7631
    %v7633 = vsel %vm7630, %v7632, %v7628
    %v7634 = vmul.f32 1.0, %v7633
    %v7635 = vrcp.pop %v7473
    %v7636 = vmul.f32 %v7473, %v7635
    %v7637 = vsub.f32 1.0, %v7636
    %v7638 = vmul.f32 %v7635, %v7637
    %v7639 = vadd.f32 %v7635, %v7638
    %vm7640 = vweird.f32 %v7473
    %vm7641 = vweird.f32 %v7635
    %vm7642 = vmor %vm7640, %vm7641
    %v7643 = vsel %vm7642, %v7635, %v7639
    %v7644 = vand.u32 2147483647, %v7473
    %vm7645 = vcmp.eq.f32.partialorder %v7644, 8.507059e+37
    %v7646 = vand.u32 %v7473, 2147483648
    %v7647 = vor.u32 1.1754944e-38, %v7646
    %v7648 = vsel %vm7645, %v7647, %v7643
    %v7649 = vmul.f32 1.0, %v7648
    %v7650 = vrcp.pop %v7474
    %v7651 = vmul.f32 %v7474, %v7650
    %v7652 = vsub.f32 1.0, %v7651
    %v7653 = vmul.f32 %v7650, %v7652
    %v7654 = vadd.f32 %v7650, %v7653
    %vm7655 = vweird.f32 %v7474
    %vm7656 = vweird.f32 %v7650
    %vm7657 = vmor %vm7655, %vm7656
    %v7658 = vsel %vm7657, %v7650, %v7654
    %v7659 = vand.u32 2147483647, %v7474
    %vm7660 = vcmp.eq.f32.partialorder %v7659, 8.507059e+37
    %v7661 = vand.u32 %v7474, 2147483648
    %v7662 = vor.u32 1.1754944e-38, %v7661
    %v7663 = vsel %vm7660, %v7662, %v7658
    %v7664 = vmul.f32 1.0, %v7663
    %v7665 = vrcp.pop %v7475
    %v7666 = vmul.f32 %v7475, %v7665
    %v7667 = vsub.f32 1.0, %v7666
    %v7668 = vmul.f32 %v7665, %v7667
    %v7669 = vadd.f32 %v7665, %v7668
    %vm7670 = vweird.f32 %v7475
    %vm7671 = vweird.f32 %v7665
    %vm7672 = vmor %vm7670, %vm7671
    %v7673 = vsel %vm7672, %v7665, %v7669
    %v7674 = vand.u32 2147483647, %v7475
    %vm7675 = vcmp.eq.f32.partialorder %v7674, 8.507059e+37
    %v7676 = vand.u32 %v7475, 2147483648
    %v7677 = vor.u32 1.1754944e-38, %v7676
    %v7678 = vsel %vm7675, %v7677, %v7673
    %v7679 = vmul.f32 1.0, %v7678
    %v7680 = vrcp.pop %v7476
    %v7681 = vmul.f32 %v7476, %v7680
    %v7682 = vsub.f32 1.0, %v7681
    %v7683 = vmul.f32 %v7680, %v7682
    %v7684 = vadd.f32 %v7680, %v7683
    %vm7685 = vweird.f32 %v7476
    %vm7686 = vweird.f32 %v7680
    %vm7687 = vmor %vm7685, %vm7686
    %v7688 = vsel %vm7687, %v7680, %v7684
    %v7689 = vand.u32 2147483647, %v7476
    %vm7690 = vcmp.eq.f32.partialorder %v7689, 8.507059e+37
    %v7691 = vand.u32 %v7476, 2147483648
    %v7692 = vor.u32 1.1754944e-38, %v7691
    %v7693 = vsel %vm7690, %v7692, %v7688
    %v7694 = vmul.f32 1.0, %v7693
    %v7695 = vrcp.pop %v7477
    %v7696 = vmul.f32 %v7477, %v7695
    %v7697 = vsub.f32 1.0, %v7696
    %v7698 = vmul.f32 %v7695, %v7697
    %v7699 = vadd.f32 %v7695, %v7698
    %vm7700 = vweird.f32 %v7477
    %vm7701 = vweird.f32 %v7695
    %vm7702 = vmor %vm7700, %vm7701
    %v7703 = vsel %vm7702, %v7695, %v7699
    %v7704 = vand.u32 2147483647, %v7477
    %vm7705 = vcmp.eq.f32.partialorder %v7704, 8.507059e+37
    %v7706 = vand.u32 %v7477, 2147483648
    %v7707 = vor.u32 1.1754944e-38, %v7706
    %v7708 = vsel %vm7705, %v7707, %v7703
    %v7709 = vmul.f32 1.0, %v7708
    %v7710 = vrcp.pop %v7478
    %v7711 = vmul.f32 %v7478, %v7710
    %v7712 = vsub.f32 1.0, %v7711
    %v7713 = vmul.f32 %v7710, %v7712
    %v7714 = vadd.f32 %v7710, %v7713
    %vm7715 = vweird.f32 %v7478
    %vm7716 = vweird.f32 %v7710
    %vm7717 = vmor %vm7715, %vm7716
    %v7718 = vsel %vm7717, %v7710, %v7714
    %v7719 = vand.u32 2147483647, %v7478
    %vm7720 = vcmp.eq.f32.partialorder %v7719, 8.507059e+37
    %v7721 = vand.u32 %v7478, 2147483648
    %v7722 = vor.u32 1.1754944e-38, %v7721
    %v7723 = vsel %vm7720, %v7722, %v7718
    %v7724 = vmul.f32 1.0, %v7723
    %v7725 = vrcp.pop %v7479
    %v7726 = vmul.f32 %v7479, %v7725
    %v7727 = vsub.f32 1.0, %v7726
    %v7728 = vmul.f32 %v7725, %v7727
    %v7729 = vadd.f32 %v7725, %v7728
    %vm7730 = vweird.f32 %v7479
    %vm7731 = vweird.f32 %v7725
    %vm7732 = vmor %vm7730, %vm7731
    %v7733 = vsel %vm7732, %v7725, %v7729
    %v7734 = vand.u32 2147483647, %v7479
    %vm7735 = vcmp.eq.f32.partialorder %v7734, 8.507059e+37
    %v7736 = vand.u32 %v7479, 2147483648
    %v7737 = vor.u32 1.1754944e-38, %v7736
    %v7738 = vsel %vm7735, %v7737, %v7733
    %v7739 = vmul.f32 1.0, %v7738
    %v7740 = vrcp.pop %v7480
    %v7741 = vmul.f32 %v7480, %v7740
    %v7742 = vsub.f32 1.0, %v7741
    %v7743 = vmul.f32 %v7740, %v7742
    %v7744 = vadd.f32 %v7740, %v7743
    %vm7745 = vweird.f32 %v7480
    %vm7746 = vweird.f32 %v7740
    %vm7747 = vmor %vm7745, %vm7746
    %v7748 = vsel %vm7747, %v7740, %v7744
    %v7749 = vand.u32 2147483647, %v7480
    %vm7750 = vcmp.eq.f32.partialorder %v7749, 8.507059e+37
    %v7751 = vand.u32 %v7480, 2147483648
    %v7752 = vor.u32 1.1754944e-38, %v7751
    %v7753 = vsel %vm7750, %v7752, %v7748
    %v7754 = vmul.f32 1.0, %v7753
    %v7755 = vrcp.pop %v7481
    %v7756 = vmul.f32 %v7481, %v7755
    %v7757 = vsub.f32 1.0, %v7756
    %v7758 = vmul.f32 %v7755, %v7757
    %v7759 = vadd.f32 %v7755, %v7758
    %vm7760 = vweird.f32 %v7481
    %vm7761 = vweird.f32 %v7755
    %vm7762 = vmor %vm7760, %vm7761
    %v7763 = vsel %vm7762, %v7755, %v7759
    %v7764 = vand.u32 2147483647, %v7481
    %vm7765 = vcmp.eq.f32.partialorder %v7764, 8.507059e+37
    %v7766 = vand.u32 %v7481, 2147483648
    %v7767 = vor.u32 1.1754944e-38, %v7766
    %v7768 = vsel %vm7765, %v7767, %v7763
    %v7769 = vmul.f32 1.0, %v7768
    %v7770 = vrcp.pop %v7482
    %v7771 = vmul.f32 %v7482, %v7770
    %v7772 = vsub.f32 1.0, %v7771
    %v7773 = vmul.f32 %v7770, %v7772
    %v7774 = vadd.f32 %v7770, %v7773
    %vm7775 = vweird.f32 %v7482
    %vm7776 = vweird.f32 %v7770
    %vm7777 = vmor %vm7775, %vm7776
    %v7778 = vsel %vm7777, %v7770, %v7774
    %v7779 = vand.u32 2147483647, %v7482
    %vm7780 = vcmp.eq.f32.partialorder %v7779, 8.507059e+37
    %v7781 = vand.u32 %v7482, 2147483648
    %v7782 = vor.u32 1.1754944e-38, %v7781
    %v7783 = vsel %vm7780, %v7782, %v7778
    %v7784 = vmul.f32 1.0, %v7783
    %v7785 = vrcp.pop %v7483
    %v7786 = vmul.f32 %v7483, %v7785
    %v7787 = vsub.f32 1.0, %v7786
    %v7788 = vmul.f32 %v7785, %v7787
    %v7789 = vadd.f32 %v7785, %v7788
    %vm7790 = vweird.f32 %v7483
    %vm7791 = vweird.f32 %v7785
    %vm7792 = vmor %vm7790, %vm7791
    %v7793 = vsel %vm7792, %v7785, %v7789
    %v7794 = vand.u32 2147483647, %v7483
    %vm7795 = vcmp.eq.f32.partialorder %v7794, 8.507059e+37
    %v7796 = vand.u32 %v7483, 2147483648
    %v7797 = vor.u32 1.1754944e-38, %v7796
    %v7798 = vsel %vm7795, %v7797, %v7793
    %v7799 = vmul.f32 1.0, %v7798
    %v7800 = vrcp.pop %v7484
    %v7801 = vmul.f32 %v7484, %v7800
    %v7802 = vsub.f32 1.0, %v7801
    %v7803 = vmul.f32 %v7800, %v7802
    %v7804 = vadd.f32 %v7800, %v7803
    %vm7805 = vweird.f32 %v7484
    %vm7806 = vweird.f32 %v7800
    %vm7807 = vmor %vm7805, %vm7806
    %v7808 = vsel %vm7807, %v7800, %v7804
    %v7809 = vand.u32 2147483647, %v7484
    %vm7810 = vcmp.eq.f32.partialorder %v7809, 8.507059e+37
    %v7811 = vand.u32 %v7484, 2147483648
    %v7812 = vor.u32 1.1754944e-38, %v7811
    %v7813 = vsel %vm7810, %v7812, %v7808
    %v7814 = vmul.f32 1.0, %v7813
    %v7815 = vrcp.pop %v7485
    %v7816 = vmul.f32 %v7485, %v7815
    %v7817 = vsub.f32 1.0, %v7816
    %v7818 = vmul.f32 %v7815, %v7817
    %v7819 = vadd.f32 %v7815, %v7818
    %vm7820 = vweird.f32 %v7485
    %vm7821 = vweird.f32 %v7815
    %vm7822 = vmor %vm7820, %vm7821
    %v7823 = vsel %vm7822, %v7815, %v7819
    %v7824 = vand.u32 2147483647, %v7485
    %vm7825 = vcmp.eq.f32.partialorder %v7824, 8.507059e+37
    %v7826 = vand.u32 %v7485, 2147483648
    %v7827 = vor.u32 1.1754944e-38, %v7826
    %v7828 = vsel %vm7825, %v7827, %v7823
    %v7829 = vmul.f32 1.0, %v7828
    %v7830 = vrcp.pop %v7486
    %v7831 = vmul.f32 %v7486, %v7830
    %v7832 = vsub.f32 1.0, %v7831
    %v7833 = vmul.f32 %v7830, %v7832
    %v7834 = vadd.f32 %v7830, %v7833
    %vm7835 = vweird.f32 %v7486
    %vm7836 = vweird.f32 %v7830
    %vm7837 = vmor %vm7835, %vm7836
    %v7838 = vsel %vm7837, %v7830, %v7834
    %v7839 = vand.u32 2147483647, %v7486
    %vm7840 = vcmp.eq.f32.partialorder %v7839, 8.507059e+37
    %v7841 = vand.u32 %v7486, 2147483648
    %v7842 = vor.u32 1.1754944e-38, %v7841
    %v7843 = vsel %vm7840, %v7842, %v7838
    %v7844 = vmul.f32 1.0, %v7843
    %v7845 = vrcp.pop %v7487
    %v7846 = vmul.f32 %v7487, %v7845
    %v7847 = vsub.f32 1.0, %v7846
    %v7848 = vmul.f32 %v7845, %v7847
    %v7849 = vadd.f32 %v7845, %v7848
    %vm7850 = vweird.f32 %v7487
    %vm7851 = vweird.f32 %v7845
    %vm7852 = vmor %vm7850, %vm7851
    %v7853 = vsel %vm7852, %v7845, %v7849
    %v7854 = vand.u32 2147483647, %v7487
    %vm7855 = vcmp.eq.f32.partialorder %v7854, 8.507059e+37
    %v7856 = vand.u32 %v7487, 2147483648
    %v7857 = vor.u32 1.1754944e-38, %v7856
    %v7858 = vsel %vm7855, %v7857, %v7853
    %v7859 = vmul.f32 1.0, %v7858
    %v7860 = vrcp.pop %v7488
    %v7861 = vmul.f32 %v7488, %v7860
    %v7862 = vsub.f32 1.0, %v7861
    %v7863 = vmul.f32 %v7860, %v7862
    %v7864 = vadd.f32 %v7860, %v7863
    %vm7865 = vweird.f32 %v7488
    %vm7866 = vweird.f32 %v7860
    %vm7867 = vmor %vm7865, %vm7866
    %v7868 = vsel %vm7867, %v7860, %v7864
    %v7869 = vand.u32 2147483647, %v7488
    %vm7870 = vcmp.eq.f32.partialorder %v7869, 8.507059e+37
    %v7871 = vand.u32 %v7488, 2147483648
    %v7872 = vor.u32 1.1754944e-38, %v7871
    %v7873 = vsel %vm7870, %v7872, %v7868
    %v7874 = vmul.f32 1.0, %v7873
    %v7875 = vrcp.pop %v7489
    %v7876 = vmul.f32 %v7489, %v7875
    %v7877 = vsub.f32 1.0, %v7876
    %v7878 = vmul.f32 %v7875, %v7877
    %v7879 = vadd.f32 %v7875, %v7878
    %vm7880 = vweird.f32 %v7489
    %vm7881 = vweird.f32 %v7875
    %vm7882 = vmor %vm7880, %vm7881
    %v7883 = vsel %vm7882, %v7875, %v7879
    %v7884 = vand.u32 2147483647, %v7489
    %vm7885 = vcmp.eq.f32.partialorder %v7884, 8.507059e+37
    %v7886 = vand.u32 %v7489, 2147483648
    %v7887 = vor.u32 1.1754944e-38, %v7886
    %v7888 = vsel %vm7885, %v7887, %v7883
    %v7889 = vmul.f32 1.0, %v7888
    %v7890 = vrcp.pop %v7490
    %v7891 = vmul.f32 %v7490, %v7890
    %v7892 = vsub.f32 1.0, %v7891
    %v7893 = vmul.f32 %v7890, %v7892
    %v7894 = vadd.f32 %v7890, %v7893
    %vm7895 = vweird.f32 %v7490
    %vm7896 = vweird.f32 %v7890
    %vm7897 = vmor %vm7895, %vm7896
    %v7898 = vsel %vm7897, %v7890, %v7894
    %v7899 = vand.u32 2147483647, %v7490
    %vm7900 = vcmp.eq.f32.partialorder %v7899, 8.507059e+37
    %v7901 = vand.u32 %v7490, 2147483648
    %v7902 = vor.u32 1.1754944e-38, %v7901
    %v7903 = vsel %vm7900, %v7902, %v7898
    %v7904 = vmul.f32 1.0, %v7903
    %v7905 = vrcp.pop %v7491
    %v7906 = vmul.f32 %v7491, %v7905
    %v7907 = vsub.f32 1.0, %v7906
    %v7908 = vmul.f32 %v7905, %v7907
    %v7909 = vadd.f32 %v7905, %v7908
    %vm7910 = vweird.f32 %v7491
    %vm7911 = vweird.f32 %v7905
    %vm7912 = vmor %vm7910, %vm7911
    %v7913 = vsel %vm7912, %v7905, %v7909
    %v7914 = vand.u32 2147483647, %v7491
    %vm7915 = vcmp.eq.f32.partialorder %v7914, 8.507059e+37
    %v7916 = vand.u32 %v7491, 2147483648
    %v7917 = vor.u32 1.1754944e-38, %v7916
    %v7918 = vsel %vm7915, %v7917, %v7913
    %v7919 = vmul.f32 1.0, %v7918
    %v7920 = vrcp.pop %v7492
    %v7921 = vmul.f32 %v7492, %v7920
    %v7922 = vsub.f32 1.0, %v7921
    %v7923 = vmul.f32 %v7920, %v7922
    %v7924 = vadd.f32 %v7920, %v7923
    %vm7925 = vweird.f32 %v7492
    %vm7926 = vweird.f32 %v7920
    %vm7927 = vmor %vm7925, %vm7926
    %v7928 = vsel %vm7927, %v7920, %v7924
    %v7929 = vand.u32 2147483647, %v7492
    %vm7930 = vcmp.eq.f32.partialorder %v7929, 8.507059e+37
    %v7931 = vand.u32 %v7492, 2147483648
    %v7932 = vor.u32 1.1754944e-38, %v7931
    %v7933 = vsel %vm7930, %v7932, %v7928
    %v7934 = vmul.f32 1.0, %v7933
    %v7935 = vrcp.pop %v7493
    %v7936 = vmul.f32 %v7493, %v7935
    %v7937 = vsub.f32 1.0, %v7936
    %v7938 = vmul.f32 %v7935, %v7937
    %v7939 = vadd.f32 %v7935, %v7938
    %vm7940 = vweird.f32 %v7493
    %vm7941 = vweird.f32 %v7935
    %vm7942 = vmor %vm7940, %vm7941
    %v7943 = vsel %vm7942, %v7935, %v7939
    %v7944 = vand.u32 2147483647, %v7493
    %vm7945 = vcmp.eq.f32.partialorder %v7944, 8.507059e+37
    %v7946 = vand.u32 %v7493, 2147483648
    %v7947 = vor.u32 1.1754944e-38, %v7946
    %v7948 = vsel %vm7945, %v7947, %v7943
    %v7949 = vmul.f32 1.0, %v7948
    %v7950 = vrcp.pop %v7494
    %v7951 = vmul.f32 %v7494, %v7950
    %v7952 = vsub.f32 1.0, %v7951
    %v7953 = vmul.f32 %v7950, %v7952
    %v7954 = vadd.f32 %v7950, %v7953
    %vm7955 = vweird.f32 %v7494
    %vm7956 = vweird.f32 %v7950
    %vm7957 = vmor %vm7955, %vm7956
    %v7958 = vsel %vm7957, %v7950, %v7954
    %v7959 = vand.u32 2147483647, %v7494
    %vm7960 = vcmp.eq.f32.partialorder %v7959, 8.507059e+37
    %v7961 = vand.u32 %v7494, 2147483648
    %v7962 = vor.u32 1.1754944e-38, %v7961
    %v7963 = vsel %vm7960, %v7962, %v7958
    %v7964 = vmul.f32 1.0, %v7963
    %v7965 = vrcp.pop %v7495
    %v7966 = vmul.f32 %v7495, %v7965
    %v7967 = vsub.f32 1.0, %v7966
    %v7968 = vmul.f32 %v7965, %v7967
    %v7969 = vadd.f32 %v7965, %v7968
    %vm7970 = vweird.f32 %v7495
    %vm7971 = vweird.f32 %v7965
    %vm7972 = vmor %vm7970, %vm7971
    %v7973 = vsel %vm7972, %v7965, %v7969
    %v7974 = vand.u32 2147483647, %v7495
    %vm7975 = vcmp.eq.f32.partialorder %v7974, 8.507059e+37
    %v7976 = vand.u32 %v7495, 2147483648
    %v7977 = vor.u32 1.1754944e-38, %v7976
    %v7978 = vsel %vm7975, %v7977, %v7973
    %v7979 = vmul.f32 1.0, %v7978
    %v7980 = vrcp.pop %v7496
    %v7981 = vmul.f32 %v7496, %v7980
    %v7982 = vsub.f32 1.0, %v7981
    %v7983 = vmul.f32 %v7980, %v7982
    %v7984 = vadd.f32 %v7980, %v7983
    %vm7985 = vweird.f32 %v7496
    %vm7986 = vweird.f32 %v7980
    %vm7987 = vmor %vm7985, %vm7986
    %v7988 = vsel %vm7987, %v7980, %v7984
    %v7989 = vand.u32 2147483647, %v7496
    %vm7990 = vcmp.eq.f32.partialorder %v7989, 8.507059e+37
    %v7991 = vand.u32 %v7496, 2147483648
    %v7992 = vor.u32 1.1754944e-38, %v7991
    %v7993 = vsel %vm7990, %v7992, %v7988
    %v7994 = vmul.f32 1.0, %v7993
    %v7995 = vrcp.pop %v7497
    %v7996 = vmul.f32 %v7497, %v7995
    %v7997 = vsub.f32 1.0, %v7996
    %v7998 = vmul.f32 %v7995, %v7997
    %v7999 = vadd.f32 %v7995, %v7998
    %vm8000 = vweird.f32 %v7497
    %vm8001 = vweird.f32 %v7995
    %vm8002 = vmor %vm8000, %vm8001
    %v8003 = vsel %vm8002, %v7995, %v7999
    %v8004 = vand.u32 2147483647, %v7497
    %vm8005 = vcmp.eq.f32.partialorder %v8004, 8.507059e+37
    %v8006 = vand.u32 %v7497, 2147483648
    %v8007 = vor.u32 1.1754944e-38, %v8006
    %v8008 = vsel %vm8005, %v8007, %v8003
    %v8009 = vmul.f32 1.0, %v8008
    %v8010 = vrcp.pop %v7498
    %v8011 = vmul.f32 %v7498, %v8010
    %v8012 = vsub.f32 1.0, %v8011
    %v8013 = vmul.f32 %v8010, %v8012
    %v8014 = vadd.f32 %v8010, %v8013
    %vm8015 = vweird.f32 %v7498
    %vm8016 = vweird.f32 %v8010
    %vm8017 = vmor %vm8015, %vm8016
    %v8018 = vsel %vm8017, %v8010, %v8014
    %v8019 = vand.u32 2147483647, %v7498
    %vm8020 = vcmp.eq.f32.partialorder %v8019, 8.507059e+37
    %v8021 = vand.u32 %v7498, 2147483648
    %v8022 = vor.u32 1.1754944e-38, %v8021
    %v8023 = vsel %vm8020, %v8022, %v8018
    %v8024 = vmul.f32 1.0, %v8023
    %v8025 = vrcp.pop %v7499
    %v8026 = vmul.f32 %v7499, %v8025
    %v8027 = vsub.f32 1.0, %v8026
    %v8028 = vmul.f32 %v8025, %v8027
    %v8029 = vadd.f32 %v8025, %v8028
    %vm8030 = vweird.f32 %v7499
    %vm8031 = vweird.f32 %v8025
    %vm8032 = vmor %vm8030, %vm8031
    %v8033 = vsel %vm8032, %v8025, %v8029
    %v8034 = vand.u32 2147483647, %v7499
    %vm8035 = vcmp.eq.f32.partialorder %v8034, 8.507059e+37
    %v8036 = vand.u32 %v7499, 2147483648
    %v8037 = vor.u32 1.1754944e-38, %v8036
    %v8038 = vsel %vm8035, %v8037, %v8033
    %v8039 = vmul.f32 1.0, %v8038
    %v8040 = vrcp.pop %v7500
    %v8041 = vmul.f32 %v7500, %v8040
    %v8042 = vsub.f32 1.0, %v8041
    %v8043 = vmul.f32 %v8040, %v8042
    %v8044 = vadd.f32 %v8040, %v8043
    %vm8045 = vweird.f32 %v7500
    %vm8046 = vweird.f32 %v8040
    %vm8047 = vmor %vm8045, %vm8046
    %v8048 = vsel %vm8047, %v8040, %v8044
    %v8049 = vand.u32 2147483647, %v7500
    %vm8050 = vcmp.eq.f32.partialorder %v8049, 8.507059e+37
    %v8051 = vand.u32 %v7500, 2147483648
    %v8052 = vor.u32 1.1754944e-38, %v8051
    %v8053 = vsel %vm8050, %v8052, %v8048
    %v8054 = vmul.f32 1.0, %v8053
    %v8055 = vrcp.pop %v7501
    %v8056 = vmul.f32 %v7501, %v8055
    %v8057 = vsub.f32 1.0, %v8056
    %v8058 = vmul.f32 %v8055, %v8057
    %v8059 = vadd.f32 %v8055, %v8058
    %vm8060 = vweird.f32 %v7501
    %vm8061 = vweird.f32 %v8055
    %vm8062 = vmor %vm8060, %vm8061
    %v8063 = vsel %vm8062, %v8055, %v8059
    %v8064 = vand.u32 2147483647, %v7501
    %vm8065 = vcmp.eq.f32.partialorder %v8064, 8.507059e+37
    %v8066 = vand.u32 %v7501, 2147483648
    %v8067 = vor.u32 1.1754944e-38, %v8066
    %v8068 = vsel %vm8065, %v8067, %v8063
    %v8069 = vmul.f32 1.0, %v8068
    %v8070 = vrcp.pop %v7502
    %v8071 = vmul.f32 %v7502, %v8070
    %v8072 = vsub.f32 1.0, %v8071
    %v8073 = vmul.f32 %v8070, %v8072
    %v8074 = vadd.f32 %v8070, %v8073
    %vm8075 = vweird.f32 %v7502
    %vm8076 = vweird.f32 %v8070
    %vm8077 = vmor %vm8075, %vm8076
    %v8078 = vsel %vm8077, %v8070, %v8074
    %v8079 = vand.u32 2147483647, %v7502
    %vm8080 = vcmp.eq.f32.partialorder %v8079, 8.507059e+37
    %v8081 = vand.u32 %v7502, 2147483648
    %v8082 = vor.u32 1.1754944e-38, %v8081
    %v8083 = vsel %vm8080, %v8082, %v8078
    %v8084 = vmul.f32 1.0, %v8083
    %v8085 = vrcp.pop %v7503
    %v8086 = vmul.f32 %v7503, %v8085
    %v8087 = vsub.f32 1.0, %v8086
    %v8088 = vmul.f32 %v8085, %v8087
    %v8089 = vadd.f32 %v8085, %v8088
    %vm8090 = vweird.f32 %v7503
    %vm8091 = vweird.f32 %v8085
    %vm8092 = vmor %vm8090, %vm8091
    %v8093 = vsel %vm8092, %v8085, %v8089
    %v8094 = vand.u32 2147483647, %v7503
    %vm8095 = vcmp.eq.f32.partialorder %v8094, 8.507059e+37
    %v8096 = vand.u32 %v7503, 2147483648
    %v8097 = vor.u32 1.1754944e-38, %v8096
    %v8098 = vsel %vm8095, %v8097, %v8093
    %v8099 = vmul.f32 1.0, %v8098
    %v8100 = vrcp.pop %v7504
    %v8101 = vmul.f32 %v7504, %v8100
    %v8102 = vsub.f32 1.0, %v8101
    %v8103 = vmul.f32 %v8100, %v8102
    %v8104 = vadd.f32 %v8100, %v8103
    %vm8105 = vweird.f32 %v7504
    %vm8106 = vweird.f32 %v8100
    %vm8107 = vmor %vm8105, %vm8106
    %v8108 = vsel %vm8107, %v8100, %v8104
    %v8109 = vand.u32 2147483647, %v7504
    %vm8110 = vcmp.eq.f32.partialorder %v8109, 8.507059e+37
    %v8111 = vand.u32 %v7504, 2147483648
    %v8112 = vor.u32 1.1754944e-38, %v8111
    %v8113 = vsel %vm8110, %v8112, %v8108
    %v8114 = vmul.f32 1.0, %v8113
    %v8115 = vrcp.pop %v7505
    %v8116 = vmul.f32 %v7505, %v8115
    %v8117 = vsub.f32 1.0, %v8116
    %v8118 = vmul.f32 %v8115, %v8117
    %v8119 = vadd.f32 %v8115, %v8118
    %vm8120 = vweird.f32 %v7505
    %vm8121 = vweird.f32 %v8115
    %vm8122 = vmor %vm8120, %vm8121
    %v8123 = vsel %vm8122, %v8115, %v8119
    %v8124 = vand.u32 2147483647, %v7505
    %vm8125 = vcmp.eq.f32.partialorder %v8124, 8.507059e+37
    %v8126 = vand.u32 %v7505, 2147483648
    %v8127 = vor.u32 1.1754944e-38, %v8126
    %v8128 = vsel %vm8125, %v8127, %v8123
    %v8129 = vmul.f32 1.0, %v8128
    %v8130 = vrcp.pop %v7506
    %v8131 = vmul.f32 %v7506, %v8130
    %v8132 = vsub.f32 1.0, %v8131
    %v8133 = vmul.f32 %v8130, %v8132
    %v8134 = vadd.f32 %v8130, %v8133
    %vm8135 = vweird.f32 %v7506
    %vm8136 = vweird.f32 %v8130
    %vm8137 = vmor %vm8135, %vm8136
    %v8138 = vsel %vm8137, %v8130, %v8134
    %v8139 = vand.u32 2147483647, %v7506
    %vm8140 = vcmp.eq.f32.partialorder %v8139, 8.507059e+37
    %v8141 = vand.u32 %v7506, 2147483648
    %v8142 = vor.u32 1.1754944e-38, %v8141
    %v8143 = vsel %vm8140, %v8142, %v8138
    %v8144 = vmul.f32 1.0, %v8143
    %v8145 = vrcp.pop %v7507
    %v8146 = vmul.f32 %v7507, %v8145
    %v8147 = vsub.f32 1.0, %v8146
    %v8148 = vmul.f32 %v8145, %v8147
    %v8149 = vadd.f32 %v8145, %v8148
    %vm8150 = vweird.f32 %v7507
    %vm8151 = vweird.f32 %v8145
    %vm8152 = vmor %vm8150, %vm8151
    %v8153 = vsel %vm8152, %v8145, %v8149
    %v8154 = vand.u32 2147483647, %v7507
    %vm8155 = vcmp.eq.f32.partialorder %v8154, 8.507059e+37
    %v8156 = vand.u32 %v7507, 2147483648
    %v8157 = vor.u32 1.1754944e-38, %v8156
    %v8158 = vsel %vm8155, %v8157, %v8153
    %v8159 = vmul.f32 1.0, %v8158
    %v8160 = vrcp.pop %v7508
    %v8161 = vmul.f32 %v7508, %v8160
    %v8162 = vsub.f32 1.0, %v8161
    %v8163 = vmul.f32 %v8160, %v8162
    %v8164 = vadd.f32 %v8160, %v8163
    %vm8165 = vweird.f32 %v7508
    %vm8166 = vweird.f32 %v8160
    %vm8167 = vmor %vm8165, %vm8166
    %v8168 = vsel %vm8167, %v8160, %v8164
    %v8169 = vand.u32 2147483647, %v7508
    %vm8170 = vcmp.eq.f32.partialorder %v8169, 8.507059e+37
    %v8171 = vand.u32 %v7508, 2147483648
    %v8172 = vor.u32 1.1754944e-38, %v8171
    %v8173 = vsel %vm8170, %v8172, %v8168
    %v8174 = vmul.f32 1.0, %v8173
    %v8175 = vrcp.pop %v7509
    %v8176 = vmul.f32 %v7509, %v8175
    %v8177 = vsub.f32 1.0, %v8176
    %v8178 = vmul.f32 %v8175, %v8177
    %v8179 = vadd.f32 %v8175, %v8178
    %vm8180 = vweird.f32 %v7509
    %vm8181 = vweird.f32 %v8175
    %vm8182 = vmor %vm8180, %vm8181
    %v8183 = vsel %vm8182, %v8175, %v8179
    %v8184 = vand.u32 2147483647, %v7509
    %vm8185 = vcmp.eq.f32.partialorder %v8184, 8.507059e+37
    %v8186 = vand.u32 %v7509, 2147483648
    %v8187 = vor.u32 1.1754944e-38, %v8186
    %v8188 = vsel %vm8185, %v8187, %v8183
    %v8189 = vmul.f32 1.0, %v8188
    %v8190 = vrcp.pop %v7510
    %v8191 = vmul.f32 %v7510, %v8190
    %v8192 = vsub.f32 1.0, %v8191
    %v8193 = vmul.f32 %v8190, %v8192
    %v8194 = vadd.f32 %v8190, %v8193
    %vm8195 = vweird.f32 %v7510
    %vm8196 = vweird.f32 %v8190
    %vm8197 = vmor %vm8195, %vm8196
    %v8198 = vsel %vm8197, %v8190, %v8194
    %v8199 = vand.u32 2147483647, %v7510
    %vm8200 = vcmp.eq.f32.partialorder %v8199, 8.507059e+37
    %v8201 = vand.u32 %v7510, 2147483648
    %v8202 = vor.u32 1.1754944e-38, %v8201
    %v8203 = vsel %vm8200, %v8202, %v8198
    %v8204 = vmul.f32 1.0, %v8203
    %v8205 = vrcp.pop %v7511
    %v8206 = vmul.f32 %v7511, %v8205
    %v8207 = vsub.f32 1.0, %v8206
    %v8208 = vmul.f32 %v8205, %v8207
    %v8209 = vadd.f32 %v8205, %v8208
    %vm8210 = vweird.f32 %v7511
    %vm8211 = vweird.f32 %v8205
    %vm8212 = vmor %vm8210, %vm8211
    %v8213 = vsel %vm8212, %v8205, %v8209
    %v8214 = vand.u32 2147483647, %v7511
    %vm8215 = vcmp.eq.f32.partialorder %v8214, 8.507059e+37
    %v8216 = vand.u32 %v7511, 2147483648
    %v8217 = vor.u32 1.1754944e-38, %v8216
    %v8218 = vsel %vm8215, %v8217, %v8213
    %v8219 = vmul.f32 1.0, %v8218
    %v8220 = vrcp.pop %v7512
    %v8221 = vmul.f32 %v7512, %v8220
    %v8222 = vsub.f32 1.0, %v8221
    %v8223 = vmul.f32 %v8220, %v8222
    %v8224 = vadd.f32 %v8220, %v8223
    %vm8225 = vweird.f32 %v7512
    %vm8226 = vweird.f32 %v8220
    %vm8227 = vmor %vm8225, %vm8226
    %v8228 = vsel %vm8227, %v8220, %v8224
    %v8229 = vand.u32 2147483647, %v7512
    %vm8230 = vcmp.eq.f32.partialorder %v8229, 8.507059e+37
    %v8231 = vand.u32 %v7512, 2147483648
    %v8232 = vor.u32 1.1754944e-38, %v8231
    %v8233 = vsel %vm8230, %v8232, %v8228
    %v8234 = vmul.f32 1.0, %v8233
    %v8235 = vrcp.pop %v7513
    %v8236 = vmul.f32 %v7513, %v8235
    %v8237 = vsub.f32 1.0, %v8236
    %v8238 = vmul.f32 %v8235, %v8237
    %v8239 = vadd.f32 %v8235, %v8238
    %vm8240 = vweird.f32 %v7513
    %vm8241 = vweird.f32 %v8235
    %vm8242 = vmor %vm8240, %vm8241
    %v8243 = vsel %vm8242, %v8235, %v8239
    %v8244 = vand.u32 2147483647, %v7513
    %vm8245 = vcmp.eq.f32.partialorder %v8244, 8.507059e+37
    %v8246 = vand.u32 %v7513, 2147483648
    %v8247 = vor.u32 1.1754944e-38, %v8246
    %v8248 = vsel %vm8245, %v8247, %v8243
    %v8249 = vmul.f32 1.0, %v8248
    %v8250 = vrcp.pop %v7514
    %v8251 = vmul.f32 %v7514, %v8250
    %v8252 = vsub.f32 1.0, %v8251
    %v8253 = vmul.f32 %v8250, %v8252
    %v8254 = vadd.f32 %v8250, %v8253
    %vm8255 = vweird.f32 %v7514
    %vm8256 = vweird.f32 %v8250
    %vm8257 = vmor %vm8255, %vm8256
    %v8258 = vsel %vm8257, %v8250, %v8254
    %v8259 = vand.u32 2147483647, %v7514
    %vm8260 = vcmp.eq.f32.partialorder %v8259, 8.507059e+37
    %v8261 = vand.u32 %v7514, 2147483648
    %v8262 = vor.u32 1.1754944e-38, %v8261
    %v8263 = vsel %vm8260, %v8262, %v8258
    %v8264 = vmul.f32 1.0, %v8263
    %v8265 = vrcp.pop %v7515
    %v8266 = vmul.f32 %v7515, %v8265
    %v8267 = vsub.f32 1.0, %v8266
    %v8268 = vmul.f32 %v8265, %v8267
    %v8269 = vadd.f32 %v8265, %v8268
    %vm8270 = vweird.f32 %v7515
    %vm8271 = vweird.f32 %v8265
    %vm8272 = vmor %vm8270, %vm8271
    %v8273 = vsel %vm8272, %v8265, %v8269
    %v8274 = vand.u32 2147483647, %v7515
    %vm8275 = vcmp.eq.f32.partialorder %v8274, 8.507059e+37
    %v8276 = vand.u32 %v7515, 2147483648
    %v8277 = vor.u32 1.1754944e-38, %v8276
    %v8278 = vsel %vm8275, %v8277, %v8273
    %v8279 = vmul.f32 1.0, %v8278
    %v8280 = vrcp.pop %v7516
    %v8281 = vmul.f32 %v7516, %v8280
    %v8282 = vsub.f32 1.0, %v8281
    %v8283 = vmul.f32 %v8280, %v8282
    %v8284 = vadd.f32 %v8280, %v8283
    %vm8285 = vweird.f32 %v7516
    %vm8286 = vweird.f32 %v8280
    %vm8287 = vmor %vm8285, %vm8286
    %v8288 = vsel %vm8287, %v8280, %v8284
    %v8289 = vand.u32 2147483647, %v7516
    %vm8290 = vcmp.eq.f32.partialorder %v8289, 8.507059e+37
    %v8291 = vand.u32 %v7516, 2147483648
    %v8292 = vor.u32 1.1754944e-38, %v8291
    %v8293 = vsel %vm8290, %v8292, %v8288
    %v8294 = vmul.f32 1.0, %v8293
    %v8295 = vrcp.pop %v7517
    %v8296 = vmul.f32 %v7517, %v8295
    %v8297 = vsub.f32 1.0, %v8296
    %v8298 = vmul.f32 %v8295, %v8297
    %v8299 = vadd.f32 %v8295, %v8298
    %vm8300 = vweird.f32 %v7517
    %vm8301 = vweird.f32 %v8295
    %vm8302 = vmor %vm8300, %vm8301
    %v8303 = vsel %vm8302, %v8295, %v8299
    %v8304 = vand.u32 2147483647, %v7517
    %vm8305 = vcmp.eq.f32.partialorder %v8304, 8.507059e+37
    %v8306 = vand.u32 %v7517, 2147483648
    %v8307 = vor.u32 1.1754944e-38, %v8306
    %v8308 = vsel %vm8305, %v8307, %v8303
    %v8309 = vmul.f32 1.0, %v8308
    %v8310 = vrcp.pop %v7518
    %v8311 = vmul.f32 %v7518, %v8310
    %v8312 = vsub.f32 1.0, %v8311
    %v8313 = vmul.f32 %v8310, %v8312
    %v8314 = vadd.f32 %v8310, %v8313
    %vm8315 = vweird.f32 %v7518
    %vm8316 = vweird.f32 %v8310
    %vm8317 = vmor %vm8315, %vm8316
    %v8318 = vsel %vm8317, %v8310, %v8314
    %v8319 = vand.u32 2147483647, %v7518
    %vm8320 = vcmp.eq.f32.partialorder %v8319, 8.507059e+37
    %v8321 = vand.u32 %v7518, 2147483648
    %v8322 = vor.u32 1.1754944e-38, %v8321
    %v8323 = vsel %vm8320, %v8322, %v8318
    %v8324 = vmul.f32 1.0, %v8323
    %v8325 = vrcp.pop %v7519
    %v8326 = vmul.f32 %v7519, %v8325
    %v8327 = vsub.f32 1.0, %v8326
    %v8328 = vmul.f32 %v8325, %v8327
    %v8329 = vadd.f32 %v8325, %v8328
    %vm8330 = vweird.f32 %v7519
    %vm8331 = vweird.f32 %v8325
    %vm8332 = vmor %vm8330, %vm8331
    %v8333 = vsel %vm8332, %v8325, %v8329
    %v8334 = vand.u32 2147483647, %v7519
    %vm8335 = vcmp.eq.f32.partialorder %v8334, 8.507059e+37
    %v8336 = vand.u32 %v7519, 2147483648
    %v8337 = vor.u32 1.1754944e-38, %v8336
    %v8338 = vsel %vm8335, %v8337, %v8333
    %v8339 = vmul.f32 1.0, %v8338
    %v8340 = vrcp.pop %v7520
    %v8341 = vmul.f32 %v7520, %v8340
    %v8342 = vsub.f32 1.0, %v8341
    %v8343 = vmul.f32 %v8340, %v8342
    %v8344 = vadd.f32 %v8340, %v8343
    %vm8345 = vweird.f32 %v7520
    %vm8346 = vweird.f32 %v8340
    %vm8347 = vmor %vm8345, %vm8346
    %v8348 = vsel %vm8347, %v8340, %v8344
    %v8349 = vand.u32 2147483647, %v7520
    %vm8350 = vcmp.eq.f32.partialorder %v8349, 8.507059e+37
    %v8351 = vand.u32 %v7520, 2147483648
    %v8352 = vor.u32 1.1754944e-38, %v8351
    %v8353 = vsel %vm8350, %v8352, %v8348
    %v8354 = vmul.f32 1.0, %v8353
    %v8355 = vrcp.pop %v7521
    %v8356 = vmul.f32 %v7521, %v8355
    %v8357 = vsub.f32 1.0, %v8356
    %v8358 = vmul.f32 %v8355, %v8357
    %v8359 = vadd.f32 %v8355, %v8358
    %vm8360 = vweird.f32 %v7521
    %vm8361 = vweird.f32 %v8355
    %vm8362 = vmor %vm8360, %vm8361
    %v8363 = vsel %vm8362, %v8355, %v8359
    %v8364 = vand.u32 2147483647, %v7521
    %vm8365 = vcmp.eq.f32.partialorder %v8364, 8.507059e+37
    %v8366 = vand.u32 %v7521, 2147483648
    %v8367 = vor.u32 1.1754944e-38, %v8366
    %v8368 = vsel %vm8365, %v8367, %v8363
    %v8369 = vmul.f32 1.0, %v8368
    %v8370 = vrcp.pop %v7522
    %v8371 = vmul.f32 %v7522, %v8370
    %v8372 = vsub.f32 1.0, %v8371
    %v8373 = vmul.f32 %v8370, %v8372
    %v8374 = vadd.f32 %v8370, %v8373
    %vm8375 = vweird.f32 %v7522
    %vm8376 = vweird.f32 %v8370
    %vm8377 = vmor %vm8375, %vm8376
    %v8378 = vsel %vm8377, %v8370, %v8374
    %v8379 = vand.u32 2147483647, %v7522
    %vm8380 = vcmp.eq.f32.partialorder %v8379, 8.507059e+37
    %v8381 = vand.u32 %v7522, 2147483648
    %v8382 = vor.u32 1.1754944e-38, %v8381
    %v8383 = vsel %vm8380, %v8382, %v8378
    %v8384 = vmul.f32 1.0, %v8383
    %v8385 = vrcp.pop %v7523
    %v8386 = vmul.f32 %v7523, %v8385
    %v8387 = vsub.f32 1.0, %v8386
    %v8388 = vmul.f32 %v8385, %v8387
    %v8389 = vadd.f32 %v8385, %v8388
    %vm8390 = vweird.f32 %v7523
    %vm8391 = vweird.f32 %v8385
    %vm8392 = vmor %vm8390, %vm8391
    %v8393 = vsel %vm8392, %v8385, %v8389
    %v8394 = vand.u32 2147483647, %v7523
    %vm8395 = vcmp.eq.f32.partialorder %v8394, 8.507059e+37
    %v8396 = vand.u32 %v7523, 2147483648
    %v8397 = vor.u32 1.1754944e-38, %v8396
    %v8398 = vsel %vm8395, %v8397, %v8393
    %v8399 = vmul.f32 1.0, %v8398
    %v8400 = vrcp.pop %v7524
    %v8401 = vmul.f32 %v7524, %v8400
    %v8402 = vsub.f32 1.0, %v8401
    %v8403 = vmul.f32 %v8400, %v8402
    %v8404 = vadd.f32 %v8400, %v8403
    %vm8405 = vweird.f32 %v7524
    %vm8406 = vweird.f32 %v8400
    %vm8407 = vmor %vm8405, %vm8406
    %v8408 = vsel %vm8407, %v8400, %v8404
    %v8409 = vand.u32 2147483647, %v7524
    %vm8410 = vcmp.eq.f32.partialorder %v8409, 8.507059e+37
    %v8411 = vand.u32 %v7524, 2147483648
    %v8412 = vor.u32 1.1754944e-38, %v8411
    %v8413 = vsel %vm8410, %v8412, %v8408
    %v8414 = vmul.f32 1.0, %v8413
    %v8415 = vrcp.pop %v7525
    %v8416 = vmul.f32 %v7525, %v8415
    %v8417 = vsub.f32 1.0, %v8416
    %v8418 = vmul.f32 %v8415, %v8417
    %v8419 = vadd.f32 %v8415, %v8418
    %vm8420 = vweird.f32 %v7525
    %vm8421 = vweird.f32 %v8415
    %vm8422 = vmor %vm8420, %vm8421
    %v8423 = vsel %vm8422, %v8415, %v8419
    %v8424 = vand.u32 2147483647, %v7525
    %vm8425 = vcmp.eq.f32.partialorder %v8424, 8.507059e+37
    %v8426 = vand.u32 %v7525, 2147483648
    %v8427 = vor.u32 1.1754944e-38, %v8426
    %v8428 = vsel %vm8425, %v8427, %v8423
    %v8429 = vmul.f32 1.0, %v8428
    %v8430 = vrcp.pop %v7526
    %v8431 = vmul.f32 %v7526, %v8430
    %v8432 = vsub.f32 1.0, %v8431
    %v8433 = vmul.f32 %v8430, %v8432
    %v8434 = vadd.f32 %v8430, %v8433
    %vm8435 = vweird.f32 %v7526
    %vm8436 = vweird.f32 %v8430
    %vm8437 = vmor %vm8435, %vm8436
    %v8438 = vsel %vm8437, %v8430, %v8434
    %v8439 = vand.u32 2147483647, %v7526
    %vm8440 = vcmp.eq.f32.partialorder %v8439, 8.507059e+37
    %v8441 = vand.u32 %v7526, 2147483648
    %v8442 = vor.u32 1.1754944e-38, %v8441
    %v8443 = vsel %vm8440, %v8442, %v8438
    %v8444 = vmul.f32 1.0, %v8443
    %v8445 = vrcp.pop %v7527
    %v8446 = vmul.f32 %v7527, %v8445
    %v8447 = vsub.f32 1.0, %v8446
    %v8448 = vmul.f32 %v8445, %v8447
    %v8449 = vadd.f32 %v8445, %v8448
    %vm8450 = vweird.f32 %v7527
    %vm8451 = vweird.f32 %v8445
    %vm8452 = vmor %vm8450, %vm8451
    %v8453 = vsel %vm8452, %v8445, %v8449
    %v8454 = vand.u32 2147483647, %v7527
    %vm8455 = vcmp.eq.f32.partialorder %v8454, 8.507059e+37
    %v8456 = vand.u32 %v7527, 2147483648
    %v8457 = vor.u32 1.1754944e-38, %v8456
    %v8458 = vsel %vm8455, %v8457, %v8453
    %v8459 = vmul.f32 1.0, %v8458
    %v8460 = vrcp.pop %v7528
    %v8461 = vmul.f32 %v7528, %v8460
    %v8462 = vsub.f32 1.0, %v8461
    %v8463 = vmul.f32 %v8460, %v8462
    %v8464 = vadd.f32 %v8460, %v8463
    %vm8465 = vweird.f32 %v7528
    %vm8466 = vweird.f32 %v8460
    %vm8467 = vmor %vm8465, %vm8466
    %v8468 = vsel %vm8467, %v8460, %v8464
    %v8469 = vand.u32 2147483647, %v7528
    %vm8470 = vcmp.eq.f32.partialorder %v8469, 8.507059e+37
    %v8471 = vand.u32 %v7528, 2147483648
    %v8472 = vor.u32 1.1754944e-38, %v8471
    %v8473 = vsel %vm8470, %v8472, %v8468
    %v8474 = vmul.f32 1.0, %v8473
    %v8475 = vrcp.pop %v7529
    %v8476 = vmul.f32 %v7529, %v8475
    %v8477 = vsub.f32 1.0, %v8476
    %v8478 = vmul.f32 %v8475, %v8477
    %v8479 = vadd.f32 %v8475, %v8478
    %vm8480 = vweird.f32 %v7529
    %vm8481 = vweird.f32 %v8475
    %vm8482 = vmor %vm8480, %vm8481
    %v8483 = vsel %vm8482, %v8475, %v8479
    %v8484 = vand.u32 2147483647, %v7529
    %vm8485 = vcmp.eq.f32.partialorder %v8484, 8.507059e+37
    %v8486 = vand.u32 %v7529, 2147483648
    %v8487 = vor.u32 1.1754944e-38, %v8486
    %v8488 = vsel %vm8485, %v8487, %v8483
    %v8489 = vmul.f32 1.0, %v8488
    %8491 = vset.pattern.permute.xlu0 40
    %8492 = vperm.xlu0 %8491, %v7544
    %v8493 = vpop.permute.xlu0 %8492
    %8496 = vset.pattern.permute.xlu0 40
    %8497 = vperm.xlu0 %8496, %v7559
    %v8498 = vpop.permute.xlu0 %8497
    %8501 = vset.pattern.permute.xlu0 40
    %8502 = vperm.xlu0 %8501, %v7574
    %v8503 = vpop.permute.xlu0 %8502
    %8506 = vset.pattern.permute.xlu0 40
    %8507 = vperm.xlu0 %8506, %v7589
    %v8508 = vpop.permute.xlu0 %8507
    %8511 = vset.pattern.permute.xlu0 40
    %8512 = vperm.xlu0 %8511, %v7604
    %v8513 = vpop.permute.xlu0 %8512
    %8516 = vset.pattern.permute.xlu0 40
    %8517 = vperm.xlu0 %8516, %v7619
    %v8518 = vpop.permute.xlu0 %8517
    %8521 = vset.pattern.permute.xlu0 40
    %8522 = vperm.xlu0 %8521, %v7634
    %v8523 = vpop.permute.xlu0 %8522
    %8526 = vset.pattern.permute.xlu0 40
    %8527 = vperm.xlu0 %8526, %v7649
    %v8528 = vpop.permute.xlu0 %8527
    %8531 = vset.pattern.permute.xlu0 40
    %8532 = vperm.xlu0 %8531, %v7664
    %v8533 = vpop.permute.xlu0 %8532
    %8536 = vset.pattern.permute.xlu0 40
    %8537 = vperm.xlu0 %8536, %v7679
    %v8538 = vpop.permute.xlu0 %8537
    %8541 = vset.pattern.permute.xlu0 40
    %8542 = vperm.xlu0 %8541, %v7694
    %v8543 = vpop.permute.xlu0 %8542
    %8546 = vset.pattern.permute.xlu0 40
    %8547 = vperm.xlu0 %8546, %v7709
    %v8548 = vpop.permute.xlu0 %8547
    %8551 = vset.pattern.permute.xlu0 40
    %8552 = vperm.xlu0 %8551, %v7724
    %v8553 = vpop.permute.xlu0 %8552
    %8556 = vset.pattern.permute.xlu0 40
    %8557 = vperm.xlu0 %8556, %v7739
    %v8558 = vpop.permute.xlu0 %8557
    %8561 = vset.pattern.permute.xlu0 40
    %8562 = vperm.xlu0 %8561, %v7754
    %v8563 = vpop.permute.xlu0 %8562
    %8566 = vset.pattern.permute.xlu0 40
    %8567 = vperm.xlu0 %8566, %v7769
    %v8568 = vpop.permute.xlu0 %8567
    %8571 = vset.pattern.permute.xlu0 40
    %8572 = vperm.xlu0 %8571, %v7784
    %v8573 = vpop.permute.xlu0 %8572
    %8576 = vset.pattern.permute.xlu0 40
    %8577 = vperm.xlu0 %8576, %v7799
    %v8578 = vpop.permute.xlu0 %8577
    %8581 = vset.pattern.permute.xlu0 40
    %8582 = vperm.xlu0 %8581, %v7814
    %v8583 = vpop.permute.xlu0 %8582
    %8586 = vset.pattern.permute.xlu0 40
    %8587 = vperm.xlu0 %8586, %v7829
    %v8588 = vpop.permute.xlu0 %8587
    %8591 = vset.pattern.permute.xlu0 40
    %8592 = vperm.xlu0 %8591, %v7844
    %v8593 = vpop.permute.xlu0 %8592
    %8596 = vset.pattern.permute.xlu0 40
    %8597 = vperm.xlu0 %8596, %v7859
    %v8598 = vpop.permute.xlu0 %8597
    %8601 = vset.pattern.permute.xlu0 40
    %8602 = vperm.xlu0 %8601, %v7874
    %v8603 = vpop.permute.xlu0 %8602
    %8606 = vset.pattern.permute.xlu0 40
    %8607 = vperm.xlu0 %8606, %v7889
    %v8608 = vpop.permute.xlu0 %8607
    %8611 = vset.pattern.permute.xlu0 40
    %8612 = vperm.xlu0 %8611, %v7904
    %v8613 = vpop.permute.xlu0 %8612
    %8616 = vset.pattern.permute.xlu0 40
    %8617 = vperm.xlu0 %8616, %v7919
    %v8618 = vpop.permute.xlu0 %8617
    %8621 = vset.pattern.permute.xlu0 40
    %8622 = vperm.xlu0 %8621, %v7934
    %v8623 = vpop.permute.xlu0 %8622
    %8626 = vset.pattern.permute.xlu0 40
    %8627 = vperm.xlu0 %8626, %v7949
    %v8628 = vpop.permute.xlu0 %8627
    %8631 = vset.pattern.permute.xlu0 40
    %8632 = vperm.xlu0 %8631, %v7964
    %v8633 = vpop.permute.xlu0 %8632
    %8636 = vset.pattern.permute.xlu0 40
    %8637 = vperm.xlu0 %8636, %v7979
    %v8638 = vpop.permute.xlu0 %8637
    %8641 = vset.pattern.permute.xlu0 40
    %8642 = vperm.xlu0 %8641, %v7994
    %v8643 = vpop.permute.xlu0 %8642
    %8646 = vset.pattern.permute.xlu0 40
    %8647 = vperm.xlu0 %8646, %v8009
    %v8648 = vpop.permute.xlu0 %8647
    %8651 = vset.pattern.permute.xlu0 40
    %8652 = vperm.xlu0 %8651, %v8024
    %v8653 = vpop.permute.xlu0 %8652
    %8656 = vset.pattern.permute.xlu0 40
    %8657 = vperm.xlu0 %8656, %v8039
    %v8658 = vpop.permute.xlu0 %8657
    %8661 = vset.pattern.permute.xlu0 40
    %8662 = vperm.xlu0 %8661, %v8054
    %v8663 = vpop.permute.xlu0 %8662
    %8666 = vset.pattern.permute.xlu0 40
    %8667 = vperm.xlu0 %8666, %v8069
    %v8668 = vpop.permute.xlu0 %8667
    %8671 = vset.pattern.permute.xlu0 40
    %8672 = vperm.xlu0 %8671, %v8084
    %v8673 = vpop.permute.xlu0 %8672
    %8676 = vset.pattern.permute.xlu0 40
    %8677 = vperm.xlu0 %8676, %v8099
    %v8678 = vpop.permute.xlu0 %8677
    %8681 = vset.pattern.permute.xlu0 40
    %8682 = vperm.xlu0 %8681, %v8114
    %v8683 = vpop.permute.xlu0 %8682
    %8686 = vset.pattern.permute.xlu0 40
    %8687 = vperm.xlu0 %8686, %v8129
    %v8688 = vpop.permute.xlu0 %8687
    %8691 = vset.pattern.permute.xlu0 40
    %8692 = vperm.xlu0 %8691, %v8144
    %v8693 = vpop.permute.xlu0 %8692
    %8696 = vset.pattern.permute.xlu0 40
    %8697 = vperm.xlu0 %8696, %v8159
    %v8698 = vpop.permute.xlu0 %8697
    %8701 = vset.pattern.permute.xlu0 40
    %8702 = vperm.xlu0 %8701, %v8174
    %v8703 = vpop.permute.xlu0 %8702
    %8706 = vset.pattern.permute.xlu0 40
    %8707 = vperm.xlu0 %8706, %v8189
    %v8708 = vpop.permute.xlu0 %8707
    %8711 = vset.pattern.permute.xlu0 40
    %8712 = vperm.xlu0 %8711, %v8204
    %v8713 = vpop.permute.xlu0 %8712
    %8716 = vset.pattern.permute.xlu0 40
    %8717 = vperm.xlu0 %8716, %v8219
    %v8718 = vpop.permute.xlu0 %8717
    %8721 = vset.pattern.permute.xlu0 40
    %8722 = vperm.xlu0 %8721, %v8234
    %v8723 = vpop.permute.xlu0 %8722
    %8726 = vset.pattern.permute.xlu0 40
    %8727 = vperm.xlu0 %8726, %v8249
    %v8728 = vpop.permute.xlu0 %8727
    %8731 = vset.pattern.permute.xlu0 40
    %8732 = vperm.xlu0 %8731, %v8264
    %v8733 = vpop.permute.xlu0 %8732
    %8736 = vset.pattern.permute.xlu0 40
    %8737 = vperm.xlu0 %8736, %v8279
    %v8738 = vpop.permute.xlu0 %8737
    %8741 = vset.pattern.permute.xlu0 40
    %8742 = vperm.xlu0 %8741, %v8294
    %v8743 = vpop.permute.xlu0 %8742
    %8746 = vset.pattern.permute.xlu0 40
    %8747 = vperm.xlu0 %8746, %v8309
    %v8748 = vpop.permute.xlu0 %8747
    %8751 = vset.pattern.permute.xlu0 40
    %8752 = vperm.xlu0 %8751, %v8324
    %v8753 = vpop.permute.xlu0 %8752
    %8756 = vset.pattern.permute.xlu0 40
    %8757 = vperm.xlu0 %8756, %v8339
    %v8758 = vpop.permute.xlu0 %8757
    %8761 = vset.pattern.permute.xlu0 40
    %8762 = vperm.xlu0 %8761, %v8354
    %v8763 = vpop.permute.xlu0 %8762
    %8766 = vset.pattern.permute.xlu0 40
    %8767 = vperm.xlu0 %8766, %v8369
    %v8768 = vpop.permute.xlu0 %8767
    %8771 = vset.pattern.permute.xlu0 40
    %8772 = vperm.xlu0 %8771, %v8384
    %v8773 = vpop.permute.xlu0 %8772
    %8776 = vset.pattern.permute.xlu0 40
    %8777 = vperm.xlu0 %8776, %v8399
    %v8778 = vpop.permute.xlu0 %8777
    %8781 = vset.pattern.permute.xlu0 40
    %8782 = vperm.xlu0 %8781, %v8414
    %v8783 = vpop.permute.xlu0 %8782
    %8786 = vset.pattern.permute.xlu0 40
    %8787 = vperm.xlu0 %8786, %v8429
    %v8788 = vpop.permute.xlu0 %8787
    %8791 = vset.pattern.permute.xlu0 40
    %8792 = vperm.xlu0 %8791, %v8444
    %v8793 = vpop.permute.xlu0 %8792
    %8796 = vset.pattern.permute.xlu0 40
    %8797 = vperm.xlu0 %8796, %v8459
    %v8798 = vpop.permute.xlu0 %8797
    %8801 = vset.pattern.permute.xlu0 40
    %8802 = vperm.xlu0 %8801, %v8474
    %v8803 = vpop.permute.xlu0 %8802
    %8806 = vset.pattern.permute.xlu0 40
    %8807 = vperm.xlu0 %8806, %v8489
    %v8808 = vpop.permute.xlu0 %8807
    %v8810 = vmul.f32 %v7402, %v8493
    %v8811 = vmul.f32 %v7403, %v8498
    %v8812 = vmul.f32 %v7404, %v8503
    %v8813 = vmul.f32 %v7405, %v8508
    %v8814 = vmul.f32 %v7406, %v8513
    %v8815 = vmul.f32 %v7407, %v8518
    %v8816 = vmul.f32 %v7408, %v8523
    %v8817 = vmul.f32 %v7409, %v8528
    %v8818 = vmul.f32 %v7410, %v8533
    %v8819 = vmul.f32 %v7411, %v8538
    %v8820 = vmul.f32 %v7412, %v8543
    %v8821 = vmul.f32 %v7413, %v8548
    %v8822 = vmul.f32 %v7414, %v8553
    %v8823 = vmul.f32 %v7415, %v8558
    %v8824 = vmul.f32 %v7416, %v8563
    %v8825 = vmul.f32 %v7417, %v8568
    %v8826 = vmul.f32 %v7418, %v8573
    %v8827 = vmul.f32 %v7419, %v8578
    %v8828 = vmul.f32 %v7420, %v8583
    %v8829 = vmul.f32 %v7421, %v8588
    %v8830 = vmul.f32 %v7422, %v8593
    %v8831 = vmul.f32 %v7423, %v8598
    %v8832 = vmul.f32 %v7424, %v8603
    %v8833 = vmul.f32 %v7425, %v8608
    %v8834 = vmul.f32 %v7426, %v8613
    %v8835 = vmul.f32 %v7427, %v8618
    %v8836 = vmul.f32 %v7428, %v8623
    %v8837 = vmul.f32 %v7429, %v8628
    %v8838 = vmul.f32 %v7430, %v8633
    %v8839 = vmul.f32 %v7431, %v8638
    %v8840 = vmul.f32 %v7432, %v8643
    %v8841 = vmul.f32 %v7433, %v8648
    %v8842 = vmul.f32 %v7434, %v8653
    %v8843 = vmul.f32 %v7435, %v8658
    %v8844 = vmul.f32 %v7436, %v8663
    %v8845 = vmul.f32 %v7437, %v8668
    %v8846 = vmul.f32 %v7438, %v8673
    %v8847 = vmul.f32 %v7439, %v8678
    %v8848 = vmul.f32 %v7440, %v8683
    %v8849 = vmul.f32 %v7441, %v8688
    %v8850 = vmul.f32 %v7442, %v8693
    %v8851 = vmul.f32 %v7443, %v8698
    %v8852 = vmul.f32 %v7444, %v8703
    %v8853 = vmul.f32 %v7445, %v8708
    %v8854 = vmul.f32 %v7446, %v8713
    %v8855 = vmul.f32 %v7447, %v8718
    %v8856 = vmul.f32 %v7448, %v8723
    %v8857 = vmul.f32 %v7449, %v8728
    %v8858 = vmul.f32 %v7450, %v8733
    %v8859 = vmul.f32 %v7451, %v8738
    %v8860 = vmul.f32 %v7452, %v8743
    %v8861 = vmul.f32 %v7453, %v8748
    %v8862 = vmul.f32 %v7454, %v8753
    %v8863 = vmul.f32 %v7455, %v8758
    %v8864 = vmul.f32 %v7456, %v8763
    %v8865 = vmul.f32 %v7457, %v8768
    %v8866 = vmul.f32 %v7458, %v8773
    %v8867 = vmul.f32 %v7459, %v8778
    %v8868 = vmul.f32 %v7460, %v8783
    %v8869 = vmul.f32 %v7461, %v8788
    %v8870 = vmul.f32 %v7462, %v8793
    %v8871 = vmul.f32 %v7463, %v8798
    %v8872 = vmul.f32 %v7464, %v8803
    %v8873 = vmul.f32 %v7465, %v8808
    %8874 = vst [vmem:[%s2] sm:$0xff] %v8810
    %8875 = vst [vmem:[%s2 + $0x8] sm:$0xff] %v8811
    %8876 = vst [vmem:[%s2 + $0x10] sm:$0xff] %v8812
    %8877 = vst [vmem:[%s2 + $0x18] sm:$0xff] %v8813
    %8878 = vst [vmem:[%s2 + $0x20] sm:$0xff] %v8814
    %8879 = vst [vmem:[%s2 + $0x28] sm:$0xff] %v8815
    %8880 = vst [vmem:[%s2 + $0x30] sm:$0xff] %v8816
    %8881 = vst [vmem:[%s2 + $0x38] sm:$0xff] %v8817
    %8882 = vst [vmem:[%s2 + $0x40] sm:$0xff] %v8818
    %8883 = vst [vmem:[%s2 + $0x48] sm:$0xff] %v8819
    %8884 = vst [vmem:[%s2 + $0x50] sm:$0xff] %v8820
    %8885 = vst [vmem:[%s2 + $0x58] sm:$0xff] %v8821
    %8886 = vst [vmem:[%s2 + $0x60] sm:$0xff] %v8822
    %8887 = vst [vmem:[%s2 + $0x68] sm:$0xff] %v8823
    %8888 = vst [vmem:[%s2 + $0x70] sm:$0xff] %v8824
    %8889 = vst [vmem:[%s2 + $0x78] sm:$0xff] %v8825
    %8890 = vst [vmem:[%s2 + $0x80] sm:$0xff] %v8826
    %8891 = vst [vmem:[%s2 + $0x88] sm:$0xff] %v8827
    %8892 = vst [vmem:[%s2 + $0x90] sm:$0xff] %v8828
    %8893 = vst [vmem:[%s2 + $0x98] sm:$0xff] %v8829
    %8894 = vst [vmem:[%s2 + $0xa0] sm:$0xff] %v8830
    %8895 = vst [vmem:[%s2 + $0xa8] sm:$0xff] %v8831
    %8896 = vst [vmem:[%s2 + $0xb0] sm:$0xff] %v8832
    %8897 = vst [vmem:[%s2 + $0xb8] sm:$0xff] %v8833
    %8898 = vst [vmem:[%s2 + $0xc0] sm:$0xff] %v8834
    %8899 = vst [vmem:[%s2 + $0xc8] sm:$0xff] %v8835
    %8900 = vst [vmem:[%s2 + $0xd0] sm:$0xff] %v8836
    %8901 = vst [vmem:[%s2 + $0xd8] sm:$0xff] %v8837
    %8902 = vst [vmem:[%s2 + $0xe0] sm:$0xff] %v8838
    %8903 = vst [vmem:[%s2 + $0xe8] sm:$0xff] %v8839
    %8904 = vst [vmem:[%s2 + $0xf0] sm:$0xff] %v8840
    %8905 = vst [vmem:[%s2 + $0xf8] sm:$0xff] %v8841
    %8906 = vst [vmem:[%s2 + $0x100] sm:$0xff] %v8842
    %8907 = vst [vmem:[%s2 + $0x108] sm:$0xff] %v8843
    %8908 = vst [vmem:[%s2 + $0x110] sm:$0xff] %v8844
    %8909 = vst [vmem:[%s2 + $0x118] sm:$0xff] %v8845
    %8910 = vst [vmem:[%s2 + $0x120] sm:$0xff] %v8846
    %8911 = vst [vmem:[%s2 + $0x128] sm:$0xff] %v8847
    %8912 = vst [vmem:[%s2 + $0x130] sm:$0xff] %v8848
    %8913 = vst [vmem:[%s2 + $0x138] sm:$0xff] %v8849
    %8914 = vst [vmem:[%s2 + $0x140] sm:$0xff] %v8850
    %8915 = vst [vmem:[%s2 + $0x148] sm:$0xff] %v8851
    %8916 = vst [vmem:[%s2 + $0x150] sm:$0xff] %v8852
    %8917 = vst [vmem:[%s2 + $0x158] sm:$0xff] %v8853
    %8918 = vst [vmem:[%s2 + $0x160] sm:$0xff] %v8854
    %8919 = vst [vmem:[%s2 + $0x168] sm:$0xff] %v8855
    %8920 = vst [vmem:[%s2 + $0x170] sm:$0xff] %v8856
    %8921 = vst [vmem:[%s2 + $0x178] sm:$0xff] %v8857
    %8922 = vst [vmem:[%s2 + $0x180] sm:$0xff] %v8858
    %8923 = vst [vmem:[%s2 + $0x188] sm:$0xff] %v8859
    %8924 = vst [vmem:[%s2 + $0x190] sm:$0xff] %v8860
    %8925 = vst [vmem:[%s2 + $0x198] sm:$0xff] %v8861
    %8926 = vst [vmem:[%s2 + $0x1a0] sm:$0xff] %v8862
    %8927 = vst [vmem:[%s2 + $0x1a8] sm:$0xff] %v8863
    %8928 = vst [vmem:[%s2 + $0x1b0] sm:$0xff] %v8864
    %8929 = vst [vmem:[%s2 + $0x1b8] sm:$0xff] %v8865
    %8930 = vst [vmem:[%s2 + $0x1c0] sm:$0xff] %v8866
    %8931 = vst [vmem:[%s2 + $0x1c8] sm:$0xff] %v8867
    %8932 = vst [vmem:[%s2 + $0x1d0] sm:$0xff] %v8868
    %8933 = vst [vmem:[%s2 + $0x1d8] sm:$0xff] %v8869
    %8934 = vst [vmem:[%s2 + $0x1e0] sm:$0xff] %v8870
    %8935 = vst [vmem:[%s2 + $0x1e8] sm:$0xff] %v8871
    %8936 = vst [vmem:[%s2 + $0x1f0] sm:$0xff] %v8872
    %8937 = vst [vmem:[%s2 + $0x1f8] sm:$0xff] %v8873
  $region17: #{lightgcn_layer.1} parent=0 // pred_fallthru
    _
  // Predicated region
  $region18: #{lightgcn_layer.1} parent=0 // pred_check
    _
  $region19: #{lightgcn_layer.1} parent=0 // pred_check_branch
    %8939 = sbr.rel (0) target = $region21
  $region20: #{lightgcn_layer.1} parent=0 // pred_region
    _
  $region21: #{lightgcn_layer.1} parent=0 // pred_fallthru
    _
  // Predicated region
  $region22: #{lightgcn_layer.1} parent=0 // pred_check
    _
  $region23: #{lightgcn_layer.1} parent=0 // pred_check_branch
    %8941 = sbr.rel (0) target = $region25
  $region24: #{lightgcn_layer.1} parent=0 // pred_region
    _
  $region25: #{lightgcn_layer.1} parent=0 // pred_fallthru
    _

</llo_original>
